<compile_context>
chip_gen: v7x
topology: tpu7x:2x2x1
jax: 0.10.0
libtpu: 0.0.40
codegen_flags: <defaults>
</compile_context>

<pallas_src>
import jax
import jax.numpy as jnp
from jax.experimental import pallas as pl
from jax.experimental.pallas import tpu as pltpu

# ---------------- model hyper-params (small, synthetic) ----------------
B = 2              # batch
C = 3              # image channels
IMG = 16           # image height = width
PS = 8             # patch size
NP = (IMG // PS) ** 2      # number of patches = 4
S = NP + 1                 # real sequence length incl. CLS = 5
S_PAD = 8                  # padded sequence length (full sublane tile)
D = 32                     # hidden size (real ViT-base: 768)
H = 4                      # attention heads
DH = D // H                # head dim = 8
BH = B * H                 # fused batch*heads = 8
DM = 2 * D                 # MLP intermediate = 64
L = 2                      # encoder layers
P = C * PS * PS            # flattened patch dim = 192
LN_EPS = 1e-12             # HF ViT layer_norm_eps


def _layer_norm(x, g, b):
    mu = jnp.mean(x, axis=-1, keepdims=True)
    var = jnp.mean((x - mu) ** 2, axis=-1, keepdims=True)
    return (x - mu) * jax.lax.rsqrt(var + LN_EPS) * g + b


def _tile_heads(a):
    """(H, X, Y) -> (B*H, X, Y): replicate a per-head tensor across the batch."""
    return jnp.broadcast_to(a[None], (B,) + a.shape).reshape((BH,) + a.shape[1:])


def vit_kernel(patches_ref, pw_ref, add_ref,
               ln1g_ref, ln1b_ref,
               wq_ref, bq_ref, wk_ref, bk_ref, wv_ref, bv_ref,
               wo_ref, bo_ref,
               ln2g_ref, ln2b_ref, w1_ref, b1_ref, w2_ref, b2_ref,
               lnfg_ref, lnfb_ref, poolw_ref, poolb_ref,
               out_ref):
    f32 = jnp.float32
    bf16 = jnp.bfloat16

    # ---- patch embedding for the whole batch + CLS/pos via additive term ----
    # (processor normalization and the patch-conv bias are pre-folded into
    #  pw_ref / add_ref by the wrapper)
    x = jnp.dot(patches_ref[...].astype(bf16), pw_ref[...],
                preferred_element_type=f32) + add_ref[...]        # (B*S_PAD, D) f32

    # key-padding mask: sequence positions >= S are pad -> excluded as keys.
    kidx = jax.lax.broadcasted_iota(jnp.int32, (1, 1, S_PAD), 2)
    kmask = jnp.where(kidx < S, 0.0, -1e9).astype(f32)            # (1, 1, S_PAD)

    for l in range(L):
        # -------- self-attention: all heads fused as (B*H)-batched einsums --------
        hln = _layer_norm(x, ln1g_ref[l], ln1b_ref[l])            # (B*S_PAD, D) f32
        hb = jnp.broadcast_to(hln.reshape(B, 1, S_PAD, D), (B, H, S_PAD, D))
        hb = hb.reshape(BH, S_PAD, D).astype(bf16)                # (BH, S_PAD, D)

        q = jnp.einsum('bsd,bde->bse', hb, _tile_heads(wq_ref[l]),
                       preferred_element_type=f32) + _tile_heads(bq_ref[l])
        k = jnp.einsum('bsd,bde->bse', hb, _tile_heads(wk_ref[l]),
                       preferred_element_type=f32) + _tile_heads(bk_ref[l])
        v = jnp.einsum('bsd,bde->bse', hb, _tile_heads(wv_ref[l]),
                       preferred_element_type=f32) + _tile_heads(bv_ref[l])

        # scores (1/sqrt(DH) pre-folded into wq/bq); masked softmax in f32.
        s = jnp.einsum('bqe,bke->bqk', q.astype(bf16), k.astype(bf16),
                       preferred_element_type=f32) + kmask        # (BH, S_PAD, S_PAD)
        s = s - jnp.max(s, axis=-1, keepdims=True)
        p = jnp.exp(s)
        p = p * pl.reciprocal(jnp.sum(p, axis=-1, keepdims=True), approx=True)

        o = jnp.einsum('bqk,bke->bqe', p.astype(bf16), v.astype(bf16),
                       preferred_element_type=f32)                # (BH, S_PAD, DH)
        # per-head partial output projections, then reduce over heads.
        proj = jnp.einsum('bse,bed->bsd', o.astype(bf16), _tile_heads(wo_ref[l]),
                          preferred_element_type=f32)             # (BH, S_PAD, D)
        attn = jnp.sum(proj.reshape(B, H, S_PAD, D), axis=1).reshape(B * S_PAD, D)
        x = x + attn + bo_ref[l]

        # -------- MLP --------
        h2 = _layer_norm(x, ln2g_ref[l], ln2b_ref[l])
        h2 = jnp.dot(h2.astype(bf16), w1_ref[l], preferred_element_type=f32) + b1_ref[l]
        # TODO(synk): HF ViT uses exact (erf) GELU; tanh-approx GELU used here.
        h2 = jax.nn.gelu(h2, approximate=True)
        x = x + jnp.dot(h2.astype(bf16), w2_ref[l], preferred_element_type=f32) + b2_ref[l]

    # ---- final LayerNorm + pooler (CLS token -> dense -> tanh) ----
    xf = _layer_norm(x, lnfg_ref[...], lnfb_ref[...])             # (B*S_PAD, D)
    cls_tok = xf.reshape(B, S_PAD, D)[:, 0, :]                    # (B, D)
    pooled = jnp.tanh(jnp.dot(cls_tok.astype(bf16), poolw_ref[...],
                              preferred_element_type=f32) + poolb_ref[...])
    out_ref[...] = pooled.astype(out_ref.dtype)                   # single (B, D) store


def vit_forward(image_feats, params):
    """image_feats: (B, C, IMG, IMG) float32 (NCHW), values in [0, 1]."""
    assert image_feats.shape == (B, C, IMG, IMG)

    # --- glue: non-overlapping patches -> (B*S_PAD, P); row 0 (CLS slot) and
    #     rows S..S_PAD-1 (pad) are zero so they contribute nothing to the matmul.
    nh, nw = IMG // PS, IMG // PS
    xp = image_feats.reshape(B, C, nh, PS, nw, PS)
    xp = jnp.transpose(xp, (0, 2, 4, 1, 3, 5)).reshape(B, NP, P)
    patches = jnp.zeros((B, S_PAD, P), jnp.float32).at[:, 1:1 + NP, :].set(xp)
    patches = patches.reshape(B * S_PAD, P)

    # --- fold the processor normalization (x - 0.5) / 0.5 = 2x - 1 into the
    #     patch-embedding weights/bias (removes a standalone elementwise pass).
    pw_eff = 2.0 * params['patch_w']                                          # (P, D)
    pb_eff = params['patch_b'] - jnp.sum(params['patch_w'], axis=0, keepdims=True)

    # --- additive term per sequence row: CLS+pos for row 0, pos+bias for patch
    #     rows, 0 for pad rows; tiled over batch so the kernel adds it directly.
    add_rows = jnp.zeros((S_PAD, D), jnp.float32)
    add_rows = add_rows.at[0, :].set(params['cls'][0] + params['pos'][0])
    add_rows = add_rows.at[1:1 + NP, :].set(params['pos'][1:1 + NP] + pb_eff)
    add = jnp.broadcast_to(add_rows[None], (B, S_PAD, D)).reshape(B * S_PAD, D)

    # --- split fused QKV into per-head weights (head-major leading axis) and
    #     fold the 1/sqrt(DH) attention scale into the query projection.
    scale = 1.0 / (DH ** 0.5)
    wqkv, bqkv = params['wqkv'], params['bqkv']                    # (L,D,3D), (L,1,3D)

    def heads_w(w):   # (L, D, D) -> (L, H, D, DH)
        return jnp.transpose(w.reshape(L, D, H, DH), (0, 2, 1, 3))

    def heads_b(bb):  # (L, 1, D) -> (L, H, 1, DH)
        return jnp.transpose(bb.reshape(L, 1, H, DH), (0, 2, 1, 3))

    wq_h = heads_w(wqkv[:, :, 0 * D:1 * D] * scale)
    wk_h = heads_w(wqkv[:, :, 1 * D:2 * D])
    wv_h = heads_w(wqkv[:, :, 2 * D:3 * D])
    bq_h = heads_b(bqkv[:, :, 0 * D:1 * D] * scale)
    bk_h = heads_b(bqkv[:, :, 1 * D:2 * D])
    bv_h = heads_b(bqkv[:, :, 2 * D:3 * D])
    wo_h = params['wo'].reshape(L, H, DH, D)                       # per-head output proj

    bf = lambda a: a.astype(jnp.bfloat16)   # MXU operands in bf16, f32 accumulation
    args = (
        patches, bf(pw_eff), add,
        params['ln1_g'], params['ln1_b'],
        bf(wq_h), bq_h, bf(wk_h), bk_h, bf(wv_h), bv_h,
        bf(wo_h), params['bo'],
        params['ln2_g'], params['ln2_b'],
        bf(params['w1']), params['b1'], bf(params['w2']), params['b2'],
        params['lnf_g'], params['lnf_b'],
        bf(params['pool_w']), params['pool_b'],
    )
    return pl.pallas_call(
        vit_kernel,
        out_shape=jax.ShapeDtypeStruct((B, D), jnp.float32),
        in_specs=[pl.BlockSpec(memory_space=pltpu.MemorySpace.VMEM) for _ in args],
        out_specs=pl.BlockSpec(memory_space=pltpu.MemorySpace.VMEM),
    )(*args)


def make_params(key):
    ks = jax.random.split(key, 16)
    n = lambda k, shape: (0.02 * jax.random.normal(k, shape)).astype(jnp.float32)
    zeros = lambda shape: jnp.zeros(shape, jnp.float32)
    ones = lambda shape: jnp.ones(shape, jnp.float32)
    return {
        # Conv2d(C, D, kernel=PS, stride=PS) re-expressed as (P, D) matmul.
        'patch_w': n(ks[0], (P, D)),
        'patch_b': zeros((1, D)),
        'cls':     n(ks[1], (1, D)),
        'pos':     n(ks[2], (S, D)),
        'ln1_g':   ones((L, 1, D)),  'ln1_b': zeros((L, 1, D)),
        'wqkv':    n(ks[3], (L, D, 3 * D)), 'bqkv': zeros((L, 1, 3 * D)),
        'wo':      n(ks[4], (L, D, D)),     'bo':   zeros((L, 1, D)),
        'ln2_g':   ones((L, 1, D)),  'ln2_b': zeros((L, 1, D)),
        'w1':      n(ks[5], (L, D, DM)),    'b1':   zeros((L, 1, DM)),
        'w2':      n(ks[6], (L, DM, D)),    'b2':   zeros((L, 1, D)),
        'lnf_g':   ones((1, D)),     'lnf_b': zeros((1, D)),
        'pool_w':  n(ks[7], (D, D)), 'pool_b': zeros((1, D)),
    }


if __name__ == "__main__":
    key = jax.random.PRNGKey(0)
    kp, kx = jax.random.split(key)
    params = make_params(kp)
    # synthetic "image_feats": values in [0, 1], NCHW, do_rescale=False
    image_feats = jax.random.uniform(kx, (B, C, IMG, IMG), jnp.float32)

    pooler_output = jax.jit(vit_forward)(image_feats, params)     # (B, D)
    jax.block_until_ready(pooler_output)
    assert pooler_output.shape == (B, D)
    assert bool(jnp.all(jnp.isfinite(pooler_output)))
    print("KERNEL_OK")
</pallas_src>

<mosaic_0001>
module attributes {stable_mosaic.version = 11 : i64} {
  func.func @vit_kernel(%arg0: memref<16x192xf32, #tpu.memory_space<vmem>>, %arg1: memref<192x32xbf16, #tpu.memory_space<vmem>>, %arg2: memref<16x32xf32, #tpu.memory_space<vmem>>, %arg3: memref<2x1x32xf32, #tpu.memory_space<vmem>>, %arg4: memref<2x1x32xf32, #tpu.memory_space<vmem>>, %arg5: memref<2x4x32x8xbf16, #tpu.memory_space<vmem>>, %arg6: memref<2x4x1x8xf32, #tpu.memory_space<vmem>>, %arg7: memref<2x4x32x8xbf16, #tpu.memory_space<vmem>>, %arg8: memref<2x4x1x8xf32, #tpu.memory_space<vmem>>, %arg9: memref<2x4x32x8xbf16, #tpu.memory_space<vmem>>, %arg10: memref<2x4x1x8xf32, #tpu.memory_space<vmem>>, %arg11: memref<2x4x8x32xbf16, #tpu.memory_space<vmem>>, %arg12: memref<2x1x32xf32, #tpu.memory_space<vmem>>, %arg13: memref<2x1x32xf32, #tpu.memory_space<vmem>>, %arg14: memref<2x1x32xf32, #tpu.memory_space<vmem>>, %arg15: memref<2x32x64xbf16, #tpu.memory_space<vmem>>, %arg16: memref<2x1x64xf32, #tpu.memory_space<vmem>>, %arg17: memref<2x64x32xbf16, #tpu.memory_space<vmem>>, %arg18: memref<2x1x32xf32, #tpu.memory_space<vmem>>, %arg19: memref<1x32xf32, #tpu.memory_space<vmem>>, %arg20: memref<1x32xf32, #tpu.memory_space<vmem>>, %arg21: memref<32x32xbf16, #tpu.memory_space<vmem>>, %arg22: memref<1x32xf32, #tpu.memory_space<vmem>>, %arg23: memref<2x32xf32, #tpu.memory_space<vmem>>) attributes {dimension_semantics = [], scalar_prefetch = 0 : i64, scratch_operands = 0 : i64, tpu.core_type = #tpu.core_type<tc>} {
    %c0 = arith.constant 0 : index
    %c0_0 = arith.constant 0 : index
    %0 = vector.load %arg0[%c0, %c0_0] : memref<16x192xf32, #tpu.memory_space<vmem>>, vector<16x192xf32>
    %1 = arith.truncf %0 : vector<16x192xf32> to vector<16x192xbf16>
    %c0_1 = arith.constant 0 : index
    %c0_2 = arith.constant 0 : index
    %2 = vector.load %arg1[%c0_1, %c0_2] : memref<192x32xbf16, #tpu.memory_space<vmem>>, vector<192x32xbf16>
    %cst = arith.constant dense<0.000000e+00> : vector<16x32xf32>
    %3 = tpu.matmul %1, %2, %cst {dimension_numbers = #tpu.dot_dimension_numbers<[1], [0], [0], [1], [0, 0, 1, 1], [], []>} : vector<16x192xbf16>, vector<192x32xbf16>, vector<16x32xf32> -> vector<16x32xf32>
    %c0_3 = arith.constant 0 : index
    %c0_4 = arith.constant 0 : index
    %4 = vector.load %arg2[%c0_3, %c0_4] : memref<16x32xf32, #tpu.memory_space<vmem>>, vector<16x32xf32>
    %5 = arith.addf %3, %4 : vector<16x32xf32>
    %6 = tpu.iota {dimensions = array<i32: 2>} : vector<1x1x8xi32>
    %c5_i32 = arith.constant 5 : i32
    %7 = vector.broadcast %c5_i32 : i32 to vector<1x1x8xi32>
    %8 = arith.cmpi slt, %6, %7 : vector<1x1x8xi32>
    %cst_5 = arith.constant 0.000000e+00 : f32
    %cst_6 = arith.constant -1.000000e+09 : f32
    %9 = vector.broadcast %cst_5 : f32 to vector<1x1x8xf32>
    %10 = vector.broadcast %cst_6 : f32 to vector<1x1x8xf32>
    %11 = arith.select %8, %9, %10 : vector<1x1x8xi1>, vector<1x1x8xf32>
    %c0_7 = arith.constant 0 : index
    %c0_8 = arith.constant 0 : index
    %c0_9 = arith.constant 0 : index
    %12 = vector.load %arg3[%c0_7, %c0_8, %c0_9] : memref<2x1x32xf32, #tpu.memory_space<vmem>>, vector<1x1x32xf32>
    %13 = vector.shape_cast %12 : vector<1x1x32xf32> to vector<1x32xf32>
    %c0_10 = arith.constant 0 : index
    %c0_11 = arith.constant 0 : index
    %c0_12 = arith.constant 0 : index
    %14 = vector.load %arg4[%c0_10, %c0_11, %c0_12] : memref<2x1x32xf32, #tpu.memory_space<vmem>>, vector<1x1x32xf32>
    %15 = vector.shape_cast %14 : vector<1x1x32xf32> to vector<1x32xf32>
    %cst_13 = arith.constant dense<0.000000e+00> : vector<16xf32>
    %16 = vector.multi_reduction <add>, %5, %cst_13 [1] : vector<16x32xf32> to vector<16xf32>
    %17 = vector.shape_cast %16 : vector<16xf32> to vector<16x1xf32>
    %cst_14 = arith.constant 3.200000e+01 : f32
    %18 = vector.broadcast %cst_14 : f32 to vector<16x1xf32>
    %19 = arith.divf %17, %18 : vector<16x1xf32>
    %20 = vector.broadcast %19 : vector<16x1xf32> to vector<16x32xf32>
    %21 = arith.subf %5, %20 : vector<16x32xf32>
    %22 = arith.mulf %21, %21 : vector<16x32xf32>
    %cst_15 = arith.constant dense<0.000000e+00> : vector<16xf32>
    %23 = vector.multi_reduction <add>, %22, %cst_15 [1] : vector<16x32xf32> to vector<16xf32>
    %24 = vector.shape_cast %23 : vector<16xf32> to vector<16x1xf32>
    %cst_16 = arith.constant 3.200000e+01 : f32
    %25 = vector.broadcast %cst_16 : f32 to vector<16x1xf32>
    %26 = arith.divf %24, %25 : vector<16x1xf32>
    %27 = vector.broadcast %19 : vector<16x1xf32> to vector<16x32xf32>
    %28 = arith.subf %5, %27 : vector<16x32xf32>
    %cst_17 = arith.constant 9.99999996E-13 : f32
    %29 = vector.broadcast %cst_17 : f32 to vector<16x1xf32>
    %30 = arith.addf %26, %29 : vector<16x1xf32>
    %31 = math.rsqrt %30 : vector<16x1xf32>
    %32 = vector.broadcast %31 : vector<16x1xf32> to vector<16x32xf32>
    %33 = arith.mulf %28, %32 : vector<16x32xf32>
    %34 = vector.broadcast %13 : vector<1x32xf32> to vector<16x32xf32>
    %35 = arith.mulf %33, %34 : vector<16x32xf32>
    %36 = vector.broadcast %15 : vector<1x32xf32> to vector<16x32xf32>
    %37 = arith.addf %35, %36 : vector<16x32xf32>
    %38 = vector.shape_cast %37 : vector<16x32xf32> to vector<2x1x8x32xf32>
    %39 = vector.shape_cast %38 : vector<2x1x8x32xf32> to vector<2x1x8x32xf32>
    %40 = vector.broadcast %39 : vector<2x1x8x32xf32> to vector<2x4x8x32xf32>
    %41 = vector.shape_cast %40 : vector<2x4x8x32xf32> to vector<8x8x32xf32>
    %42 = arith.truncf %41 : vector<8x8x32xf32> to vector<8x8x32xbf16>
    %c0_18 = arith.constant 0 : index
    %c0_19 = arith.constant 0 : index
    %c0_20 = arith.constant 0 : index
    %c0_21 = arith.constant 0 : index
    %43 = vector.load %arg5[%c0_18, %c0_19, %c0_20, %c0_21] : memref<2x4x32x8xbf16, #tpu.memory_space<vmem>>, vector<1x4x32x8xbf16>
    %44 = vector.shape_cast %43 : vector<1x4x32x8xbf16> to vector<4x32x8xbf16>
    %45 = vector.shape_cast %44 : vector<4x32x8xbf16> to vector<1x4x32x8xbf16>
    %46 = vector.shape_cast %45 : vector<1x4x32x8xbf16> to vector<1x4x32x8xbf16>
    %47 = vector.broadcast %46 : vector<1x4x32x8xbf16> to vector<2x4x32x8xbf16>
    %48 = vector.shape_cast %47 : vector<2x4x32x8xbf16> to vector<8x32x8xbf16>
    "tpu.trace_start"() <{level = 10 : i32, message = "bsd,bde->bse"}> : () -> ()
    %cst_22 = arith.constant dense<0.000000e+00> : vector<8x8x8xf32>
    %49 = tpu.matmul %42, %48, %cst_22 {dimension_numbers = #tpu.dot_dimension_numbers<[2], [1], [1], [2], [0, 0, 0, 1, 1, 2], [0], [0]>} : vector<8x8x32xbf16>, vector<8x32x8xbf16>, vector<8x8x8xf32> -> vector<8x8x8xf32>
    "tpu.trace_stop"() : () -> ()
    %c0_23 = arith.constant 0 : index
    %c0_24 = arith.constant 0 : index
    %c0_25 = arith.constant 0 : index
    %c0_26 = arith.constant 0 : index
    %50 = vector.load %arg6[%c0_23, %c0_24, %c0_25, %c0_26] : memref<2x4x1x8xf32, #tpu.memory_space<vmem>>, vector<1x4x1x8xf32>
    %51 = vector.shape_cast %50 : vector<1x4x1x8xf32> to vector<4x1x8xf32>
    %52 = vector.shape_cast %51 : vector<4x1x8xf32> to vector<1x4x1x8xf32>
    %53 = vector.shape_cast %52 : vector<1x4x1x8xf32> to vector<1x4x1x8xf32>
    %54 = vector.broadcast %53 : vector<1x4x1x8xf32> to vector<2x4x1x8xf32>
    %55 = vector.shape_cast %54 : vector<2x4x1x8xf32> to vector<8x1x8xf32>
    %56 = vector.broadcast %55 : vector<8x1x8xf32> to vector<8x8x8xf32>
    %57 = arith.addf %49, %56 : vector<8x8x8xf32>
    %c0_27 = arith.constant 0 : index
    %c0_28 = arith.constant 0 : index
    %c0_29 = arith.constant 0 : index
    %c0_30 = arith.constant 0 : index
    %58 = vector.load %arg7[%c0_27, %c0_28, %c0_29, %c0_30] : memref<2x4x32x8xbf16, #tpu.memory_space<vmem>>, vector<1x4x32x8xbf16>
    %59 = vector.shape_cast %58 : vector<1x4x32x8xbf16> to vector<4x32x8xbf16>
    %60 = vector.shape_cast %59 : vector<4x32x8xbf16> to vector<1x4x32x8xbf16>
    %61 = vector.shape_cast %60 : vector<1x4x32x8xbf16> to vector<1x4x32x8xbf16>
    %62 = vector.broadcast %61 : vector<1x4x32x8xbf16> to vector<2x4x32x8xbf16>
    %63 = vector.shape_cast %62 : vector<2x4x32x8xbf16> to vector<8x32x8xbf16>
    "tpu.trace_start"() <{level = 10 : i32, message = "bsd,bde->bse"}> : () -> ()
    %cst_31 = arith.constant dense<0.000000e+00> : vector<8x8x8xf32>
    %64 = tpu.matmul %42, %63, %cst_31 {dimension_numbers = #tpu.dot_dimension_numbers<[2], [1], [1], [2], [0, 0, 0, 1, 1, 2], [0], [0]>} : vector<8x8x32xbf16>, vector<8x32x8xbf16>, vector<8x8x8xf32> -> vector<8x8x8xf32>
    "tpu.trace_stop"() : () -> ()
    %c0_32 = arith.constant 0 : index
    %c0_33 = arith.constant 0 : index
    %c0_34 = arith.constant 0 : index
    %c0_35 = arith.constant 0 : index
    %65 = vector.load %arg8[%c0_32, %c0_33, %c0_34, %c0_35] : memref<2x4x1x8xf32, #tpu.memory_space<vmem>>, vector<1x4x1x8xf32>
    %66 = vector.shape_cast %65 : vector<1x4x1x8xf32> to vector<4x1x8xf32>
    %67 = vector.shape_cast %66 : vector<4x1x8xf32> to vector<1x4x1x8xf32>
    %68 = vector.shape_cast %67 : vector<1x4x1x8xf32> to vector<1x4x1x8xf32>
    %69 = vector.broadcast %68 : vector<1x4x1x8xf32> to vector<2x4x1x8xf32>
    %70 = vector.shape_cast %69 : vector<2x4x1x8xf32> to vector<8x1x8xf32>
    %71 = vector.broadcast %70 : vector<8x1x8xf32> to vector<8x8x8xf32>
    %72 = arith.addf %64, %71 : vector<8x8x8xf32>
    %c0_36 = arith.constant 0 : index
    %c0_37 = arith.constant 0 : index
    %c0_38 = arith.constant 0 : index
    %c0_39 = arith.constant 0 : index
    %73 = vector.load %arg9[%c0_36, %c0_37, %c0_38, %c0_39] : memref<2x4x32x8xbf16, #tpu.memory_space<vmem>>, vector<1x4x32x8xbf16>
    %74 = vector.shape_cast %73 : vector<1x4x32x8xbf16> to vector<4x32x8xbf16>
    %75 = vector.shape_cast %74 : vector<4x32x8xbf16> to vector<1x4x32x8xbf16>
    %76 = vector.shape_cast %75 : vector<1x4x32x8xbf16> to vector<1x4x32x8xbf16>
    %77 = vector.broadcast %76 : vector<1x4x32x8xbf16> to vector<2x4x32x8xbf16>
    %78 = vector.shape_cast %77 : vector<2x4x32x8xbf16> to vector<8x32x8xbf16>
    "tpu.trace_start"() <{level = 10 : i32, message = "bsd,bde->bse"}> : () -> ()
    %cst_40 = arith.constant dense<0.000000e+00> : vector<8x8x8xf32>
    %79 = tpu.matmul %42, %78, %cst_40 {dimension_numbers = #tpu.dot_dimension_numbers<[2], [1], [1], [2], [0, 0, 0, 1, 1, 2], [0], [0]>} : vector<8x8x32xbf16>, vector<8x32x8xbf16>, vector<8x8x8xf32> -> vector<8x8x8xf32>
    "tpu.trace_stop"() : () -> ()
    %c0_41 = arith.constant 0 : index
    %c0_42 = arith.constant 0 : index
    %c0_43 = arith.constant 0 : index
    %c0_44 = arith.constant 0 : index
    %80 = vector.load %arg10[%c0_41, %c0_42, %c0_43, %c0_44] : memref<2x4x1x8xf32, #tpu.memory_space<vmem>>, vector<1x4x1x8xf32>
    %81 = vector.shape_cast %80 : vector<1x4x1x8xf32> to vector<4x1x8xf32>
    %82 = vector.shape_cast %81 : vector<4x1x8xf32> to vector<1x4x1x8xf32>
    %83 = vector.shape_cast %82 : vector<1x4x1x8xf32> to vector<1x4x1x8xf32>
    %84 = vector.broadcast %83 : vector<1x4x1x8xf32> to vector<2x4x1x8xf32>
    %85 = vector.shape_cast %84 : vector<2x4x1x8xf32> to vector<8x1x8xf32>
    %86 = vector.broadcast %85 : vector<8x1x8xf32> to vector<8x8x8xf32>
    %87 = arith.addf %79, %86 : vector<8x8x8xf32>
    %88 = arith.truncf %57 : vector<8x8x8xf32> to vector<8x8x8xbf16>
    %89 = arith.truncf %72 : vector<8x8x8xf32> to vector<8x8x8xbf16>
    "tpu.trace_start"() <{level = 10 : i32, message = "bqe,bke->bqk"}> : () -> ()
    %cst_45 = arith.constant dense<0.000000e+00> : vector<8x8x8xf32>
    %90 = tpu.matmul %88, %89, %cst_45 {dimension_numbers = #tpu.dot_dimension_numbers<[2], [2], [1], [1], [0, 0, 0, 1, 1, 1], [0], [0]>} : vector<8x8x8xbf16>, vector<8x8x8xbf16>, vector<8x8x8xf32> -> vector<8x8x8xf32>
    "tpu.trace_stop"() : () -> ()
    %91 = vector.broadcast %11 : vector<1x1x8xf32> to vector<8x8x8xf32>
    %92 = arith.addf %90, %91 : vector<8x8x8xf32>
    %cst_46 = arith.constant dense<0xFF800000> : vector<8x8xf32>
    %93 = vector.multi_reduction <maximumf>, %92, %cst_46 [2] : vector<8x8x8xf32> to vector<8x8xf32>
    %94 = vector.shape_cast %93 : vector<8x8xf32> to vector<8x8x1xf32>
    %95 = vector.broadcast %94 : vector<8x8x1xf32> to vector<8x8x8xf32>
    %96 = arith.subf %92, %95 : vector<8x8x8xf32>
    %97 = math.exp %96 : vector<8x8x8xf32>
    %cst_47 = arith.constant dense<0.000000e+00> : vector<8x8xf32>
    %98 = vector.multi_reduction <add>, %97, %cst_47 [2] : vector<8x8x8xf32> to vector<8x8xf32>
    %99 = vector.shape_cast %98 : vector<8x8xf32> to vector<8x8x1xf32>
    %100 = tpu.reciprocal %99 {approx = true} : vector<8x8x1xf32> -> vector<8x8x1xf32>
    %101 = vector.broadcast %100 : vector<8x8x1xf32> to vector<8x8x8xf32>
    %102 = arith.mulf %97, %101 : vector<8x8x8xf32>
    %103 = arith.truncf %102 : vector<8x8x8xf32> to vector<8x8x8xbf16>
    %104 = arith.truncf %87 : vector<8x8x8xf32> to vector<8x8x8xbf16>
    "tpu.trace_start"() <{level = 10 : i32, message = "bqk,bke->bqe"}> : () -> ()
    %cst_48 = arith.constant dense<0.000000e+00> : vector<8x8x8xf32>
    %105 = tpu.matmul %103, %104, %cst_48 {dimension_numbers = #tpu.dot_dimension_numbers<[2], [1], [1], [2], [0, 0, 0, 1, 1, 2], [0], [0]>} : vector<8x8x8xbf16>, vector<8x8x8xbf16>, vector<8x8x8xf32> -> vector<8x8x8xf32>
    "tpu.trace_stop"() : () -> ()
    %106 = arith.truncf %105 : vector<8x8x8xf32> to vector<8x8x8xbf16>
    %c0_49 = arith.constant 0 : index
    %c0_50 = arith.constant 0 : index
    %c0_51 = arith.constant 0 : index
    %c0_52 = arith.constant 0 : index
    %107 = vector.load %arg11[%c0_49, %c0_50, %c0_51, %c0_52] : memref<2x4x8x32xbf16, #tpu.memory_space<vmem>>, vector<1x4x8x32xbf16>
    %108 = vector.shape_cast %107 : vector<1x4x8x32xbf16> to vector<4x8x32xbf16>
    %109 = vector.shape_cast %108 : vector<4x8x32xbf16> to vector<1x4x8x32xbf16>
    %110 = vector.shape_cast %109 : vector<1x4x8x32xbf16> to vector<1x4x8x32xbf16>
    %111 = vector.broadcast %110 : vector<1x4x8x32xbf16> to vector<2x4x8x32xbf16>
    %112 = vector.shape_cast %111 : vector<2x4x8x32xbf16> to vector<8x8x32xbf16>
    "tpu.trace_start"() <{level = 10 : i32, message = "bse,bed->bsd"}> : () -> ()
    %cst_53 = arith.constant dense<0.000000e+00> : vector<8x8x32xf32>
    %113 = tpu.matmul %106, %112, %cst_53 {dimension_numbers = #tpu.dot_dimension_numbers<[2], [1], [1], [2], [0, 0, 0, 1, 1, 2], [0], [0]>} : vector<8x8x8xbf16>, vector<8x8x32xbf16>, vector<8x8x32xf32> -> vector<8x8x32xf32>
    "tpu.trace_stop"() : () -> ()
    %114 = vector.shape_cast %113 : vector<8x8x32xf32> to vector<2x4x8x32xf32>
    %cst_54 = arith.constant dense<0.000000e+00> : vector<2x8x32xf32>
    %115 = vector.multi_reduction <add>, %114, %cst_54 [1] : vector<2x4x8x32xf32> to vector<2x8x32xf32>
    %116 = vector.shape_cast %115 : vector<2x8x32xf32> to vector<16x32xf32>
    %117 = arith.addf %5, %116 : vector<16x32xf32>
    %c0_55 = arith.constant 0 : index
    %c0_56 = arith.constant 0 : index
    %c0_57 = arith.constant 0 : index
    %118 = vector.load %arg12[%c0_55, %c0_56, %c0_57] : memref<2x1x32xf32, #tpu.memory_space<vmem>>, vector<1x1x32xf32>
    %119 = vector.shape_cast %118 : vector<1x1x32xf32> to vector<1x32xf32>
    %120 = vector.broadcast %119 : vector<1x32xf32> to vector<16x32xf32>
    %121 = arith.addf %117, %120 : vector<16x32xf32>
    %c0_58 = arith.constant 0 : index
    %c0_59 = arith.constant 0 : index
    %c0_60 = arith.constant 0 : index
    %122 = vector.load %arg13[%c0_58, %c0_59, %c0_60] : memref<2x1x32xf32, #tpu.memory_space<vmem>>, vector<1x1x32xf32>
    %123 = vector.shape_cast %122 : vector<1x1x32xf32> to vector<1x32xf32>
    %c0_61 = arith.constant 0 : index
    %c0_62 = arith.constant 0 : index
    %c0_63 = arith.constant 0 : index
    %124 = vector.load %arg14[%c0_61, %c0_62, %c0_63] : memref<2x1x32xf32, #tpu.memory_space<vmem>>, vector<1x1x32xf32>
    %125 = vector.shape_cast %124 : vector<1x1x32xf32> to vector<1x32xf32>
    %cst_64 = arith.constant dense<0.000000e+00> : vector<16xf32>
    %126 = vector.multi_reduction <add>, %121, %cst_64 [1] : vector<16x32xf32> to vector<16xf32>
    %127 = vector.shape_cast %126 : vector<16xf32> to vector<16x1xf32>
    %cst_65 = arith.constant 3.200000e+01 : f32
    %128 = vector.broadcast %cst_65 : f32 to vector<16x1xf32>
    %129 = arith.divf %127, %128 : vector<16x1xf32>
    %130 = vector.broadcast %129 : vector<16x1xf32> to vector<16x32xf32>
    %131 = arith.subf %121, %130 : vector<16x32xf32>
    %132 = arith.mulf %131, %131 : vector<16x32xf32>
    %cst_66 = arith.constant dense<0.000000e+00> : vector<16xf32>
    %133 = vector.multi_reduction <add>, %132, %cst_66 [1] : vector<16x32xf32> to vector<16xf32>
    %134 = vector.shape_cast %133 : vector<16xf32> to vector<16x1xf32>
    %cst_67 = arith.constant 3.200000e+01 : f32
    %135 = vector.broadcast %cst_67 : f32 to vector<16x1xf32>
    %136 = arith.divf %134, %135 : vector<16x1xf32>
    %137 = vector.broadcast %129 : vector<16x1xf32> to vector<16x32xf32>
    %138 = arith.subf %121, %137 : vector<16x32xf32>
    %cst_68 = arith.constant 9.99999996E-13 : f32
    %139 = vector.broadcast %cst_68 : f32 to vector<16x1xf32>
    %140 = arith.addf %136, %139 : vector<16x1xf32>
    %141 = math.rsqrt %140 : vector<16x1xf32>
    %142 = vector.broadcast %141 : vector<16x1xf32> to vector<16x32xf32>
    %143 = arith.mulf %138, %142 : vector<16x32xf32>
    %144 = vector.broadcast %123 : vector<1x32xf32> to vector<16x32xf32>
    %145 = arith.mulf %143, %144 : vector<16x32xf32>
    %146 = vector.broadcast %125 : vector<1x32xf32> to vector<16x32xf32>
    %147 = arith.addf %145, %146 : vector<16x32xf32>
    %148 = arith.truncf %147 : vector<16x32xf32> to vector<16x32xbf16>
    %c0_69 = arith.constant 0 : index
    %c0_70 = arith.constant 0 : index
    %c0_71 = arith.constant 0 : index
    %149 = vector.load %arg15[%c0_69, %c0_70, %c0_71] : memref<2x32x64xbf16, #tpu.memory_space<vmem>>, vector<1x32x64xbf16>
    %150 = vector.shape_cast %149 : vector<1x32x64xbf16> to vector<32x64xbf16>
    %cst_72 = arith.constant dense<0.000000e+00> : vector<16x64xf32>
    %151 = tpu.matmul %148, %150, %cst_72 {dimension_numbers = #tpu.dot_dimension_numbers<[1], [0], [0], [1], [0, 0, 1, 1], [], []>} : vector<16x32xbf16>, vector<32x64xbf16>, vector<16x64xf32> -> vector<16x64xf32>
    %c0_73 = arith.constant 0 : index
    %c0_74 = arith.constant 0 : index
    %c0_75 = arith.constant 0 : index
    %152 = vector.load %arg16[%c0_73, %c0_74, %c0_75] : memref<2x1x64xf32, #tpu.memory_space<vmem>>, vector<1x1x64xf32>
    %153 = vector.shape_cast %152 : vector<1x1x64xf32> to vector<1x64xf32>
    %154 = vector.broadcast %153 : vector<1x64xf32> to vector<16x64xf32>
    %155 = arith.addf %151, %154 : vector<16x64xf32>
    %156 = arith.mulf %155, %155 : vector<16x64xf32>
    %157 = arith.mulf %155, %156 : vector<16x64xf32>
    %cst_76 = arith.constant 4.471500e-02 : f32
    %158 = vector.broadcast %cst_76 : f32 to vector<16x64xf32>
    %159 = arith.mulf %158, %157 : vector<16x64xf32>
    %160 = arith.addf %155, %159 : vector<16x64xf32>
    %cst_77 = arith.constant 0.797884583 : f32
    %161 = vector.broadcast %cst_77 : f32 to vector<16x64xf32>
    %162 = arith.mulf %161, %160 : vector<16x64xf32>
    %163 = math.tanh %162 : vector<16x64xf32>
    %cst_78 = arith.constant 1.000000e+00 : f32
    %164 = vector.broadcast %cst_78 : f32 to vector<16x64xf32>
    %165 = arith.addf %164, %163 : vector<16x64xf32>
    %cst_79 = arith.constant 5.000000e-01 : f32
    %166 = vector.broadcast %cst_79 : f32 to vector<16x64xf32>
    %167 = arith.mulf %166, %165 : vector<16x64xf32>
    %168 = arith.mulf %155, %167 : vector<16x64xf32>
    %169 = arith.truncf %168 : vector<16x64xf32> to vector<16x64xbf16>
    %c0_80 = arith.constant 0 : index
    %c0_81 = arith.constant 0 : index
    %c0_82 = arith.constant 0 : index
    %170 = vector.load %arg17[%c0_80, %c0_81, %c0_82] : memref<2x64x32xbf16, #tpu.memory_space<vmem>>, vector<1x64x32xbf16>
    %171 = vector.shape_cast %170 : vector<1x64x32xbf16> to vector<64x32xbf16>
    %cst_83 = arith.constant dense<0.000000e+00> : vector<16x32xf32>
    %172 = tpu.matmul %169, %171, %cst_83 {dimension_numbers = #tpu.dot_dimension_numbers<[1], [0], [0], [1], [0, 0, 1, 1], [], []>} : vector<16x64xbf16>, vector<64x32xbf16>, vector<16x32xf32> -> vector<16x32xf32>
    %173 = arith.addf %121, %172 : vector<16x32xf32>
    %c0_84 = arith.constant 0 : index
    %c0_85 = arith.constant 0 : index
    %c0_86 = arith.constant 0 : index
    %174 = vector.load %arg18[%c0_84, %c0_85, %c0_86] : memref<2x1x32xf32, #tpu.memory_space<vmem>>, vector<1x1x32xf32>
    %175 = vector.shape_cast %174 : vector<1x1x32xf32> to vector<1x32xf32>
    %176 = vector.broadcast %175 : vector<1x32xf32> to vector<16x32xf32>
    %177 = arith.addf %173, %176 : vector<16x32xf32>
    %c1 = arith.constant 1 : index
    %c0_87 = arith.constant 0 : index
    %c0_88 = arith.constant 0 : index
    %178 = vector.load %arg3[%c1, %c0_87, %c0_88] : memref<2x1x32xf32, #tpu.memory_space<vmem>>, vector<1x1x32xf32>
    %179 = vector.shape_cast %178 : vector<1x1x32xf32> to vector<1x32xf32>
    %c1_89 = arith.constant 1 : index
    %c0_90 = arith.constant 0 : index
    %c0_91 = arith.constant 0 : index
    %180 = vector.load %arg4[%c1_89, %c0_90, %c0_91] : memref<2x1x32xf32, #tpu.memory_space<vmem>>, vector<1x1x32xf32>
    %181 = vector.shape_cast %180 : vector<1x1x32xf32> to vector<1x32xf32>
    %cst_92 = arith.constant dense<0.000000e+00> : vector<16xf32>
    %182 = vector.multi_reduction <add>, %177, %cst_92 [1] : vector<16x32xf32> to vector<16xf32>
    %183 = vector.shape_cast %182 : vector<16xf32> to vector<16x1xf32>
    %cst_93 = arith.constant 3.200000e+01 : f32
    %184 = vector.broadcast %cst_93 : f32 to vector<16x1xf32>
    %185 = arith.divf %183, %184 : vector<16x1xf32>
    %186 = vector.broadcast %185 : vector<16x1xf32> to vector<16x32xf32>
    %187 = arith.subf %177, %186 : vector<16x32xf32>
    %188 = arith.mulf %187, %187 : vector<16x32xf32>
    %cst_94 = arith.constant dense<0.000000e+00> : vector<16xf32>
    %189 = vector.multi_reduction <add>, %188, %cst_94 [1] : vector<16x32xf32> to vector<16xf32>
    %190 = vector.shape_cast %189 : vector<16xf32> to vector<16x1xf32>
    %cst_95 = arith.constant 3.200000e+01 : f32
    %191 = vector.broadcast %cst_95 : f32 to vector<16x1xf32>
    %192 = arith.divf %190, %191 : vector<16x1xf32>
    %193 = vector.broadcast %185 : vector<16x1xf32> to vector<16x32xf32>
    %194 = arith.subf %177, %193 : vector<16x32xf32>
    %cst_96 = arith.constant 9.99999996E-13 : f32
    %195 = vector.broadcast %cst_96 : f32 to vector<16x1xf32>
    %196 = arith.addf %192, %195 : vector<16x1xf32>
    %197 = math.rsqrt %196 : vector<16x1xf32>
    %198 = vector.broadcast %197 : vector<16x1xf32> to vector<16x32xf32>
    %199 = arith.mulf %194, %198 : vector<16x32xf32>
    %200 = vector.broadcast %179 : vector<1x32xf32> to vector<16x32xf32>
    %201 = arith.mulf %199, %200 : vector<16x32xf32>
    %202 = vector.broadcast %181 : vector<1x32xf32> to vector<16x32xf32>
    %203 = arith.addf %201, %202 : vector<16x32xf32>
    %204 = vector.shape_cast %203 : vector<16x32xf32> to vector<2x1x8x32xf32>
    %205 = vector.shape_cast %204 : vector<2x1x8x32xf32> to vector<2x1x8x32xf32>
    %206 = vector.broadcast %205 : vector<2x1x8x32xf32> to vector<2x4x8x32xf32>
    %207 = vector.shape_cast %206 : vector<2x4x8x32xf32> to vector<8x8x32xf32>
    %208 = arith.truncf %207 : vector<8x8x32xf32> to vector<8x8x32xbf16>
    %c1_97 = arith.constant 1 : index
    %c0_98 = arith.constant 0 : index
    %c0_99 = arith.constant 0 : index
    %c0_100 = arith.constant 0 : index
    %209 = vector.load %arg5[%c1_97, %c0_98, %c0_99, %c0_100] : memref<2x4x32x8xbf16, #tpu.memory_space<vmem>>, vector<1x4x32x8xbf16>
    %210 = vector.shape_cast %209 : vector<1x4x32x8xbf16> to vector<4x32x8xbf16>
    %211 = vector.shape_cast %210 : vector<4x32x8xbf16> to vector<1x4x32x8xbf16>
    %212 = vector.shape_cast %211 : vector<1x4x32x8xbf16> to vector<1x4x32x8xbf16>
    %213 = vector.broadcast %212 : vector<1x4x32x8xbf16> to vector<2x4x32x8xbf16>
    %214 = vector.shape_cast %213 : vector<2x4x32x8xbf16> to vector<8x32x8xbf16>
    "tpu.trace_start"() <{level = 10 : i32, message = "bsd,bde->bse"}> : () -> ()
    %cst_101 = arith.constant dense<0.000000e+00> : vector<8x8x8xf32>
    %215 = tpu.matmul %208, %214, %cst_101 {dimension_numbers = #tpu.dot_dimension_numbers<[2], [1], [1], [2], [0, 0, 0, 1, 1, 2], [0], [0]>} : vector<8x8x32xbf16>, vector<8x32x8xbf16>, vector<8x8x8xf32> -> vector<8x8x8xf32>
    "tpu.trace_stop"() : () -> ()
    %c1_102 = arith.constant 1 : index
    %c0_103 = arith.constant 0 : index
    %c0_104 = arith.constant 0 : index
    %c0_105 = arith.constant 0 : index
    %216 = vector.load %arg6[%c1_102, %c0_103, %c0_104, %c0_105] : memref<2x4x1x8xf32, #tpu.memory_space<vmem>>, vector<1x4x1x8xf32>
    %217 = vector.shape_cast %216 : vector<1x4x1x8xf32> to vector<4x1x8xf32>
    %218 = vector.shape_cast %217 : vector<4x1x8xf32> to vector<1x4x1x8xf32>
    %219 = vector.shape_cast %218 : vector<1x4x1x8xf32> to vector<1x4x1x8xf32>
    %220 = vector.broadcast %219 : vector<1x4x1x8xf32> to vector<2x4x1x8xf32>
    %221 = vector.shape_cast %220 : vector<2x4x1x8xf32> to vector<8x1x8xf32>
    %222 = vector.broadcast %221 : vector<8x1x8xf32> to vector<8x8x8xf32>
    %223 = arith.addf %215, %222 : vector<8x8x8xf32>
    %c1_106 = arith.constant 1 : index
    %c0_107 = arith.constant 0 : index
    %c0_108 = arith.constant 0 : index
    %c0_109 = arith.constant 0 : index
    %224 = vector.load %arg7[%c1_106, %c0_107, %c0_108, %c0_109] : memref<2x4x32x8xbf16, #tpu.memory_space<vmem>>, vector<1x4x32x8xbf16>
    %225 = vector.shape_cast %224 : vector<1x4x32x8xbf16> to vector<4x32x8xbf16>
    %226 = vector.shape_cast %225 : vector<4x32x8xbf16> to vector<1x4x32x8xbf16>
    %227 = vector.shape_cast %226 : vector<1x4x32x8xbf16> to vector<1x4x32x8xbf16>
    %228 = vector.broadcast %227 : vector<1x4x32x8xbf16> to vector<2x4x32x8xbf16>
    %229 = vector.shape_cast %228 : vector<2x4x32x8xbf16> to vector<8x32x8xbf16>
    "tpu.trace_start"() <{level = 10 : i32, message = "bsd,bde->bse"}> : () -> ()
    %cst_110 = arith.constant dense<0.000000e+00> : vector<8x8x8xf32>
    %230 = tpu.matmul %208, %229, %cst_110 {dimension_numbers = #tpu.dot_dimension_numbers<[2], [1], [1], [2], [0, 0, 0, 1, 1, 2], [0], [0]>} : vector<8x8x32xbf16>, vector<8x32x8xbf16>, vector<8x8x8xf32> -> vector<8x8x8xf32>
    "tpu.trace_stop"() : () -> ()
    %c1_111 = arith.constant 1 : index
    %c0_112 = arith.constant 0 : index
    %c0_113 = arith.constant 0 : index
    %c0_114 = arith.constant 0 : index
    %231 = vector.load %arg8[%c1_111, %c0_112, %c0_113, %c0_114] : memref<2x4x1x8xf32, #tpu.memory_space<vmem>>, vector<1x4x1x8xf32>
    %232 = vector.shape_cast %231 : vector<1x4x1x8xf32> to vector<4x1x8xf32>
    %233 = vector.shape_cast %232 : vector<4x1x8xf32> to vector<1x4x1x8xf32>
    %234 = vector.shape_cast %233 : vector<1x4x1x8xf32> to vector<1x4x1x8xf32>
    %235 = vector.broadcast %234 : vector<1x4x1x8xf32> to vector<2x4x1x8xf32>
    %236 = vector.shape_cast %235 : vector<2x4x1x8xf32> to vector<8x1x8xf32>
    %237 = vector.broadcast %236 : vector<8x1x8xf32> to vector<8x8x8xf32>
    %238 = arith.addf %230, %237 : vector<8x8x8xf32>
    %c1_115 = arith.constant 1 : index
    %c0_116 = arith.constant 0 : index
    %c0_117 = arith.constant 0 : index
    %c0_118 = arith.constant 0 : index
    %239 = vector.load %arg9[%c1_115, %c0_116, %c0_117, %c0_118] : memref<2x4x32x8xbf16, #tpu.memory_space<vmem>>, vector<1x4x32x8xbf16>
    %240 = vector.shape_cast %239 : vector<1x4x32x8xbf16> to vector<4x32x8xbf16>
    %241 = vector.shape_cast %240 : vector<4x32x8xbf16> to vector<1x4x32x8xbf16>
    %242 = vector.shape_cast %241 : vector<1x4x32x8xbf16> to vector<1x4x32x8xbf16>
    %243 = vector.broadcast %242 : vector<1x4x32x8xbf16> to vector<2x4x32x8xbf16>
    %244 = vector.shape_cast %243 : vector<2x4x32x8xbf16> to vector<8x32x8xbf16>
    "tpu.trace_start"() <{level = 10 : i32, message = "bsd,bde->bse"}> : () -> ()
    %cst_119 = arith.constant dense<0.000000e+00> : vector<8x8x8xf32>
    %245 = tpu.matmul %208, %244, %cst_119 {dimension_numbers = #tpu.dot_dimension_numbers<[2], [1], [1], [2], [0, 0, 0, 1, 1, 2], [0], [0]>} : vector<8x8x32xbf16>, vector<8x32x8xbf16>, vector<8x8x8xf32> -> vector<8x8x8xf32>
    "tpu.trace_stop"() : () -> ()
    %c1_120 = arith.constant 1 : index
    %c0_121 = arith.constant 0 : index
    %c0_122 = arith.constant 0 : index
    %c0_123 = arith.constant 0 : index
    %246 = vector.load %arg10[%c1_120, %c0_121, %c0_122, %c0_123] : memref<2x4x1x8xf32, #tpu.memory_space<vmem>>, vector<1x4x1x8xf32>
    %247 = vector.shape_cast %246 : vector<1x4x1x8xf32> to vector<4x1x8xf32>
    %248 = vector.shape_cast %247 : vector<4x1x8xf32> to vector<1x4x1x8xf32>
    %249 = vector.shape_cast %248 : vector<1x4x1x8xf32> to vector<1x4x1x8xf32>
    %250 = vector.broadcast %249 : vector<1x4x1x8xf32> to vector<2x4x1x8xf32>
    %251 = vector.shape_cast %250 : vector<2x4x1x8xf32> to vector<8x1x8xf32>
    %252 = vector.broadcast %251 : vector<8x1x8xf32> to vector<8x8x8xf32>
    %253 = arith.addf %245, %252 : vector<8x8x8xf32>
    %254 = arith.truncf %223 : vector<8x8x8xf32> to vector<8x8x8xbf16>
    %255 = arith.truncf %238 : vector<8x8x8xf32> to vector<8x8x8xbf16>
    "tpu.trace_start"() <{level = 10 : i32, message = "bqe,bke->bqk"}> : () -> ()
    %cst_124 = arith.constant dense<0.000000e+00> : vector<8x8x8xf32>
    %256 = tpu.matmul %254, %255, %cst_124 {dimension_numbers = #tpu.dot_dimension_numbers<[2], [2], [1], [1], [0, 0, 0, 1, 1, 1], [0], [0]>} : vector<8x8x8xbf16>, vector<8x8x8xbf16>, vector<8x8x8xf32> -> vector<8x8x8xf32>
    "tpu.trace_stop"() : () -> ()
    %257 = vector.broadcast %11 : vector<1x1x8xf32> to vector<8x8x8xf32>
    %258 = arith.addf %256, %257 : vector<8x8x8xf32>
    %cst_125 = arith.constant dense<0xFF800000> : vector<8x8xf32>
    %259 = vector.multi_reduction <maximumf>, %258, %cst_125 [2] : vector<8x8x8xf32> to vector<8x8xf32>
    %260 = vector.shape_cast %259 : vector<8x8xf32> to vector<8x8x1xf32>
    %261 = vector.broadcast %260 : vector<8x8x1xf32> to vector<8x8x8xf32>
    %262 = arith.subf %258, %261 : vector<8x8x8xf32>
    %263 = math.exp %262 : vector<8x8x8xf32>
    %cst_126 = arith.constant dense<0.000000e+00> : vector<8x8xf32>
    %264 = vector.multi_reduction <add>, %263, %cst_126 [2] : vector<8x8x8xf32> to vector<8x8xf32>
    %265 = vector.shape_cast %264 : vector<8x8xf32> to vector<8x8x1xf32>
    %266 = tpu.reciprocal %265 {approx = true} : vector<8x8x1xf32> -> vector<8x8x1xf32>
    %267 = vector.broadcast %266 : vector<8x8x1xf32> to vector<8x8x8xf32>
    %268 = arith.mulf %263, %267 : vector<8x8x8xf32>
    %269 = arith.truncf %268 : vector<8x8x8xf32> to vector<8x8x8xbf16>
    %270 = arith.truncf %253 : vector<8x8x8xf32> to vector<8x8x8xbf16>
    "tpu.trace_start"() <{level = 10 : i32, message = "bqk,bke->bqe"}> : () -> ()
    %cst_127 = arith.constant dense<0.000000e+00> : vector<8x8x8xf32>
    %271 = tpu.matmul %269, %270, %cst_127 {dimension_numbers = #tpu.dot_dimension_numbers<[2], [1], [1], [2], [0, 0, 0, 1, 1, 2], [0], [0]>} : vector<8x8x8xbf16>, vector<8x8x8xbf16>, vector<8x8x8xf32> -> vector<8x8x8xf32>
    "tpu.trace_stop"() : () -> ()
    %272 = arith.truncf %271 : vector<8x8x8xf32> to vector<8x8x8xbf16>
    %c1_128 = arith.constant 1 : index
    %c0_129 = arith.constant 0 : index
    %c0_130 = arith.constant 0 : index
    %c0_131 = arith.constant 0 : index
    %273 = vector.load %arg11[%c1_128, %c0_129, %c0_130, %c0_131] : memref<2x4x8x32xbf16, #tpu.memory_space<vmem>>, vector<1x4x8x32xbf16>
    %274 = vector.shape_cast %273 : vector<1x4x8x32xbf16> to vector<4x8x32xbf16>
    %275 = vector.shape_cast %274 : vector<4x8x32xbf16> to vector<1x4x8x32xbf16>
    %276 = vector.shape_cast %275 : vector<1x4x8x32xbf16> to vector<1x4x8x32xbf16>
    %277 = vector.broadcast %276 : vector<1x4x8x32xbf16> to vector<2x4x8x32xbf16>
    %278 = vector.shape_cast %277 : vector<2x4x8x32xbf16> to vector<8x8x32xbf16>
    "tpu.trace_start"() <{level = 10 : i32, message = "bse,bed->bsd"}> : () -> ()
    %cst_132 = arith.constant dense<0.000000e+00> : vector<8x8x32xf32>
    %279 = tpu.matmul %272, %278, %cst_132 {dimension_numbers = #tpu.dot_dimension_numbers<[2], [1], [1], [2], [0, 0, 0, 1, 1, 2], [0], [0]>} : vector<8x8x8xbf16>, vector<8x8x32xbf16>, vector<8x8x32xf32> -> vector<8x8x32xf32>
    "tpu.trace_stop"() : () -> ()
    %280 = vector.shape_cast %279 : vector<8x8x32xf32> to vector<2x4x8x32xf32>
    %cst_133 = arith.constant dense<0.000000e+00> : vector<2x8x32xf32>
    %281 = vector.multi_reduction <add>, %280, %cst_133 [1] : vector<2x4x8x32xf32> to vector<2x8x32xf32>
    %282 = vector.shape_cast %281 : vector<2x8x32xf32> to vector<16x32xf32>
    %283 = arith.addf %177, %282 : vector<16x32xf32>
    %c1_134 = arith.constant 1 : index
    %c0_135 = arith.constant 0 : index
    %c0_136 = arith.constant 0 : index
    %284 = vector.load %arg12[%c1_134, %c0_135, %c0_136] : memref<2x1x32xf32, #tpu.memory_space<vmem>>, vector<1x1x32xf32>
    %285 = vector.shape_cast %284 : vector<1x1x32xf32> to vector<1x32xf32>
    %286 = vector.broadcast %285 : vector<1x32xf32> to vector<16x32xf32>
    %287 = arith.addf %283, %286 : vector<16x32xf32>
    %c1_137 = arith.constant 1 : index
    %c0_138 = arith.constant 0 : index
    %c0_139 = arith.constant 0 : index
    %288 = vector.load %arg13[%c1_137, %c0_138, %c0_139] : memref<2x1x32xf32, #tpu.memory_space<vmem>>, vector<1x1x32xf32>
    %289 = vector.shape_cast %288 : vector<1x1x32xf32> to vector<1x32xf32>
    %c1_140 = arith.constant 1 : index
    %c0_141 = arith.constant 0 : index
    %c0_142 = arith.constant 0 : index
    %290 = vector.load %arg14[%c1_140, %c0_141, %c0_142] : memref<2x1x32xf32, #tpu.memory_space<vmem>>, vector<1x1x32xf32>
    %291 = vector.shape_cast %290 : vector<1x1x32xf32> to vector<1x32xf32>
    %cst_143 = arith.constant dense<0.000000e+00> : vector<16xf32>
    %292 = vector.multi_reduction <add>, %287, %cst_143 [1] : vector<16x32xf32> to vector<16xf32>
    %293 = vector.shape_cast %292 : vector<16xf32> to vector<16x1xf32>
    %cst_144 = arith.constant 3.200000e+01 : f32
    %294 = vector.broadcast %cst_144 : f32 to vector<16x1xf32>
    %295 = arith.divf %293, %294 : vector<16x1xf32>
    %296 = vector.broadcast %295 : vector<16x1xf32> to vector<16x32xf32>
    %297 = arith.subf %287, %296 : vector<16x32xf32>
    %298 = arith.mulf %297, %297 : vector<16x32xf32>
    %cst_145 = arith.constant dense<0.000000e+00> : vector<16xf32>
    %299 = vector.multi_reduction <add>, %298, %cst_145 [1] : vector<16x32xf32> to vector<16xf32>
    %300 = vector.shape_cast %299 : vector<16xf32> to vector<16x1xf32>
    %cst_146 = arith.constant 3.200000e+01 : f32
    %301 = vector.broadcast %cst_146 : f32 to vector<16x1xf32>
    %302 = arith.divf %300, %301 : vector<16x1xf32>
    %303 = vector.broadcast %295 : vector<16x1xf32> to vector<16x32xf32>
    %304 = arith.subf %287, %303 : vector<16x32xf32>
    %cst_147 = arith.constant 9.99999996E-13 : f32
    %305 = vector.broadcast %cst_147 : f32 to vector<16x1xf32>
    %306 = arith.addf %302, %305 : vector<16x1xf32>
    %307 = math.rsqrt %306 : vector<16x1xf32>
    %308 = vector.broadcast %307 : vector<16x1xf32> to vector<16x32xf32>
    %309 = arith.mulf %304, %308 : vector<16x32xf32>
    %310 = vector.broadcast %289 : vector<1x32xf32> to vector<16x32xf32>
    %311 = arith.mulf %309, %310 : vector<16x32xf32>
    %312 = vector.broadcast %291 : vector<1x32xf32> to vector<16x32xf32>
    %313 = arith.addf %311, %312 : vector<16x32xf32>
    %314 = arith.truncf %313 : vector<16x32xf32> to vector<16x32xbf16>
    %c1_148 = arith.constant 1 : index
    %c0_149 = arith.constant 0 : index
    %c0_150 = arith.constant 0 : index
    %315 = vector.load %arg15[%c1_148, %c0_149, %c0_150] : memref<2x32x64xbf16, #tpu.memory_space<vmem>>, vector<1x32x64xbf16>
    %316 = vector.shape_cast %315 : vector<1x32x64xbf16> to vector<32x64xbf16>
    %cst_151 = arith.constant dense<0.000000e+00> : vector<16x64xf32>
    %317 = tpu.matmul %314, %316, %cst_151 {dimension_numbers = #tpu.dot_dimension_numbers<[1], [0], [0], [1], [0, 0, 1, 1], [], []>} : vector<16x32xbf16>, vector<32x64xbf16>, vector<16x64xf32> -> vector<16x64xf32>
    %c1_152 = arith.constant 1 : index
    %c0_153 = arith.constant 0 : index
    %c0_154 = arith.constant 0 : index
    %318 = vector.load %arg16[%c1_152, %c0_153, %c0_154] : memref<2x1x64xf32, #tpu.memory_space<vmem>>, vector<1x1x64xf32>
    %319 = vector.shape_cast %318 : vector<1x1x64xf32> to vector<1x64xf32>
    %320 = vector.broadcast %319 : vector<1x64xf32> to vector<16x64xf32>
    %321 = arith.addf %317, %320 : vector<16x64xf32>
    %322 = arith.mulf %321, %321 : vector<16x64xf32>
    %323 = arith.mulf %321, %322 : vector<16x64xf32>
    %cst_155 = arith.constant 4.471500e-02 : f32
    %324 = vector.broadcast %cst_155 : f32 to vector<16x64xf32>
    %325 = arith.mulf %324, %323 : vector<16x64xf32>
    %326 = arith.addf %321, %325 : vector<16x64xf32>
    %cst_156 = arith.constant 0.797884583 : f32
    %327 = vector.broadcast %cst_156 : f32 to vector<16x64xf32>
    %328 = arith.mulf %327, %326 : vector<16x64xf32>
    %329 = math.tanh %328 : vector<16x64xf32>
    %cst_157 = arith.constant 1.000000e+00 : f32
    %330 = vector.broadcast %cst_157 : f32 to vector<16x64xf32>
    %331 = arith.addf %330, %329 : vector<16x64xf32>
    %cst_158 = arith.constant 5.000000e-01 : f32
    %332 = vector.broadcast %cst_158 : f32 to vector<16x64xf32>
    %333 = arith.mulf %332, %331 : vector<16x64xf32>
    %334 = arith.mulf %321, %333 : vector<16x64xf32>
    %335 = arith.truncf %334 : vector<16x64xf32> to vector<16x64xbf16>
    %c1_159 = arith.constant 1 : index
    %c0_160 = arith.constant 0 : index
    %c0_161 = arith.constant 0 : index
    %336 = vector.load %arg17[%c1_159, %c0_160, %c0_161] : memref<2x64x32xbf16, #tpu.memory_space<vmem>>, vector<1x64x32xbf16>
    %337 = vector.shape_cast %336 : vector<1x64x32xbf16> to vector<64x32xbf16>
    %cst_162 = arith.constant dense<0.000000e+00> : vector<16x32xf32>
    %338 = tpu.matmul %335, %337, %cst_162 {dimension_numbers = #tpu.dot_dimension_numbers<[1], [0], [0], [1], [0, 0, 1, 1], [], []>} : vector<16x64xbf16>, vector<64x32xbf16>, vector<16x32xf32> -> vector<16x32xf32>
    %339 = arith.addf %287, %338 : vector<16x32xf32>
    %c1_163 = arith.constant 1 : index
    %c0_164 = arith.constant 0 : index
    %c0_165 = arith.constant 0 : index
    %340 = vector.load %arg18[%c1_163, %c0_164, %c0_165] : memref<2x1x32xf32, #tpu.memory_space<vmem>>, vector<1x1x32xf32>
    %341 = vector.shape_cast %340 : vector<1x1x32xf32> to vector<1x32xf32>
    %342 = vector.broadcast %341 : vector<1x32xf32> to vector<16x32xf32>
    %343 = arith.addf %339, %342 : vector<16x32xf32>
    %c0_166 = arith.constant 0 : index
    %c0_167 = arith.constant 0 : index
    %344 = vector.load %arg19[%c0_166, %c0_167] : memref<1x32xf32, #tpu.memory_space<vmem>>, vector<1x32xf32>
    %c0_168 = arith.constant 0 : index
    %c0_169 = arith.constant 0 : index
    %345 = vector.load %arg20[%c0_168, %c0_169] : memref<1x32xf32, #tpu.memory_space<vmem>>, vector<1x32xf32>
    %cst_170 = arith.constant dense<0.000000e+00> : vector<16xf32>
    %346 = vector.multi_reduction <add>, %343, %cst_170 [1] : vector<16x32xf32> to vector<16xf32>
    %347 = vector.shape_cast %346 : vector<16xf32> to vector<16x1xf32>
    %cst_171 = arith.constant 3.200000e+01 : f32
    %348 = vector.broadcast %cst_171 : f32 to vector<16x1xf32>
    %349 = arith.divf %347, %348 : vector<16x1xf32>
    %350 = vector.broadcast %349 : vector<16x1xf32> to vector<16x32xf32>
    %351 = arith.subf %343, %350 : vector<16x32xf32>
    %352 = arith.mulf %351, %351 : vector<16x32xf32>
    %cst_172 = arith.constant dense<0.000000e+00> : vector<16xf32>
    %353 = vector.multi_reduction <add>, %352, %cst_172 [1] : vector<16x32xf32> to vector<16xf32>
    %354 = vector.shape_cast %353 : vector<16xf32> to vector<16x1xf32>
    %cst_173 = arith.constant 3.200000e+01 : f32
    %355 = vector.broadcast %cst_173 : f32 to vector<16x1xf32>
    %356 = arith.divf %354, %355 : vector<16x1xf32>
    %357 = vector.broadcast %349 : vector<16x1xf32> to vector<16x32xf32>
    %358 = arith.subf %343, %357 : vector<16x32xf32>
    %cst_174 = arith.constant 9.99999996E-13 : f32
    %359 = vector.broadcast %cst_174 : f32 to vector<16x1xf32>
    %360 = arith.addf %356, %359 : vector<16x1xf32>
    %361 = math.rsqrt %360 : vector<16x1xf32>
    %362 = vector.broadcast %361 : vector<16x1xf32> to vector<16x32xf32>
    %363 = arith.mulf %358, %362 : vector<16x32xf32>
    %364 = vector.broadcast %344 : vector<1x32xf32> to vector<16x32xf32>
    %365 = arith.mulf %363, %364 : vector<16x32xf32>
    %366 = vector.broadcast %345 : vector<1x32xf32> to vector<16x32xf32>
    %367 = arith.addf %365, %366 : vector<16x32xf32>
    %368 = vector.shape_cast %367 : vector<16x32xf32> to vector<2x8x32xf32>
    %369 = vector.extract_strided_slice %368 {offsets = [0, 0, 0], sizes = [2, 1, 32], strides = [1, 1, 1]} : vector<2x8x32xf32> to vector<2x1x32xf32>
    %370 = vector.shape_cast %369 : vector<2x1x32xf32> to vector<2x32xf32>
    %371 = arith.truncf %370 : vector<2x32xf32> to vector<2x32xbf16>
    %c0_175 = arith.constant 0 : index
    %c0_176 = arith.constant 0 : index
    %372 = vector.load %arg21[%c0_175, %c0_176] : memref<32x32xbf16, #tpu.memory_space<vmem>>, vector<32x32xbf16>
    %cst_177 = arith.constant dense<0.000000e+00> : vector<2x32xf32>
    %373 = tpu.matmul %371, %372, %cst_177 {dimension_numbers = #tpu.dot_dimension_numbers<[1], [0], [0], [1], [0, 0, 1, 1], [], []>} : vector<2x32xbf16>, vector<32x32xbf16>, vector<2x32xf32> -> vector<2x32xf32>
    %c0_178 = arith.constant 0 : index
    %c0_179 = arith.constant 0 : index
    %374 = vector.load %arg22[%c0_178, %c0_179] : memref<1x32xf32, #tpu.memory_space<vmem>>, vector<1x32xf32>
    %375 = vector.broadcast %374 : vector<1x32xf32> to vector<2x32xf32>
    %376 = arith.addf %373, %375 : vector<2x32xf32>
    %377 = math.tanh %376 : vector<2x32xf32>
    %c0_180 = arith.constant 0 : index
    %c0_181 = arith.constant 0 : index
    %378 = vector.load %arg23[%c0_180, %c0_181] : memref<2x32xf32, #tpu.memory_space<vmem>>, vector<2x32xf32>
    tpu.vector_store %arg23[%c0_180, %c0_181], %377 {strides = array<i32>} : memref<2x32xf32, #tpu.memory_space<vmem>>, vector<2x32xf32>,
    return
  }
}

</mosaic_0001>

<llo_original>
// kernel: vit_forward.1
$region0: #{vit_forward.1}
  #allocation0 [shape = 'u32[]', space=smem, size = 0x4, offset = 0x4, fixed_abs, tag = 'smem constant byte address 0x4 - core index']
  #allocation1 [shape = 'u32[144,128]{1,0:T(1,128)}', space=vmem, size = 0x12000, scoped, tag = 'internal scratch']
  %s0 = inlined_call_operand.vmem [shape: f32[16,192], index: 0, kind: input, shape index: {}]
  %s1 = inlined_call_operand.vmem [shape: bf16[192,32], index: 1, kind: input, shape index: {}]
  %s2 = inlined_call_operand.vmem [shape: f32[16,32], index: 2, kind: input, shape index: {}]
  %s3 = inlined_call_operand.vmem [shape: f32[2,1,32], index: 3, kind: input, shape index: {}]
  %s4 = inlined_call_operand.vmem [shape: f32[2,1,32], index: 4, kind: input, shape index: {}]
  %s5 = inlined_call_operand.vmem [shape: bf16[2,4,32,8], index: 5, kind: input, shape index: {}]
  %s6 = inlined_call_operand.vmem [shape: f32[2,4,1,8], index: 6, kind: input, shape index: {}]
  %s7 = inlined_call_operand.vmem [shape: bf16[2,4,32,8], index: 7, kind: input, shape index: {}]
  %s8 = inlined_call_operand.vmem [shape: f32[2,4,1,8], index: 8, kind: input, shape index: {}]
  %s9 = inlined_call_operand.vmem [shape: bf16[2,4,32,8], index: 9, kind: input, shape index: {}]
  %s10 = inlined_call_operand.vmem [shape: f32[2,4,1,8], index: 10, kind: input, shape index: {}]
  %s11 = inlined_call_operand.vmem [shape: bf16[2,4,8,32], index: 11, kind: input, shape index: {}]
  %s12 = inlined_call_operand.vmem [shape: f32[2,1,32], index: 12, kind: input, shape index: {}]
  %s13 = inlined_call_operand.vmem [shape: f32[2,1,32], index: 13, kind: input, shape index: {}]
  %s14 = inlined_call_operand.vmem [shape: f32[2,1,32], index: 14, kind: input, shape index: {}]
  %s15 = inlined_call_operand.vmem [shape: bf16[2,32,64], index: 15, kind: input, shape index: {}]
  %s16 = inlined_call_operand.vmem [shape: f32[2,1,64], index: 16, kind: input, shape index: {}]
  %s17 = inlined_call_operand.vmem [shape: bf16[2,64,32], index: 17, kind: input, shape index: {}]
  %s18 = inlined_call_operand.vmem [shape: f32[2,1,32], index: 18, kind: input, shape index: {}]
  %s19 = inlined_call_operand.vmem [shape: f32[1,32], index: 19, kind: input, shape index: {}]
  %s20 = inlined_call_operand.vmem [shape: f32[1,32], index: 20, kind: input, shape index: {}]
  %s21 = inlined_call_operand.vmem [shape: bf16[32,32], index: 21, kind: input, shape index: {}]
  %s22 = inlined_call_operand.vmem [shape: f32[1,32], index: 22, kind: input, shape index: {}]
  %s23 = inlined_call_operand.hbm [shape: f32[2,32], index: 23, kind: output, shape index: {}]
  %s24 = sld [smem:[#allocation0]]
  $region102: #{vit_forward.1} parent=0
    _
  %s26 = ssub.s32 1, %s24
  %s27 = scalar_select 0, %s26, %s24
  $region1: #{vit_forward.1} parent=0
    #allocation2 [shape = 'u8[1024]{0}', space=vmem, size = 0x400, scoped, tag = 'output window, operand 0, single buffered']
    #allocation3 [shape = 's32[1]{0}', space=sflag, size = 0x4, scoped, tag = 'scoped memory for vit_forward.1']
    %28 = vsyncpa [#allocation3], 0
    // Predicated region
    $region2: #{vit_forward.1} parent=1 // pred_check
      _
    $region3: #{vit_forward.1} parent=1 // pred_check_branch
      %30 = sbr.rel (0) target = $region5
    $region4: #{vit_forward.1} parent=1 // pred_region
      _
    $region5: #{vit_forward.1} parent=1 // pred_fallthru
      _
    // Predicated region
    $region6: #{vit_forward.1} parent=1 // pred_check
      _
    $region7: #{vit_forward.1} parent=1 // pred_check_branch
      %32 = sbr.rel (0) target = $region9
    $region8: #{vit_forward.1} parent=1 // pred_region
      _
    $region9: #{vit_forward.1} parent=1 // pred_fallthru
      _
    // Predicated region
    $region10: #{vit_forward.1} parent=1 // pred_check
      _
    $region11: #{vit_forward.1} parent=1 // pred_check_branch
      %34 = sbr.rel (0) target = $region13
    $region12: #{vit_forward.1} parent=1 // pred_region
      _
    $region13: #{vit_forward.1} parent=1 // pred_fallthru
      _
    // Predicated region
    $region14: #{vit_forward.1} parent=1 // pred_check
      _
    $region15: #{vit_forward.1} parent=1 // pred_check_branch
      %36 = sbr.rel (0) target = $region17
    $region16: #{vit_forward.1} parent=1 // pred_region
      _
    $region17: #{vit_forward.1} parent=1 // pred_fallthru
      _
    // Predicated region
    $region18: #{vit_forward.1} parent=1 // pred_check
      _
    $region19: #{vit_forward.1} parent=1 // pred_check_branch
      %38 = sbr.rel (0) target = $region21
    $region20: #{vit_forward.1} parent=1 // pred_region
      _
    $region21: #{vit_forward.1} parent=1 // pred_fallthru
      _
    // Predicated region
    $region22: #{vit_forward.1} parent=1 // pred_check
      _
    $region23: #{vit_forward.1} parent=1 // pred_check_branch
      %40 = sbr.rel (0) target = $region25
    $region24: #{vit_forward.1} parent=1 // pred_region
      _
    $region25: #{vit_forward.1} parent=1 // pred_fallthru
      _
    // Predicated region
    $region26: #{vit_forward.1} parent=1 // pred_check
      _
    $region27: #{vit_forward.1} parent=1 // pred_check_branch
      %42 = sbr.rel (0) target = $region29
    $region28: #{vit_forward.1} parent=1 // pred_region
      _
    $region29: #{vit_forward.1} parent=1 // pred_fallthru
      _
    // Predicated region
    $region30: #{vit_forward.1} parent=1 // pred_check
      _
    $region31: #{vit_forward.1} parent=1 // pred_check_branch
      %44 = sbr.rel (0) target = $region33
    $region32: #{vit_forward.1} parent=1 // pred_region
      _
    $region33: #{vit_forward.1} parent=1 // pred_fallthru
      _
    // Predicated region
    $region34: #{vit_forward.1} parent=1 // pred_check
      _
    $region35: #{vit_forward.1} parent=1 // pred_check_branch
      %46 = sbr.rel (0) target = $region37
    $region36: #{vit_forward.1} parent=1 // pred_region
      _
    $region37: #{vit_forward.1} parent=1 // pred_fallthru
      _
    // Predicated region
    $region38: #{vit_forward.1} parent=1 // pred_check
      _
    $region39: #{vit_forward.1} parent=1 // pred_check_branch
      %48 = sbr.rel (0) target = $region41
    $region40: #{vit_forward.1} parent=1 // pred_region
      _
    $region41: #{vit_forward.1} parent=1 // pred_fallthru
      _
    // Predicated region
    $region42: #{vit_forward.1} parent=1 // pred_check
      _
    $region43: #{vit_forward.1} parent=1 // pred_check_branch
      %50 = sbr.rel (0) target = $region45
    $region44: #{vit_forward.1} parent=1 // pred_region
      _
    $region45: #{vit_forward.1} parent=1 // pred_fallthru
      _
    // Predicated region
    $region46: #{vit_forward.1} parent=1 // pred_check
      _
    $region47: #{vit_forward.1} parent=1 // pred_check_branch
      %52 = sbr.rel (0) target = $region49
    $region48: #{vit_forward.1} parent=1 // pred_region
      _
    $region49: #{vit_forward.1} parent=1 // pred_fallthru
      _
    // Predicated region
    $region50: #{vit_forward.1} parent=1 // pred_check
      _
    $region51: #{vit_forward.1} parent=1 // pred_check_branch
      %54 = sbr.rel (0) target = $region53
    $region52: #{vit_forward.1} parent=1 // pred_region
      _
    $region53: #{vit_forward.1} parent=1 // pred_fallthru
      _
    // Predicated region
    $region54: #{vit_forward.1} parent=1 // pred_check
      _
    $region55: #{vit_forward.1} parent=1 // pred_check_branch
      %56 = sbr.rel (0) target = $region57
    $region56: #{vit_forward.1} parent=1 // pred_region
      _
    $region57: #{vit_forward.1} parent=1 // pred_fallthru
      _
    // Predicated region
    $region58: #{vit_forward.1} parent=1 // pred_check
      _
    $region59: #{vit_forward.1} parent=1 // pred_check_branch
      %58 = sbr.rel (0) target = $region61
    $region60: #{vit_forward.1} parent=1 // pred_region
      _
    $region61: #{vit_forward.1} parent=1 // pred_fallthru
      _
    // Predicated region
    $region62: #{vit_forward.1} parent=1 // pred_check
      _
    $region63: #{vit_forward.1} parent=1 // pred_check_branch
      %60 = sbr.rel (0) target = $region65
    $region64: #{vit_forward.1} parent=1 // pred_region
      _
    $region65: #{vit_forward.1} parent=1 // pred_fallthru
      _
    // Predicated region
    $region66: #{vit_forward.1} parent=1 // pred_check
      _
    $region67: #{vit_forward.1} parent=1 // pred_check_branch
      %62 = sbr.rel (0) target = $region69
    $region68: #{vit_forward.1} parent=1 // pred_region
      _
    $region69: #{vit_forward.1} parent=1 // pred_fallthru
      _
    // Predicated region
    $region70: #{vit_forward.1} parent=1 // pred_check
      _
    $region71: #{vit_forward.1} parent=1 // pred_check_branch
      %64 = sbr.rel (0) target = $region73
    $region72: #{vit_forward.1} parent=1 // pred_region
      _
    $region73: #{vit_forward.1} parent=1 // pred_fallthru
      _
    // Predicated region
    $region74: #{vit_forward.1} parent=1 // pred_check
      _
    $region75: #{vit_forward.1} parent=1 // pred_check_branch
      %66 = sbr.rel (0) target = $region77
    $region76: #{vit_forward.1} parent=1 // pred_region
      _
    $region77: #{vit_forward.1} parent=1 // pred_fallthru
      _
    // Predicated region
    $region78: #{vit_forward.1} parent=1 // pred_check
      _
    $region79: #{vit_forward.1} parent=1 // pred_check_branch
      %68 = sbr.rel (0) target = $region81
    $region80: #{vit_forward.1} parent=1 // pred_region
      _
    $region81: #{vit_forward.1} parent=1 // pred_fallthru
      _
    // Predicated region
    $region82: #{vit_forward.1} parent=1 // pred_check
      _
    $region83: #{vit_forward.1} parent=1 // pred_check_branch
      %70 = sbr.rel (0) target = $region85
    $region84: #{vit_forward.1} parent=1 // pred_region
      _
    $region85: #{vit_forward.1} parent=1 // pred_fallthru
      _
    // Predicated region
    $region86: #{vit_forward.1} parent=1 // pred_check
      _
    $region87: #{vit_forward.1} parent=1 // pred_check_branch
      %72 = sbr.rel (0) target = $region89
    $region88: #{vit_forward.1} parent=1 // pred_region
      _
    $region89: #{vit_forward.1} parent=1 // pred_fallthru
      _
    // Predicated region
    $region90: #{vit_forward.1} parent=1 // pred_check
      _
    $region91: #{vit_forward.1} parent=1 // pred_check_branch
      %74 = sbr.rel (0) target = $region93
    $region92: #{vit_forward.1} parent=1 // pred_region
      _
    $region93: #{vit_forward.1} parent=1 // pred_fallthru
      _
    %v76 = vld [vmem:[%s0] sm:$0xff]
    %v77 = vld [vmem:[%s0 + $0x8] sm:$0xff]
    %v78 = vld [vmem:[%s0 + $0x10] sm:$0xff]
    %v79 = vld [vmem:[%s0 + $0x18] sm:$0xff]
    %v80 = vpack.c.bf16 %v78, %v76
    %v81 = vpack.c.bf16 %v79, %v77
    %v82 = vld [vmem:[%s1] sm:$0xf]
    %v83 = vld [vmem:[%s1 + $0x4] sm:$0xf]
    %v84 = vld [vmem:[%s1 + $0x8] sm:$0xf]
    %v85 = vld [vmem:[%s1 + $0xc] sm:$0xf]
    %v86 = vld [vmem:[%s1 + $0x10] sm:$0xf]
    %v87 = vld [vmem:[%s1 + $0x14] sm:$0xf]
    %v88 = vld [vmem:[%s1 + $0x18] sm:$0xf]
    %v89 = vld [vmem:[%s1 + $0x1c] sm:$0xf]
    %v90 = vld [vmem:[%s1 + $0x20] sm:$0xf]
    %v91 = vld [vmem:[%s1 + $0x24] sm:$0xf]
    %v92 = vld [vmem:[%s1 + $0x28] sm:$0xf]
    %v93 = vld [vmem:[%s1 + $0x2c] sm:$0xf]
    %v94 = vld [vmem:[%s1 + $0x30] sm:$0xf]
    %v95 = vld [vmem:[%s1 + $0x34] sm:$0xf]
    %v96 = vld [vmem:[%s1 + $0x38] sm:$0xf]
    %v97 = vld [vmem:[%s1 + $0x3c] sm:$0xf]
    %v98 = vld [vmem:[%s1 + $0x40] sm:$0xf]
    %v99 = vld [vmem:[%s1 + $0x44] sm:$0xf]
    %v100 = vld [vmem:[%s1 + $0x48] sm:$0xf]
    %v101 = vld [vmem:[%s1 + $0x4c] sm:$0xf]
    %v102 = vld [vmem:[%s1 + $0x50] sm:$0xf]
    %v103 = vld [vmem:[%s1 + $0x54] sm:$0xf]
    %v104 = vld [vmem:[%s1 + $0x58] sm:$0xf]
    %v105 = vld [vmem:[%s1 + $0x5c] sm:$0xf]
    %v106 = vld [vmem:[%s2] sm:$0xff]
    %v107 = vld [vmem:[%s2 + $0x8] sm:$0xff]
    %v132 = vunpack.c.l.b16 %v82
    %v133 = vunpack.c.l.b16 %v83
    %v134 = vunpack.c.l.b16 %v84
    %v135 = vunpack.c.l.b16 %v85
    %v136 = vunpack.c.l.b16 %v86
    %v137 = vunpack.c.l.b16 %v87
    %v138 = vunpack.c.l.b16 %v88
    %v139 = vunpack.c.l.b16 %v89
    %v140 = vunpack.c.l.b16 %v90
    %v141 = vunpack.c.l.b16 %v91
    %v142 = vunpack.c.l.b16 %v92
    %v143 = vunpack.c.l.b16 %v93
    %v144 = vunpack.c.l.b16 %v94
    %v145 = vunpack.c.l.b16 %v95
    %v146 = vunpack.c.l.b16 %v96
    %v147 = vunpack.c.l.b16 %v97
    %v148 = vunpack.c.l.b16 %v98
    %v149 = vunpack.c.l.b16 %v99
    %v150 = vunpack.c.l.b16 %v100
    %v151 = vunpack.c.l.b16 %v101
    %v152 = vunpack.c.l.b16 %v102
    %v153 = vunpack.c.l.b16 %v103
    %v154 = vunpack.c.l.b16 %v104
    %v155 = vunpack.c.l.b16 %v105
    %v156 = vpack.c.b16 %v133, %v132
    %v157 = vpack.c.b16 %v135, %v134
    %v158 = vpack.c.b16 %v137, %v136
    %v159 = vpack.c.b16 %v139, %v138
    %v160 = vpack.c.b16 %v141, %v140
    %v161 = vpack.c.b16 %v143, %v142
    %v162 = vpack.c.b16 %v145, %v144
    %v163 = vpack.c.b16 %v147, %v146
    %v164 = vpack.c.b16 %v149, %v148
    %v165 = vpack.c.b16 %v151, %v150
    %v166 = vpack.c.b16 %v153, %v152
    %v167 = vpack.c.b16 %v155, %v154
    %vm180 = vcmask 523264
    %v182 = vsel %vm180, %v81, 0
    %184 = vmatprep.subr.bf16.mxu0 0
    %185 = vmatpush1.bf16.msra.mxu0 %v156
    %186 = vmatprep.subr.bf16.mxu0 0
    %187 = vmatpush1.bf16.msra.mxu0 %v157
    %188 = vmatprep.subr.bf16.mxu0 0
    %189 = vmatpush1.bf16.msra.mxu0 %v158
    %190 = vmatprep.subr.bf16.mxu0 0
    %191 = vmatpush1.bf16.msra.mxu0 %v159
    %192 = vmatprep.subr.bf16.mxu0 0
    %193 = vmatpush1.bf16.msra.mxu0 %v160
    %194 = vmatprep.subr.bf16.mxu0 0
    %195 = vmatpush1.bf16.msra.mxu0 %v161
    %196 = vmatprep.subr.bf16.mxu0 0
    %197 = vmatpush1.bf16.msra.mxu0 %v162
    %198 = vmatprep.subr.bf16.mxu0 0
    %199 = vmatpush1.bf16.msra.mxu0 %v163
    %200 = vmatprep.subr.bf16.mxu0 0
    %201 = vmatpush1.bf16.msra.mxu0 %v164
    %202 = vmatprep.subr.bf16.mxu0 0
    %203 = vmatpush1.bf16.msra.mxu0 %v165
    %204 = vmatprep.subr.bf16.mxu0 0
    %205 = vmatpush1.bf16.msra.mxu0 %v166
    %206 = vmatprep.subr.bf16.mxu0 0
    %207 = vmatpush1.bf16.msra.mxu0 %v167
    %208 = vmatprep.subr.bf16.mxu0 0
    %209 = vmatpush1.bf16.msra.mxu0 0
    %210 = vmatprep.subr.bf16.mxu0 0
    %211 = vmatpush1.bf16.msra.mxu0 0
    %212 = vmatprep.subr.bf16.mxu0 0
    %213 = vmatpush1.bf16.msra.mxu0 0
    %214 = vmatprep.subr.bf16.mxu0 0
    %215 = vmatpush1.bf16.msra.mxu0 0
    %216 = vmatprep.mubr.bf16.mxu0 %v182
    %217 = vmatmul.mubr.bf16.gmra.mrb[0].mxu0 %v80
    %v218 = vpop.f32.mrb[0].mxu0
    %v219 = vadd.f32 %v106, %v218
    %v220 = vpop.f32.mrb[0].mxu0
    %v221 = vpop.f32.mrb[0].mxu0
    %v222 = vadd.f32 %v107, %v221
    %v223 = vpop.f32.mrb[0].mxu0
    %224 = vdwg.mxu0
    %v225 = vlaneseq
    %v226 = vand.u32 %v225, 127
    %vm227 = vcmp.lt.s32.totalorder %v226, 5
    %v228 = vsel %vm227, 0.0, -1e+09
    %v229 = vld [vmem:[%s3] sm:$0x1]
    %v230 = vld [vmem:[%s4] sm:$0x1]
    %vm231 = vcmask 261120
    %v232 = vsel %vm231, %v219, 0.0
    %233 = vadd.xlane.f32.xlu0 %v232
    %v234 = vpop.xlane.xlu0 %233
    %v235 = vsel %vm231, %v222, 0.0
    %236 = vadd.xlane.f32.xlu0 %v235
    %v237 = vpop.xlane.xlu0 %236
    %v238 = vrcp.pop 32.0
    %v239 = vmul.f32 %v234, %v238
    %v240 = vmul.f32 %v237, %v238
    %v241 = vsub.f32 %v219, %v239
    %v242 = vsub.f32 %v222, %v240
    %v243 = vmul.f32 %v241, %v241
    %v244 = vmul.f32 %v242, %v242
    %v245 = vsel %vm231, %v243, 0.0
    %246 = vadd.xlane.f32.xlu0 %v245
    %v247 = vpop.xlane.xlu0 %246
    %v248 = vsel %vm231, %v244, 0.0
    %249 = vadd.xlane.f32.xlu0 %v248
    %v250 = vpop.xlane.xlu0 %249
    %v251 = vmul.f32 %v247, %v238
    %v252 = vmul.f32 %v250, %v238
    %v253 = vadd.f32 %v251, 1e-12
    %v254 = vadd.f32 %v252, 1e-12
    %v255 = vrsqrt.pop %v253
    %v256 = vrsqrt.pop %v254
    %v257 = vmul.f32 %v241, %v255
    %v258 = vmul.f32 %v242, %v256
    %v260 = vlaneseq
    %v261 = vshrl.u32 %v260, 7
    %v262 = vsub.s32 0, %v261
    %v263 = vrot.slane %v229, %v262
    %v265 = vmul.f32 %v257, %v263
    %v266 = vmul.f32 %v258, %v263
    %v268 = vlaneseq
    %v269 = vshrl.u32 %v268, 7
    %v270 = vsub.s32 0, %v269
    %v271 = vrot.slane %v230, %v270
    %v273 = vadd.f32 %v265, %v271
    %v274 = vadd.f32 %v266, %v271
    %v275 = vpack.c.bf16 %v273, %v273
    %v276 = vpack.c.bf16 %v274, %v274
    %v277 = vld [vmem:[%s5] sm:$0xf]
    %v278 = vld [vmem:[%s5 + $0x4] sm:$0xf]
    %v279 = vld [vmem:[%s5 + $0x8] sm:$0xf]
    %v280 = vld [vmem:[%s5 + $0xc] sm:$0xf]
    %v281 = vld [vmem:[%s5 + $0x10] sm:$0xf]
    %v282 = vld [vmem:[%s5 + $0x14] sm:$0xf]
    %v283 = vld [vmem:[%s5 + $0x18] sm:$0xf]
    %v284 = vld [vmem:[%s5 + $0x1c] sm:$0xf]
    %v285 = vld [vmem:[%s5 + $0x20] sm:$0xf]
    %v286 = vld [vmem:[%s5 + $0x24] sm:$0xf]
    %v287 = vld [vmem:[%s5 + $0x28] sm:$0xf]
    %v288 = vld [vmem:[%s5 + $0x2c] sm:$0xf]
    %v289 = vld [vmem:[%s5 + $0x30] sm:$0xf]
    %v290 = vld [vmem:[%s5 + $0x34] sm:$0xf]
    %v291 = vld [vmem:[%s5 + $0x38] sm:$0xf]
    %v292 = vld [vmem:[%s5 + $0x3c] sm:$0xf]
    %v293 = vld [vmem:[%s6] sm:$0x1]
    %v294 = vld [vmem:[%s6 + $0x1] sm:$0x1]
    %v295 = vld [vmem:[%s6 + $0x2] sm:$0x1]
    %v296 = vld [vmem:[%s6 + $0x3] sm:$0x1]
    %v301 = vlaneseq
    %v302 = vshrl.u32 %v301, 7
    %v303 = vsub.s32 0, %v302
    %v304 = vrot.slane %v293, %v303
    %v305 = vlaneseq
    %v306 = vshrl.u32 %v305, 7
    %v307 = vsub.s32 0, %v306
    %v308 = vrot.slane %v294, %v307
    %v309 = vlaneseq
    %v310 = vshrl.u32 %v309, 7
    %v311 = vsub.s32 0, %v310
    %v312 = vrot.slane %v295, %v311
    %v313 = vlaneseq
    %v314 = vshrl.u32 %v313, 7
    %v315 = vsub.s32 0, %v314
    %v316 = vrot.slane %v296, %v315
    %v325 = vunpack.c.l.b16 %v277
    %v326 = vunpack.c.l.b16 %v278
    %v327 = vunpack.c.l.b16 %v279
    %v328 = vunpack.c.l.b16 %v280
    %v329 = vpack.c.b16 %v326, %v325
    %v330 = vpack.c.b16 %v328, %v327
    %v334 = vsel %vm231, %v275, 0
    %336 = vmatprep.subr.bf16.mxu0 0
    %337 = vmatpush1.bf16.msra.mxu0 %v329
    %338 = vmatprep.subr.bf16.mxu0 0
    %339 = vmatpush1.bf16.msra.mxu0 %v330
    %340 = vmatprep.subr.bf16.mxu0 0
    %341 = vmatpush1.bf16.msra.mxu0 0
    %342 = vmatprep.subr.bf16.mxu0 0
    %343 = vmatpush1.bf16.msra.mxu0 0
    %344 = vmatprep.subr.bf16.mxu0 0
    %345 = vmatpush1.bf16.msra.mxu0 0
    %346 = vmatprep.subr.bf16.mxu0 0
    %347 = vmatpush1.bf16.msra.mxu0 0
    %348 = vmatprep.subr.bf16.mxu0 0
    %349 = vmatpush1.bf16.msra.mxu0 0
    %350 = vmatprep.subr.bf16.mxu0 0
    %351 = vmatpush1.bf16.msra.mxu0 0
    %352 = vmatprep.subr.bf16.mxu0 0
    %353 = vmatpush1.bf16.msra.mxu0 0
    %354 = vmatprep.subr.bf16.mxu0 0
    %355 = vmatpush1.bf16.msra.mxu0 0
    %356 = vmatprep.subr.bf16.mxu0 0
    %357 = vmatpush1.bf16.msra.mxu0 0
    %358 = vmatprep.subr.bf16.mxu0 0
    %359 = vmatpush1.bf16.msra.mxu0 0
    %360 = vmatprep.subr.bf16.mxu0 0
    %361 = vmatpush1.bf16.msra.mxu0 0
    %362 = vmatprep.subr.bf16.mxu0 0
    %363 = vmatpush1.bf16.msra.mxu0 0
    %364 = vmatprep.subr.bf16.mxu0 0
    %365 = vmatpush1.bf16.msra.mxu0 0
    %366 = vmatprep.subr.bf16.mxu0 0
    %367 = vmatpush1.bf16.msra.mxu0 0
    %368 = vmatprep.mubr.bf16.mxu0 0
    %369 = vmatmul.mubr.bf16.gmra.mrb[0].mxu0 %v334
    %v370 = vpop.f32.mrb[0].mxu0
    %v371 = vadd.f32 %v304, %v370
    %v372 = vpop.f32.mrb[0].mxu0
    %v373 = vpop.f32.mrb[0].mxu0
    %v374 = vpop.f32.mrb[0].mxu0
    %375 = vdwg.mxu0
    %v380 = vunpack.c.l.b16 %v281
    %v381 = vunpack.c.l.b16 %v282
    %v382 = vunpack.c.l.b16 %v283
    %v383 = vunpack.c.l.b16 %v284
    %v384 = vpack.c.b16 %v381, %v380
    %v385 = vpack.c.b16 %v383, %v382
    %388 = vmatprep.subr.bf16.mxu0 0
    %389 = vmatpush1.bf16.msra.mxu0 %v384
    %390 = vmatprep.subr.bf16.mxu0 0
    %391 = vmatpush1.bf16.msra.mxu0 %v385
    %392 = vmatprep.subr.bf16.mxu0 0
    %393 = vmatpush1.bf16.msra.mxu0 0
    %394 = vmatprep.subr.bf16.mxu0 0
    %395 = vmatpush1.bf16.msra.mxu0 0
    %396 = vmatprep.subr.bf16.mxu0 0
    %397 = vmatpush1.bf16.msra.mxu0 0
    %398 = vmatprep.subr.bf16.mxu0 0
    %399 = vmatpush1.bf16.msra.mxu0 0
    %400 = vmatprep.subr.bf16.mxu0 0
    %401 = vmatpush1.bf16.msra.mxu0 0
    %402 = vmatprep.subr.bf16.mxu0 0
    %403 = vmatpush1.bf16.msra.mxu0 0
    %404 = vmatprep.subr.bf16.mxu0 0
    %405 = vmatpush1.bf16.msra.mxu0 0
    %406 = vmatprep.subr.bf16.mxu0 0
    %407 = vmatpush1.bf16.msra.mxu0 0
    %408 = vmatprep.subr.bf16.mxu0 0
    %409 = vmatpush1.bf16.msra.mxu0 0
    %410 = vmatprep.subr.bf16.mxu0 0
    %411 = vmatpush1.bf16.msra.mxu0 0
    %412 = vmatprep.subr.bf16.mxu0 0
    %413 = vmatpush1.bf16.msra.mxu0 0
    %414 = vmatprep.subr.bf16.mxu0 0
    %415 = vmatpush1.bf16.msra.mxu0 0
    %416 = vmatprep.subr.bf16.mxu0 0
    %417 = vmatpush1.bf16.msra.mxu0 0
    %418 = vmatprep.subr.bf16.mxu0 0
    %419 = vmatpush1.bf16.msra.mxu0 0
    %420 = vmatprep.mubr.bf16.mxu0 0
    %421 = vmatmul.mubr.bf16.gmra.mrb[0].mxu0 %v334
    %v422 = vpop.f32.mrb[0].mxu0
    %v423 = vadd.f32 %v308, %v422
    %v424 = vpop.f32.mrb[0].mxu0
    %v425 = vpop.f32.mrb[0].mxu0
    %v426 = vpop.f32.mrb[0].mxu0
    %427 = vdwg.mxu0
    %v432 = vunpack.c.l.b16 %v285
    %v433 = vunpack.c.l.b16 %v286
    %v434 = vunpack.c.l.b16 %v287
    %v435 = vunpack.c.l.b16 %v288
    %v436 = vpack.c.b16 %v433, %v432
    %v437 = vpack.c.b16 %v435, %v434
    %440 = vmatprep.subr.bf16.mxu0 0
    %441 = vmatpush1.bf16.msra.mxu0 %v436
    %442 = vmatprep.subr.bf16.mxu0 0
    %443 = vmatpush1.bf16.msra.mxu0 %v437
    %444 = vmatprep.subr.bf16.mxu0 0
    %445 = vmatpush1.bf16.msra.mxu0 0
    %446 = vmatprep.subr.bf16.mxu0 0
    %447 = vmatpush1.bf16.msra.mxu0 0
    %448 = vmatprep.subr.bf16.mxu0 0
    %449 = vmatpush1.bf16.msra.mxu0 0
    %450 = vmatprep.subr.bf16.mxu0 0
    %451 = vmatpush1.bf16.msra.mxu0 0
    %452 = vmatprep.subr.bf16.mxu0 0
    %453 = vmatpush1.bf16.msra.mxu0 0
    %454 = vmatprep.subr.bf16.mxu0 0
    %455 = vmatpush1.bf16.msra.mxu0 0
    %456 = vmatprep.subr.bf16.mxu0 0
    %457 = vmatpush1.bf16.msra.mxu0 0
    %458 = vmatprep.subr.bf16.mxu0 0
    %459 = vmatpush1.bf16.msra.mxu0 0
    %460 = vmatprep.subr.bf16.mxu0 0
    %461 = vmatpush1.bf16.msra.mxu0 0
    %462 = vmatprep.subr.bf16.mxu0 0
    %463 = vmatpush1.bf16.msra.mxu0 0
    %464 = vmatprep.subr.bf16.mxu0 0
    %465 = vmatpush1.bf16.msra.mxu0 0
    %466 = vmatprep.subr.bf16.mxu0 0
    %467 = vmatpush1.bf16.msra.mxu0 0
    %468 = vmatprep.subr.bf16.mxu0 0
    %469 = vmatpush1.bf16.msra.mxu0 0
    %470 = vmatprep.subr.bf16.mxu0 0
    %471 = vmatpush1.bf16.msra.mxu0 0
    %472 = vmatprep.mubr.bf16.mxu0 0
    %473 = vmatmul.mubr.bf16.gmra.mrb[0].mxu0 %v334
    %v474 = vpop.f32.mrb[0].mxu0
    %v475 = vadd.f32 %v312, %v474
    %v476 = vpop.f32.mrb[0].mxu0
    %v477 = vpop.f32.mrb[0].mxu0
    %v478 = vpop.f32.mrb[0].mxu0
    %479 = vdwg.mxu0
    %v484 = vunpack.c.l.b16 %v289
    %v485 = vunpack.c.l.b16 %v290
    %v486 = vunpack.c.l.b16 %v291
    %v487 = vunpack.c.l.b16 %v292
    %v488 = vpack.c.b16 %v485, %v484
    %v489 = vpack.c.b16 %v487, %v486
    %492 = vmatprep.subr.bf16.mxu0 0
    %493 = vmatpush1.bf16.msra.mxu0 %v488
    %494 = vmatprep.subr.bf16.mxu0 0
    %495 = vmatpush1.bf16.msra.mxu0 %v489
    %496 = vmatprep.subr.bf16.mxu0 0
    %497 = vmatpush1.bf16.msra.mxu0 0
    %498 = vmatprep.subr.bf16.mxu0 0
    %499 = vmatpush1.bf16.msra.mxu0 0
    %500 = vmatprep.subr.bf16.mxu0 0
    %501 = vmatpush1.bf16.msra.mxu0 0
    %502 = vmatprep.subr.bf16.mxu0 0
    %503 = vmatpush1.bf16.msra.mxu0 0
    %504 = vmatprep.subr.bf16.mxu0 0
    %505 = vmatpush1.bf16.msra.mxu0 0
    %506 = vmatprep.subr.bf16.mxu0 0
    %507 = vmatpush1.bf16.msra.mxu0 0
    %508 = vmatprep.subr.bf16.mxu0 0
    %509 = vmatpush1.bf16.msra.mxu0 0
    %510 = vmatprep.subr.bf16.mxu0 0
    %511 = vmatpush1.bf16.msra.mxu0 0
    %512 = vmatprep.subr.bf16.mxu0 0
    %513 = vmatpush1.bf16.msra.mxu0 0
    %514 = vmatprep.subr.bf16.mxu0 0
    %515 = vmatpush1.bf16.msra.mxu0 0
    %516 = vmatprep.subr.bf16.mxu0 0
    %517 = vmatpush1.bf16.msra.mxu0 0
    %518 = vmatprep.subr.bf16.mxu0 0
    %519 = vmatpush1.bf16.msra.mxu0 0
    %520 = vmatprep.subr.bf16.mxu0 0
    %521 = vmatpush1.bf16.msra.mxu0 0
    %522 = vmatprep.subr.bf16.mxu0 0
    %523 = vmatpush1.bf16.msra.mxu0 0
    %524 = vmatprep.mubr.bf16.mxu0 0
    %525 = vmatmul.mubr.bf16.gmra.mrb[0].mxu0 %v334
    %v526 = vpop.f32.mrb[0].mxu0
    %v527 = vadd.f32 %v316, %v526
    %v528 = vpop.f32.mrb[0].mxu0
    %v529 = vpop.f32.mrb[0].mxu0
    %v530 = vpop.f32.mrb[0].mxu0
    %531 = vdwg.mxu0
    %v533 = vsel %vm231, %v276, 0
    %535 = vmatprep.subr.bf16.mxu0 0
    %536 = vmatpush1.bf16.msra.mxu0 %v329
    %537 = vmatprep.subr.bf16.mxu0 0
    %538 = vmatpush1.bf16.msra.mxu0 %v330
    %539 = vmatprep.subr.bf16.mxu0 0
    %540 = vmatpush1.bf16.msra.mxu0 0
    %541 = vmatprep.subr.bf16.mxu0 0
    %542 = vmatpush1.bf16.msra.mxu0 0
    %543 = vmatprep.subr.bf16.mxu0 0
    %544 = vmatpush1.bf16.msra.mxu0 0
    %545 = vmatprep.subr.bf16.mxu0 0
    %546 = vmatpush1.bf16.msra.mxu0 0
    %547 = vmatprep.subr.bf16.mxu0 0
    %548 = vmatpush1.bf16.msra.mxu0 0
    %549 = vmatprep.subr.bf16.mxu0 0
    %550 = vmatpush1.bf16.msra.mxu0 0
    %551 = vmatprep.subr.bf16.mxu0 0
    %552 = vmatpush1.bf16.msra.mxu0 0
    %553 = vmatprep.subr.bf16.mxu0 0
    %554 = vmatpush1.bf16.msra.mxu0 0
    %555 = vmatprep.subr.bf16.mxu0 0
    %556 = vmatpush1.bf16.msra.mxu0 0
    %557 = vmatprep.subr.bf16.mxu0 0
    %558 = vmatpush1.bf16.msra.mxu0 0
    %559 = vmatprep.subr.bf16.mxu0 0
    %560 = vmatpush1.bf16.msra.mxu0 0
    %561 = vmatprep.subr.bf16.mxu0 0
    %562 = vmatpush1.bf16.msra.mxu0 0
    %563 = vmatprep.subr.bf16.mxu0 0
    %564 = vmatpush1.bf16.msra.mxu0 0
    %565 = vmatprep.subr.bf16.mxu0 0
    %566 = vmatpush1.bf16.msra.mxu0 0
    %567 = vmatprep.mubr.bf16.mxu0 0
    %568 = vmatmul.mubr.bf16.gmra.mrb[0].mxu0 %v533
    %v569 = vpop.f32.mrb[0].mxu0
    %v570 = vadd.f32 %v304, %v569
    %v571 = vpop.f32.mrb[0].mxu0
    %v572 = vpop.f32.mrb[0].mxu0
    %v573 = vpop.f32.mrb[0].mxu0
    %574 = vdwg.mxu0
    %575 = vmatprep.subr.bf16.mxu0 0
    %576 = vmatpush1.bf16.msra.mxu0 %v384
    %577 = vmatprep.subr.bf16.mxu0 0
    %578 = vmatpush1.bf16.msra.mxu0 %v385
    %579 = vmatprep.subr.bf16.mxu0 0
    %580 = vmatpush1.bf16.msra.mxu0 0
    %581 = vmatprep.subr.bf16.mxu0 0
    %582 = vmatpush1.bf16.msra.mxu0 0
    %583 = vmatprep.subr.bf16.mxu0 0
    %584 = vmatpush1.bf16.msra.mxu0 0
    %585 = vmatprep.subr.bf16.mxu0 0
    %586 = vmatpush1.bf16.msra.mxu0 0
    %587 = vmatprep.subr.bf16.mxu0 0
    %588 = vmatpush1.bf16.msra.mxu0 0
    %589 = vmatprep.subr.bf16.mxu0 0
    %590 = vmatpush1.bf16.msra.mxu0 0
    %591 = vmatprep.subr.bf16.mxu0 0
    %592 = vmatpush1.bf16.msra.mxu0 0
    %593 = vmatprep.subr.bf16.mxu0 0
    %594 = vmatpush1.bf16.msra.mxu0 0
    %595 = vmatprep.subr.bf16.mxu0 0
    %596 = vmatpush1.bf16.msra.mxu0 0
    %597 = vmatprep.subr.bf16.mxu0 0
    %598 = vmatpush1.bf16.msra.mxu0 0
    %599 = vmatprep.subr.bf16.mxu0 0
    %600 = vmatpush1.bf16.msra.mxu0 0
    %601 = vmatprep.subr.bf16.mxu0 0
    %602 = vmatpush1.bf16.msra.mxu0 0
    %603 = vmatprep.subr.bf16.mxu0 0
    %604 = vmatpush1.bf16.msra.mxu0 0
    %605 = vmatprep.subr.bf16.mxu0 0
    %606 = vmatpush1.bf16.msra.mxu0 0
    %607 = vmatprep.mubr.bf16.mxu0 0
    %608 = vmatmul.mubr.bf16.gmra.mrb[0].mxu0 %v533
    %v609 = vpop.f32.mrb[0].mxu0
    %v610 = vadd.f32 %v308, %v609
    %v611 = vpop.f32.mrb[0].mxu0
    %v612 = vpop.f32.mrb[0].mxu0
    %v613 = vpop.f32.mrb[0].mxu0
    %614 = vdwg.mxu0
    %615 = vmatprep.subr.bf16.mxu0 0
    %616 = vmatpush1.bf16.msra.mxu0 %v436
    %617 = vmatprep.subr.bf16.mxu0 0
    %618 = vmatpush1.bf16.msra.mxu0 %v437
    %619 = vmatprep.subr.bf16.mxu0 0
    %620 = vmatpush1.bf16.msra.mxu0 0
    %621 = vmatprep.subr.bf16.mxu0 0
    %622 = vmatpush1.bf16.msra.mxu0 0
    %623 = vmatprep.subr.bf16.mxu0 0
    %624 = vmatpush1.bf16.msra.mxu0 0
    %625 = vmatprep.subr.bf16.mxu0 0
    %626 = vmatpush1.bf16.msra.mxu0 0
    %627 = vmatprep.subr.bf16.mxu0 0
    %628 = vmatpush1.bf16.msra.mxu0 0
    %629 = vmatprep.subr.bf16.mxu0 0
    %630 = vmatpush1.bf16.msra.mxu0 0
    %631 = vmatprep.subr.bf16.mxu0 0
    %632 = vmatpush1.bf16.msra.mxu0 0
    %633 = vmatprep.subr.bf16.mxu0 0
    %634 = vmatpush1.bf16.msra.mxu0 0
    %635 = vmatprep.subr.bf16.mxu0 0
    %636 = vmatpush1.bf16.msra.mxu0 0
    %637 = vmatprep.subr.bf16.mxu0 0
    %638 = vmatpush1.bf16.msra.mxu0 0
    %639 = vmatprep.subr.bf16.mxu0 0
    %640 = vmatpush1.bf16.msra.mxu0 0
    %641 = vmatprep.subr.bf16.mxu0 0
    %642 = vmatpush1.bf16.msra.mxu0 0
    %643 = vmatprep.subr.bf16.mxu0 0
    %644 = vmatpush1.bf16.msra.mxu0 0
    %645 = vmatprep.subr.bf16.mxu0 0
    %646 = vmatpush1.bf16.msra.mxu0 0
    %647 = vmatprep.mubr.bf16.mxu0 0
    %648 = vmatmul.mubr.bf16.gmra.mrb[0].mxu0 %v533
    %v649 = vpop.f32.mrb[0].mxu0
    %v650 = vadd.f32 %v312, %v649
    %v651 = vpop.f32.mrb[0].mxu0
    %v652 = vpop.f32.mrb[0].mxu0
    %v653 = vpop.f32.mrb[0].mxu0
    %654 = vdwg.mxu0
    %655 = vmatprep.subr.bf16.mxu0 0
    %656 = vmatpush1.bf16.msra.mxu0 %v488
    %657 = vmatprep.subr.bf16.mxu0 0
    %658 = vmatpush1.bf16.msra.mxu0 %v489
    %659 = vmatprep.subr.bf16.mxu0 0
    %660 = vmatpush1.bf16.msra.mxu0 0
    %661 = vmatprep.subr.bf16.mxu0 0
    %662 = vmatpush1.bf16.msra.mxu0 0
    %663 = vmatprep.subr.bf16.mxu0 0
    %664 = vmatpush1.bf16.msra.mxu0 0
    %665 = vmatprep.subr.bf16.mxu0 0
    %666 = vmatpush1.bf16.msra.mxu0 0
    %667 = vmatprep.subr.bf16.mxu0 0
    %668 = vmatpush1.bf16.msra.mxu0 0
    %669 = vmatprep.subr.bf16.mxu0 0
    %670 = vmatpush1.bf16.msra.mxu0 0
    %671 = vmatprep.subr.bf16.mxu0 0
    %672 = vmatpush1.bf16.msra.mxu0 0
    %673 = vmatprep.subr.bf16.mxu0 0
    %674 = vmatpush1.bf16.msra.mxu0 0
    %675 = vmatprep.subr.bf16.mxu0 0
    %676 = vmatpush1.bf16.msra.mxu0 0
    %677 = vmatprep.subr.bf16.mxu0 0
    %678 = vmatpush1.bf16.msra.mxu0 0
    %679 = vmatprep.subr.bf16.mxu0 0
    %680 = vmatpush1.bf16.msra.mxu0 0
    %681 = vmatprep.subr.bf16.mxu0 0
    %682 = vmatpush1.bf16.msra.mxu0 0
    %683 = vmatprep.subr.bf16.mxu0 0
    %684 = vmatpush1.bf16.msra.mxu0 0
    %685 = vmatprep.subr.bf16.mxu0 0
    %686 = vmatpush1.bf16.msra.mxu0 0
    %687 = vmatprep.mubr.bf16.mxu0 0
    %688 = vmatmul.mubr.bf16.gmra.mrb[0].mxu0 %v533
    %v689 = vpop.f32.mrb[0].mxu0
    %v690 = vadd.f32 %v316, %v689
    %v691 = vpop.f32.mrb[0].mxu0
    %v692 = vpop.f32.mrb[0].mxu0
    %v693 = vpop.f32.mrb[0].mxu0
    %694 = vdwg.mxu0
    %v695 = vld [vmem:[%s7] sm:$0xf]
    %v696 = vld [vmem:[%s7 + $0x4] sm:$0xf]
    %v697 = vld [vmem:[%s7 + $0x8] sm:$0xf]
    %v698 = vld [vmem:[%s7 + $0xc] sm:$0xf]
    %v699 = vld [vmem:[%s7 + $0x10] sm:$0xf]
    %v700 = vld [vmem:[%s7 + $0x14] sm:$0xf]
    %v701 = vld [vmem:[%s7 + $0x18] sm:$0xf]
    %v702 = vld [vmem:[%s7 + $0x1c] sm:$0xf]
    %v703 = vld [vmem:[%s7 + $0x20] sm:$0xf]
    %v704 = vld [vmem:[%s7 + $0x24] sm:$0xf]
    %v705 = vld [vmem:[%s7 + $0x28] sm:$0xf]
    %v706 = vld [vmem:[%s7 + $0x2c] sm:$0xf]
    %v707 = vld [vmem:[%s7 + $0x30] sm:$0xf]
    %v708 = vld [vmem:[%s7 + $0x34] sm:$0xf]
    %v709 = vld [vmem:[%s7 + $0x38] sm:$0xf]
    %v710 = vld [vmem:[%s7 + $0x3c] sm:$0xf]
    %v711 = vld [vmem:[%s8] sm:$0x1]
    %v712 = vld [vmem:[%s8 + $0x1] sm:$0x1]
    %v713 = vld [vmem:[%s8 + $0x2] sm:$0x1]
    %v714 = vld [vmem:[%s8 + $0x3] sm:$0x1]
    %v719 = vlaneseq
    %v720 = vshrl.u32 %v719, 7
    %v721 = vsub.s32 0, %v720
    %v722 = vrot.slane %v711, %v721
    %v723 = vlaneseq
    %v724 = vshrl.u32 %v723, 7
    %v725 = vsub.s32 0, %v724
    %v726 = vrot.slane %v712, %v725
    %v727 = vlaneseq
    %v728 = vshrl.u32 %v727, 7
    %v729 = vsub.s32 0, %v728
    %v730 = vrot.slane %v713, %v729
    %v731 = vlaneseq
    %v732 = vshrl.u32 %v731, 7
    %v733 = vsub.s32 0, %v732
    %v734 = vrot.slane %v714, %v733
    %v743 = vunpack.c.l.b16 %v695
    %v744 = vunpack.c.l.b16 %v696
    %v745 = vunpack.c.l.b16 %v697
    %v746 = vunpack.c.l.b16 %v698
    %v747 = vpack.c.b16 %v744, %v743
    %v748 = vpack.c.b16 %v746, %v745
    %751 = vmatprep.subr.bf16.mxu0 0
    %752 = vmatpush1.bf16.msra.mxu0 %v747
    %753 = vmatprep.subr.bf16.mxu0 0
    %754 = vmatpush1.bf16.msra.mxu0 %v748
    %755 = vmatprep.subr.bf16.mxu0 0
    %756 = vmatpush1.bf16.msra.mxu0 0
    %757 = vmatprep.subr.bf16.mxu0 0
    %758 = vmatpush1.bf16.msra.mxu0 0
    %759 = vmatprep.subr.bf16.mxu0 0
    %760 = vmatpush1.bf16.msra.mxu0 0
    %761 = vmatprep.subr.bf16.mxu0 0
    %762 = vmatpush1.bf16.msra.mxu0 0
    %763 = vmatprep.subr.bf16.mxu0 0
    %764 = vmatpush1.bf16.msra.mxu0 0
    %765 = vmatprep.subr.bf16.mxu0 0
    %766 = vmatpush1.bf16.msra.mxu0 0
    %767 = vmatprep.subr.bf16.mxu0 0
    %768 = vmatpush1.bf16.msra.mxu0 0
    %769 = vmatprep.subr.bf16.mxu0 0
    %770 = vmatpush1.bf16.msra.mxu0 0
    %771 = vmatprep.subr.bf16.mxu0 0
    %772 = vmatpush1.bf16.msra.mxu0 0
    %773 = vmatprep.subr.bf16.mxu0 0
    %774 = vmatpush1.bf16.msra.mxu0 0
    %775 = vmatprep.subr.bf16.mxu0 0
    %776 = vmatpush1.bf16.msra.mxu0 0
    %777 = vmatprep.subr.bf16.mxu0 0
    %778 = vmatpush1.bf16.msra.mxu0 0
    %779 = vmatprep.subr.bf16.mxu0 0
    %780 = vmatpush1.bf16.msra.mxu0 0
    %781 = vmatprep.subr.bf16.mxu0 0
    %782 = vmatpush1.bf16.msra.mxu0 0
    %783 = vmatprep.mubr.bf16.mxu0 0
    %784 = vmatmul.mubr.bf16.gmra.mrb[0].mxu0 %v334
    %v785 = vpop.f32.mrb[0].mxu0
    %v786 = vadd.f32 %v722, %v785
    %v787 = vpop.f32.mrb[0].mxu0
    %v788 = vpop.f32.mrb[0].mxu0
    %v789 = vpop.f32.mrb[0].mxu0
    %790 = vdwg.mxu0
    %v795 = vunpack.c.l.b16 %v699
    %v796 = vunpack.c.l.b16 %v700
    %v797 = vunpack.c.l.b16 %v701
    %v798 = vunpack.c.l.b16 %v702
    %v799 = vpack.c.b16 %v796, %v795
    %v800 = vpack.c.b16 %v798, %v797
    %803 = vmatprep.subr.bf16.mxu0 0
    %804 = vmatpush1.bf16.msra.mxu0 %v799
    %805 = vmatprep.subr.bf16.mxu0 0
    %806 = vmatpush1.bf16.msra.mxu0 %v800
    %807 = vmatprep.subr.bf16.mxu0 0
    %808 = vmatpush1.bf16.msra.mxu0 0
    %809 = vmatprep.subr.bf16.mxu0 0
    %810 = vmatpush1.bf16.msra.mxu0 0
    %811 = vmatprep.subr.bf16.mxu0 0
    %812 = vmatpush1.bf16.msra.mxu0 0
    %813 = vmatprep.subr.bf16.mxu0 0
    %814 = vmatpush1.bf16.msra.mxu0 0
    %815 = vmatprep.subr.bf16.mxu0 0
    %816 = vmatpush1.bf16.msra.mxu0 0
    %817 = vmatprep.subr.bf16.mxu0 0
    %818 = vmatpush1.bf16.msra.mxu0 0
    %819 = vmatprep.subr.bf16.mxu0 0
    %820 = vmatpush1.bf16.msra.mxu0 0
    %821 = vmatprep.subr.bf16.mxu0 0
    %822 = vmatpush1.bf16.msra.mxu0 0
    %823 = vmatprep.subr.bf16.mxu0 0
    %824 = vmatpush1.bf16.msra.mxu0 0
    %825 = vmatprep.subr.bf16.mxu0 0
    %826 = vmatpush1.bf16.msra.mxu0 0
    %827 = vmatprep.subr.bf16.mxu0 0
    %828 = vmatpush1.bf16.msra.mxu0 0
    %829 = vmatprep.subr.bf16.mxu0 0
    %830 = vmatpush1.bf16.msra.mxu0 0
    %831 = vmatprep.subr.bf16.mxu0 0
    %832 = vmatpush1.bf16.msra.mxu0 0
    %833 = vmatprep.subr.bf16.mxu0 0
    %834 = vmatpush1.bf16.msra.mxu0 0
    %835 = vmatprep.mubr.bf16.mxu0 0
    %836 = vmatmul.mubr.bf16.gmra.mrb[0].mxu0 %v334
    %v837 = vpop.f32.mrb[0].mxu0
    %v838 = vadd.f32 %v726, %v837
    %v839 = vpop.f32.mrb[0].mxu0
    %v840 = vpop.f32.mrb[0].mxu0
    %v841 = vpop.f32.mrb[0].mxu0
    %842 = vdwg.mxu0
    %v847 = vunpack.c.l.b16 %v703
    %v848 = vunpack.c.l.b16 %v704
    %v849 = vunpack.c.l.b16 %v705
    %v850 = vunpack.c.l.b16 %v706
    %v851 = vpack.c.b16 %v848, %v847
    %v852 = vpack.c.b16 %v850, %v849
    %855 = vmatprep.subr.bf16.mxu0 0
    %856 = vmatpush1.bf16.msra.mxu0 %v851
    %857 = vmatprep.subr.bf16.mxu0 0
    %858 = vmatpush1.bf16.msra.mxu0 %v852
    %859 = vmatprep.subr.bf16.mxu0 0
    %860 = vmatpush1.bf16.msra.mxu0 0
    %861 = vmatprep.subr.bf16.mxu0 0
    %862 = vmatpush1.bf16.msra.mxu0 0
    %863 = vmatprep.subr.bf16.mxu0 0
    %864 = vmatpush1.bf16.msra.mxu0 0
    %865 = vmatprep.subr.bf16.mxu0 0
    %866 = vmatpush1.bf16.msra.mxu0 0
    %867 = vmatprep.subr.bf16.mxu0 0
    %868 = vmatpush1.bf16.msra.mxu0 0
    %869 = vmatprep.subr.bf16.mxu0 0
    %870 = vmatpush1.bf16.msra.mxu0 0
    %871 = vmatprep.subr.bf16.mxu0 0
    %872 = vmatpush1.bf16.msra.mxu0 0
    %873 = vmatprep.subr.bf16.mxu0 0
    %874 = vmatpush1.bf16.msra.mxu0 0
    %875 = vmatprep.subr.bf16.mxu0 0
    %876 = vmatpush1.bf16.msra.mxu0 0
    %877 = vmatprep.subr.bf16.mxu0 0
    %878 = vmatpush1.bf16.msra.mxu0 0
    %879 = vmatprep.subr.bf16.mxu0 0
    %880 = vmatpush1.bf16.msra.mxu0 0
    %881 = vmatprep.subr.bf16.mxu0 0
    %882 = vmatpush1.bf16.msra.mxu0 0
    %883 = vmatprep.subr.bf16.mxu0 0
    %884 = vmatpush1.bf16.msra.mxu0 0
    %885 = vmatprep.subr.bf16.mxu0 0
    %886 = vmatpush1.bf16.msra.mxu0 0
    %887 = vmatprep.mubr.bf16.mxu0 0
    %888 = vmatmul.mubr.bf16.gmra.mrb[0].mxu0 %v334
    %v889 = vpop.f32.mrb[0].mxu0
    %v890 = vadd.f32 %v730, %v889
    %v891 = vpop.f32.mrb[0].mxu0
    %v892 = vpop.f32.mrb[0].mxu0
    %v893 = vpop.f32.mrb[0].mxu0
    %894 = vdwg.mxu0
    %v899 = vunpack.c.l.b16 %v707
    %v900 = vunpack.c.l.b16 %v708
    %v901 = vunpack.c.l.b16 %v709
    %v902 = vunpack.c.l.b16 %v710
    %v903 = vpack.c.b16 %v900, %v899
    %v904 = vpack.c.b16 %v902, %v901
    %907 = vmatprep.subr.bf16.mxu0 0
    %908 = vmatpush1.bf16.msra.mxu0 %v903
    %909 = vmatprep.subr.bf16.mxu0 0
    %910 = vmatpush1.bf16.msra.mxu0 %v904
    %911 = vmatprep.subr.bf16.mxu0 0
    %912 = vmatpush1.bf16.msra.mxu0 0
    %913 = vmatprep.subr.bf16.mxu0 0
    %914 = vmatpush1.bf16.msra.mxu0 0
    %915 = vmatprep.subr.bf16.mxu0 0
    %916 = vmatpush1.bf16.msra.mxu0 0
    %917 = vmatprep.subr.bf16.mxu0 0
    %918 = vmatpush1.bf16.msra.mxu0 0
    %919 = vmatprep.subr.bf16.mxu0 0
    %920 = vmatpush1.bf16.msra.mxu0 0
    %921 = vmatprep.subr.bf16.mxu0 0
    %922 = vmatpush1.bf16.msra.mxu0 0
    %923 = vmatprep.subr.bf16.mxu0 0
    %924 = vmatpush1.bf16.msra.mxu0 0
    %925 = vmatprep.subr.bf16.mxu0 0
    %926 = vmatpush1.bf16.msra.mxu0 0
    %927 = vmatprep.subr.bf16.mxu0 0
    %928 = vmatpush1.bf16.msra.mxu0 0
    %929 = vmatprep.subr.bf16.mxu0 0
    %930 = vmatpush1.bf16.msra.mxu0 0
    %931 = vmatprep.subr.bf16.mxu0 0
    %932 = vmatpush1.bf16.msra.mxu0 0
    %933 = vmatprep.subr.bf16.mxu0 0
    %934 = vmatpush1.bf16.msra.mxu0 0
    %935 = vmatprep.subr.bf16.mxu0 0
    %936 = vmatpush1.bf16.msra.mxu0 0
    %937 = vmatprep.subr.bf16.mxu0 0
    %938 = vmatpush1.bf16.msra.mxu0 0
    %939 = vmatprep.mubr.bf16.mxu0 0
    %940 = vmatmul.mubr.bf16.gmra.mrb[0].mxu0 %v334
    %v941 = vpop.f32.mrb[0].mxu0
    %v942 = vadd.f32 %v734, %v941
    %v943 = vpop.f32.mrb[0].mxu0
    %v944 = vpop.f32.mrb[0].mxu0
    %v945 = vpop.f32.mrb[0].mxu0
    %946 = vdwg.mxu0
    %947 = vmatprep.subr.bf16.mxu0 0
    %948 = vmatpush1.bf16.msra.mxu0 %v747
    %949 = vmatprep.subr.bf16.mxu0 0
    %950 = vmatpush1.bf16.msra.mxu0 %v748
    %951 = vmatprep.subr.bf16.mxu0 0
    %952 = vmatpush1.bf16.msra.mxu0 0
    %953 = vmatprep.subr.bf16.mxu0 0
    %954 = vmatpush1.bf16.msra.mxu0 0
    %955 = vmatprep.subr.bf16.mxu0 0
    %956 = vmatpush1.bf16.msra.mxu0 0
    %957 = vmatprep.subr.bf16.mxu0 0
    %958 = vmatpush1.bf16.msra.mxu0 0
    %959 = vmatprep.subr.bf16.mxu0 0
    %960 = vmatpush1.bf16.msra.mxu0 0
    %961 = vmatprep.subr.bf16.mxu0 0
    %962 = vmatpush1.bf16.msra.mxu0 0
    %963 = vmatprep.subr.bf16.mxu0 0
    %964 = vmatpush1.bf16.msra.mxu0 0
    %965 = vmatprep.subr.bf16.mxu0 0
    %966 = vmatpush1.bf16.msra.mxu0 0
    %967 = vmatprep.subr.bf16.mxu0 0
    %968 = vmatpush1.bf16.msra.mxu0 0
    %969 = vmatprep.subr.bf16.mxu0 0
    %970 = vmatpush1.bf16.msra.mxu0 0
    %971 = vmatprep.subr.bf16.mxu0 0
    %972 = vmatpush1.bf16.msra.mxu0 0
    %973 = vmatprep.subr.bf16.mxu0 0
    %974 = vmatpush1.bf16.msra.mxu0 0
    %975 = vmatprep.subr.bf16.mxu0 0
    %976 = vmatpush1.bf16.msra.mxu0 0
    %977 = vmatprep.subr.bf16.mxu0 0
    %978 = vmatpush1.bf16.msra.mxu0 0
    %979 = vmatprep.mubr.bf16.mxu0 0
    %980 = vmatmul.mubr.bf16.gmra.mrb[0].mxu0 %v533
    %v981 = vpop.f32.mrb[0].mxu0
    %v982 = vadd.f32 %v722, %v981
    %v983 = vpop.f32.mrb[0].mxu0
    %v984 = vpop.f32.mrb[0].mxu0
    %v985 = vpop.f32.mrb[0].mxu0
    %986 = vdwg.mxu0
    %987 = vmatprep.subr.bf16.mxu0 0
    %988 = vmatpush1.bf16.msra.mxu0 %v799
    %989 = vmatprep.subr.bf16.mxu0 0
    %990 = vmatpush1.bf16.msra.mxu0 %v800
    %991 = vmatprep.subr.bf16.mxu0 0
    %992 = vmatpush1.bf16.msra.mxu0 0
    %993 = vmatprep.subr.bf16.mxu0 0
    %994 = vmatpush1.bf16.msra.mxu0 0
    %995 = vmatprep.subr.bf16.mxu0 0
    %996 = vmatpush1.bf16.msra.mxu0 0
    %997 = vmatprep.subr.bf16.mxu0 0
    %998 = vmatpush1.bf16.msra.mxu0 0
    %999 = vmatprep.subr.bf16.mxu0 0
    %1000 = vmatpush1.bf16.msra.mxu0 0
    %1001 = vmatprep.subr.bf16.mxu0 0
    %1002 = vmatpush1.bf16.msra.mxu0 0
    %1003 = vmatprep.subr.bf16.mxu0 0
    %1004 = vmatpush1.bf16.msra.mxu0 0
    %1005 = vmatprep.subr.bf16.mxu0 0
    %1006 = vmatpush1.bf16.msra.mxu0 0
    %1007 = vmatprep.subr.bf16.mxu0 0
    %1008 = vmatpush1.bf16.msra.mxu0 0
    %1009 = vmatprep.subr.bf16.mxu0 0
    %1010 = vmatpush1.bf16.msra.mxu0 0
    %1011 = vmatprep.subr.bf16.mxu0 0
    %1012 = vmatpush1.bf16.msra.mxu0 0
    %1013 = vmatprep.subr.bf16.mxu0 0
    %1014 = vmatpush1.bf16.msra.mxu0 0
    %1015 = vmatprep.subr.bf16.mxu0 0
    %1016 = vmatpush1.bf16.msra.mxu0 0
    %1017 = vmatprep.subr.bf16.mxu0 0
    %1018 = vmatpush1.bf16.msra.mxu0 0
    %1019 = vmatprep.mubr.bf16.mxu0 0
    %1020 = vmatmul.mubr.bf16.gmra.mrb[0].mxu0 %v533
    %v1021 = vpop.f32.mrb[0].mxu0
    %v1022 = vadd.f32 %v726, %v1021
    %v1023 = vpop.f32.mrb[0].mxu0
    %v1024 = vpop.f32.mrb[0].mxu0
    %v1025 = vpop.f32.mrb[0].mxu0
    %1026 = vdwg.mxu0
    %1027 = vmatprep.subr.bf16.mxu0 0
    %1028 = vmatpush1.bf16.msra.mxu0 %v851
    %1029 = vmatprep.subr.bf16.mxu0 0
    %1030 = vmatpush1.bf16.msra.mxu0 %v852
    %1031 = vmatprep.subr.bf16.mxu0 0
    %1032 = vmatpush1.bf16.msra.mxu0 0
    %1033 = vmatprep.subr.bf16.mxu0 0
    %1034 = vmatpush1.bf16.msra.mxu0 0
    %1035 = vmatprep.subr.bf16.mxu0 0
    %1036 = vmatpush1.bf16.msra.mxu0 0
    %1037 = vmatprep.subr.bf16.mxu0 0
    %1038 = vmatpush1.bf16.msra.mxu0 0
    %1039 = vmatprep.subr.bf16.mxu0 0
    %1040 = vmatpush1.bf16.msra.mxu0 0
    %1041 = vmatprep.subr.bf16.mxu0 0
    %1042 = vmatpush1.bf16.msra.mxu0 0
    %1043 = vmatprep.subr.bf16.mxu0 0
    %1044 = vmatpush1.bf16.msra.mxu0 0
    %1045 = vmatprep.subr.bf16.mxu0 0
    %1046 = vmatpush1.bf16.msra.mxu0 0
    %1047 = vmatprep.subr.bf16.mxu0 0
    %1048 = vmatpush1.bf16.msra.mxu0 0
    %1049 = vmatprep.subr.bf16.mxu0 0
    %1050 = vmatpush1.bf16.msra.mxu0 0
    %1051 = vmatprep.subr.bf16.mxu0 0
    %1052 = vmatpush1.bf16.msra.mxu0 0
    %1053 = vmatprep.subr.bf16.mxu0 0
    %1054 = vmatpush1.bf16.msra.mxu0 0
    %1055 = vmatprep.subr.bf16.mxu0 0
    %1056 = vmatpush1.bf16.msra.mxu0 0
    %1057 = vmatprep.subr.bf16.mxu0 0
    %1058 = vmatpush1.bf16.msra.mxu0 0
    %1059 = vmatprep.mubr.bf16.mxu0 0
    %1060 = vmatmul.mubr.bf16.gmra.mrb[0].mxu0 %v533
    %v1061 = vpop.f32.mrb[0].mxu0
    %v1062 = vadd.f32 %v730, %v1061
    %v1063 = vpop.f32.mrb[0].mxu0
    %v1064 = vpop.f32.mrb[0].mxu0
    %v1065 = vpop.f32.mrb[0].mxu0
    %1066 = vdwg.mxu0
    %1067 = vmatprep.subr.bf16.mxu0 0
    %1068 = vmatpush1.bf16.msra.mxu0 %v903
    %1069 = vmatprep.subr.bf16.mxu0 0
    %1070 = vmatpush1.bf16.msra.mxu0 %v904
    %1071 = vmatprep.subr.bf16.mxu0 0
    %1072 = vmatpush1.bf16.msra.mxu0 0
    %1073 = vmatprep.subr.bf16.mxu0 0
    %1074 = vmatpush1.bf16.msra.mxu0 0
    %1075 = vmatprep.subr.bf16.mxu0 0
    %1076 = vmatpush1.bf16.msra.mxu0 0
    %1077 = vmatprep.subr.bf16.mxu0 0
    %1078 = vmatpush1.bf16.msra.mxu0 0
    %1079 = vmatprep.subr.bf16.mxu0 0
    %1080 = vmatpush1.bf16.msra.mxu0 0
    %1081 = vmatprep.subr.bf16.mxu0 0
    %1082 = vmatpush1.bf16.msra.mxu0 0
    %1083 = vmatprep.subr.bf16.mxu0 0
    %1084 = vmatpush1.bf16.msra.mxu0 0
    %1085 = vmatprep.subr.bf16.mxu0 0
    %1086 = vmatpush1.bf16.msra.mxu0 0
    %1087 = vmatprep.subr.bf16.mxu0 0
    %1088 = vmatpush1.bf16.msra.mxu0 0
    %1089 = vmatprep.subr.bf16.mxu0 0
    %1090 = vmatpush1.bf16.msra.mxu0 0
    %1091 = vmatprep.subr.bf16.mxu0 0
    %1092 = vmatpush1.bf16.msra.mxu0 0
    %1093 = vmatprep.subr.bf16.mxu0 0
    %1094 = vmatpush1.bf16.msra.mxu0 0
    %1095 = vmatprep.subr.bf16.mxu0 0
    %1096 = vmatpush1.bf16.msra.mxu0 0
    %1097 = vmatprep.subr.bf16.mxu0 0
    %1098 = vmatpush1.bf16.msra.mxu0 0
    %1099 = vmatprep.mubr.bf16.mxu0 0
    %1100 = vmatmul.mubr.bf16.gmra.mrb[0].mxu0 %v533
    %v1101 = vpop.f32.mrb[0].mxu0
    %v1102 = vadd.f32 %v734, %v1101
    %v1103 = vpop.f32.mrb[0].mxu0
    %v1104 = vpop.f32.mrb[0].mxu0
    %v1105 = vpop.f32.mrb[0].mxu0
    %1106 = vdwg.mxu0
    %v1107 = vld [vmem:[%s9] sm:$0xf]
    %v1108 = vld [vmem:[%s9 + $0x4] sm:$0xf]
    %v1109 = vld [vmem:[%s9 + $0x8] sm:$0xf]
    %v1110 = vld [vmem:[%s9 + $0xc] sm:$0xf]
    %v1111 = vld [vmem:[%s9 + $0x10] sm:$0xf]
    %v1112 = vld [vmem:[%s9 + $0x14] sm:$0xf]
    %v1113 = vld [vmem:[%s9 + $0x18] sm:$0xf]
    %v1114 = vld [vmem:[%s9 + $0x1c] sm:$0xf]
    %v1115 = vld [vmem:[%s9 + $0x20] sm:$0xf]
    %v1116 = vld [vmem:[%s9 + $0x24] sm:$0xf]
    %v1117 = vld [vmem:[%s9 + $0x28] sm:$0xf]
    %v1118 = vld [vmem:[%s9 + $0x2c] sm:$0xf]
    %v1119 = vld [vmem:[%s9 + $0x30] sm:$0xf]
    %v1120 = vld [vmem:[%s9 + $0x34] sm:$0xf]
    %v1121 = vld [vmem:[%s9 + $0x38] sm:$0xf]
    %v1122 = vld [vmem:[%s9 + $0x3c] sm:$0xf]
    %v1123 = vld [vmem:[%s10] sm:$0x1]
    %v1124 = vld [vmem:[%s10 + $0x1] sm:$0x1]
    %v1125 = vld [vmem:[%s10 + $0x2] sm:$0x1]
    %v1126 = vld [vmem:[%s10 + $0x3] sm:$0x1]
    %v1131 = vlaneseq
    %v1132 = vshrl.u32 %v1131, 7
    %v1133 = vsub.s32 0, %v1132
    %v1134 = vrot.slane %v1123, %v1133
    %v1135 = vlaneseq
    %v1136 = vshrl.u32 %v1135, 7
    %v1137 = vsub.s32 0, %v1136
    %v1138 = vrot.slane %v1124, %v1137
    %v1139 = vlaneseq
    %v1140 = vshrl.u32 %v1139, 7
    %v1141 = vsub.s32 0, %v1140
    %v1142 = vrot.slane %v1125, %v1141
    %v1143 = vlaneseq
    %v1144 = vshrl.u32 %v1143, 7
    %v1145 = vsub.s32 0, %v1144
    %v1146 = vrot.slane %v1126, %v1145
    %v1155 = vunpack.c.l.b16 %v1107
    %v1156 = vunpack.c.l.b16 %v1108
    %v1157 = vunpack.c.l.b16 %v1109
    %v1158 = vunpack.c.l.b16 %v1110
    %v1159 = vpack.c.b16 %v1156, %v1155
    %v1160 = vpack.c.b16 %v1158, %v1157
    %1163 = vmatprep.subr.bf16.mxu0 0
    %1164 = vmatpush1.bf16.msra.mxu0 %v1159
    %1165 = vmatprep.subr.bf16.mxu0 0
    %1166 = vmatpush1.bf16.msra.mxu0 %v1160
    %1167 = vmatprep.subr.bf16.mxu0 0
    %1168 = vmatpush1.bf16.msra.mxu0 0
    %1169 = vmatprep.subr.bf16.mxu0 0
    %1170 = vmatpush1.bf16.msra.mxu0 0
    %1171 = vmatprep.subr.bf16.mxu0 0
    %1172 = vmatpush1.bf16.msra.mxu0 0
    %1173 = vmatprep.subr.bf16.mxu0 0
    %1174 = vmatpush1.bf16.msra.mxu0 0
    %1175 = vmatprep.subr.bf16.mxu0 0
    %1176 = vmatpush1.bf16.msra.mxu0 0
    %1177 = vmatprep.subr.bf16.mxu0 0
    %1178 = vmatpush1.bf16.msra.mxu0 0
    %1179 = vmatprep.subr.bf16.mxu0 0
    %1180 = vmatpush1.bf16.msra.mxu0 0
    %1181 = vmatprep.subr.bf16.mxu0 0
    %1182 = vmatpush1.bf16.msra.mxu0 0
    %1183 = vmatprep.subr.bf16.mxu0 0
    %1184 = vmatpush1.bf16.msra.mxu0 0
    %1185 = vmatprep.subr.bf16.mxu0 0
    %1186 = vmatpush1.bf16.msra.mxu0 0
    %1187 = vmatprep.subr.bf16.mxu0 0
    %1188 = vmatpush1.bf16.msra.mxu0 0
    %1189 = vmatprep.subr.bf16.mxu0 0
    %1190 = vmatpush1.bf16.msra.mxu0 0
    %1191 = vmatprep.subr.bf16.mxu0 0
    %1192 = vmatpush1.bf16.msra.mxu0 0
    %1193 = vmatprep.subr.bf16.mxu0 0
    %1194 = vmatpush1.bf16.msra.mxu0 0
    %1195 = vmatprep.mubr.bf16.mxu0 0
    %1196 = vmatmul.mubr.bf16.gmra.mrb[0].mxu0 %v334
    %v1197 = vpop.f32.mrb[0].mxu0
    %v1198 = vadd.f32 %v1134, %v1197
    %v1199 = vpop.f32.mrb[0].mxu0
    %v1200 = vpop.f32.mrb[0].mxu0
    %v1201 = vpop.f32.mrb[0].mxu0
    %1202 = vdwg.mxu0
    %v1207 = vunpack.c.l.b16 %v1111
    %v1208 = vunpack.c.l.b16 %v1112
    %v1209 = vunpack.c.l.b16 %v1113
    %v1210 = vunpack.c.l.b16 %v1114
    %v1211 = vpack.c.b16 %v1208, %v1207
    %v1212 = vpack.c.b16 %v1210, %v1209
    %1215 = vmatprep.subr.bf16.mxu0 0
    %1216 = vmatpush1.bf16.msra.mxu0 %v1211
    %1217 = vmatprep.subr.bf16.mxu0 0
    %1218 = vmatpush1.bf16.msra.mxu0 %v1212
    %1219 = vmatprep.subr.bf16.mxu0 0
    %1220 = vmatpush1.bf16.msra.mxu0 0
    %1221 = vmatprep.subr.bf16.mxu0 0
    %1222 = vmatpush1.bf16.msra.mxu0 0
    %1223 = vmatprep.subr.bf16.mxu0 0
    %1224 = vmatpush1.bf16.msra.mxu0 0
    %1225 = vmatprep.subr.bf16.mxu0 0
    %1226 = vmatpush1.bf16.msra.mxu0 0
    %1227 = vmatprep.subr.bf16.mxu0 0
    %1228 = vmatpush1.bf16.msra.mxu0 0
    %1229 = vmatprep.subr.bf16.mxu0 0
    %1230 = vmatpush1.bf16.msra.mxu0 0
    %1231 = vmatprep.subr.bf16.mxu0 0
    %1232 = vmatpush1.bf16.msra.mxu0 0
    %1233 = vmatprep.subr.bf16.mxu0 0
    %1234 = vmatpush1.bf16.msra.mxu0 0
    %1235 = vmatprep.subr.bf16.mxu0 0
    %1236 = vmatpush1.bf16.msra.mxu0 0
    %1237 = vmatprep.subr.bf16.mxu0 0
    %1238 = vmatpush1.bf16.msra.mxu0 0
    %1239 = vmatprep.subr.bf16.mxu0 0
    %1240 = vmatpush1.bf16.msra.mxu0 0
    %1241 = vmatprep.subr.bf16.mxu0 0
    %1242 = vmatpush1.bf16.msra.mxu0 0
    %1243 = vmatprep.subr.bf16.mxu0 0
    %1244 = vmatpush1.bf16.msra.mxu0 0
    %1245 = vmatprep.subr.bf16.mxu0 0
    %1246 = vmatpush1.bf16.msra.mxu0 0
    %1247 = vmatprep.mubr.bf16.mxu0 0
    %1248 = vmatmul.mubr.bf16.gmra.mrb[0].mxu0 %v334
    %v1249 = vpop.f32.mrb[0].mxu0
    %v1250 = vadd.f32 %v1138, %v1249
    %v1251 = vpop.f32.mrb[0].mxu0
    %v1252 = vpop.f32.mrb[0].mxu0
    %v1253 = vpop.f32.mrb[0].mxu0
    %1254 = vdwg.mxu0
    %v1259 = vunpack.c.l.b16 %v1115
    %v1260 = vunpack.c.l.b16 %v1116
    %v1261 = vunpack.c.l.b16 %v1117
    %v1262 = vunpack.c.l.b16 %v1118
    %v1263 = vpack.c.b16 %v1260, %v1259
    %v1264 = vpack.c.b16 %v1262, %v1261
    %1267 = vmatprep.subr.bf16.mxu0 0
    %1268 = vmatpush1.bf16.msra.mxu0 %v1263
    %1269 = vmatprep.subr.bf16.mxu0 0
    %1270 = vmatpush1.bf16.msra.mxu0 %v1264
    %1271 = vmatprep.subr.bf16.mxu0 0
    %1272 = vmatpush1.bf16.msra.mxu0 0
    %1273 = vmatprep.subr.bf16.mxu0 0
    %1274 = vmatpush1.bf16.msra.mxu0 0
    %1275 = vmatprep.subr.bf16.mxu0 0
    %1276 = vmatpush1.bf16.msra.mxu0 0
    %1277 = vmatprep.subr.bf16.mxu0 0
    %1278 = vmatpush1.bf16.msra.mxu0 0
    %1279 = vmatprep.subr.bf16.mxu0 0
    %1280 = vmatpush1.bf16.msra.mxu0 0
    %1281 = vmatprep.subr.bf16.mxu0 0
    %1282 = vmatpush1.bf16.msra.mxu0 0
    %1283 = vmatprep.subr.bf16.mxu0 0
    %1284 = vmatpush1.bf16.msra.mxu0 0
    %1285 = vmatprep.subr.bf16.mxu0 0
    %1286 = vmatpush1.bf16.msra.mxu0 0
    %1287 = vmatprep.subr.bf16.mxu0 0
    %1288 = vmatpush1.bf16.msra.mxu0 0
    %1289 = vmatprep.subr.bf16.mxu0 0
    %1290 = vmatpush1.bf16.msra.mxu0 0
    %1291 = vmatprep.subr.bf16.mxu0 0
    %1292 = vmatpush1.bf16.msra.mxu0 0
    %1293 = vmatprep.subr.bf16.mxu0 0
    %1294 = vmatpush1.bf16.msra.mxu0 0
    %1295 = vmatprep.subr.bf16.mxu0 0
    %1296 = vmatpush1.bf16.msra.mxu0 0
    %1297 = vmatprep.subr.bf16.mxu0 0
    %1298 = vmatpush1.bf16.msra.mxu0 0
    %1299 = vmatprep.mubr.bf16.mxu0 0
    %1300 = vmatmul.mubr.bf16.gmra.mrb[0].mxu0 %v334
    %v1301 = vpop.f32.mrb[0].mxu0
    %v1302 = vadd.f32 %v1142, %v1301
    %v1303 = vpop.f32.mrb[0].mxu0
    %v1304 = vpop.f32.mrb[0].mxu0
    %v1305 = vpop.f32.mrb[0].mxu0
    %1306 = vdwg.mxu0
    %v1311 = vunpack.c.l.b16 %v1119
    %v1312 = vunpack.c.l.b16 %v1120
    %v1313 = vunpack.c.l.b16 %v1121
    %v1314 = vunpack.c.l.b16 %v1122
    %v1315 = vpack.c.b16 %v1312, %v1311
    %v1316 = vpack.c.b16 %v1314, %v1313
    %1319 = vmatprep.subr.bf16.mxu0 0
    %1320 = vmatpush1.bf16.msra.mxu0 %v1315
    %1321 = vmatprep.subr.bf16.mxu0 0
    %1322 = vmatpush1.bf16.msra.mxu0 %v1316
    %1323 = vmatprep.subr.bf16.mxu0 0
    %1324 = vmatpush1.bf16.msra.mxu0 0
    %1325 = vmatprep.subr.bf16.mxu0 0
    %1326 = vmatpush1.bf16.msra.mxu0 0
    %1327 = vmatprep.subr.bf16.mxu0 0
    %1328 = vmatpush1.bf16.msra.mxu0 0
    %1329 = vmatprep.subr.bf16.mxu0 0
    %1330 = vmatpush1.bf16.msra.mxu0 0
    %1331 = vmatprep.subr.bf16.mxu0 0
    %1332 = vmatpush1.bf16.msra.mxu0 0
    %1333 = vmatprep.subr.bf16.mxu0 0
    %1334 = vmatpush1.bf16.msra.mxu0 0
    %1335 = vmatprep.subr.bf16.mxu0 0
    %1336 = vmatpush1.bf16.msra.mxu0 0
    %1337 = vmatprep.subr.bf16.mxu0 0
    %1338 = vmatpush1.bf16.msra.mxu0 0
    %1339 = vmatprep.subr.bf16.mxu0 0
    %1340 = vmatpush1.bf16.msra.mxu0 0
    %1341 = vmatprep.subr.bf16.mxu0 0
    %1342 = vmatpush1.bf16.msra.mxu0 0
    %1343 = vmatprep.subr.bf16.mxu0 0
    %1344 = vmatpush1.bf16.msra.mxu0 0
    %1345 = vmatprep.subr.bf16.mxu0 0
    %1346 = vmatpush1.bf16.msra.mxu0 0
    %1347 = vmatprep.subr.bf16.mxu0 0
    %1348 = vmatpush1.bf16.msra.mxu0 0
    %1349 = vmatprep.subr.bf16.mxu0 0
    %1350 = vmatpush1.bf16.msra.mxu0 0
    %1351 = vmatprep.mubr.bf16.mxu0 0
    %1352 = vmatmul.mubr.bf16.gmra.mrb[0].mxu0 %v334
    %v1353 = vpop.f32.mrb[0].mxu0
    %v1354 = vadd.f32 %v1146, %v1353
    %v1355 = vpop.f32.mrb[0].mxu0
    %v1356 = vpop.f32.mrb[0].mxu0
    %v1357 = vpop.f32.mrb[0].mxu0
    %1358 = vdwg.mxu0
    %1359 = vmatprep.subr.bf16.mxu0 0
    %1360 = vmatpush1.bf16.msra.mxu0 %v1159
    %1361 = vmatprep.subr.bf16.mxu0 0
    %1362 = vmatpush1.bf16.msra.mxu0 %v1160
    %1363 = vmatprep.subr.bf16.mxu0 0
    %1364 = vmatpush1.bf16.msra.mxu0 0
    %1365 = vmatprep.subr.bf16.mxu0 0
    %1366 = vmatpush1.bf16.msra.mxu0 0
    %1367 = vmatprep.subr.bf16.mxu0 0
    %1368 = vmatpush1.bf16.msra.mxu0 0
    %1369 = vmatprep.subr.bf16.mxu0 0
    %1370 = vmatpush1.bf16.msra.mxu0 0
    %1371 = vmatprep.subr.bf16.mxu0 0
    %1372 = vmatpush1.bf16.msra.mxu0 0
    %1373 = vmatprep.subr.bf16.mxu0 0
    %1374 = vmatpush1.bf16.msra.mxu0 0
    %1375 = vmatprep.subr.bf16.mxu0 0
    %1376 = vmatpush1.bf16.msra.mxu0 0
    %1377 = vmatprep.subr.bf16.mxu0 0
    %1378 = vmatpush1.bf16.msra.mxu0 0
    %1379 = vmatprep.subr.bf16.mxu0 0
    %1380 = vmatpush1.bf16.msra.mxu0 0
    %1381 = vmatprep.subr.bf16.mxu0 0
    %1382 = vmatpush1.bf16.msra.mxu0 0
    %1383 = vmatprep.subr.bf16.mxu0 0
    %1384 = vmatpush1.bf16.msra.mxu0 0
    %1385 = vmatprep.subr.bf16.mxu0 0
    %1386 = vmatpush1.bf16.msra.mxu0 0
    %1387 = vmatprep.subr.bf16.mxu0 0
    %1388 = vmatpush1.bf16.msra.mxu0 0
    %1389 = vmatprep.subr.bf16.mxu0 0
    %1390 = vmatpush1.bf16.msra.mxu0 0
    %1391 = vmatprep.mubr.bf16.mxu0 0
    %1392 = vmatmul.mubr.bf16.gmra.mrb[0].mxu0 %v533
    %v1393 = vpop.f32.mrb[0].mxu0
    %v1394 = vadd.f32 %v1134, %v1393
    %v1395 = vpop.f32.mrb[0].mxu0
    %v1396 = vpop.f32.mrb[0].mxu0
    %v1397 = vpop.f32.mrb[0].mxu0
    %1398 = vdwg.mxu0
    %1399 = vmatprep.subr.bf16.mxu0 0
    %1400 = vmatpush1.bf16.msra.mxu0 %v1211
    %1401 = vmatprep.subr.bf16.mxu0 0
    %1402 = vmatpush1.bf16.msra.mxu0 %v1212
    %1403 = vmatprep.subr.bf16.mxu0 0
    %1404 = vmatpush1.bf16.msra.mxu0 0
    %1405 = vmatprep.subr.bf16.mxu0 0
    %1406 = vmatpush1.bf16.msra.mxu0 0
    %1407 = vmatprep.subr.bf16.mxu0 0
    %1408 = vmatpush1.bf16.msra.mxu0 0
    %1409 = vmatprep.subr.bf16.mxu0 0
    %1410 = vmatpush1.bf16.msra.mxu0 0
    %1411 = vmatprep.subr.bf16.mxu0 0
    %1412 = vmatpush1.bf16.msra.mxu0 0
    %1413 = vmatprep.subr.bf16.mxu0 0
    %1414 = vmatpush1.bf16.msra.mxu0 0
    %1415 = vmatprep.subr.bf16.mxu0 0
    %1416 = vmatpush1.bf16.msra.mxu0 0
    %1417 = vmatprep.subr.bf16.mxu0 0
    %1418 = vmatpush1.bf16.msra.mxu0 0
    %1419 = vmatprep.subr.bf16.mxu0 0
    %1420 = vmatpush1.bf16.msra.mxu0 0
    %1421 = vmatprep.subr.bf16.mxu0 0
    %1422 = vmatpush1.bf16.msra.mxu0 0
    %1423 = vmatprep.subr.bf16.mxu0 0
    %1424 = vmatpush1.bf16.msra.mxu0 0
    %1425 = vmatprep.subr.bf16.mxu0 0
    %1426 = vmatpush1.bf16.msra.mxu0 0
    %1427 = vmatprep.subr.bf16.mxu0 0
    %1428 = vmatpush1.bf16.msra.mxu0 0
    %1429 = vmatprep.subr.bf16.mxu0 0
    %1430 = vmatpush1.bf16.msra.mxu0 0
    %1431 = vmatprep.mubr.bf16.mxu0 0
    %1432 = vmatmul.mubr.bf16.gmra.mrb[0].mxu0 %v533
    %v1433 = vpop.f32.mrb[0].mxu0
    %v1434 = vadd.f32 %v1138, %v1433
    %v1435 = vpop.f32.mrb[0].mxu0
    %v1436 = vpop.f32.mrb[0].mxu0
    %v1437 = vpop.f32.mrb[0].mxu0
    %1438 = vdwg.mxu0
    %1439 = vmatprep.subr.bf16.mxu0 0
    %1440 = vmatpush1.bf16.msra.mxu0 %v1263
    %1441 = vmatprep.subr.bf16.mxu0 0
    %1442 = vmatpush1.bf16.msra.mxu0 %v1264
    %1443 = vmatprep.subr.bf16.mxu0 0
    %1444 = vmatpush1.bf16.msra.mxu0 0
    %1445 = vmatprep.subr.bf16.mxu0 0
    %1446 = vmatpush1.bf16.msra.mxu0 0
    %1447 = vmatprep.subr.bf16.mxu0 0
    %1448 = vmatpush1.bf16.msra.mxu0 0
    %1449 = vmatprep.subr.bf16.mxu0 0
    %1450 = vmatpush1.bf16.msra.mxu0 0
    %1451 = vmatprep.subr.bf16.mxu0 0
    %1452 = vmatpush1.bf16.msra.mxu0 0
    %1453 = vmatprep.subr.bf16.mxu0 0
    %1454 = vmatpush1.bf16.msra.mxu0 0
    %1455 = vmatprep.subr.bf16.mxu0 0
    %1456 = vmatpush1.bf16.msra.mxu0 0
    %1457 = vmatprep.subr.bf16.mxu0 0
    %1458 = vmatpush1.bf16.msra.mxu0 0
    %1459 = vmatprep.subr.bf16.mxu0 0
    %1460 = vmatpush1.bf16.msra.mxu0 0
    %1461 = vmatprep.subr.bf16.mxu0 0
    %1462 = vmatpush1.bf16.msra.mxu0 0
    %1463 = vmatprep.subr.bf16.mxu0 0
    %1464 = vmatpush1.bf16.msra.mxu0 0
    %1465 = vmatprep.subr.bf16.mxu0 0
    %1466 = vmatpush1.bf16.msra.mxu0 0
    %1467 = vmatprep.subr.bf16.mxu0 0
    %1468 = vmatpush1.bf16.msra.mxu0 0
    %1469 = vmatprep.subr.bf16.mxu0 0
    %1470 = vmatpush1.bf16.msra.mxu0 0
    %1471 = vmatprep.mubr.bf16.mxu0 0
    %1472 = vmatmul.mubr.bf16.gmra.mrb[0].mxu0 %v533
    %v1473 = vpop.f32.mrb[0].mxu0
    %v1474 = vadd.f32 %v1142, %v1473
    %v1475 = vpop.f32.mrb[0].mxu0
    %v1476 = vpop.f32.mrb[0].mxu0
    %v1477 = vpop.f32.mrb[0].mxu0
    %1478 = vdwg.mxu0
    %1479 = vmatprep.subr.bf16.mxu0 0
    %1480 = vmatpush1.bf16.msra.mxu0 %v1315
    %1481 = vmatprep.subr.bf16.mxu0 0
    %1482 = vmatpush1.bf16.msra.mxu0 %v1316
    %1483 = vmatprep.subr.bf16.mxu0 0
    %1484 = vmatpush1.bf16.msra.mxu0 0
    %1485 = vmatprep.subr.bf16.mxu0 0
    %1486 = vmatpush1.bf16.msra.mxu0 0
    %1487 = vmatprep.subr.bf16.mxu0 0
    %1488 = vmatpush1.bf16.msra.mxu0 0
    %1489 = vmatprep.subr.bf16.mxu0 0
    %1490 = vmatpush1.bf16.msra.mxu0 0
    %1491 = vmatprep.subr.bf16.mxu0 0
    %1492 = vmatpush1.bf16.msra.mxu0 0
    %1493 = vmatprep.subr.bf16.mxu0 0
    %1494 = vmatpush1.bf16.msra.mxu0 0
    %1495 = vmatprep.subr.bf16.mxu0 0
    %1496 = vmatpush1.bf16.msra.mxu0 0
    %1497 = vmatprep.subr.bf16.mxu0 0
    %1498 = vmatpush1.bf16.msra.mxu0 0
    %1499 = vmatprep.subr.bf16.mxu0 0
    %1500 = vmatpush1.bf16.msra.mxu0 0
    %1501 = vmatprep.subr.bf16.mxu0 0
    %1502 = vmatpush1.bf16.msra.mxu0 0
    %1503 = vmatprep.subr.bf16.mxu0 0
    %1504 = vmatpush1.bf16.msra.mxu0 0
    %1505 = vmatprep.subr.bf16.mxu0 0
    %1506 = vmatpush1.bf16.msra.mxu0 0
    %1507 = vmatprep.subr.bf16.mxu0 0
    %1508 = vmatpush1.bf16.msra.mxu0 0
    %1509 = vmatprep.subr.bf16.mxu0 0
    %1510 = vmatpush1.bf16.msra.mxu0 0
    %1511 = vmatprep.mubr.bf16.mxu0 0
    %1512 = vmatmul.mubr.bf16.gmra.mrb[0].mxu0 %v533
    %v1513 = vpop.f32.mrb[0].mxu0
    %v1514 = vadd.f32 %v1146, %v1513
    %v1515 = vpop.f32.mrb[0].mxu0
    %v1516 = vpop.f32.mrb[0].mxu0
    %v1517 = vpop.f32.mrb[0].mxu0
    %1518 = vdwg.mxu0
    %v1519 = vpack.c.bf16 %v371, %v371
    %v1520 = vpack.c.bf16 %v423, %v423
    %v1521 = vpack.c.bf16 %v475, %v475
    %v1522 = vpack.c.bf16 %v527, %v527
    %v1523 = vpack.c.bf16 %v570, %v570
    %v1524 = vpack.c.bf16 %v610, %v610
    %v1525 = vpack.c.bf16 %v650, %v650
    %v1526 = vpack.c.bf16 %v690, %v690
    %v1527 = vpack.c.bf16 %v786, %v786
    %v1528 = vpack.c.bf16 %v838, %v838
    %v1529 = vpack.c.bf16 %v890, %v890
    %v1530 = vpack.c.bf16 %v942, %v942
    %v1531 = vpack.c.bf16 %v982, %v982
    %v1532 = vpack.c.bf16 %v1022, %v1022
    %v1533 = vpack.c.bf16 %v1062, %v1062
    %v1534 = vpack.c.bf16 %v1102, %v1102
    %vm1535 = vcmask 64512
    %v1537 = vsel %vm1535, %v1519, 0
    %v1540 = vsel %vm1535, %v1527, 0
    %1542 = vmatprep.subr.bf16.mxu0 0
    %1543 = vmatpush1.bf16.xpose.msra.mxu0 %v1540
    %1544 = vmatprep.subr.bf16.mxu0 0
    %1545 = vmatpush1.bf16.xpose.msra.mxu0 0
    %1546 = vmatprep.subr.bf16.mxu0 0
    %1547 = vmatpush1.bf16.xpose.msra.mxu0 0
    %1548 = vmatprep.subr.bf16.mxu0 0
    %1549 = vmatpush1.bf16.xpose.msra.mxu0 0
    %1550 = vmatprep.subr.bf16.mxu0 0
    %1551 = vmatpush1.bf16.xpose.msra.mxu0 0
    %1552 = vmatprep.subr.bf16.mxu0 0
    %1553 = vmatpush1.bf16.xpose.msra.mxu0 0
    %1554 = vmatprep.subr.bf16.mxu0 0
    %1555 = vmatpush1.bf16.xpose.msra.mxu0 0
    %1556 = vmatprep.subr.bf16.mxu0 0
    %1557 = vmatpush1.bf16.xpose.msra.mxu0 0
    %1558 = vmatprep.subr.bf16.mxu0 0
    %1559 = vmatpush1.bf16.xpose.msra.mxu0 0
    %1560 = vmatprep.subr.bf16.mxu0 0
    %1561 = vmatpush1.bf16.xpose.msra.mxu0 0
    %1562 = vmatprep.subr.bf16.mxu0 0
    %1563 = vmatpush1.bf16.xpose.msra.mxu0 0
    %1564 = vmatprep.subr.bf16.mxu0 0
    %1565 = vmatpush1.bf16.xpose.msra.mxu0 0
    %1566 = vmatprep.subr.bf16.mxu0 0
    %1567 = vmatpush1.bf16.xpose.msra.mxu0 0
    %1568 = vmatprep.subr.bf16.mxu0 0
    %1569 = vmatpush1.bf16.xpose.msra.mxu0 0
    %1570 = vmatprep.subr.bf16.mxu0 0
    %1571 = vmatpush1.bf16.xpose.msra.mxu0 0
    %1572 = vmatprep.subr.bf16.mxu0 0
    %1573 = vmatpush1.bf16.xpose.msra.mxu0 0
    %1574 = vmatprep.mubr.bf16.mxu0 0
    %1575 = vmatmul.mubr.bf16.gmra.mrb[0].mxu0 %v1537
    %v1576 = vpop.f32.mrb[0].mxu0
    %v1577 = vadd.f32 %v228, %v1576
    %v1578 = vpop.f32.mrb[0].mxu0
    %v1579 = vpop.f32.mrb[0].mxu0
    %v1580 = vpop.f32.mrb[0].mxu0
    %1581 = vdwg.mxu0
    %v1583 = vsel %vm1535, %v1520, 0
    %v1586 = vsel %vm1535, %v1528, 0
    %1588 = vmatprep.subr.bf16.mxu0 0
    %1589 = vmatpush1.bf16.xpose.msra.mxu0 %v1586
    %1590 = vmatprep.subr.bf16.mxu0 0
    %1591 = vmatpush1.bf16.xpose.msra.mxu0 0
    %1592 = vmatprep.subr.bf16.mxu0 0
    %1593 = vmatpush1.bf16.xpose.msra.mxu0 0
    %1594 = vmatprep.subr.bf16.mxu0 0
    %1595 = vmatpush1.bf16.xpose.msra.mxu0 0
    %1596 = vmatprep.subr.bf16.mxu0 0
    %1597 = vmatpush1.bf16.xpose.msra.mxu0 0
    %1598 = vmatprep.subr.bf16.mxu0 0
    %1599 = vmatpush1.bf16.xpose.msra.mxu0 0
    %1600 = vmatprep.subr.bf16.mxu0 0
    %1601 = vmatpush1.bf16.xpose.msra.mxu0 0
    %1602 = vmatprep.subr.bf16.mxu0 0
    %1603 = vmatpush1.bf16.xpose.msra.mxu0 0
    %1604 = vmatprep.subr.bf16.mxu0 0
    %1605 = vmatpush1.bf16.xpose.msra.mxu0 0
    %1606 = vmatprep.subr.bf16.mxu0 0
    %1607 = vmatpush1.bf16.xpose.msra.mxu0 0
    %1608 = vmatprep.subr.bf16.mxu0 0
    %1609 = vmatpush1.bf16.xpose.msra.mxu0 0
    %1610 = vmatprep.subr.bf16.mxu0 0
    %1611 = vmatpush1.bf16.xpose.msra.mxu0 0
    %1612 = vmatprep.subr.bf16.mxu0 0
    %1613 = vmatpush1.bf16.xpose.msra.mxu0 0
    %1614 = vmatprep.subr.bf16.mxu0 0
    %1615 = vmatpush1.bf16.xpose.msra.mxu0 0
    %1616 = vmatprep.subr.bf16.mxu0 0
    %1617 = vmatpush1.bf16.xpose.msra.mxu0 0
    %1618 = vmatprep.subr.bf16.mxu0 0
    %1619 = vmatpush1.bf16.xpose.msra.mxu0 0
    %1620 = vmatprep.mubr.bf16.mxu0 0
    %1621 = vmatmul.mubr.bf16.gmra.mrb[0].mxu0 %v1583
    %v1622 = vpop.f32.mrb[0].mxu0
    %v1623 = vadd.f32 %v228, %v1622
    %v1624 = vpop.f32.mrb[0].mxu0
    %v1625 = vpop.f32.mrb[0].mxu0
    %v1626 = vpop.f32.mrb[0].mxu0
    %1627 = vdwg.mxu0
    %v1629 = vsel %vm1535, %v1521, 0
    %v1632 = vsel %vm1535, %v1529, 0
    %1634 = vmatprep.subr.bf16.mxu0 0
    %1635 = vmatpush1.bf16.xpose.msra.mxu0 %v1632
    %1636 = vmatprep.subr.bf16.mxu0 0
    %1637 = vmatpush1.bf16.xpose.msra.mxu0 0
    %1638 = vmatprep.subr.bf16.mxu0 0
    %1639 = vmatpush1.bf16.xpose.msra.mxu0 0
    %1640 = vmatprep.subr.bf16.mxu0 0
    %1641 = vmatpush1.bf16.xpose.msra.mxu0 0
    %1642 = vmatprep.subr.bf16.mxu0 0
    %1643 = vmatpush1.bf16.xpose.msra.mxu0 0
    %1644 = vmatprep.subr.bf16.mxu0 0
    %1645 = vmatpush1.bf16.xpose.msra.mxu0 0
    %1646 = vmatprep.subr.bf16.mxu0 0
    %1647 = vmatpush1.bf16.xpose.msra.mxu0 0
    %1648 = vmatprep.subr.bf16.mxu0 0
    %1649 = vmatpush1.bf16.xpose.msra.mxu0 0
    %1650 = vmatprep.subr.bf16.mxu0 0
    %1651 = vmatpush1.bf16.xpose.msra.mxu0 0
    %1652 = vmatprep.subr.bf16.mxu0 0
    %1653 = vmatpush1.bf16.xpose.msra.mxu0 0
    %1654 = vmatprep.subr.bf16.mxu0 0
    %1655 = vmatpush1.bf16.xpose.msra.mxu0 0
    %1656 = vmatprep.subr.bf16.mxu0 0
    %1657 = vmatpush1.bf16.xpose.msra.mxu0 0
    %1658 = vmatprep.subr.bf16.mxu0 0
    %1659 = vmatpush1.bf16.xpose.msra.mxu0 0
    %1660 = vmatprep.subr.bf16.mxu0 0
    %1661 = vmatpush1.bf16.xpose.msra.mxu0 0
    %1662 = vmatprep.subr.bf16.mxu0 0
    %1663 = vmatpush1.bf16.xpose.msra.mxu0 0
    %1664 = vmatprep.subr.bf16.mxu0 0
    %1665 = vmatpush1.bf16.xpose.msra.mxu0 0
    %1666 = vmatprep.mubr.bf16.mxu0 0
    %1667 = vmatmul.mubr.bf16.gmra.mrb[0].mxu0 %v1629
    %v1668 = vpop.f32.mrb[0].mxu0
    %v1669 = vadd.f32 %v228, %v1668
    %v1670 = vpop.f32.mrb[0].mxu0
    %v1671 = vpop.f32.mrb[0].mxu0
    %v1672 = vpop.f32.mrb[0].mxu0
    %1673 = vdwg.mxu0
    %v1675 = vsel %vm1535, %v1522, 0
    %v1678 = vsel %vm1535, %v1530, 0
    %1680 = vmatprep.subr.bf16.mxu0 0
    %1681 = vmatpush1.bf16.xpose.msra.mxu0 %v1678
    %1682 = vmatprep.subr.bf16.mxu0 0
    %1683 = vmatpush1.bf16.xpose.msra.mxu0 0
    %1684 = vmatprep.subr.bf16.mxu0 0
    %1685 = vmatpush1.bf16.xpose.msra.mxu0 0
    %1686 = vmatprep.subr.bf16.mxu0 0
    %1687 = vmatpush1.bf16.xpose.msra.mxu0 0
    %1688 = vmatprep.subr.bf16.mxu0 0
    %1689 = vmatpush1.bf16.xpose.msra.mxu0 0
    %1690 = vmatprep.subr.bf16.mxu0 0
    %1691 = vmatpush1.bf16.xpose.msra.mxu0 0
    %1692 = vmatprep.subr.bf16.mxu0 0
    %1693 = vmatpush1.bf16.xpose.msra.mxu0 0
    %1694 = vmatprep.subr.bf16.mxu0 0
    %1695 = vmatpush1.bf16.xpose.msra.mxu0 0
    %1696 = vmatprep.subr.bf16.mxu0 0
    %1697 = vmatpush1.bf16.xpose.msra.mxu0 0
    %1698 = vmatprep.subr.bf16.mxu0 0
    %1699 = vmatpush1.bf16.xpose.msra.mxu0 0
    %1700 = vmatprep.subr.bf16.mxu0 0
    %1701 = vmatpush1.bf16.xpose.msra.mxu0 0
    %1702 = vmatprep.subr.bf16.mxu0 0
    %1703 = vmatpush1.bf16.xpose.msra.mxu0 0
    %1704 = vmatprep.subr.bf16.mxu0 0
    %1705 = vmatpush1.bf16.xpose.msra.mxu0 0
    %1706 = vmatprep.subr.bf16.mxu0 0
    %1707 = vmatpush1.bf16.xpose.msra.mxu0 0
    %1708 = vmatprep.subr.bf16.mxu0 0
    %1709 = vmatpush1.bf16.xpose.msra.mxu0 0
    %1710 = vmatprep.subr.bf16.mxu0 0
    %1711 = vmatpush1.bf16.xpose.msra.mxu0 0
    %1712 = vmatprep.mubr.bf16.mxu0 0
    %1713 = vmatmul.mubr.bf16.gmra.mrb[0].mxu0 %v1675
    %v1714 = vpop.f32.mrb[0].mxu0
    %v1715 = vadd.f32 %v228, %v1714
    %v1716 = vpop.f32.mrb[0].mxu0
    %v1717 = vpop.f32.mrb[0].mxu0
    %v1718 = vpop.f32.mrb[0].mxu0
    %1719 = vdwg.mxu0
    %v1721 = vsel %vm1535, %v1523, 0
    %v1724 = vsel %vm1535, %v1531, 0
    %1726 = vmatprep.subr.bf16.mxu0 0
    %1727 = vmatpush1.bf16.xpose.msra.mxu0 %v1724
    %1728 = vmatprep.subr.bf16.mxu0 0
    %1729 = vmatpush1.bf16.xpose.msra.mxu0 0
    %1730 = vmatprep.subr.bf16.mxu0 0
    %1731 = vmatpush1.bf16.xpose.msra.mxu0 0
    %1732 = vmatprep.subr.bf16.mxu0 0
    %1733 = vmatpush1.bf16.xpose.msra.mxu0 0
    %1734 = vmatprep.subr.bf16.mxu0 0
    %1735 = vmatpush1.bf16.xpose.msra.mxu0 0
    %1736 = vmatprep.subr.bf16.mxu0 0
    %1737 = vmatpush1.bf16.xpose.msra.mxu0 0
    %1738 = vmatprep.subr.bf16.mxu0 0
    %1739 = vmatpush1.bf16.xpose.msra.mxu0 0
    %1740 = vmatprep.subr.bf16.mxu0 0
    %1741 = vmatpush1.bf16.xpose.msra.mxu0 0
    %1742 = vmatprep.subr.bf16.mxu0 0
    %1743 = vmatpush1.bf16.xpose.msra.mxu0 0
    %1744 = vmatprep.subr.bf16.mxu0 0
    %1745 = vmatpush1.bf16.xpose.msra.mxu0 0
    %1746 = vmatprep.subr.bf16.mxu0 0
    %1747 = vmatpush1.bf16.xpose.msra.mxu0 0
    %1748 = vmatprep.subr.bf16.mxu0 0
    %1749 = vmatpush1.bf16.xpose.msra.mxu0 0
    %1750 = vmatprep.subr.bf16.mxu0 0
    %1751 = vmatpush1.bf16.xpose.msra.mxu0 0
    %1752 = vmatprep.subr.bf16.mxu0 0
    %1753 = vmatpush1.bf16.xpose.msra.mxu0 0
    %1754 = vmatprep.subr.bf16.mxu0 0
    %1755 = vmatpush1.bf16.xpose.msra.mxu0 0
    %1756 = vmatprep.subr.bf16.mxu0 0
    %1757 = vmatpush1.bf16.xpose.msra.mxu0 0
    %1758 = vmatprep.mubr.bf16.mxu0 0
    %1759 = vmatmul.mubr.bf16.gmra.mrb[0].mxu0 %v1721
    %v1760 = vpop.f32.mrb[0].mxu0
    %v1761 = vadd.f32 %v228, %v1760
    %v1762 = vpop.f32.mrb[0].mxu0
    %v1763 = vpop.f32.mrb[0].mxu0
    %v1764 = vpop.f32.mrb[0].mxu0
    %1765 = vdwg.mxu0
    %v1767 = vsel %vm1535, %v1524, 0
    %v1770 = vsel %vm1535, %v1532, 0
    %1772 = vmatprep.subr.bf16.mxu0 0
    %1773 = vmatpush1.bf16.xpose.msra.mxu0 %v1770
    %1774 = vmatprep.subr.bf16.mxu0 0
    %1775 = vmatpush1.bf16.xpose.msra.mxu0 0
    %1776 = vmatprep.subr.bf16.mxu0 0
    %1777 = vmatpush1.bf16.xpose.msra.mxu0 0
    %1778 = vmatprep.subr.bf16.mxu0 0
    %1779 = vmatpush1.bf16.xpose.msra.mxu0 0
    %1780 = vmatprep.subr.bf16.mxu0 0
    %1781 = vmatpush1.bf16.xpose.msra.mxu0 0
    %1782 = vmatprep.subr.bf16.mxu0 0
    %1783 = vmatpush1.bf16.xpose.msra.mxu0 0
    %1784 = vmatprep.subr.bf16.mxu0 0
    %1785 = vmatpush1.bf16.xpose.msra.mxu0 0
    %1786 = vmatprep.subr.bf16.mxu0 0
    %1787 = vmatpush1.bf16.xpose.msra.mxu0 0
    %1788 = vmatprep.subr.bf16.mxu0 0
    %1789 = vmatpush1.bf16.xpose.msra.mxu0 0
    %1790 = vmatprep.subr.bf16.mxu0 0
    %1791 = vmatpush1.bf16.xpose.msra.mxu0 0
    %1792 = vmatprep.subr.bf16.mxu0 0
    %1793 = vmatpush1.bf16.xpose.msra.mxu0 0
    %1794 = vmatprep.subr.bf16.mxu0 0
    %1795 = vmatpush1.bf16.xpose.msra.mxu0 0
    %1796 = vmatprep.subr.bf16.mxu0 0
    %1797 = vmatpush1.bf16.xpose.msra.mxu0 0
    %1798 = vmatprep.subr.bf16.mxu0 0
    %1799 = vmatpush1.bf16.xpose.msra.mxu0 0
    %1800 = vmatprep.subr.bf16.mxu0 0
    %1801 = vmatpush1.bf16.xpose.msra.mxu0 0
    %1802 = vmatprep.subr.bf16.mxu0 0
    %1803 = vmatpush1.bf16.xpose.msra.mxu0 0
    %1804 = vmatprep.mubr.bf16.mxu0 0
    %1805 = vmatmul.mubr.bf16.gmra.mrb[0].mxu0 %v1767
    %v1806 = vpop.f32.mrb[0].mxu0
    %v1807 = vadd.f32 %v228, %v1806
    %v1808 = vpop.f32.mrb[0].mxu0
    %v1809 = vpop.f32.mrb[0].mxu0
    %v1810 = vpop.f32.mrb[0].mxu0
    %1811 = vdwg.mxu0
    %v1813 = vsel %vm1535, %v1525, 0
    %v1816 = vsel %vm1535, %v1533, 0
    %1818 = vmatprep.subr.bf16.mxu0 0
    %1819 = vmatpush1.bf16.xpose.msra.mxu0 %v1816
    %1820 = vmatprep.subr.bf16.mxu0 0
    %1821 = vmatpush1.bf16.xpose.msra.mxu0 0
    %1822 = vmatprep.subr.bf16.mxu0 0
    %1823 = vmatpush1.bf16.xpose.msra.mxu0 0
    %1824 = vmatprep.subr.bf16.mxu0 0
    %1825 = vmatpush1.bf16.xpose.msra.mxu0 0
    %1826 = vmatprep.subr.bf16.mxu0 0
    %1827 = vmatpush1.bf16.xpose.msra.mxu0 0
    %1828 = vmatprep.subr.bf16.mxu0 0
    %1829 = vmatpush1.bf16.xpose.msra.mxu0 0
    %1830 = vmatprep.subr.bf16.mxu0 0
    %1831 = vmatpush1.bf16.xpose.msra.mxu0 0
    %1832 = vmatprep.subr.bf16.mxu0 0
    %1833 = vmatpush1.bf16.xpose.msra.mxu0 0
    %1834 = vmatprep.subr.bf16.mxu0 0
    %1835 = vmatpush1.bf16.xpose.msra.mxu0 0
    %1836 = vmatprep.subr.bf16.mxu0 0
    %1837 = vmatpush1.bf16.xpose.msra.mxu0 0
    %1838 = vmatprep.subr.bf16.mxu0 0
    %1839 = vmatpush1.bf16.xpose.msra.mxu0 0
    %1840 = vmatprep.subr.bf16.mxu0 0
    %1841 = vmatpush1.bf16.xpose.msra.mxu0 0
    %1842 = vmatprep.subr.bf16.mxu0 0
    %1843 = vmatpush1.bf16.xpose.msra.mxu0 0
    %1844 = vmatprep.subr.bf16.mxu0 0
    %1845 = vmatpush1.bf16.xpose.msra.mxu0 0
    %1846 = vmatprep.subr.bf16.mxu0 0
    %1847 = vmatpush1.bf16.xpose.msra.mxu0 0
    %1848 = vmatprep.subr.bf16.mxu0 0
    %1849 = vmatpush1.bf16.xpose.msra.mxu0 0
    %1850 = vmatprep.mubr.bf16.mxu0 0
    %1851 = vmatmul.mubr.bf16.gmra.mrb[0].mxu0 %v1813
    %v1852 = vpop.f32.mrb[0].mxu0
    %v1853 = vadd.f32 %v228, %v1852
    %v1854 = vpop.f32.mrb[0].mxu0
    %v1855 = vpop.f32.mrb[0].mxu0
    %v1856 = vpop.f32.mrb[0].mxu0
    %1857 = vdwg.mxu0
    %v1859 = vsel %vm1535, %v1526, 0
    %v1862 = vsel %vm1535, %v1534, 0
    %1864 = vmatprep.subr.bf16.mxu0 0
    %1865 = vmatpush1.bf16.xpose.msra.mxu0 %v1862
    %1866 = vmatprep.subr.bf16.mxu0 0
    %1867 = vmatpush1.bf16.xpose.msra.mxu0 0
    %1868 = vmatprep.subr.bf16.mxu0 0
    %1869 = vmatpush1.bf16.xpose.msra.mxu0 0
    %1870 = vmatprep.subr.bf16.mxu0 0
    %1871 = vmatpush1.bf16.xpose.msra.mxu0 0
    %1872 = vmatprep.subr.bf16.mxu0 0
    %1873 = vmatpush1.bf16.xpose.msra.mxu0 0
    %1874 = vmatprep.subr.bf16.mxu0 0
    %1875 = vmatpush1.bf16.xpose.msra.mxu0 0
    %1876 = vmatprep.subr.bf16.mxu0 0
    %1877 = vmatpush1.bf16.xpose.msra.mxu0 0
    %1878 = vmatprep.subr.bf16.mxu0 0
    %1879 = vmatpush1.bf16.xpose.msra.mxu0 0
    %1880 = vmatprep.subr.bf16.mxu0 0
    %1881 = vmatpush1.bf16.xpose.msra.mxu0 0
    %1882 = vmatprep.subr.bf16.mxu0 0
    %1883 = vmatpush1.bf16.xpose.msra.mxu0 0
    %1884 = vmatprep.subr.bf16.mxu0 0
    %1885 = vmatpush1.bf16.xpose.msra.mxu0 0
    %1886 = vmatprep.subr.bf16.mxu0 0
    %1887 = vmatpush1.bf16.xpose.msra.mxu0 0
    %1888 = vmatprep.subr.bf16.mxu0 0
    %1889 = vmatpush1.bf16.xpose.msra.mxu0 0
    %1890 = vmatprep.subr.bf16.mxu0 0
    %1891 = vmatpush1.bf16.xpose.msra.mxu0 0
    %1892 = vmatprep.subr.bf16.mxu0 0
    %1893 = vmatpush1.bf16.xpose.msra.mxu0 0
    %1894 = vmatprep.subr.bf16.mxu0 0
    %1895 = vmatpush1.bf16.xpose.msra.mxu0 0
    %1896 = vmatprep.mubr.bf16.mxu0 0
    %1897 = vmatmul.mubr.bf16.gmra.mrb[0].mxu0 %v1859
    %v1898 = vpop.f32.mrb[0].mxu0
    %v1899 = vadd.f32 %v228, %v1898
    %v1900 = vpop.f32.mrb[0].mxu0
    %v1901 = vpop.f32.mrb[0].mxu0
    %v1902 = vpop.f32.mrb[0].mxu0
    %1903 = vdwg.mxu0
    %v1904 = vsel %vm1535, %v1577, -inf
    %1905 = vmax.xlane.f32.xlu0 %v1904
    %v1906 = vpop.xlane.xlu0 %1905
    %v1907 = vsel %vm1535, %v1623, -inf
    %1908 = vmax.xlane.f32.xlu0 %v1907
    %v1909 = vpop.xlane.xlu0 %1908
    %v1910 = vsel %vm1535, %v1669, -inf
    %1911 = vmax.xlane.f32.xlu0 %v1910
    %v1912 = vpop.xlane.xlu0 %1911
    %v1913 = vsel %vm1535, %v1715, -inf
    %1914 = vmax.xlane.f32.xlu0 %v1913
    %v1915 = vpop.xlane.xlu0 %1914
    %v1916 = vsel %vm1535, %v1761, -inf
    %1917 = vmax.xlane.f32.xlu0 %v1916
    %v1918 = vpop.xlane.xlu0 %1917
    %v1919 = vsel %vm1535, %v1807, -inf
    %1920 = vmax.xlane.f32.xlu0 %v1919
    %v1921 = vpop.xlane.xlu0 %1920
    %v1922 = vsel %vm1535, %v1853, -inf
    %1923 = vmax.xlane.f32.xlu0 %v1922
    %v1924 = vpop.xlane.xlu0 %1923
    %v1925 = vsel %vm1535, %v1899, -inf
    %1926 = vmax.xlane.f32.xlu0 %v1925
    %v1927 = vpop.xlane.xlu0 %1926
    %v1928 = vsub.f32 %v1577, %v1906
    %v1929 = vsub.f32 %v1623, %v1909
    %v1930 = vsub.f32 %v1669, %v1912
    %v1931 = vsub.f32 %v1715, %v1915
    %v1932 = vsub.f32 %v1761, %v1918
    %v1933 = vsub.f32 %v1807, %v1921
    %v1934 = vsub.f32 %v1853, %v1924
    %v1935 = vsub.f32 %v1899, %v1927
    %v1936 = vmul.f32 %v1928, 1.442695
    %v1937 = vpow.pop %v1936
    %v1938 = vmul.f32 %v1929, 1.442695
    %v1939 = vpow.pop %v1938
    %v1940 = vmul.f32 %v1930, 1.442695
    %v1941 = vpow.pop %v1940
    %v1942 = vmul.f32 %v1931, 1.442695
    %v1943 = vpow.pop %v1942
    %v1944 = vmul.f32 %v1932, 1.442695
    %v1945 = vpow.pop %v1944
    %v1946 = vmul.f32 %v1933, 1.442695
    %v1947 = vpow.pop %v1946
    %v1948 = vmul.f32 %v1934, 1.442695
    %v1949 = vpow.pop %v1948
    %v1950 = vmul.f32 %v1935, 1.442695
    %v1951 = vpow.pop %v1950
    %v1952 = vsel %vm1535, %v1937, 0.0
    %1953 = vadd.xlane.f32.xlu0 %v1952
    %v1954 = vpop.xlane.xlu0 %1953
    %v1955 = vsel %vm1535, %v1939, 0.0
    %1956 = vadd.xlane.f32.xlu0 %v1955
    %v1957 = vpop.xlane.xlu0 %1956
    %v1958 = vsel %vm1535, %v1941, 0.0
    %1959 = vadd.xlane.f32.xlu0 %v1958
    %v1960 = vpop.xlane.xlu0 %1959
    %v1961 = vsel %vm1535, %v1943, 0.0
    %1962 = vadd.xlane.f32.xlu0 %v1961
    %v1963 = vpop.xlane.xlu0 %1962
    %v1964 = vsel %vm1535, %v1945, 0.0
    %1965 = vadd.xlane.f32.xlu0 %v1964
    %v1966 = vpop.xlane.xlu0 %1965
    %v1967 = vsel %vm1535, %v1947, 0.0
    %1968 = vadd.xlane.f32.xlu0 %v1967
    %v1969 = vpop.xlane.xlu0 %1968
    %v1970 = vsel %vm1535, %v1949, 0.0
    %1971 = vadd.xlane.f32.xlu0 %v1970
    %v1972 = vpop.xlane.xlu0 %1971
    %v1973 = vsel %vm1535, %v1951, 0.0
    %1974 = vadd.xlane.f32.xlu0 %v1973
    %v1975 = vpop.xlane.xlu0 %1974
    %v1976 = vrcp.pop %v1954
    %v1977 = vrcp.pop %v1957
    %v1978 = vrcp.pop %v1960
    %v1979 = vrcp.pop %v1963
    %v1980 = vrcp.pop %v1966
    %v1981 = vrcp.pop %v1969
    %v1982 = vrcp.pop %v1972
    %v1983 = vrcp.pop %v1975
    %v1984 = vmul.f32 %v1937, %v1976
    %v1985 = vmul.f32 %v1939, %v1977
    %v1986 = vmul.f32 %v1941, %v1978
    %v1987 = vmul.f32 %v1943, %v1979
    %v1988 = vmul.f32 %v1945, %v1980
    %v1989 = vmul.f32 %v1947, %v1981
    %v1990 = vmul.f32 %v1949, %v1982
    %v1991 = vmul.f32 %v1951, %v1983
    %v1992 = vpack.c.bf16 %v1984, %v1984
    %v1993 = vpack.c.bf16 %v1985, %v1985
    %v1994 = vpack.c.bf16 %v1986, %v1986
    %v1995 = vpack.c.bf16 %v1987, %v1987
    %v1996 = vpack.c.bf16 %v1988, %v1988
    %v1997 = vpack.c.bf16 %v1989, %v1989
    %v1998 = vpack.c.bf16 %v1990, %v1990
    %v1999 = vpack.c.bf16 %v1991, %v1991
    %v2000 = vpack.c.bf16 %v1198, %v1198
    %v2001 = vpack.c.bf16 %v1250, %v1250
    %v2002 = vpack.c.bf16 %v1302, %v1302
    %v2003 = vpack.c.bf16 %v1354, %v1354
    %v2004 = vpack.c.bf16 %v1394, %v1394
    %v2005 = vpack.c.bf16 %v1434, %v1434
    %v2006 = vpack.c.bf16 %v1474, %v1474
    %v2007 = vpack.c.bf16 %v1514, %v1514
    %v2009 = vsel %vm1535, %v1992, 0
    %vm2011 = vcmask 1043456
    %v2013 = vsel %vm2011, %v2000, 0
    %2015 = vmatprep.subr.bf16.mxu0 0
    %2016 = vmatpush1.bf16.msra.mxu0 %v2013
    %2017 = vmatprep.subr.bf16.mxu0 0
    %2018 = vmatpush1.bf16.msra.mxu0 0
    %2019 = vmatprep.subr.bf16.mxu0 0
    %2020 = vmatpush1.bf16.msra.mxu0 0
    %2021 = vmatprep.subr.bf16.mxu0 0
    %2022 = vmatpush1.bf16.msra.mxu0 0
    %2023 = vmatprep.subr.bf16.mxu0 0
    %2024 = vmatpush1.bf16.msra.mxu0 0
    %2025 = vmatprep.subr.bf16.mxu0 0
    %2026 = vmatpush1.bf16.msra.mxu0 0
    %2027 = vmatprep.subr.bf16.mxu0 0
    %2028 = vmatpush1.bf16.msra.mxu0 0
    %2029 = vmatprep.subr.bf16.mxu0 0
    %2030 = vmatpush1.bf16.msra.mxu0 0
    %2031 = vmatprep.subr.bf16.mxu0 0
    %2032 = vmatpush1.bf16.msra.mxu0 0
    %2033 = vmatprep.subr.bf16.mxu0 0
    %2034 = vmatpush1.bf16.msra.mxu0 0
    %2035 = vmatprep.subr.bf16.mxu0 0
    %2036 = vmatpush1.bf16.msra.mxu0 0
    %2037 = vmatprep.subr.bf16.mxu0 0
    %2038 = vmatpush1.bf16.msra.mxu0 0
    %2039 = vmatprep.subr.bf16.mxu0 0
    %2040 = vmatpush1.bf16.msra.mxu0 0
    %2041 = vmatprep.subr.bf16.mxu0 0
    %2042 = vmatpush1.bf16.msra.mxu0 0
    %2043 = vmatprep.subr.bf16.mxu0 0
    %2044 = vmatpush1.bf16.msra.mxu0 0
    %2045 = vmatprep.subr.bf16.mxu0 0
    %2046 = vmatpush1.bf16.msra.mxu0 0
    %2047 = vmatprep.mubr.bf16.mxu0 0
    %2048 = vmatmul.mubr.bf16.gmra.mrb[0].mxu0 %v2009
    %v2049 = vpop.f32.mrb[0].mxu0
    %v2050 = vadd.f32 0.0, %v2049
    %v2051 = vpop.f32.mrb[0].mxu0
    %v2052 = vpop.f32.mrb[0].mxu0
    %v2053 = vpop.f32.mrb[0].mxu0
    %2054 = vdwg.mxu0
    %v2056 = vsel %vm1535, %v1993, 0
    %v2059 = vsel %vm2011, %v2001, 0
    %2061 = vmatprep.subr.bf16.mxu0 0
    %2062 = vmatpush1.bf16.msra.mxu0 %v2059
    %2063 = vmatprep.subr.bf16.mxu0 0
    %2064 = vmatpush1.bf16.msra.mxu0 0
    %2065 = vmatprep.subr.bf16.mxu0 0
    %2066 = vmatpush1.bf16.msra.mxu0 0
    %2067 = vmatprep.subr.bf16.mxu0 0
    %2068 = vmatpush1.bf16.msra.mxu0 0
    %2069 = vmatprep.subr.bf16.mxu0 0
    %2070 = vmatpush1.bf16.msra.mxu0 0
    %2071 = vmatprep.subr.bf16.mxu0 0
    %2072 = vmatpush1.bf16.msra.mxu0 0
    %2073 = vmatprep.subr.bf16.mxu0 0
    %2074 = vmatpush1.bf16.msra.mxu0 0
    %2075 = vmatprep.subr.bf16.mxu0 0
    %2076 = vmatpush1.bf16.msra.mxu0 0
    %2077 = vmatprep.subr.bf16.mxu0 0
    %2078 = vmatpush1.bf16.msra.mxu0 0
    %2079 = vmatprep.subr.bf16.mxu0 0
    %2080 = vmatpush1.bf16.msra.mxu0 0
    %2081 = vmatprep.subr.bf16.mxu0 0
    %2082 = vmatpush1.bf16.msra.mxu0 0
    %2083 = vmatprep.subr.bf16.mxu0 0
    %2084 = vmatpush1.bf16.msra.mxu0 0
    %2085 = vmatprep.subr.bf16.mxu0 0
    %2086 = vmatpush1.bf16.msra.mxu0 0
    %2087 = vmatprep.subr.bf16.mxu0 0
    %2088 = vmatpush1.bf16.msra.mxu0 0
    %2089 = vmatprep.subr.bf16.mxu0 0
    %2090 = vmatpush1.bf16.msra.mxu0 0
    %2091 = vmatprep.subr.bf16.mxu0 0
    %2092 = vmatpush1.bf16.msra.mxu0 0
    %2093 = vmatprep.mubr.bf16.mxu0 0
    %2094 = vmatmul.mubr.bf16.gmra.mrb[0].mxu0 %v2056
    %v2095 = vpop.f32.mrb[0].mxu0
    %v2096 = vadd.f32 0.0, %v2095
    %v2097 = vpop.f32.mrb[0].mxu0
    %v2098 = vpop.f32.mrb[0].mxu0
    %v2099 = vpop.f32.mrb[0].mxu0
    %2100 = vdwg.mxu0
    %v2102 = vsel %vm1535, %v1994, 0
    %v2105 = vsel %vm2011, %v2002, 0
    %2107 = vmatprep.subr.bf16.mxu0 0
    %2108 = vmatpush1.bf16.msra.mxu0 %v2105
    %2109 = vmatprep.subr.bf16.mxu0 0
    %2110 = vmatpush1.bf16.msra.mxu0 0
    %2111 = vmatprep.subr.bf16.mxu0 0
    %2112 = vmatpush1.bf16.msra.mxu0 0
    %2113 = vmatprep.subr.bf16.mxu0 0
    %2114 = vmatpush1.bf16.msra.mxu0 0
    %2115 = vmatprep.subr.bf16.mxu0 0
    %2116 = vmatpush1.bf16.msra.mxu0 0
    %2117 = vmatprep.subr.bf16.mxu0 0
    %2118 = vmatpush1.bf16.msra.mxu0 0
    %2119 = vmatprep.subr.bf16.mxu0 0
    %2120 = vmatpush1.bf16.msra.mxu0 0
    %2121 = vmatprep.subr.bf16.mxu0 0
    %2122 = vmatpush1.bf16.msra.mxu0 0
    %2123 = vmatprep.subr.bf16.mxu0 0
    %2124 = vmatpush1.bf16.msra.mxu0 0
    %2125 = vmatprep.subr.bf16.mxu0 0
    %2126 = vmatpush1.bf16.msra.mxu0 0
    %2127 = vmatprep.subr.bf16.mxu0 0
    %2128 = vmatpush1.bf16.msra.mxu0 0
    %2129 = vmatprep.subr.bf16.mxu0 0
    %2130 = vmatpush1.bf16.msra.mxu0 0
    %2131 = vmatprep.subr.bf16.mxu0 0
    %2132 = vmatpush1.bf16.msra.mxu0 0
    %2133 = vmatprep.subr.bf16.mxu0 0
    %2134 = vmatpush1.bf16.msra.mxu0 0
    %2135 = vmatprep.subr.bf16.mxu0 0
    %2136 = vmatpush1.bf16.msra.mxu0 0
    %2137 = vmatprep.subr.bf16.mxu0 0
    %2138 = vmatpush1.bf16.msra.mxu0 0
    %2139 = vmatprep.mubr.bf16.mxu0 0
    %2140 = vmatmul.mubr.bf16.gmra.mrb[0].mxu0 %v2102
    %v2141 = vpop.f32.mrb[0].mxu0
    %v2142 = vadd.f32 0.0, %v2141
    %v2143 = vpop.f32.mrb[0].mxu0
    %v2144 = vpop.f32.mrb[0].mxu0
    %v2145 = vpop.f32.mrb[0].mxu0
    %2146 = vdwg.mxu0
    %v2148 = vsel %vm1535, %v1995, 0
    %v2151 = vsel %vm2011, %v2003, 0
    %2153 = vmatprep.subr.bf16.mxu0 0
    %2154 = vmatpush1.bf16.msra.mxu0 %v2151
    %2155 = vmatprep.subr.bf16.mxu0 0
    %2156 = vmatpush1.bf16.msra.mxu0 0
    %2157 = vmatprep.subr.bf16.mxu0 0
    %2158 = vmatpush1.bf16.msra.mxu0 0
    %2159 = vmatprep.subr.bf16.mxu0 0
    %2160 = vmatpush1.bf16.msra.mxu0 0
    %2161 = vmatprep.subr.bf16.mxu0 0
    %2162 = vmatpush1.bf16.msra.mxu0 0
    %2163 = vmatprep.subr.bf16.mxu0 0
    %2164 = vmatpush1.bf16.msra.mxu0 0
    %2165 = vmatprep.subr.bf16.mxu0 0
    %2166 = vmatpush1.bf16.msra.mxu0 0
    %2167 = vmatprep.subr.bf16.mxu0 0
    %2168 = vmatpush1.bf16.msra.mxu0 0
    %2169 = vmatprep.subr.bf16.mxu0 0
    %2170 = vmatpush1.bf16.msra.mxu0 0
    %2171 = vmatprep.subr.bf16.mxu0 0
    %2172 = vmatpush1.bf16.msra.mxu0 0
    %2173 = vmatprep.subr.bf16.mxu0 0
    %2174 = vmatpush1.bf16.msra.mxu0 0
    %2175 = vmatprep.subr.bf16.mxu0 0
    %2176 = vmatpush1.bf16.msra.mxu0 0
    %2177 = vmatprep.subr.bf16.mxu0 0
    %2178 = vmatpush1.bf16.msra.mxu0 0
    %2179 = vmatprep.subr.bf16.mxu0 0
    %2180 = vmatpush1.bf16.msra.mxu0 0
    %2181 = vmatprep.subr.bf16.mxu0 0
    %2182 = vmatpush1.bf16.msra.mxu0 0
    %2183 = vmatprep.subr.bf16.mxu0 0
    %2184 = vmatpush1.bf16.msra.mxu0 0
    %2185 = vmatprep.mubr.bf16.mxu0 0
    %2186 = vmatmul.mubr.bf16.gmra.mrb[0].mxu0 %v2148
    %v2187 = vpop.f32.mrb[0].mxu0
    %v2188 = vadd.f32 0.0, %v2187
    %v2189 = vpop.f32.mrb[0].mxu0
    %v2190 = vpop.f32.mrb[0].mxu0
    %v2191 = vpop.f32.mrb[0].mxu0
    %2192 = vdwg.mxu0
    %v2194 = vsel %vm1535, %v1996, 0
    %v2197 = vsel %vm2011, %v2004, 0
    %2199 = vmatprep.subr.bf16.mxu0 0
    %2200 = vmatpush1.bf16.msra.mxu0 %v2197
    %2201 = vmatprep.subr.bf16.mxu0 0
    %2202 = vmatpush1.bf16.msra.mxu0 0
    %2203 = vmatprep.subr.bf16.mxu0 0
    %2204 = vmatpush1.bf16.msra.mxu0 0
    %2205 = vmatprep.subr.bf16.mxu0 0
    %2206 = vmatpush1.bf16.msra.mxu0 0
    %2207 = vmatprep.subr.bf16.mxu0 0
    %2208 = vmatpush1.bf16.msra.mxu0 0
    %2209 = vmatprep.subr.bf16.mxu0 0
    %2210 = vmatpush1.bf16.msra.mxu0 0
    %2211 = vmatprep.subr.bf16.mxu0 0
    %2212 = vmatpush1.bf16.msra.mxu0 0
    %2213 = vmatprep.subr.bf16.mxu0 0
    %2214 = vmatpush1.bf16.msra.mxu0 0
    %2215 = vmatprep.subr.bf16.mxu0 0
    %2216 = vmatpush1.bf16.msra.mxu0 0
    %2217 = vmatprep.subr.bf16.mxu0 0
    %2218 = vmatpush1.bf16.msra.mxu0 0
    %2219 = vmatprep.subr.bf16.mxu0 0
    %2220 = vmatpush1.bf16.msra.mxu0 0
    %2221 = vmatprep.subr.bf16.mxu0 0
    %2222 = vmatpush1.bf16.msra.mxu0 0
    %2223 = vmatprep.subr.bf16.mxu0 0
    %2224 = vmatpush1.bf16.msra.mxu0 0
    %2225 = vmatprep.subr.bf16.mxu0 0
    %2226 = vmatpush1.bf16.msra.mxu0 0
    %2227 = vmatprep.subr.bf16.mxu0 0
    %2228 = vmatpush1.bf16.msra.mxu0 0
    %2229 = vmatprep.subr.bf16.mxu0 0
    %2230 = vmatpush1.bf16.msra.mxu0 0
    %2231 = vmatprep.mubr.bf16.mxu0 0
    %2232 = vmatmul.mubr.bf16.gmra.mrb[0].mxu0 %v2194
    %v2233 = vpop.f32.mrb[0].mxu0
    %v2234 = vadd.f32 0.0, %v2233
    %v2235 = vpop.f32.mrb[0].mxu0
    %v2236 = vpop.f32.mrb[0].mxu0
    %v2237 = vpop.f32.mrb[0].mxu0
    %2238 = vdwg.mxu0
    %v2240 = vsel %vm1535, %v1997, 0
    %v2243 = vsel %vm2011, %v2005, 0
    %2245 = vmatprep.subr.bf16.mxu0 0
    %2246 = vmatpush1.bf16.msra.mxu0 %v2243
    %2247 = vmatprep.subr.bf16.mxu0 0
    %2248 = vmatpush1.bf16.msra.mxu0 0
    %2249 = vmatprep.subr.bf16.mxu0 0
    %2250 = vmatpush1.bf16.msra.mxu0 0
    %2251 = vmatprep.subr.bf16.mxu0 0
    %2252 = vmatpush1.bf16.msra.mxu0 0
    %2253 = vmatprep.subr.bf16.mxu0 0
    %2254 = vmatpush1.bf16.msra.mxu0 0
    %2255 = vmatprep.subr.bf16.mxu0 0
    %2256 = vmatpush1.bf16.msra.mxu0 0
    %2257 = vmatprep.subr.bf16.mxu0 0
    %2258 = vmatpush1.bf16.msra.mxu0 0
    %2259 = vmatprep.subr.bf16.mxu0 0
    %2260 = vmatpush1.bf16.msra.mxu0 0
    %2261 = vmatprep.subr.bf16.mxu0 0
    %2262 = vmatpush1.bf16.msra.mxu0 0
    %2263 = vmatprep.subr.bf16.mxu0 0
    %2264 = vmatpush1.bf16.msra.mxu0 0
    %2265 = vmatprep.subr.bf16.mxu0 0
    %2266 = vmatpush1.bf16.msra.mxu0 0
    %2267 = vmatprep.subr.bf16.mxu0 0
    %2268 = vmatpush1.bf16.msra.mxu0 0
    %2269 = vmatprep.subr.bf16.mxu0 0
    %2270 = vmatpush1.bf16.msra.mxu0 0
    %2271 = vmatprep.subr.bf16.mxu0 0
    %2272 = vmatpush1.bf16.msra.mxu0 0
    %2273 = vmatprep.subr.bf16.mxu0 0
    %2274 = vmatpush1.bf16.msra.mxu0 0
    %2275 = vmatprep.subr.bf16.mxu0 0
    %2276 = vmatpush1.bf16.msra.mxu0 0
    %2277 = vmatprep.mubr.bf16.mxu0 0
    %2278 = vmatmul.mubr.bf16.gmra.mrb[0].mxu0 %v2240
    %v2279 = vpop.f32.mrb[0].mxu0
    %v2280 = vadd.f32 0.0, %v2279
    %v2281 = vpop.f32.mrb[0].mxu0
    %v2282 = vpop.f32.mrb[0].mxu0
    %v2283 = vpop.f32.mrb[0].mxu0
    %2284 = vdwg.mxu0
    %v2286 = vsel %vm1535, %v1998, 0
    %v2289 = vsel %vm2011, %v2006, 0
    %2291 = vmatprep.subr.bf16.mxu0 0
    %2292 = vmatpush1.bf16.msra.mxu0 %v2289
    %2293 = vmatprep.subr.bf16.mxu0 0
    %2294 = vmatpush1.bf16.msra.mxu0 0
    %2295 = vmatprep.subr.bf16.mxu0 0
    %2296 = vmatpush1.bf16.msra.mxu0 0
    %2297 = vmatprep.subr.bf16.mxu0 0
    %2298 = vmatpush1.bf16.msra.mxu0 0
    %2299 = vmatprep.subr.bf16.mxu0 0
    %2300 = vmatpush1.bf16.msra.mxu0 0
    %2301 = vmatprep.subr.bf16.mxu0 0
    %2302 = vmatpush1.bf16.msra.mxu0 0
    %2303 = vmatprep.subr.bf16.mxu0 0
    %2304 = vmatpush1.bf16.msra.mxu0 0
    %2305 = vmatprep.subr.bf16.mxu0 0
    %2306 = vmatpush1.bf16.msra.mxu0 0
    %2307 = vmatprep.subr.bf16.mxu0 0
    %2308 = vmatpush1.bf16.msra.mxu0 0
    %2309 = vmatprep.subr.bf16.mxu0 0
    %2310 = vmatpush1.bf16.msra.mxu0 0
    %2311 = vmatprep.subr.bf16.mxu0 0
    %2312 = vmatpush1.bf16.msra.mxu0 0
    %2313 = vmatprep.subr.bf16.mxu0 0
    %2314 = vmatpush1.bf16.msra.mxu0 0
    %2315 = vmatprep.subr.bf16.mxu0 0
    %2316 = vmatpush1.bf16.msra.mxu0 0
    %2317 = vmatprep.subr.bf16.mxu0 0
    %2318 = vmatpush1.bf16.msra.mxu0 0
    %2319 = vmatprep.subr.bf16.mxu0 0
    %2320 = vmatpush1.bf16.msra.mxu0 0
    %2321 = vmatprep.subr.bf16.mxu0 0
    %2322 = vmatpush1.bf16.msra.mxu0 0
    %2323 = vmatprep.mubr.bf16.mxu0 0
    %2324 = vmatmul.mubr.bf16.gmra.mrb[0].mxu0 %v2286
    %v2325 = vpop.f32.mrb[0].mxu0
    %v2326 = vadd.f32 0.0, %v2325
    %v2327 = vpop.f32.mrb[0].mxu0
    %v2328 = vpop.f32.mrb[0].mxu0
    %v2329 = vpop.f32.mrb[0].mxu0
    %2330 = vdwg.mxu0
    %v2332 = vsel %vm1535, %v1999, 0
    %v2335 = vsel %vm2011, %v2007, 0
    %2337 = vmatprep.subr.bf16.mxu0 0
    %2338 = vmatpush1.bf16.msra.mxu0 %v2335
    %2339 = vmatprep.subr.bf16.mxu0 0
    %2340 = vmatpush1.bf16.msra.mxu0 0
    %2341 = vmatprep.subr.bf16.mxu0 0
    %2342 = vmatpush1.bf16.msra.mxu0 0
    %2343 = vmatprep.subr.bf16.mxu0 0
    %2344 = vmatpush1.bf16.msra.mxu0 0
    %2345 = vmatprep.subr.bf16.mxu0 0
    %2346 = vmatpush1.bf16.msra.mxu0 0
    %2347 = vmatprep.subr.bf16.mxu0 0
    %2348 = vmatpush1.bf16.msra.mxu0 0
    %2349 = vmatprep.subr.bf16.mxu0 0
    %2350 = vmatpush1.bf16.msra.mxu0 0
    %2351 = vmatprep.subr.bf16.mxu0 0
    %2352 = vmatpush1.bf16.msra.mxu0 0
    %2353 = vmatprep.subr.bf16.mxu0 0
    %2354 = vmatpush1.bf16.msra.mxu0 0
    %2355 = vmatprep.subr.bf16.mxu0 0
    %2356 = vmatpush1.bf16.msra.mxu0 0
    %2357 = vmatprep.subr.bf16.mxu0 0
    %2358 = vmatpush1.bf16.msra.mxu0 0
    %2359 = vmatprep.subr.bf16.mxu0 0
    %2360 = vmatpush1.bf16.msra.mxu0 0
    %2361 = vmatprep.subr.bf16.mxu0 0
    %2362 = vmatpush1.bf16.msra.mxu0 0
    %2363 = vmatprep.subr.bf16.mxu0 0
    %2364 = vmatpush1.bf16.msra.mxu0 0
    %2365 = vmatprep.subr.bf16.mxu0 0
    %2366 = vmatpush1.bf16.msra.mxu0 0
    %2367 = vmatprep.subr.bf16.mxu0 0
    %2368 = vmatpush1.bf16.msra.mxu0 0
    %2369 = vmatprep.mubr.bf16.mxu0 0
    %2370 = vmatmul.mubr.bf16.gmra.mrb[0].mxu0 %v2332
    %v2371 = vpop.f32.mrb[0].mxu0
    %v2372 = vadd.f32 0.0, %v2371
    %v2373 = vpop.f32.mrb[0].mxu0
    %v2374 = vpop.f32.mrb[0].mxu0
    %v2375 = vpop.f32.mrb[0].mxu0
    %2376 = vdwg.mxu0
    %v2377 = vpack.c.bf16 %v2050, %v2050
    %v2378 = vpack.c.bf16 %v2096, %v2096
    %v2379 = vpack.c.bf16 %v2142, %v2142
    %v2380 = vpack.c.bf16 %v2188, %v2188
    %v2381 = vpack.c.bf16 %v2234, %v2234
    %v2382 = vpack.c.bf16 %v2280, %v2280
    %v2383 = vpack.c.bf16 %v2326, %v2326
    %v2384 = vpack.c.bf16 %v2372, %v2372
    %v2385 = vld [vmem:[%s11] sm:$0xf]
    %v2386 = vld [vmem:[%s11 + $0x4] sm:$0xf]
    %v2387 = vld [vmem:[%s11 + $0x8] sm:$0xf]
    %v2388 = vld [vmem:[%s11 + $0xc] sm:$0xf]
    %v2390 = vsel %vm1535, %v2377, 0
    %v2393 = vsel %vm2011, %v2385, 0
    %2395 = vmatprep.subr.bf16.mxu0 0
    %2396 = vmatpush1.bf16.msra.mxu0 %v2393
    %2397 = vmatprep.subr.bf16.mxu0 0
    %2398 = vmatpush1.bf16.msra.mxu0 0
    %2399 = vmatprep.subr.bf16.mxu0 0
    %2400 = vmatpush1.bf16.msra.mxu0 0
    %2401 = vmatprep.subr.bf16.mxu0 0
    %2402 = vmatpush1.bf16.msra.mxu0 0
    %2403 = vmatprep.subr.bf16.mxu0 0
    %2404 = vmatpush1.bf16.msra.mxu0 0
    %2405 = vmatprep.subr.bf16.mxu0 0
    %2406 = vmatpush1.bf16.msra.mxu0 0
    %2407 = vmatprep.subr.bf16.mxu0 0
    %2408 = vmatpush1.bf16.msra.mxu0 0
    %2409 = vmatprep.subr.bf16.mxu0 0
    %2410 = vmatpush1.bf16.msra.mxu0 0
    %2411 = vmatprep.subr.bf16.mxu0 0
    %2412 = vmatpush1.bf16.msra.mxu0 0
    %2413 = vmatprep.subr.bf16.mxu0 0
    %2414 = vmatpush1.bf16.msra.mxu0 0
    %2415 = vmatprep.subr.bf16.mxu0 0
    %2416 = vmatpush1.bf16.msra.mxu0 0
    %2417 = vmatprep.subr.bf16.mxu0 0
    %2418 = vmatpush1.bf16.msra.mxu0 0
    %2419 = vmatprep.subr.bf16.mxu0 0
    %2420 = vmatpush1.bf16.msra.mxu0 0
    %2421 = vmatprep.subr.bf16.mxu0 0
    %2422 = vmatpush1.bf16.msra.mxu0 0
    %2423 = vmatprep.subr.bf16.mxu0 0
    %2424 = vmatpush1.bf16.msra.mxu0 0
    %2425 = vmatprep.subr.bf16.mxu0 0
    %2426 = vmatpush1.bf16.msra.mxu0 0
    %2427 = vmatprep.mubr.bf16.mxu0 0
    %2428 = vmatmul.mubr.bf16.gmra.mrb[0].mxu0 %v2390
    %v2429 = vpop.f32.mrb[0].mxu0
    %v2430 = vadd.f32 0.0, %v2429
    %v2431 = vpop.f32.mrb[0].mxu0
    %v2432 = vpop.f32.mrb[0].mxu0
    %v2433 = vpop.f32.mrb[0].mxu0
    %2434 = vdwg.mxu0
    %v2436 = vsel %vm1535, %v2378, 0
    %v2439 = vsel %vm2011, %v2386, 0
    %2441 = vmatprep.subr.bf16.mxu0 0
    %2442 = vmatpush1.bf16.msra.mxu0 %v2439
    %2443 = vmatprep.subr.bf16.mxu0 0
    %2444 = vmatpush1.bf16.msra.mxu0 0
    %2445 = vmatprep.subr.bf16.mxu0 0
    %2446 = vmatpush1.bf16.msra.mxu0 0
    %2447 = vmatprep.subr.bf16.mxu0 0
    %2448 = vmatpush1.bf16.msra.mxu0 0
    %2449 = vmatprep.subr.bf16.mxu0 0
    %2450 = vmatpush1.bf16.msra.mxu0 0
    %2451 = vmatprep.subr.bf16.mxu0 0
    %2452 = vmatpush1.bf16.msra.mxu0 0
    %2453 = vmatprep.subr.bf16.mxu0 0
    %2454 = vmatpush1.bf16.msra.mxu0 0
    %2455 = vmatprep.subr.bf16.mxu0 0
    %2456 = vmatpush1.bf16.msra.mxu0 0
    %2457 = vmatprep.subr.bf16.mxu0 0
    %2458 = vmatpush1.bf16.msra.mxu0 0
    %2459 = vmatprep.subr.bf16.mxu0 0
    %2460 = vmatpush1.bf16.msra.mxu0 0
    %2461 = vmatprep.subr.bf16.mxu0 0
    %2462 = vmatpush1.bf16.msra.mxu0 0
    %2463 = vmatprep.subr.bf16.mxu0 0
    %2464 = vmatpush1.bf16.msra.mxu0 0
    %2465 = vmatprep.subr.bf16.mxu0 0
    %2466 = vmatpush1.bf16.msra.mxu0 0
    %2467 = vmatprep.subr.bf16.mxu0 0
    %2468 = vmatpush1.bf16.msra.mxu0 0
    %2469 = vmatprep.subr.bf16.mxu0 0
    %2470 = vmatpush1.bf16.msra.mxu0 0
    %2471 = vmatprep.subr.bf16.mxu0 0
    %2472 = vmatpush1.bf16.msra.mxu0 0
    %2473 = vmatprep.mubr.bf16.mxu0 0
    %2474 = vmatmul.mubr.bf16.gmra.mrb[0].mxu0 %v2436
    %v2475 = vpop.f32.mrb[0].mxu0
    %v2476 = vadd.f32 0.0, %v2475
    %v2477 = vpop.f32.mrb[0].mxu0
    %v2478 = vpop.f32.mrb[0].mxu0
    %v2479 = vpop.f32.mrb[0].mxu0
    %2480 = vdwg.mxu0
    %v2482 = vsel %vm1535, %v2379, 0
    %v2485 = vsel %vm2011, %v2387, 0
    %2487 = vmatprep.subr.bf16.mxu0 0
    %2488 = vmatpush1.bf16.msra.mxu0 %v2485
    %2489 = vmatprep.subr.bf16.mxu0 0
    %2490 = vmatpush1.bf16.msra.mxu0 0
    %2491 = vmatprep.subr.bf16.mxu0 0
    %2492 = vmatpush1.bf16.msra.mxu0 0
    %2493 = vmatprep.subr.bf16.mxu0 0
    %2494 = vmatpush1.bf16.msra.mxu0 0
    %2495 = vmatprep.subr.bf16.mxu0 0
    %2496 = vmatpush1.bf16.msra.mxu0 0
    %2497 = vmatprep.subr.bf16.mxu0 0
    %2498 = vmatpush1.bf16.msra.mxu0 0
    %2499 = vmatprep.subr.bf16.mxu0 0
    %2500 = vmatpush1.bf16.msra.mxu0 0
    %2501 = vmatprep.subr.bf16.mxu0 0
    %2502 = vmatpush1.bf16.msra.mxu0 0
    %2503 = vmatprep.subr.bf16.mxu0 0
    %2504 = vmatpush1.bf16.msra.mxu0 0
    %2505 = vmatprep.subr.bf16.mxu0 0
    %2506 = vmatpush1.bf16.msra.mxu0 0
    %2507 = vmatprep.subr.bf16.mxu0 0
    %2508 = vmatpush1.bf16.msra.mxu0 0
    %2509 = vmatprep.subr.bf16.mxu0 0
    %2510 = vmatpush1.bf16.msra.mxu0 0
    %2511 = vmatprep.subr.bf16.mxu0 0
    %2512 = vmatpush1.bf16.msra.mxu0 0
    %2513 = vmatprep.subr.bf16.mxu0 0
    %2514 = vmatpush1.bf16.msra.mxu0 0
    %2515 = vmatprep.subr.bf16.mxu0 0
    %2516 = vmatpush1.bf16.msra.mxu0 0
    %2517 = vmatprep.subr.bf16.mxu0 0
    %2518 = vmatpush1.bf16.msra.mxu0 0
    %2519 = vmatprep.mubr.bf16.mxu0 0
    %2520 = vmatmul.mubr.bf16.gmra.mrb[0].mxu0 %v2482
    %v2521 = vpop.f32.mrb[0].mxu0
    %v2522 = vadd.f32 0.0, %v2521
    %v2523 = vpop.f32.mrb[0].mxu0
    %v2524 = vpop.f32.mrb[0].mxu0
    %v2525 = vpop.f32.mrb[0].mxu0
    %2526 = vdwg.mxu0
    %v2528 = vsel %vm1535, %v2380, 0
    %v2531 = vsel %vm2011, %v2388, 0
    %2533 = vmatprep.subr.bf16.mxu0 0
    %2534 = vmatpush1.bf16.msra.mxu0 %v2531
    %2535 = vmatprep.subr.bf16.mxu0 0
    %2536 = vmatpush1.bf16.msra.mxu0 0
    %2537 = vmatprep.subr.bf16.mxu0 0
    %2538 = vmatpush1.bf16.msra.mxu0 0
    %2539 = vmatprep.subr.bf16.mxu0 0
    %2540 = vmatpush1.bf16.msra.mxu0 0
    %2541 = vmatprep.subr.bf16.mxu0 0
    %2542 = vmatpush1.bf16.msra.mxu0 0
    %2543 = vmatprep.subr.bf16.mxu0 0
    %2544 = vmatpush1.bf16.msra.mxu0 0
    %2545 = vmatprep.subr.bf16.mxu0 0
    %2546 = vmatpush1.bf16.msra.mxu0 0
    %2547 = vmatprep.subr.bf16.mxu0 0
    %2548 = vmatpush1.bf16.msra.mxu0 0
    %2549 = vmatprep.subr.bf16.mxu0 0
    %2550 = vmatpush1.bf16.msra.mxu0 0
    %2551 = vmatprep.subr.bf16.mxu0 0
    %2552 = vmatpush1.bf16.msra.mxu0 0
    %2553 = vmatprep.subr.bf16.mxu0 0
    %2554 = vmatpush1.bf16.msra.mxu0 0
    %2555 = vmatprep.subr.bf16.mxu0 0
    %2556 = vmatpush1.bf16.msra.mxu0 0
    %2557 = vmatprep.subr.bf16.mxu0 0
    %2558 = vmatpush1.bf16.msra.mxu0 0
    %2559 = vmatprep.subr.bf16.mxu0 0
    %2560 = vmatpush1.bf16.msra.mxu0 0
    %2561 = vmatprep.subr.bf16.mxu0 0
    %2562 = vmatpush1.bf16.msra.mxu0 0
    %2563 = vmatprep.subr.bf16.mxu0 0
    %2564 = vmatpush1.bf16.msra.mxu0 0
    %2565 = vmatprep.mubr.bf16.mxu0 0
    %2566 = vmatmul.mubr.bf16.gmra.mrb[0].mxu0 %v2528
    %v2567 = vpop.f32.mrb[0].mxu0
    %v2568 = vadd.f32 0.0, %v2567
    %v2569 = vpop.f32.mrb[0].mxu0
    %v2570 = vpop.f32.mrb[0].mxu0
    %v2571 = vpop.f32.mrb[0].mxu0
    %2572 = vdwg.mxu0
    %v2574 = vsel %vm1535, %v2381, 0
    %2576 = vmatprep.subr.bf16.mxu0 0
    %2577 = vmatpush1.bf16.msra.mxu0 %v2393
    %2578 = vmatprep.subr.bf16.mxu0 0
    %2579 = vmatpush1.bf16.msra.mxu0 0
    %2580 = vmatprep.subr.bf16.mxu0 0
    %2581 = vmatpush1.bf16.msra.mxu0 0
    %2582 = vmatprep.subr.bf16.mxu0 0
    %2583 = vmatpush1.bf16.msra.mxu0 0
    %2584 = vmatprep.subr.bf16.mxu0 0
    %2585 = vmatpush1.bf16.msra.mxu0 0
    %2586 = vmatprep.subr.bf16.mxu0 0
    %2587 = vmatpush1.bf16.msra.mxu0 0
    %2588 = vmatprep.subr.bf16.mxu0 0
    %2589 = vmatpush1.bf16.msra.mxu0 0
    %2590 = vmatprep.subr.bf16.mxu0 0
    %2591 = vmatpush1.bf16.msra.mxu0 0
    %2592 = vmatprep.subr.bf16.mxu0 0
    %2593 = vmatpush1.bf16.msra.mxu0 0
    %2594 = vmatprep.subr.bf16.mxu0 0
    %2595 = vmatpush1.bf16.msra.mxu0 0
    %2596 = vmatprep.subr.bf16.mxu0 0
    %2597 = vmatpush1.bf16.msra.mxu0 0
    %2598 = vmatprep.subr.bf16.mxu0 0
    %2599 = vmatpush1.bf16.msra.mxu0 0
    %2600 = vmatprep.subr.bf16.mxu0 0
    %2601 = vmatpush1.bf16.msra.mxu0 0
    %2602 = vmatprep.subr.bf16.mxu0 0
    %2603 = vmatpush1.bf16.msra.mxu0 0
    %2604 = vmatprep.subr.bf16.mxu0 0
    %2605 = vmatpush1.bf16.msra.mxu0 0
    %2606 = vmatprep.subr.bf16.mxu0 0
    %2607 = vmatpush1.bf16.msra.mxu0 0
    %2608 = vmatprep.mubr.bf16.mxu0 0
    %2609 = vmatmul.mubr.bf16.gmra.mrb[0].mxu0 %v2574
    %v2610 = vpop.f32.mrb[0].mxu0
    %v2611 = vadd.f32 0.0, %v2610
    %v2612 = vpop.f32.mrb[0].mxu0
    %v2613 = vpop.f32.mrb[0].mxu0
    %v2614 = vpop.f32.mrb[0].mxu0
    %2615 = vdwg.mxu0
    %v2617 = vsel %vm1535, %v2382, 0
    %2619 = vmatprep.subr.bf16.mxu0 0
    %2620 = vmatpush1.bf16.msra.mxu0 %v2439
    %2621 = vmatprep.subr.bf16.mxu0 0
    %2622 = vmatpush1.bf16.msra.mxu0 0
    %2623 = vmatprep.subr.bf16.mxu0 0
    %2624 = vmatpush1.bf16.msra.mxu0 0
    %2625 = vmatprep.subr.bf16.mxu0 0
    %2626 = vmatpush1.bf16.msra.mxu0 0
    %2627 = vmatprep.subr.bf16.mxu0 0
    %2628 = vmatpush1.bf16.msra.mxu0 0
    %2629 = vmatprep.subr.bf16.mxu0 0
    %2630 = vmatpush1.bf16.msra.mxu0 0
    %2631 = vmatprep.subr.bf16.mxu0 0
    %2632 = vmatpush1.bf16.msra.mxu0 0
    %2633 = vmatprep.subr.bf16.mxu0 0
    %2634 = vmatpush1.bf16.msra.mxu0 0
    %2635 = vmatprep.subr.bf16.mxu0 0
    %2636 = vmatpush1.bf16.msra.mxu0 0
    %2637 = vmatprep.subr.bf16.mxu0 0
    %2638 = vmatpush1.bf16.msra.mxu0 0
    %2639 = vmatprep.subr.bf16.mxu0 0
    %2640 = vmatpush1.bf16.msra.mxu0 0
    %2641 = vmatprep.subr.bf16.mxu0 0
    %2642 = vmatpush1.bf16.msra.mxu0 0
    %2643 = vmatprep.subr.bf16.mxu0 0
    %2644 = vmatpush1.bf16.msra.mxu0 0
    %2645 = vmatprep.subr.bf16.mxu0 0
    %2646 = vmatpush1.bf16.msra.mxu0 0
    %2647 = vmatprep.subr.bf16.mxu0 0
    %2648 = vmatpush1.bf16.msra.mxu0 0
    %2649 = vmatprep.subr.bf16.mxu0 0
    %2650 = vmatpush1.bf16.msra.mxu0 0
    %2651 = vmatprep.mubr.bf16.mxu0 0
    %2652 = vmatmul.mubr.bf16.gmra.mrb[0].mxu0 %v2617
    %v2653 = vpop.f32.mrb[0].mxu0
    %v2654 = vadd.f32 0.0, %v2653
    %v2655 = vpop.f32.mrb[0].mxu0
    %v2656 = vpop.f32.mrb[0].mxu0
    %v2657 = vpop.f32.mrb[0].mxu0
    %2658 = vdwg.mxu0
    %v2660 = vsel %vm1535, %v2383, 0
    %2662 = vmatprep.subr.bf16.mxu0 0
    %2663 = vmatpush1.bf16.msra.mxu0 %v2485
    %2664 = vmatprep.subr.bf16.mxu0 0
    %2665 = vmatpush1.bf16.msra.mxu0 0
    %2666 = vmatprep.subr.bf16.mxu0 0
    %2667 = vmatpush1.bf16.msra.mxu0 0
    %2668 = vmatprep.subr.bf16.mxu0 0
    %2669 = vmatpush1.bf16.msra.mxu0 0
    %2670 = vmatprep.subr.bf16.mxu0 0
    %2671 = vmatpush1.bf16.msra.mxu0 0
    %2672 = vmatprep.subr.bf16.mxu0 0
    %2673 = vmatpush1.bf16.msra.mxu0 0
    %2674 = vmatprep.subr.bf16.mxu0 0
    %2675 = vmatpush1.bf16.msra.mxu0 0
    %2676 = vmatprep.subr.bf16.mxu0 0
    %2677 = vmatpush1.bf16.msra.mxu0 0
    %2678 = vmatprep.subr.bf16.mxu0 0
    %2679 = vmatpush1.bf16.msra.mxu0 0
    %2680 = vmatprep.subr.bf16.mxu0 0
    %2681 = vmatpush1.bf16.msra.mxu0 0
    %2682 = vmatprep.subr.bf16.mxu0 0
    %2683 = vmatpush1.bf16.msra.mxu0 0
    %2684 = vmatprep.subr.bf16.mxu0 0
    %2685 = vmatpush1.bf16.msra.mxu0 0
    %2686 = vmatprep.subr.bf16.mxu0 0
    %2687 = vmatpush1.bf16.msra.mxu0 0
    %2688 = vmatprep.subr.bf16.mxu0 0
    %2689 = vmatpush1.bf16.msra.mxu0 0
    %2690 = vmatprep.subr.bf16.mxu0 0
    %2691 = vmatpush1.bf16.msra.mxu0 0
    %2692 = vmatprep.subr.bf16.mxu0 0
    %2693 = vmatpush1.bf16.msra.mxu0 0
    %2694 = vmatprep.mubr.bf16.mxu0 0
    %2695 = vmatmul.mubr.bf16.gmra.mrb[0].mxu0 %v2660
    %v2696 = vpop.f32.mrb[0].mxu0
    %v2697 = vadd.f32 0.0, %v2696
    %v2698 = vpop.f32.mrb[0].mxu0
    %v2699 = vpop.f32.mrb[0].mxu0
    %v2700 = vpop.f32.mrb[0].mxu0
    %2701 = vdwg.mxu0
    %v2703 = vsel %vm1535, %v2384, 0
    %2705 = vmatprep.subr.bf16.mxu0 0
    %2706 = vmatpush1.bf16.msra.mxu0 %v2531
    %2707 = vmatprep.subr.bf16.mxu0 0
    %2708 = vmatpush1.bf16.msra.mxu0 0
    %2709 = vmatprep.subr.bf16.mxu0 0
    %2710 = vmatpush1.bf16.msra.mxu0 0
    %2711 = vmatprep.subr.bf16.mxu0 0
    %2712 = vmatpush1.bf16.msra.mxu0 0
    %2713 = vmatprep.subr.bf16.mxu0 0
    %2714 = vmatpush1.bf16.msra.mxu0 0
    %2715 = vmatprep.subr.bf16.mxu0 0
    %2716 = vmatpush1.bf16.msra.mxu0 0
    %2717 = vmatprep.subr.bf16.mxu0 0
    %2718 = vmatpush1.bf16.msra.mxu0 0
    %2719 = vmatprep.subr.bf16.mxu0 0
    %2720 = vmatpush1.bf16.msra.mxu0 0
    %2721 = vmatprep.subr.bf16.mxu0 0
    %2722 = vmatpush1.bf16.msra.mxu0 0
    %2723 = vmatprep.subr.bf16.mxu0 0
    %2724 = vmatpush1.bf16.msra.mxu0 0
    %2725 = vmatprep.subr.bf16.mxu0 0
    %2726 = vmatpush1.bf16.msra.mxu0 0
    %2727 = vmatprep.subr.bf16.mxu0 0
    %2728 = vmatpush1.bf16.msra.mxu0 0
    %2729 = vmatprep.subr.bf16.mxu0 0
    %2730 = vmatpush1.bf16.msra.mxu0 0
    %2731 = vmatprep.subr.bf16.mxu0 0
    %2732 = vmatpush1.bf16.msra.mxu0 0
    %2733 = vmatprep.subr.bf16.mxu0 0
    %2734 = vmatpush1.bf16.msra.mxu0 0
    %2735 = vmatprep.subr.bf16.mxu0 0
    %2736 = vmatpush1.bf16.msra.mxu0 0
    %2737 = vmatprep.mubr.bf16.mxu0 0
    %2738 = vmatmul.mubr.bf16.gmra.mrb[0].mxu0 %v2703
    %v2739 = vpop.f32.mrb[0].mxu0
    %v2740 = vadd.f32 0.0, %v2739
    %v2741 = vpop.f32.mrb[0].mxu0
    %v2742 = vpop.f32.mrb[0].mxu0
    %v2743 = vpop.f32.mrb[0].mxu0
    %2744 = vdwg.mxu0
    %v2745 = vsel %vm231, %v2430, 0.0
    %v2746 = vsel %vm231, %v2476, 0.0
    %v2747 = vadd.f32 %v2745, %v2746
    %v2748 = vsel %vm231, %v2522, 0.0
    %v2749 = vadd.f32 %v2747, %v2748
    %v2750 = vsel %vm231, %v2568, 0.0
    %v2751 = vadd.f32 %v2749, %v2750
    %v2752 = vsel %vm231, %v2611, 0.0
    %v2753 = vsel %vm231, %v2654, 0.0
    %v2754 = vadd.f32 %v2752, %v2753
    %v2755 = vsel %vm231, %v2697, 0.0
    %v2756 = vadd.f32 %v2754, %v2755
    %v2757 = vsel %vm231, %v2740, 0.0
    %v2758 = vadd.f32 %v2756, %v2757
    %v2759 = vadd.f32 %v219, %v2751
    %v2760 = vadd.f32 %v222, %v2758
    %v2761 = vld [vmem:[%s12] sm:$0x1]
    %v2763 = vlaneseq
    %v2764 = vshrl.u32 %v2763, 7
    %v2765 = vsub.s32 0, %v2764
    %v2766 = vrot.slane %v2761, %v2765
    %v2768 = vadd.f32 %v2759, %v2766
    %v2769 = vadd.f32 %v2760, %v2766
    %v2770 = vld [vmem:[%s13] sm:$0x1]
    %v2771 = vld [vmem:[%s14] sm:$0x1]
    %v2772 = vsel %vm231, %v2768, 0.0
    %2773 = vadd.xlane.f32.xlu0 %v2772
    %v2774 = vpop.xlane.xlu0 %2773
    %v2775 = vsel %vm231, %v2769, 0.0
    %2776 = vadd.xlane.f32.xlu0 %v2775
    %v2777 = vpop.xlane.xlu0 %2776
    %v2778 = vmul.f32 %v2774, %v238
    %v2779 = vmul.f32 %v2777, %v238
    %v2780 = vsub.f32 %v2768, %v2778
    %v2781 = vsub.f32 %v2769, %v2779
    %v2782 = vmul.f32 %v2780, %v2780
    %v2783 = vmul.f32 %v2781, %v2781
    %v2784 = vsel %vm231, %v2782, 0.0
    %2785 = vadd.xlane.f32.xlu0 %v2784
    %v2786 = vpop.xlane.xlu0 %2785
    %v2787 = vsel %vm231, %v2783, 0.0
    %2788 = vadd.xlane.f32.xlu0 %v2787
    %v2789 = vpop.xlane.xlu0 %2788
    %v2790 = vmul.f32 %v2786, %v238
    %v2791 = vmul.f32 %v2789, %v238
    %v2792 = vadd.f32 %v2790, 1e-12
    %v2793 = vadd.f32 %v2791, 1e-12
    %v2794 = vrsqrt.pop %v2792
    %v2795 = vrsqrt.pop %v2793
    %v2796 = vmul.f32 %v2780, %v2794
    %v2797 = vmul.f32 %v2781, %v2795
    %v2799 = vlaneseq
    %v2800 = vshrl.u32 %v2799, 7
    %v2801 = vsub.s32 0, %v2800
    %v2802 = vrot.slane %v2770, %v2801
    %v2804 = vmul.f32 %v2796, %v2802
    %v2805 = vmul.f32 %v2797, %v2802
    %v2807 = vlaneseq
    %v2808 = vshrl.u32 %v2807, 7
    %v2809 = vsub.s32 0, %v2808
    %v2810 = vrot.slane %v2771, %v2809
    %v2812 = vadd.f32 %v2804, %v2810
    %v2813 = vadd.f32 %v2805, %v2810
    %v2814 = vpack.c.bf16 %v2813, %v2812
    %v2815 = vld [vmem:[%s15] sm:$0xf]
    %v2816 = vld [vmem:[%s15 + $0x4] sm:$0xf]
    %v2817 = vld [vmem:[%s15 + $0x8] sm:$0xf]
    %v2818 = vld [vmem:[%s15 + $0xc] sm:$0xf]
    %v2819 = vld [vmem:[%s16] sm:$0x1]
    %v2821 = vlaneseq
    %v2822 = vshrl.u32 %v2821, 7
    %v2823 = vsub.s32 0, %v2822
    %v2824 = vrot.slane %v2819, %v2823
    %v2830 = vunpack.c.l.b16 %v2815
    %v2831 = vunpack.c.l.b16 %v2816
    %v2832 = vunpack.c.l.b16 %v2817
    %v2833 = vunpack.c.l.b16 %v2818
    %v2834 = vpack.c.b16 %v2831, %v2830
    %v2835 = vpack.c.b16 %v2833, %v2832
    %v2839 = vsel %vm231, %v2814, 0
    %2841 = vmatprep.subr.bf16.mxu0 0
    %2842 = vmatpush1.bf16.msra.mxu0 %v2834
    %2843 = vmatprep.subr.bf16.mxu0 0
    %2844 = vmatpush1.bf16.msra.mxu0 %v2835
    %2845 = vmatprep.subr.bf16.mxu0 0
    %2846 = vmatpush1.bf16.msra.mxu0 0
    %2847 = vmatprep.subr.bf16.mxu0 0
    %2848 = vmatpush1.bf16.msra.mxu0 0
    %2849 = vmatprep.subr.bf16.mxu0 0
    %2850 = vmatpush1.bf16.msra.mxu0 0
    %2851 = vmatprep.subr.bf16.mxu0 0
    %2852 = vmatpush1.bf16.msra.mxu0 0
    %2853 = vmatprep.subr.bf16.mxu0 0
    %2854 = vmatpush1.bf16.msra.mxu0 0
    %2855 = vmatprep.subr.bf16.mxu0 0
    %2856 = vmatpush1.bf16.msra.mxu0 0
    %2857 = vmatprep.subr.bf16.mxu0 0
    %2858 = vmatpush1.bf16.msra.mxu0 0
    %2859 = vmatprep.subr.bf16.mxu0 0
    %2860 = vmatpush1.bf16.msra.mxu0 0
    %2861 = vmatprep.subr.bf16.mxu0 0
    %2862 = vmatpush1.bf16.msra.mxu0 0
    %2863 = vmatprep.subr.bf16.mxu0 0
    %2864 = vmatpush1.bf16.msra.mxu0 0
    %2865 = vmatprep.subr.bf16.mxu0 0
    %2866 = vmatpush1.bf16.msra.mxu0 0
    %2867 = vmatprep.subr.bf16.mxu0 0
    %2868 = vmatpush1.bf16.msra.mxu0 0
    %2869 = vmatprep.subr.bf16.mxu0 0
    %2870 = vmatpush1.bf16.msra.mxu0 0
    %2871 = vmatprep.subr.bf16.mxu0 0
    %2872 = vmatpush1.bf16.msra.mxu0 0
    %2873 = vmatprep.mubr.bf16.mxu0 0
    %2874 = vmatmul.mubr.bf16.gmra.mrb[0].mxu0 %v2839
    %v2875 = vpop.f32.mrb[0].mxu0
    %v2876 = vadd.f32 %v2824, %v2875
    %v2877 = vpop.f32.mrb[0].mxu0
    %v2878 = vpop.f32.mrb[0].mxu0
    %v2879 = vadd.f32 %v2824, %v2878
    %v2880 = vpop.f32.mrb[0].mxu0
    %2881 = vdwg.mxu0
    %v2882 = vmul.f32 %v2876, %v2876
    %v2883 = vmul.f32 %v2879, %v2879
    %v2884 = vmul.f32 %v2876, %v2882
    %v2885 = vmul.f32 %v2879, %v2883
    %v2886 = vmul.f32 %v2884, 0.044715
    %v2887 = vmul.f32 %v2885, 0.044715
    %v2888 = vadd.f32 %v2876, %v2886
    %v2889 = vadd.f32 %v2879, %v2887
    %v2890 = vmul.f32 %v2888, 0.7978846
    %v2891 = vmul.f32 %v2889, 0.7978846
    %v2892 = vtanh.pop %v2890
    %v2893 = vtanh.pop %v2891
    %v2894 = vadd.f32 %v2892, 1.0
    %v2895 = vadd.f32 %v2893, 1.0
    %v2896 = vmul.f32 %v2894, 0.5
    %v2897 = vmul.f32 %v2895, 0.5
    %v2898 = vmul.f32 %v2876, %v2896
    %v2899 = vmul.f32 %v2879, %v2897
    %v2900 = vpack.c.bf16 %v2899, %v2898
    %v2901 = vld [vmem:[%s17] sm:$0xf]
    %v2902 = vld [vmem:[%s17 + $0x4] sm:$0xf]
    %v2903 = vld [vmem:[%s17 + $0x8] sm:$0xf]
    %v2904 = vld [vmem:[%s17 + $0xc] sm:$0xf]
    %v2905 = vld [vmem:[%s17 + $0x10] sm:$0xf]
    %v2906 = vld [vmem:[%s17 + $0x14] sm:$0xf]
    %v2907 = vld [vmem:[%s17 + $0x18] sm:$0xf]
    %v2908 = vld [vmem:[%s17 + $0x1c] sm:$0xf]
    %v2917 = vunpack.c.l.b16 %v2901
    %v2918 = vunpack.c.l.b16 %v2902
    %v2919 = vunpack.c.l.b16 %v2903
    %v2920 = vunpack.c.l.b16 %v2904
    %v2921 = vunpack.c.l.b16 %v2905
    %v2922 = vunpack.c.l.b16 %v2906
    %v2923 = vunpack.c.l.b16 %v2907
    %v2924 = vunpack.c.l.b16 %v2908
    %v2925 = vpack.c.b16 %v2918, %v2917
    %v2926 = vpack.c.b16 %v2920, %v2919
    %v2927 = vpack.c.b16 %v2922, %v2921
    %v2928 = vpack.c.b16 %v2924, %v2923
    %v2934 = vsel %vm180, %v2900, 0
    %2936 = vmatprep.subr.bf16.mxu0 0
    %2937 = vmatpush1.bf16.msra.mxu0 %v2925
    %2938 = vmatprep.subr.bf16.mxu0 0
    %2939 = vmatpush1.bf16.msra.mxu0 %v2926
    %2940 = vmatprep.subr.bf16.mxu0 0
    %2941 = vmatpush1.bf16.msra.mxu0 %v2927
    %2942 = vmatprep.subr.bf16.mxu0 0
    %2943 = vmatpush1.bf16.msra.mxu0 %v2928
    %2944 = vmatprep.subr.bf16.mxu0 0
    %2945 = vmatpush1.bf16.msra.mxu0 0
    %2946 = vmatprep.subr.bf16.mxu0 0
    %2947 = vmatpush1.bf16.msra.mxu0 0
    %2948 = vmatprep.subr.bf16.mxu0 0
    %2949 = vmatpush1.bf16.msra.mxu0 0
    %2950 = vmatprep.subr.bf16.mxu0 0
    %2951 = vmatpush1.bf16.msra.mxu0 0
    %2952 = vmatprep.subr.bf16.mxu0 0
    %2953 = vmatpush1.bf16.msra.mxu0 0
    %2954 = vmatprep.subr.bf16.mxu0 0
    %2955 = vmatpush1.bf16.msra.mxu0 0
    %2956 = vmatprep.subr.bf16.mxu0 0
    %2957 = vmatpush1.bf16.msra.mxu0 0
    %2958 = vmatprep.subr.bf16.mxu0 0
    %2959 = vmatpush1.bf16.msra.mxu0 0
    %2960 = vmatprep.subr.bf16.mxu0 0
    %2961 = vmatpush1.bf16.msra.mxu0 0
    %2962 = vmatprep.subr.bf16.mxu0 0
    %2963 = vmatpush1.bf16.msra.mxu0 0
    %2964 = vmatprep.subr.bf16.mxu0 0
    %2965 = vmatpush1.bf16.msra.mxu0 0
    %2966 = vmatprep.subr.bf16.mxu0 0
    %2967 = vmatpush1.bf16.msra.mxu0 0
    %2968 = vmatprep.mubr.bf16.mxu0 0
    %2969 = vmatmul.mubr.bf16.gmra.mrb[0].mxu0 %v2934
    %v2970 = vpop.f32.mrb[0].mxu0
    %v2971 = vadd.f32 0.0, %v2970
    %v2972 = vpop.f32.mrb[0].mxu0
    %v2973 = vpop.f32.mrb[0].mxu0
    %v2974 = vadd.f32 0.0, %v2973
    %v2975 = vpop.f32.mrb[0].mxu0
    %2976 = vdwg.mxu0
    %v2977 = vadd.f32 %v2768, %v2971
    %v2978 = vadd.f32 %v2769, %v2974
    %v2979 = vld [vmem:[%s18] sm:$0x1]
    %v2981 = vlaneseq
    %v2982 = vshrl.u32 %v2981, 7
    %v2983 = vsub.s32 0, %v2982
    %v2984 = vrot.slane %v2979, %v2983
    %v2986 = vadd.f32 %v2977, %v2984
    %v2987 = vadd.f32 %v2978, %v2984
    %s2988 = scalar_lea.vmem %s3, 1
    %v2989 = vld [vmem:[%s2988] sm:$0x1]
    %s2990 = scalar_lea.vmem %s4, 1
    %v2991 = vld [vmem:[%s2990] sm:$0x1]
    %v2992 = vsel %vm231, %v2986, 0.0
    %2993 = vadd.xlane.f32.xlu0 %v2992
    %v2994 = vpop.xlane.xlu0 %2993
    %v2995 = vsel %vm231, %v2987, 0.0
    %2996 = vadd.xlane.f32.xlu0 %v2995
    %v2997 = vpop.xlane.xlu0 %2996
    %v2998 = vmul.f32 %v2994, %v238
    %v2999 = vmul.f32 %v2997, %v238
    %v3000 = vsub.f32 %v2986, %v2998
    %v3001 = vsub.f32 %v2987, %v2999
    %v3002 = vmul.f32 %v3000, %v3000
    %v3003 = vmul.f32 %v3001, %v3001
    %v3004 = vsel %vm231, %v3002, 0.0
    %3005 = vadd.xlane.f32.xlu0 %v3004
    %v3006 = vpop.xlane.xlu0 %3005
    %v3007 = vsel %vm231, %v3003, 0.0
    %3008 = vadd.xlane.f32.xlu0 %v3007
    %v3009 = vpop.xlane.xlu0 %3008
    %v3010 = vmul.f32 %v3006, %v238
    %v3011 = vmul.f32 %v3009, %v238
    %v3012 = vadd.f32 %v3010, 1e-12
    %v3013 = vadd.f32 %v3011, 1e-12
    %v3014 = vrsqrt.pop %v3012
    %v3015 = vrsqrt.pop %v3013
    %v3016 = vmul.f32 %v3000, %v3014
    %v3017 = vmul.f32 %v3001, %v3015
    %v3019 = vlaneseq
    %v3020 = vshrl.u32 %v3019, 7
    %v3021 = vsub.s32 0, %v3020
    %v3022 = vrot.slane %v2989, %v3021
    %v3024 = vmul.f32 %v3016, %v3022
    %v3025 = vmul.f32 %v3017, %v3022
    %v3027 = vlaneseq
    %v3028 = vshrl.u32 %v3027, 7
    %v3029 = vsub.s32 0, %v3028
    %v3030 = vrot.slane %v2991, %v3029
    %v3032 = vadd.f32 %v3024, %v3030
    %v3033 = vadd.f32 %v3025, %v3030
    %v3034 = vpack.c.bf16 %v3032, %v3032
    %v3035 = vpack.c.bf16 %v3033, %v3033
    %s3036 = scalar_lea.vmem %s5, 64
    %v3037 = vld [vmem:[%s3036] sm:$0xf]
    %v3038 = vld [vmem:[%s3036 + $0x4] sm:$0xf]
    %v3039 = vld [vmem:[%s3036 + $0x8] sm:$0xf]
    %v3040 = vld [vmem:[%s3036 + $0xc] sm:$0xf]
    %v3041 = vld [vmem:[%s3036 + $0x10] sm:$0xf]
    %v3042 = vld [vmem:[%s3036 + $0x14] sm:$0xf]
    %v3043 = vld [vmem:[%s3036 + $0x18] sm:$0xf]
    %v3044 = vld [vmem:[%s3036 + $0x1c] sm:$0xf]
    %v3045 = vld [vmem:[%s3036 + $0x20] sm:$0xf]
    %v3046 = vld [vmem:[%s3036 + $0x24] sm:$0xf]
    %v3047 = vld [vmem:[%s3036 + $0x28] sm:$0xf]
    %v3048 = vld [vmem:[%s3036 + $0x2c] sm:$0xf]
    %v3049 = vld [vmem:[%s3036 + $0x30] sm:$0xf]
    %v3050 = vld [vmem:[%s3036 + $0x34] sm:$0xf]
    %v3051 = vld [vmem:[%s3036 + $0x38] sm:$0xf]
    %v3052 = vld [vmem:[%s3036 + $0x3c] sm:$0xf]
    %s3053 = scalar_lea.vmem %s6, 4
    %v3054 = vld [vmem:[%s3053] sm:$0x1]
    %v3055 = vld [vmem:[%s3053 + $0x1] sm:$0x1]
    %v3056 = vld [vmem:[%s3053 + $0x2] sm:$0x1]
    %v3057 = vld [vmem:[%s3053 + $0x3] sm:$0x1]
    %v3062 = vlaneseq
    %v3063 = vshrl.u32 %v3062, 7
    %v3064 = vsub.s32 0, %v3063
    %v3065 = vrot.slane %v3054, %v3064
    %v3066 = vlaneseq
    %v3067 = vshrl.u32 %v3066, 7
    %v3068 = vsub.s32 0, %v3067
    %v3069 = vrot.slane %v3055, %v3068
    %v3070 = vlaneseq
    %v3071 = vshrl.u32 %v3070, 7
    %v3072 = vsub.s32 0, %v3071
    %v3073 = vrot.slane %v3056, %v3072
    %v3074 = vlaneseq
    %v3075 = vshrl.u32 %v3074, 7
    %v3076 = vsub.s32 0, %v3075
    %v3077 = vrot.slane %v3057, %v3076
    %v3086 = vunpack.c.l.b16 %v3037
    %v3087 = vunpack.c.l.b16 %v3038
    %v3088 = vunpack.c.l.b16 %v3039
    %v3089 = vunpack.c.l.b16 %v3040
    %v3090 = vpack.c.b16 %v3087, %v3086
    %v3091 = vpack.c.b16 %v3089, %v3088
    %v3095 = vsel %vm231, %v3034, 0
    %3097 = vmatprep.subr.bf16.mxu0 0
    %3098 = vmatpush1.bf16.msra.mxu0 %v3090
    %3099 = vmatprep.subr.bf16.mxu0 0
    %3100 = vmatpush1.bf16.msra.mxu0 %v3091
    %3101 = vmatprep.subr.bf16.mxu0 0
    %3102 = vmatpush1.bf16.msra.mxu0 0
    %3103 = vmatprep.subr.bf16.mxu0 0
    %3104 = vmatpush1.bf16.msra.mxu0 0
    %3105 = vmatprep.subr.bf16.mxu0 0
    %3106 = vmatpush1.bf16.msra.mxu0 0
    %3107 = vmatprep.subr.bf16.mxu0 0
    %3108 = vmatpush1.bf16.msra.mxu0 0
    %3109 = vmatprep.subr.bf16.mxu0 0
    %3110 = vmatpush1.bf16.msra.mxu0 0
    %3111 = vmatprep.subr.bf16.mxu0 0
    %3112 = vmatpush1.bf16.msra.mxu0 0
    %3113 = vmatprep.subr.bf16.mxu0 0
    %3114 = vmatpush1.bf16.msra.mxu0 0
    %3115 = vmatprep.subr.bf16.mxu0 0
    %3116 = vmatpush1.bf16.msra.mxu0 0
    %3117 = vmatprep.subr.bf16.mxu0 0
    %3118 = vmatpush1.bf16.msra.mxu0 0
    %3119 = vmatprep.subr.bf16.mxu0 0
    %3120 = vmatpush1.bf16.msra.mxu0 0
    %3121 = vmatprep.subr.bf16.mxu0 0
    %3122 = vmatpush1.bf16.msra.mxu0 0
    %3123 = vmatprep.subr.bf16.mxu0 0
    %3124 = vmatpush1.bf16.msra.mxu0 0
    %3125 = vmatprep.subr.bf16.mxu0 0
    %3126 = vmatpush1.bf16.msra.mxu0 0
    %3127 = vmatprep.subr.bf16.mxu0 0
    %3128 = vmatpush1.bf16.msra.mxu0 0
    %3129 = vmatprep.mubr.bf16.mxu0 0
    %3130 = vmatmul.mubr.bf16.gmra.mrb[0].mxu0 %v3095
    %v3131 = vpop.f32.mrb[0].mxu0
    %v3132 = vadd.f32 %v3065, %v3131
    %v3133 = vpop.f32.mrb[0].mxu0
    %v3134 = vpop.f32.mrb[0].mxu0
    %v3135 = vpop.f32.mrb[0].mxu0
    %3136 = vdwg.mxu0
    %v3141 = vunpack.c.l.b16 %v3041
    %v3142 = vunpack.c.l.b16 %v3042
    %v3143 = vunpack.c.l.b16 %v3043
    %v3144 = vunpack.c.l.b16 %v3044
    %v3145 = vpack.c.b16 %v3142, %v3141
    %v3146 = vpack.c.b16 %v3144, %v3143
    %3149 = vmatprep.subr.bf16.mxu0 0
    %3150 = vmatpush1.bf16.msra.mxu0 %v3145
    %3151 = vmatprep.subr.bf16.mxu0 0
    %3152 = vmatpush1.bf16.msra.mxu0 %v3146
    %3153 = vmatprep.subr.bf16.mxu0 0
    %3154 = vmatpush1.bf16.msra.mxu0 0
    %3155 = vmatprep.subr.bf16.mxu0 0
    %3156 = vmatpush1.bf16.msra.mxu0 0
    %3157 = vmatprep.subr.bf16.mxu0 0
    %3158 = vmatpush1.bf16.msra.mxu0 0
    %3159 = vmatprep.subr.bf16.mxu0 0
    %3160 = vmatpush1.bf16.msra.mxu0 0
    %3161 = vmatprep.subr.bf16.mxu0 0
    %3162 = vmatpush1.bf16.msra.mxu0 0
    %3163 = vmatprep.subr.bf16.mxu0 0
    %3164 = vmatpush1.bf16.msra.mxu0 0
    %3165 = vmatprep.subr.bf16.mxu0 0
    %3166 = vmatpush1.bf16.msra.mxu0 0
    %3167 = vmatprep.subr.bf16.mxu0 0
    %3168 = vmatpush1.bf16.msra.mxu0 0
    %3169 = vmatprep.subr.bf16.mxu0 0
    %3170 = vmatpush1.bf16.msra.mxu0 0
    %3171 = vmatprep.subr.bf16.mxu0 0
    %3172 = vmatpush1.bf16.msra.mxu0 0
    %3173 = vmatprep.subr.bf16.mxu0 0
    %3174 = vmatpush1.bf16.msra.mxu0 0
    %3175 = vmatprep.subr.bf16.mxu0 0
    %3176 = vmatpush1.bf16.msra.mxu0 0
    %3177 = vmatprep.subr.bf16.mxu0 0
    %3178 = vmatpush1.bf16.msra.mxu0 0
    %3179 = vmatprep.subr.bf16.mxu0 0
    %3180 = vmatpush1.bf16.msra.mxu0 0
    %3181 = vmatprep.mubr.bf16.mxu0 0
    %3182 = vmatmul.mubr.bf16.gmra.mrb[0].mxu0 %v3095
    %v3183 = vpop.f32.mrb[0].mxu0
    %v3184 = vadd.f32 %v3069, %v3183
    %v3185 = vpop.f32.mrb[0].mxu0
    %v3186 = vpop.f32.mrb[0].mxu0
    %v3187 = vpop.f32.mrb[0].mxu0
    %3188 = vdwg.mxu0
    %v3193 = vunpack.c.l.b16 %v3045
    %v3194 = vunpack.c.l.b16 %v3046
    %v3195 = vunpack.c.l.b16 %v3047
    %v3196 = vunpack.c.l.b16 %v3048
    %v3197 = vpack.c.b16 %v3194, %v3193
    %v3198 = vpack.c.b16 %v3196, %v3195
    %3201 = vmatprep.subr.bf16.mxu0 0
    %3202 = vmatpush1.bf16.msra.mxu0 %v3197
    %3203 = vmatprep.subr.bf16.mxu0 0
    %3204 = vmatpush1.bf16.msra.mxu0 %v3198
    %3205 = vmatprep.subr.bf16.mxu0 0
    %3206 = vmatpush1.bf16.msra.mxu0 0
    %3207 = vmatprep.subr.bf16.mxu0 0
    %3208 = vmatpush1.bf16.msra.mxu0 0
    %3209 = vmatprep.subr.bf16.mxu0 0
    %3210 = vmatpush1.bf16.msra.mxu0 0
    %3211 = vmatprep.subr.bf16.mxu0 0
    %3212 = vmatpush1.bf16.msra.mxu0 0
    %3213 = vmatprep.subr.bf16.mxu0 0
    %3214 = vmatpush1.bf16.msra.mxu0 0
    %3215 = vmatprep.subr.bf16.mxu0 0
    %3216 = vmatpush1.bf16.msra.mxu0 0
    %3217 = vmatprep.subr.bf16.mxu0 0
    %3218 = vmatpush1.bf16.msra.mxu0 0
    %3219 = vmatprep.subr.bf16.mxu0 0
    %3220 = vmatpush1.bf16.msra.mxu0 0
    %3221 = vmatprep.subr.bf16.mxu0 0
    %3222 = vmatpush1.bf16.msra.mxu0 0
    %3223 = vmatprep.subr.bf16.mxu0 0
    %3224 = vmatpush1.bf16.msra.mxu0 0
    %3225 = vmatprep.subr.bf16.mxu0 0
    %3226 = vmatpush1.bf16.msra.mxu0 0
    %3227 = vmatprep.subr.bf16.mxu0 0
    %3228 = vmatpush1.bf16.msra.mxu0 0
    %3229 = vmatprep.subr.bf16.mxu0 0
    %3230 = vmatpush1.bf16.msra.mxu0 0
    %3231 = vmatprep.subr.bf16.mxu0 0
    %3232 = vmatpush1.bf16.msra.mxu0 0
    %3233 = vmatprep.mubr.bf16.mxu0 0
    %3234 = vmatmul.mubr.bf16.gmra.mrb[0].mxu0 %v3095
    %v3235 = vpop.f32.mrb[0].mxu0
    %v3236 = vadd.f32 %v3073, %v3235
    %v3237 = vpop.f32.mrb[0].mxu0
    %v3238 = vpop.f32.mrb[0].mxu0
    %v3239 = vpop.f32.mrb[0].mxu0
    %3240 = vdwg.mxu0
    %v3245 = vunpack.c.l.b16 %v3049
    %v3246 = vunpack.c.l.b16 %v3050
    %v3247 = vunpack.c.l.b16 %v3051
    %v3248 = vunpack.c.l.b16 %v3052
    %v3249 = vpack.c.b16 %v3246, %v3245
    %v3250 = vpack.c.b16 %v3248, %v3247
    %3253 = vmatprep.subr.bf16.mxu0 0
    %3254 = vmatpush1.bf16.msra.mxu0 %v3249
    %3255 = vmatprep.subr.bf16.mxu0 0
    %3256 = vmatpush1.bf16.msra.mxu0 %v3250
    %3257 = vmatprep.subr.bf16.mxu0 0
    %3258 = vmatpush1.bf16.msra.mxu0 0
    %3259 = vmatprep.subr.bf16.mxu0 0
    %3260 = vmatpush1.bf16.msra.mxu0 0
    %3261 = vmatprep.subr.bf16.mxu0 0
    %3262 = vmatpush1.bf16.msra.mxu0 0
    %3263 = vmatprep.subr.bf16.mxu0 0
    %3264 = vmatpush1.bf16.msra.mxu0 0
    %3265 = vmatprep.subr.bf16.mxu0 0
    %3266 = vmatpush1.bf16.msra.mxu0 0
    %3267 = vmatprep.subr.bf16.mxu0 0
    %3268 = vmatpush1.bf16.msra.mxu0 0
    %3269 = vmatprep.subr.bf16.mxu0 0
    %3270 = vmatpush1.bf16.msra.mxu0 0
    %3271 = vmatprep.subr.bf16.mxu0 0
    %3272 = vmatpush1.bf16.msra.mxu0 0
    %3273 = vmatprep.subr.bf16.mxu0 0
    %3274 = vmatpush1.bf16.msra.mxu0 0
    %3275 = vmatprep.subr.bf16.mxu0 0
    %3276 = vmatpush1.bf16.msra.mxu0 0
    %3277 = vmatprep.subr.bf16.mxu0 0
    %3278 = vmatpush1.bf16.msra.mxu0 0
    %3279 = vmatprep.subr.bf16.mxu0 0
    %3280 = vmatpush1.bf16.msra.mxu0 0
    %3281 = vmatprep.subr.bf16.mxu0 0
    %3282 = vmatpush1.bf16.msra.mxu0 0
    %3283 = vmatprep.subr.bf16.mxu0 0
    %3284 = vmatpush1.bf16.msra.mxu0 0
    %3285 = vmatprep.mubr.bf16.mxu0 0
    %3286 = vmatmul.mubr.bf16.gmra.mrb[0].mxu0 %v3095
    %v3287 = vpop.f32.mrb[0].mxu0
    %v3288 = vadd.f32 %v3077, %v3287
    %v3289 = vpop.f32.mrb[0].mxu0
    %v3290 = vpop.f32.mrb[0].mxu0
    %v3291 = vpop.f32.mrb[0].mxu0
    %3292 = vdwg.mxu0
    %v3294 = vsel %vm231, %v3035, 0
    %3296 = vmatprep.subr.bf16.mxu0 0
    %3297 = vmatpush1.bf16.msra.mxu0 %v3090
    %3298 = vmatprep.subr.bf16.mxu0 0
    %3299 = vmatpush1.bf16.msra.mxu0 %v3091
    %3300 = vmatprep.subr.bf16.mxu0 0
    %3301 = vmatpush1.bf16.msra.mxu0 0
    %3302 = vmatprep.subr.bf16.mxu0 0
    %3303 = vmatpush1.bf16.msra.mxu0 0
    %3304 = vmatprep.subr.bf16.mxu0 0
    %3305 = vmatpush1.bf16.msra.mxu0 0
    %3306 = vmatprep.subr.bf16.mxu0 0
    %3307 = vmatpush1.bf16.msra.mxu0 0
    %3308 = vmatprep.subr.bf16.mxu0 0
    %3309 = vmatpush1.bf16.msra.mxu0 0
    %3310 = vmatprep.subr.bf16.mxu0 0
    %3311 = vmatpush1.bf16.msra.mxu0 0
    %3312 = vmatprep.subr.bf16.mxu0 0
    %3313 = vmatpush1.bf16.msra.mxu0 0
    %3314 = vmatprep.subr.bf16.mxu0 0
    %3315 = vmatpush1.bf16.msra.mxu0 0
    %3316 = vmatprep.subr.bf16.mxu0 0
    %3317 = vmatpush1.bf16.msra.mxu0 0
    %3318 = vmatprep.subr.bf16.mxu0 0
    %3319 = vmatpush1.bf16.msra.mxu0 0
    %3320 = vmatprep.subr.bf16.mxu0 0
    %3321 = vmatpush1.bf16.msra.mxu0 0
    %3322 = vmatprep.subr.bf16.mxu0 0
    %3323 = vmatpush1.bf16.msra.mxu0 0
    %3324 = vmatprep.subr.bf16.mxu0 0
    %3325 = vmatpush1.bf16.msra.mxu0 0
    %3326 = vmatprep.subr.bf16.mxu0 0
    %3327 = vmatpush1.bf16.msra.mxu0 0
    %3328 = vmatprep.mubr.bf16.mxu0 0
    %3329 = vmatmul.mubr.bf16.gmra.mrb[0].mxu0 %v3294
    %v3330 = vpop.f32.mrb[0].mxu0
    %v3331 = vadd.f32 %v3065, %v3330
    %v3332 = vpop.f32.mrb[0].mxu0
    %v3333 = vpop.f32.mrb[0].mxu0
    %v3334 = vpop.f32.mrb[0].mxu0
    %3335 = vdwg.mxu0
    %3336 = vmatprep.subr.bf16.mxu0 0
    %3337 = vmatpush1.bf16.msra.mxu0 %v3145
    %3338 = vmatprep.subr.bf16.mxu0 0
    %3339 = vmatpush1.bf16.msra.mxu0 %v3146
    %3340 = vmatprep.subr.bf16.mxu0 0
    %3341 = vmatpush1.bf16.msra.mxu0 0
    %3342 = vmatprep.subr.bf16.mxu0 0
    %3343 = vmatpush1.bf16.msra.mxu0 0
    %3344 = vmatprep.subr.bf16.mxu0 0
    %3345 = vmatpush1.bf16.msra.mxu0 0
    %3346 = vmatprep.subr.bf16.mxu0 0
    %3347 = vmatpush1.bf16.msra.mxu0 0
    %3348 = vmatprep.subr.bf16.mxu0 0
    %3349 = vmatpush1.bf16.msra.mxu0 0
    %3350 = vmatprep.subr.bf16.mxu0 0
    %3351 = vmatpush1.bf16.msra.mxu0 0
    %3352 = vmatprep.subr.bf16.mxu0 0
    %3353 = vmatpush1.bf16.msra.mxu0 0
    %3354 = vmatprep.subr.bf16.mxu0 0
    %3355 = vmatpush1.bf16.msra.mxu0 0
    %3356 = vmatprep.subr.bf16.mxu0 0
    %3357 = vmatpush1.bf16.msra.mxu0 0
    %3358 = vmatprep.subr.bf16.mxu0 0
    %3359 = vmatpush1.bf16.msra.mxu0 0
    %3360 = vmatprep.subr.bf16.mxu0 0
    %3361 = vmatpush1.bf16.msra.mxu0 0
    %3362 = vmatprep.subr.bf16.mxu0 0
    %3363 = vmatpush1.bf16.msra.mxu0 0
    %3364 = vmatprep.subr.bf16.mxu0 0
    %3365 = vmatpush1.bf16.msra.mxu0 0
    %3366 = vmatprep.subr.bf16.mxu0 0
    %3367 = vmatpush1.bf16.msra.mxu0 0
    %3368 = vmatprep.mubr.bf16.mxu0 0
    %3369 = vmatmul.mubr.bf16.gmra.mrb[0].mxu0 %v3294
    %v3370 = vpop.f32.mrb[0].mxu0
    %v3371 = vadd.f32 %v3069, %v3370
    %v3372 = vpop.f32.mrb[0].mxu0
    %v3373 = vpop.f32.mrb[0].mxu0
    %v3374 = vpop.f32.mrb[0].mxu0
    %3375 = vdwg.mxu0
    %3376 = vmatprep.subr.bf16.mxu0 0
    %3377 = vmatpush1.bf16.msra.mxu0 %v3197
    %3378 = vmatprep.subr.bf16.mxu0 0
    %3379 = vmatpush1.bf16.msra.mxu0 %v3198
    %3380 = vmatprep.subr.bf16.mxu0 0
    %3381 = vmatpush1.bf16.msra.mxu0 0
    %3382 = vmatprep.subr.bf16.mxu0 0
    %3383 = vmatpush1.bf16.msra.mxu0 0
    %3384 = vmatprep.subr.bf16.mxu0 0
    %3385 = vmatpush1.bf16.msra.mxu0 0
    %3386 = vmatprep.subr.bf16.mxu0 0
    %3387 = vmatpush1.bf16.msra.mxu0 0
    %3388 = vmatprep.subr.bf16.mxu0 0
    %3389 = vmatpush1.bf16.msra.mxu0 0
    %3390 = vmatprep.subr.bf16.mxu0 0
    %3391 = vmatpush1.bf16.msra.mxu0 0
    %3392 = vmatprep.subr.bf16.mxu0 0
    %3393 = vmatpush1.bf16.msra.mxu0 0
    %3394 = vmatprep.subr.bf16.mxu0 0
    %3395 = vmatpush1.bf16.msra.mxu0 0
    %3396 = vmatprep.subr.bf16.mxu0 0
    %3397 = vmatpush1.bf16.msra.mxu0 0
    %3398 = vmatprep.subr.bf16.mxu0 0
    %3399 = vmatpush1.bf16.msra.mxu0 0
    %3400 = vmatprep.subr.bf16.mxu0 0
    %3401 = vmatpush1.bf16.msra.mxu0 0
    %3402 = vmatprep.subr.bf16.mxu0 0
    %3403 = vmatpush1.bf16.msra.mxu0 0
    %3404 = vmatprep.subr.bf16.mxu0 0
    %3405 = vmatpush1.bf16.msra.mxu0 0
    %3406 = vmatprep.subr.bf16.mxu0 0
    %3407 = vmatpush1.bf16.msra.mxu0 0
    %3408 = vmatprep.mubr.bf16.mxu0 0
    %3409 = vmatmul.mubr.bf16.gmra.mrb[0].mxu0 %v3294
    %v3410 = vpop.f32.mrb[0].mxu0
    %v3411 = vadd.f32 %v3073, %v3410
    %v3412 = vpop.f32.mrb[0].mxu0
    %v3413 = vpop.f32.mrb[0].mxu0
    %v3414 = vpop.f32.mrb[0].mxu0
    %3415 = vdwg.mxu0
    %3416 = vmatprep.subr.bf16.mxu0 0
    %3417 = vmatpush1.bf16.msra.mxu0 %v3249
    %3418 = vmatprep.subr.bf16.mxu0 0
    %3419 = vmatpush1.bf16.msra.mxu0 %v3250
    %3420 = vmatprep.subr.bf16.mxu0 0
    %3421 = vmatpush1.bf16.msra.mxu0 0
    %3422 = vmatprep.subr.bf16.mxu0 0
    %3423 = vmatpush1.bf16.msra.mxu0 0
    %3424 = vmatprep.subr.bf16.mxu0 0
    %3425 = vmatpush1.bf16.msra.mxu0 0
    %3426 = vmatprep.subr.bf16.mxu0 0
    %3427 = vmatpush1.bf16.msra.mxu0 0
    %3428 = vmatprep.subr.bf16.mxu0 0
    %3429 = vmatpush1.bf16.msra.mxu0 0
    %3430 = vmatprep.subr.bf16.mxu0 0
    %3431 = vmatpush1.bf16.msra.mxu0 0
    %3432 = vmatprep.subr.bf16.mxu0 0
    %3433 = vmatpush1.bf16.msra.mxu0 0
    %3434 = vmatprep.subr.bf16.mxu0 0
    %3435 = vmatpush1.bf16.msra.mxu0 0
    %3436 = vmatprep.subr.bf16.mxu0 0
    %3437 = vmatpush1.bf16.msra.mxu0 0
    %3438 = vmatprep.subr.bf16.mxu0 0
    %3439 = vmatpush1.bf16.msra.mxu0 0
    %3440 = vmatprep.subr.bf16.mxu0 0
    %3441 = vmatpush1.bf16.msra.mxu0 0
    %3442 = vmatprep.subr.bf16.mxu0 0
    %3443 = vmatpush1.bf16.msra.mxu0 0
    %3444 = vmatprep.subr.bf16.mxu0 0
    %3445 = vmatpush1.bf16.msra.mxu0 0
    %3446 = vmatprep.subr.bf16.mxu0 0
    %3447 = vmatpush1.bf16.msra.mxu0 0
    %3448 = vmatprep.mubr.bf16.mxu0 0
    %3449 = vmatmul.mubr.bf16.gmra.mrb[0].mxu0 %v3294
    %v3450 = vpop.f32.mrb[0].mxu0
    %v3451 = vadd.f32 %v3077, %v3450
    %v3452 = vpop.f32.mrb[0].mxu0
    %v3453 = vpop.f32.mrb[0].mxu0
    %v3454 = vpop.f32.mrb[0].mxu0
    %3455 = vdwg.mxu0
    %s3456 = scalar_lea.vmem %s7, 64
    %v3457 = vld [vmem:[%s3456] sm:$0xf]
    %v3458 = vld [vmem:[%s3456 + $0x4] sm:$0xf]
    %v3459 = vld [vmem:[%s3456 + $0x8] sm:$0xf]
    %v3460 = vld [vmem:[%s3456 + $0xc] sm:$0xf]
    %v3461 = vld [vmem:[%s3456 + $0x10] sm:$0xf]
    %v3462 = vld [vmem:[%s3456 + $0x14] sm:$0xf]
    %v3463 = vld [vmem:[%s3456 + $0x18] sm:$0xf]
    %v3464 = vld [vmem:[%s3456 + $0x1c] sm:$0xf]
    %v3465 = vld [vmem:[%s3456 + $0x20] sm:$0xf]
    %v3466 = vld [vmem:[%s3456 + $0x24] sm:$0xf]
    %v3467 = vld [vmem:[%s3456 + $0x28] sm:$0xf]
    %v3468 = vld [vmem:[%s3456 + $0x2c] sm:$0xf]
    %v3469 = vld [vmem:[%s3456 + $0x30] sm:$0xf]
    %v3470 = vld [vmem:[%s3456 + $0x34] sm:$0xf]
    %v3471 = vld [vmem:[%s3456 + $0x38] sm:$0xf]
    %v3472 = vld [vmem:[%s3456 + $0x3c] sm:$0xf]
    %s3473 = scalar_lea.vmem %s8, 4
    %v3474 = vld [vmem:[%s3473] sm:$0x1]
    %v3475 = vld [vmem:[%s3473 + $0x1] sm:$0x1]
    %v3476 = vld [vmem:[%s3473 + $0x2] sm:$0x1]
    %v3477 = vld [vmem:[%s3473 + $0x3] sm:$0x1]
    %v3482 = vlaneseq
    %v3483 = vshrl.u32 %v3482, 7
    %v3484 = vsub.s32 0, %v3483
    %v3485 = vrot.slane %v3474, %v3484
    %v3486 = vlaneseq
    %v3487 = vshrl.u32 %v3486, 7
    %v3488 = vsub.s32 0, %v3487
    %v3489 = vrot.slane %v3475, %v3488
    %v3490 = vlaneseq
    %v3491 = vshrl.u32 %v3490, 7
    %v3492 = vsub.s32 0, %v3491
    %v3493 = vrot.slane %v3476, %v3492
    %v3494 = vlaneseq
    %v3495 = vshrl.u32 %v3494, 7
    %v3496 = vsub.s32 0, %v3495
    %v3497 = vrot.slane %v3477, %v3496
    %v3506 = vunpack.c.l.b16 %v3457
    %v3507 = vunpack.c.l.b16 %v3458
    %v3508 = vunpack.c.l.b16 %v3459
    %v3509 = vunpack.c.l.b16 %v3460
    %v3510 = vpack.c.b16 %v3507, %v3506
    %v3511 = vpack.c.b16 %v3509, %v3508
    %3514 = vmatprep.subr.bf16.mxu0 0
    %3515 = vmatpush1.bf16.msra.mxu0 %v3510
    %3516 = vmatprep.subr.bf16.mxu0 0
    %3517 = vmatpush1.bf16.msra.mxu0 %v3511
    %3518 = vmatprep.subr.bf16.mxu0 0
    %3519 = vmatpush1.bf16.msra.mxu0 0
    %3520 = vmatprep.subr.bf16.mxu0 0
    %3521 = vmatpush1.bf16.msra.mxu0 0
    %3522 = vmatprep.subr.bf16.mxu0 0
    %3523 = vmatpush1.bf16.msra.mxu0 0
    %3524 = vmatprep.subr.bf16.mxu0 0
    %3525 = vmatpush1.bf16.msra.mxu0 0
    %3526 = vmatprep.subr.bf16.mxu0 0
    %3527 = vmatpush1.bf16.msra.mxu0 0
    %3528 = vmatprep.subr.bf16.mxu0 0
    %3529 = vmatpush1.bf16.msra.mxu0 0
    %3530 = vmatprep.subr.bf16.mxu0 0
    %3531 = vmatpush1.bf16.msra.mxu0 0
    %3532 = vmatprep.subr.bf16.mxu0 0
    %3533 = vmatpush1.bf16.msra.mxu0 0
    %3534 = vmatprep.subr.bf16.mxu0 0
    %3535 = vmatpush1.bf16.msra.mxu0 0
    %3536 = vmatprep.subr.bf16.mxu0 0
    %3537 = vmatpush1.bf16.msra.mxu0 0
    %3538 = vmatprep.subr.bf16.mxu0 0
    %3539 = vmatpush1.bf16.msra.mxu0 0
    %3540 = vmatprep.subr.bf16.mxu0 0
    %3541 = vmatpush1.bf16.msra.mxu0 0
    %3542 = vmatprep.subr.bf16.mxu0 0
    %3543 = vmatpush1.bf16.msra.mxu0 0
    %3544 = vmatprep.subr.bf16.mxu0 0
    %3545 = vmatpush1.bf16.msra.mxu0 0
    %3546 = vmatprep.mubr.bf16.mxu0 0
    %3547 = vmatmul.mubr.bf16.gmra.mrb[0].mxu0 %v3095
    %v3548 = vpop.f32.mrb[0].mxu0
    %v3549 = vadd.f32 %v3485, %v3548
    %v3550 = vpop.f32.mrb[0].mxu0
    %v3551 = vpop.f32.mrb[0].mxu0
    %v3552 = vpop.f32.mrb[0].mxu0
    %3553 = vdwg.mxu0
    %v3558 = vunpack.c.l.b16 %v3461
    %v3559 = vunpack.c.l.b16 %v3462
    %v3560 = vunpack.c.l.b16 %v3463
    %v3561 = vunpack.c.l.b16 %v3464
    %v3562 = vpack.c.b16 %v3559, %v3558
    %v3563 = vpack.c.b16 %v3561, %v3560
    %3566 = vmatprep.subr.bf16.mxu0 0
    %3567 = vmatpush1.bf16.msra.mxu0 %v3562
    %3568 = vmatprep.subr.bf16.mxu0 0
    %3569 = vmatpush1.bf16.msra.mxu0 %v3563
    %3570 = vmatprep.subr.bf16.mxu0 0
    %3571 = vmatpush1.bf16.msra.mxu0 0
    %3572 = vmatprep.subr.bf16.mxu0 0
    %3573 = vmatpush1.bf16.msra.mxu0 0
    %3574 = vmatprep.subr.bf16.mxu0 0
    %3575 = vmatpush1.bf16.msra.mxu0 0
    %3576 = vmatprep.subr.bf16.mxu0 0
    %3577 = vmatpush1.bf16.msra.mxu0 0
    %3578 = vmatprep.subr.bf16.mxu0 0
    %3579 = vmatpush1.bf16.msra.mxu0 0
    %3580 = vmatprep.subr.bf16.mxu0 0
    %3581 = vmatpush1.bf16.msra.mxu0 0
    %3582 = vmatprep.subr.bf16.mxu0 0
    %3583 = vmatpush1.bf16.msra.mxu0 0
    %3584 = vmatprep.subr.bf16.mxu0 0
    %3585 = vmatpush1.bf16.msra.mxu0 0
    %3586 = vmatprep.subr.bf16.mxu0 0
    %3587 = vmatpush1.bf16.msra.mxu0 0
    %3588 = vmatprep.subr.bf16.mxu0 0
    %3589 = vmatpush1.bf16.msra.mxu0 0
    %3590 = vmatprep.subr.bf16.mxu0 0
    %3591 = vmatpush1.bf16.msra.mxu0 0
    %3592 = vmatprep.subr.bf16.mxu0 0
    %3593 = vmatpush1.bf16.msra.mxu0 0
    %3594 = vmatprep.subr.bf16.mxu0 0
    %3595 = vmatpush1.bf16.msra.mxu0 0
    %3596 = vmatprep.subr.bf16.mxu0 0
    %3597 = vmatpush1.bf16.msra.mxu0 0
    %3598 = vmatprep.mubr.bf16.mxu0 0
    %3599 = vmatmul.mubr.bf16.gmra.mrb[0].mxu0 %v3095
    %v3600 = vpop.f32.mrb[0].mxu0
    %v3601 = vadd.f32 %v3489, %v3600
    %v3602 = vpop.f32.mrb[0].mxu0
    %v3603 = vpop.f32.mrb[0].mxu0
    %v3604 = vpop.f32.mrb[0].mxu0
    %3605 = vdwg.mxu0
    %v3610 = vunpack.c.l.b16 %v3465
    %v3611 = vunpack.c.l.b16 %v3466
    %v3612 = vunpack.c.l.b16 %v3467
    %v3613 = vunpack.c.l.b16 %v3468
    %v3614 = vpack.c.b16 %v3611, %v3610
    %v3615 = vpack.c.b16 %v3613, %v3612
    %3618 = vmatprep.subr.bf16.mxu0 0
    %3619 = vmatpush1.bf16.msra.mxu0 %v3614
    %3620 = vmatprep.subr.bf16.mxu0 0
    %3621 = vmatpush1.bf16.msra.mxu0 %v3615
    %3622 = vmatprep.subr.bf16.mxu0 0
    %3623 = vmatpush1.bf16.msra.mxu0 0
    %3624 = vmatprep.subr.bf16.mxu0 0
    %3625 = vmatpush1.bf16.msra.mxu0 0
    %3626 = vmatprep.subr.bf16.mxu0 0
    %3627 = vmatpush1.bf16.msra.mxu0 0
    %3628 = vmatprep.subr.bf16.mxu0 0
    %3629 = vmatpush1.bf16.msra.mxu0 0
    %3630 = vmatprep.subr.bf16.mxu0 0
    %3631 = vmatpush1.bf16.msra.mxu0 0
    %3632 = vmatprep.subr.bf16.mxu0 0
    %3633 = vmatpush1.bf16.msra.mxu0 0
    %3634 = vmatprep.subr.bf16.mxu0 0
    %3635 = vmatpush1.bf16.msra.mxu0 0
    %3636 = vmatprep.subr.bf16.mxu0 0
    %3637 = vmatpush1.bf16.msra.mxu0 0
    %3638 = vmatprep.subr.bf16.mxu0 0
    %3639 = vmatpush1.bf16.msra.mxu0 0
    %3640 = vmatprep.subr.bf16.mxu0 0
    %3641 = vmatpush1.bf16.msra.mxu0 0
    %3642 = vmatprep.subr.bf16.mxu0 0
    %3643 = vmatpush1.bf16.msra.mxu0 0
    %3644 = vmatprep.subr.bf16.mxu0 0
    %3645 = vmatpush1.bf16.msra.mxu0 0
    %3646 = vmatprep.subr.bf16.mxu0 0
    %3647 = vmatpush1.bf16.msra.mxu0 0
    %3648 = vmatprep.subr.bf16.mxu0 0
    %3649 = vmatpush1.bf16.msra.mxu0 0
    %3650 = vmatprep.mubr.bf16.mxu0 0
    %3651 = vmatmul.mubr.bf16.gmra.mrb[0].mxu0 %v3095
    %v3652 = vpop.f32.mrb[0].mxu0
    %v3653 = vadd.f32 %v3493, %v3652
    %v3654 = vpop.f32.mrb[0].mxu0
    %v3655 = vpop.f32.mrb[0].mxu0
    %v3656 = vpop.f32.mrb[0].mxu0
    %3657 = vdwg.mxu0
    %v3662 = vunpack.c.l.b16 %v3469
    %v3663 = vunpack.c.l.b16 %v3470
    %v3664 = vunpack.c.l.b16 %v3471
    %v3665 = vunpack.c.l.b16 %v3472
    %v3666 = vpack.c.b16 %v3663, %v3662
    %v3667 = vpack.c.b16 %v3665, %v3664
    %3670 = vmatprep.subr.bf16.mxu0 0
    %3671 = vmatpush1.bf16.msra.mxu0 %v3666
    %3672 = vmatprep.subr.bf16.mxu0 0
    %3673 = vmatpush1.bf16.msra.mxu0 %v3667
    %3674 = vmatprep.subr.bf16.mxu0 0
    %3675 = vmatpush1.bf16.msra.mxu0 0
    %3676 = vmatprep.subr.bf16.mxu0 0
    %3677 = vmatpush1.bf16.msra.mxu0 0
    %3678 = vmatprep.subr.bf16.mxu0 0
    %3679 = vmatpush1.bf16.msra.mxu0 0
    %3680 = vmatprep.subr.bf16.mxu0 0
    %3681 = vmatpush1.bf16.msra.mxu0 0
    %3682 = vmatprep.subr.bf16.mxu0 0
    %3683 = vmatpush1.bf16.msra.mxu0 0
    %3684 = vmatprep.subr.bf16.mxu0 0
    %3685 = vmatpush1.bf16.msra.mxu0 0
    %3686 = vmatprep.subr.bf16.mxu0 0
    %3687 = vmatpush1.bf16.msra.mxu0 0
    %3688 = vmatprep.subr.bf16.mxu0 0
    %3689 = vmatpush1.bf16.msra.mxu0 0
    %3690 = vmatprep.subr.bf16.mxu0 0
    %3691 = vmatpush1.bf16.msra.mxu0 0
    %3692 = vmatprep.subr.bf16.mxu0 0
    %3693 = vmatpush1.bf16.msra.mxu0 0
    %3694 = vmatprep.subr.bf16.mxu0 0
    %3695 = vmatpush1.bf16.msra.mxu0 0
    %3696 = vmatprep.subr.bf16.mxu0 0
    %3697 = vmatpush1.bf16.msra.mxu0 0
    %3698 = vmatprep.subr.bf16.mxu0 0
    %3699 = vmatpush1.bf16.msra.mxu0 0
    %3700 = vmatprep.subr.bf16.mxu0 0
    %3701 = vmatpush1.bf16.msra.mxu0 0
    %3702 = vmatprep.mubr.bf16.mxu0 0
    %3703 = vmatmul.mubr.bf16.gmra.mrb[0].mxu0 %v3095
    %v3704 = vpop.f32.mrb[0].mxu0
    %v3705 = vadd.f32 %v3497, %v3704
    %v3706 = vpop.f32.mrb[0].mxu0
    %v3707 = vpop.f32.mrb[0].mxu0
    %v3708 = vpop.f32.mrb[0].mxu0
    %3709 = vdwg.mxu0
    %3710 = vmatprep.subr.bf16.mxu0 0
    %3711 = vmatpush1.bf16.msra.mxu0 %v3510
    %3712 = vmatprep.subr.bf16.mxu0 0
    %3713 = vmatpush1.bf16.msra.mxu0 %v3511
    %3714 = vmatprep.subr.bf16.mxu0 0
    %3715 = vmatpush1.bf16.msra.mxu0 0
    %3716 = vmatprep.subr.bf16.mxu0 0
    %3717 = vmatpush1.bf16.msra.mxu0 0
    %3718 = vmatprep.subr.bf16.mxu0 0
    %3719 = vmatpush1.bf16.msra.mxu0 0
    %3720 = vmatprep.subr.bf16.mxu0 0
    %3721 = vmatpush1.bf16.msra.mxu0 0
    %3722 = vmatprep.subr.bf16.mxu0 0
    %3723 = vmatpush1.bf16.msra.mxu0 0
    %3724 = vmatprep.subr.bf16.mxu0 0
    %3725 = vmatpush1.bf16.msra.mxu0 0
    %3726 = vmatprep.subr.bf16.mxu0 0
    %3727 = vmatpush1.bf16.msra.mxu0 0
    %3728 = vmatprep.subr.bf16.mxu0 0
    %3729 = vmatpush1.bf16.msra.mxu0 0
    %3730 = vmatprep.subr.bf16.mxu0 0
    %3731 = vmatpush1.bf16.msra.mxu0 0
    %3732 = vmatprep.subr.bf16.mxu0 0
    %3733 = vmatpush1.bf16.msra.mxu0 0
    %3734 = vmatprep.subr.bf16.mxu0 0
    %3735 = vmatpush1.bf16.msra.mxu0 0
    %3736 = vmatprep.subr.bf16.mxu0 0
    %3737 = vmatpush1.bf16.msra.mxu0 0
    %3738 = vmatprep.subr.bf16.mxu0 0
    %3739 = vmatpush1.bf16.msra.mxu0 0
    %3740 = vmatprep.subr.bf16.mxu0 0
    %3741 = vmatpush1.bf16.msra.mxu0 0
    %3742 = vmatprep.mubr.bf16.mxu0 0
    %3743 = vmatmul.mubr.bf16.gmra.mrb[0].mxu0 %v3294
    %v3744 = vpop.f32.mrb[0].mxu0
    %v3745 = vadd.f32 %v3485, %v3744
    %v3746 = vpop.f32.mrb[0].mxu0
    %v3747 = vpop.f32.mrb[0].mxu0
    %v3748 = vpop.f32.mrb[0].mxu0
    %3749 = vdwg.mxu0
    %3750 = vmatprep.subr.bf16.mxu0 0
    %3751 = vmatpush1.bf16.msra.mxu0 %v3562
    %3752 = vmatprep.subr.bf16.mxu0 0
    %3753 = vmatpush1.bf16.msra.mxu0 %v3563
    %3754 = vmatprep.subr.bf16.mxu0 0
    %3755 = vmatpush1.bf16.msra.mxu0 0
    %3756 = vmatprep.subr.bf16.mxu0 0
    %3757 = vmatpush1.bf16.msra.mxu0 0
    %3758 = vmatprep.subr.bf16.mxu0 0
    %3759 = vmatpush1.bf16.msra.mxu0 0
    %3760 = vmatprep.subr.bf16.mxu0 0
    %3761 = vmatpush1.bf16.msra.mxu0 0
    %3762 = vmatprep.subr.bf16.mxu0 0
    %3763 = vmatpush1.bf16.msra.mxu0 0
    %3764 = vmatprep.subr.bf16.mxu0 0
    %3765 = vmatpush1.bf16.msra.mxu0 0
    %3766 = vmatprep.subr.bf16.mxu0 0
    %3767 = vmatpush1.bf16.msra.mxu0 0
    %3768 = vmatprep.subr.bf16.mxu0 0
    %3769 = vmatpush1.bf16.msra.mxu0 0
    %3770 = vmatprep.subr.bf16.mxu0 0
    %3771 = vmatpush1.bf16.msra.mxu0 0
    %3772 = vmatprep.subr.bf16.mxu0 0
    %3773 = vmatpush1.bf16.msra.mxu0 0
    %3774 = vmatprep.subr.bf16.mxu0 0
    %3775 = vmatpush1.bf16.msra.mxu0 0
    %3776 = vmatprep.subr.bf16.mxu0 0
    %3777 = vmatpush1.bf16.msra.mxu0 0
    %3778 = vmatprep.subr.bf16.mxu0 0
    %3779 = vmatpush1.bf16.msra.mxu0 0
    %3780 = vmatprep.subr.bf16.mxu0 0
    %3781 = vmatpush1.bf16.msra.mxu0 0
    %3782 = vmatprep.mubr.bf16.mxu0 0
    %3783 = vmatmul.mubr.bf16.gmra.mrb[0].mxu0 %v3294
    %v3784 = vpop.f32.mrb[0].mxu0
    %v3785 = vadd.f32 %v3489, %v3784
    %v3786 = vpop.f32.mrb[0].mxu0
    %v3787 = vpop.f32.mrb[0].mxu0
    %v3788 = vpop.f32.mrb[0].mxu0
    %3789 = vdwg.mxu0
    %3790 = vmatprep.subr.bf16.mxu0 0
    %3791 = vmatpush1.bf16.msra.mxu0 %v3614
    %3792 = vmatprep.subr.bf16.mxu0 0
    %3793 = vmatpush1.bf16.msra.mxu0 %v3615
    %3794 = vmatprep.subr.bf16.mxu0 0
    %3795 = vmatpush1.bf16.msra.mxu0 0
    %3796 = vmatprep.subr.bf16.mxu0 0
    %3797 = vmatpush1.bf16.msra.mxu0 0
    %3798 = vmatprep.subr.bf16.mxu0 0
    %3799 = vmatpush1.bf16.msra.mxu0 0
    %3800 = vmatprep.subr.bf16.mxu0 0
    %3801 = vmatpush1.bf16.msra.mxu0 0
    %3802 = vmatprep.subr.bf16.mxu0 0
    %3803 = vmatpush1.bf16.msra.mxu0 0
    %3804 = vmatprep.subr.bf16.mxu0 0
    %3805 = vmatpush1.bf16.msra.mxu0 0
    %3806 = vmatprep.subr.bf16.mxu0 0
    %3807 = vmatpush1.bf16.msra.mxu0 0
    %3808 = vmatprep.subr.bf16.mxu0 0
    %3809 = vmatpush1.bf16.msra.mxu0 0
    %3810 = vmatprep.subr.bf16.mxu0 0
    %3811 = vmatpush1.bf16.msra.mxu0 0
    %3812 = vmatprep.subr.bf16.mxu0 0
    %3813 = vmatpush1.bf16.msra.mxu0 0
    %3814 = vmatprep.subr.bf16.mxu0 0
    %3815 = vmatpush1.bf16.msra.mxu0 0
    %3816 = vmatprep.subr.bf16.mxu0 0
    %3817 = vmatpush1.bf16.msra.mxu0 0
    %3818 = vmatprep.subr.bf16.mxu0 0
    %3819 = vmatpush1.bf16.msra.mxu0 0
    %3820 = vmatprep.subr.bf16.mxu0 0
    %3821 = vmatpush1.bf16.msra.mxu0 0
    %3822 = vmatprep.mubr.bf16.mxu0 0
    %3823 = vmatmul.mubr.bf16.gmra.mrb[0].mxu0 %v3294
    %v3824 = vpop.f32.mrb[0].mxu0
    %v3825 = vadd.f32 %v3493, %v3824
    %v3826 = vpop.f32.mrb[0].mxu0
    %v3827 = vpop.f32.mrb[0].mxu0
    %v3828 = vpop.f32.mrb[0].mxu0
    %3829 = vdwg.mxu0
    %3830 = vmatprep.subr.bf16.mxu0 0
    %3831 = vmatpush1.bf16.msra.mxu0 %v3666
    %3832 = vmatprep.subr.bf16.mxu0 0
    %3833 = vmatpush1.bf16.msra.mxu0 %v3667
    %3834 = vmatprep.subr.bf16.mxu0 0
    %3835 = vmatpush1.bf16.msra.mxu0 0
    %3836 = vmatprep.subr.bf16.mxu0 0
    %3837 = vmatpush1.bf16.msra.mxu0 0
    %3838 = vmatprep.subr.bf16.mxu0 0
    %3839 = vmatpush1.bf16.msra.mxu0 0
    %3840 = vmatprep.subr.bf16.mxu0 0
    %3841 = vmatpush1.bf16.msra.mxu0 0
    %3842 = vmatprep.subr.bf16.mxu0 0
    %3843 = vmatpush1.bf16.msra.mxu0 0
    %3844 = vmatprep.subr.bf16.mxu0 0
    %3845 = vmatpush1.bf16.msra.mxu0 0
    %3846 = vmatprep.subr.bf16.mxu0 0
    %3847 = vmatpush1.bf16.msra.mxu0 0
    %3848 = vmatprep.subr.bf16.mxu0 0
    %3849 = vmatpush1.bf16.msra.mxu0 0
    %3850 = vmatprep.subr.bf16.mxu0 0
    %3851 = vmatpush1.bf16.msra.mxu0 0
    %3852 = vmatprep.subr.bf16.mxu0 0
    %3853 = vmatpush1.bf16.msra.mxu0 0
    %3854 = vmatprep.subr.bf16.mxu0 0
    %3855 = vmatpush1.bf16.msra.mxu0 0
    %3856 = vmatprep.subr.bf16.mxu0 0
    %3857 = vmatpush1.bf16.msra.mxu0 0
    %3858 = vmatprep.subr.bf16.mxu0 0
    %3859 = vmatpush1.bf16.msra.mxu0 0
    %3860 = vmatprep.subr.bf16.mxu0 0
    %3861 = vmatpush1.bf16.msra.mxu0 0
    %3862 = vmatprep.mubr.bf16.mxu0 0
    %3863 = vmatmul.mubr.bf16.gmra.mrb[0].mxu0 %v3294
    %v3864 = vpop.f32.mrb[0].mxu0
    %v3865 = vadd.f32 %v3497, %v3864
    %v3866 = vpop.f32.mrb[0].mxu0
    %v3867 = vpop.f32.mrb[0].mxu0
    %v3868 = vpop.f32.mrb[0].mxu0
    %3869 = vdwg.mxu0
    %s3870 = scalar_lea.vmem %s9, 64
    %v3871 = vld [vmem:[%s3870] sm:$0xf]
    %v3872 = vld [vmem:[%s3870 + $0x4] sm:$0xf]
    %v3873 = vld [vmem:[%s3870 + $0x8] sm:$0xf]
    %v3874 = vld [vmem:[%s3870 + $0xc] sm:$0xf]
    %v3875 = vld [vmem:[%s3870 + $0x10] sm:$0xf]
    %v3876 = vld [vmem:[%s3870 + $0x14] sm:$0xf]
    %v3877 = vld [vmem:[%s3870 + $0x18] sm:$0xf]
    %v3878 = vld [vmem:[%s3870 + $0x1c] sm:$0xf]
    %v3879 = vld [vmem:[%s3870 + $0x20] sm:$0xf]
    %v3880 = vld [vmem:[%s3870 + $0x24] sm:$0xf]
    %v3881 = vld [vmem:[%s3870 + $0x28] sm:$0xf]
    %v3882 = vld [vmem:[%s3870 + $0x2c] sm:$0xf]
    %v3883 = vld [vmem:[%s3870 + $0x30] sm:$0xf]
    %v3884 = vld [vmem:[%s3870 + $0x34] sm:$0xf]
    %v3885 = vld [vmem:[%s3870 + $0x38] sm:$0xf]
    %v3886 = vld [vmem:[%s3870 + $0x3c] sm:$0xf]
    %s3887 = scalar_lea.vmem %s10, 4
    %v3888 = vld [vmem:[%s3887] sm:$0x1]
    %v3889 = vld [vmem:[%s3887 + $0x1] sm:$0x1]
    %v3890 = vld [vmem:[%s3887 + $0x2] sm:$0x1]
    %v3891 = vld [vmem:[%s3887 + $0x3] sm:$0x1]
    %v3896 = vlaneseq
    %v3897 = vshrl.u32 %v3896, 7
    %v3898 = vsub.s32 0, %v3897
    %v3899 = vrot.slane %v3888, %v3898
    %v3900 = vlaneseq
    %v3901 = vshrl.u32 %v3900, 7
    %v3902 = vsub.s32 0, %v3901
    %v3903 = vrot.slane %v3889, %v3902
    %v3904 = vlaneseq
    %v3905 = vshrl.u32 %v3904, 7
    %v3906 = vsub.s32 0, %v3905
    %v3907 = vrot.slane %v3890, %v3906
    %v3908 = vlaneseq
    %v3909 = vshrl.u32 %v3908, 7
    %v3910 = vsub.s32 0, %v3909
    %v3911 = vrot.slane %v3891, %v3910
    %v3920 = vunpack.c.l.b16 %v3871
    %v3921 = vunpack.c.l.b16 %v3872
    %v3922 = vunpack.c.l.b16 %v3873
    %v3923 = vunpack.c.l.b16 %v3874
    %v3924 = vpack.c.b16 %v3921, %v3920
    %v3925 = vpack.c.b16 %v3923, %v3922
    %3928 = vmatprep.subr.bf16.mxu0 0
    %3929 = vmatpush1.bf16.msra.mxu0 %v3924
    %3930 = vmatprep.subr.bf16.mxu0 0
    %3931 = vmatpush1.bf16.msra.mxu0 %v3925
    %3932 = vmatprep.subr.bf16.mxu0 0
    %3933 = vmatpush1.bf16.msra.mxu0 0
    %3934 = vmatprep.subr.bf16.mxu0 0
    %3935 = vmatpush1.bf16.msra.mxu0 0
    %3936 = vmatprep.subr.bf16.mxu0 0
    %3937 = vmatpush1.bf16.msra.mxu0 0
    %3938 = vmatprep.subr.bf16.mxu0 0
    %3939 = vmatpush1.bf16.msra.mxu0 0
    %3940 = vmatprep.subr.bf16.mxu0 0
    %3941 = vmatpush1.bf16.msra.mxu0 0
    %3942 = vmatprep.subr.bf16.mxu0 0
    %3943 = vmatpush1.bf16.msra.mxu0 0
    %3944 = vmatprep.subr.bf16.mxu0 0
    %3945 = vmatpush1.bf16.msra.mxu0 0
    %3946 = vmatprep.subr.bf16.mxu0 0
    %3947 = vmatpush1.bf16.msra.mxu0 0
    %3948 = vmatprep.subr.bf16.mxu0 0
    %3949 = vmatpush1.bf16.msra.mxu0 0
    %3950 = vmatprep.subr.bf16.mxu0 0
    %3951 = vmatpush1.bf16.msra.mxu0 0
    %3952 = vmatprep.subr.bf16.mxu0 0
    %3953 = vmatpush1.bf16.msra.mxu0 0
    %3954 = vmatprep.subr.bf16.mxu0 0
    %3955 = vmatpush1.bf16.msra.mxu0 0
    %3956 = vmatprep.subr.bf16.mxu0 0
    %3957 = vmatpush1.bf16.msra.mxu0 0
    %3958 = vmatprep.subr.bf16.mxu0 0
    %3959 = vmatpush1.bf16.msra.mxu0 0
    %3960 = vmatprep.mubr.bf16.mxu0 0
    %3961 = vmatmul.mubr.bf16.gmra.mrb[0].mxu0 %v3095
    %v3962 = vpop.f32.mrb[0].mxu0
    %v3963 = vadd.f32 %v3899, %v3962
    %v3964 = vpop.f32.mrb[0].mxu0
    %v3965 = vpop.f32.mrb[0].mxu0
    %v3966 = vpop.f32.mrb[0].mxu0
    %3967 = vdwg.mxu0
    %v3972 = vunpack.c.l.b16 %v3875
    %v3973 = vunpack.c.l.b16 %v3876
    %v3974 = vunpack.c.l.b16 %v3877
    %v3975 = vunpack.c.l.b16 %v3878
    %v3976 = vpack.c.b16 %v3973, %v3972
    %v3977 = vpack.c.b16 %v3975, %v3974
    %3980 = vmatprep.subr.bf16.mxu0 0
    %3981 = vmatpush1.bf16.msra.mxu0 %v3976
    %3982 = vmatprep.subr.bf16.mxu0 0
    %3983 = vmatpush1.bf16.msra.mxu0 %v3977
    %3984 = vmatprep.subr.bf16.mxu0 0
    %3985 = vmatpush1.bf16.msra.mxu0 0
    %3986 = vmatprep.subr.bf16.mxu0 0
    %3987 = vmatpush1.bf16.msra.mxu0 0
    %3988 = vmatprep.subr.bf16.mxu0 0
    %3989 = vmatpush1.bf16.msra.mxu0 0
    %3990 = vmatprep.subr.bf16.mxu0 0
    %3991 = vmatpush1.bf16.msra.mxu0 0
    %3992 = vmatprep.subr.bf16.mxu0 0
    %3993 = vmatpush1.bf16.msra.mxu0 0
    %3994 = vmatprep.subr.bf16.mxu0 0
    %3995 = vmatpush1.bf16.msra.mxu0 0
    %3996 = vmatprep.subr.bf16.mxu0 0
    %3997 = vmatpush1.bf16.msra.mxu0 0
    %3998 = vmatprep.subr.bf16.mxu0 0
    %3999 = vmatpush1.bf16.msra.mxu0 0
    %4000 = vmatprep.subr.bf16.mxu0 0
    %4001 = vmatpush1.bf16.msra.mxu0 0
    %4002 = vmatprep.subr.bf16.mxu0 0
    %4003 = vmatpush1.bf16.msra.mxu0 0
    %4004 = vmatprep.subr.bf16.mxu0 0
    %4005 = vmatpush1.bf16.msra.mxu0 0
    %4006 = vmatprep.subr.bf16.mxu0 0
    %4007 = vmatpush1.bf16.msra.mxu0 0
    %4008 = vmatprep.subr.bf16.mxu0 0
    %4009 = vmatpush1.bf16.msra.mxu0 0
    %4010 = vmatprep.subr.bf16.mxu0 0
    %4011 = vmatpush1.bf16.msra.mxu0 0
    %4012 = vmatprep.mubr.bf16.mxu0 0
    %4013 = vmatmul.mubr.bf16.gmra.mrb[0].mxu0 %v3095
    %v4014 = vpop.f32.mrb[0].mxu0
    %v4015 = vadd.f32 %v3903, %v4014
    %v4016 = vpop.f32.mrb[0].mxu0
    %v4017 = vpop.f32.mrb[0].mxu0
    %v4018 = vpop.f32.mrb[0].mxu0
    %4019 = vdwg.mxu0
    %v4024 = vunpack.c.l.b16 %v3879
    %v4025 = vunpack.c.l.b16 %v3880
    %v4026 = vunpack.c.l.b16 %v3881
    %v4027 = vunpack.c.l.b16 %v3882
    %v4028 = vpack.c.b16 %v4025, %v4024
    %v4029 = vpack.c.b16 %v4027, %v4026
    %4032 = vmatprep.subr.bf16.mxu0 0
    %4033 = vmatpush1.bf16.msra.mxu0 %v4028
    %4034 = vmatprep.subr.bf16.mxu0 0
    %4035 = vmatpush1.bf16.msra.mxu0 %v4029
    %4036 = vmatprep.subr.bf16.mxu0 0
    %4037 = vmatpush1.bf16.msra.mxu0 0
    %4038 = vmatprep.subr.bf16.mxu0 0
    %4039 = vmatpush1.bf16.msra.mxu0 0
    %4040 = vmatprep.subr.bf16.mxu0 0
    %4041 = vmatpush1.bf16.msra.mxu0 0
    %4042 = vmatprep.subr.bf16.mxu0 0
    %4043 = vmatpush1.bf16.msra.mxu0 0
    %4044 = vmatprep.subr.bf16.mxu0 0
    %4045 = vmatpush1.bf16.msra.mxu0 0
    %4046 = vmatprep.subr.bf16.mxu0 0
    %4047 = vmatpush1.bf16.msra.mxu0 0
    %4048 = vmatprep.subr.bf16.mxu0 0
    %4049 = vmatpush1.bf16.msra.mxu0 0
    %4050 = vmatprep.subr.bf16.mxu0 0
    %4051 = vmatpush1.bf16.msra.mxu0 0
    %4052 = vmatprep.subr.bf16.mxu0 0
    %4053 = vmatpush1.bf16.msra.mxu0 0
    %4054 = vmatprep.subr.bf16.mxu0 0
    %4055 = vmatpush1.bf16.msra.mxu0 0
    %4056 = vmatprep.subr.bf16.mxu0 0
    %4057 = vmatpush1.bf16.msra.mxu0 0
    %4058 = vmatprep.subr.bf16.mxu0 0
    %4059 = vmatpush1.bf16.msra.mxu0 0
    %4060 = vmatprep.subr.bf16.mxu0 0
    %4061 = vmatpush1.bf16.msra.mxu0 0
    %4062 = vmatprep.subr.bf16.mxu0 0
    %4063 = vmatpush1.bf16.msra.mxu0 0
    %4064 = vmatprep.mubr.bf16.mxu0 0
    %4065 = vmatmul.mubr.bf16.gmra.mrb[0].mxu0 %v3095
    %v4066 = vpop.f32.mrb[0].mxu0
    %v4067 = vadd.f32 %v3907, %v4066
    %v4068 = vpop.f32.mrb[0].mxu0
    %v4069 = vpop.f32.mrb[0].mxu0
    %v4070 = vpop.f32.mrb[0].mxu0
    %4071 = vdwg.mxu0
    %v4076 = vunpack.c.l.b16 %v3883
    %v4077 = vunpack.c.l.b16 %v3884
    %v4078 = vunpack.c.l.b16 %v3885
    %v4079 = vunpack.c.l.b16 %v3886
    %v4080 = vpack.c.b16 %v4077, %v4076
    %v4081 = vpack.c.b16 %v4079, %v4078
    %4084 = vmatprep.subr.bf16.mxu0 0
    %4085 = vmatpush1.bf16.msra.mxu0 %v4080
    %4086 = vmatprep.subr.bf16.mxu0 0
    %4087 = vmatpush1.bf16.msra.mxu0 %v4081
    %4088 = vmatprep.subr.bf16.mxu0 0
    %4089 = vmatpush1.bf16.msra.mxu0 0
    %4090 = vmatprep.subr.bf16.mxu0 0
    %4091 = vmatpush1.bf16.msra.mxu0 0
    %4092 = vmatprep.subr.bf16.mxu0 0
    %4093 = vmatpush1.bf16.msra.mxu0 0
    %4094 = vmatprep.subr.bf16.mxu0 0
    %4095 = vmatpush1.bf16.msra.mxu0 0
    %4096 = vmatprep.subr.bf16.mxu0 0
    %4097 = vmatpush1.bf16.msra.mxu0 0
    %4098 = vmatprep.subr.bf16.mxu0 0
    %4099 = vmatpush1.bf16.msra.mxu0 0
    %4100 = vmatprep.subr.bf16.mxu0 0
    %4101 = vmatpush1.bf16.msra.mxu0 0
    %4102 = vmatprep.subr.bf16.mxu0 0
    %4103 = vmatpush1.bf16.msra.mxu0 0
    %4104 = vmatprep.subr.bf16.mxu0 0
    %4105 = vmatpush1.bf16.msra.mxu0 0
    %4106 = vmatprep.subr.bf16.mxu0 0
    %4107 = vmatpush1.bf16.msra.mxu0 0
    %4108 = vmatprep.subr.bf16.mxu0 0
    %4109 = vmatpush1.bf16.msra.mxu0 0
    %4110 = vmatprep.subr.bf16.mxu0 0
    %4111 = vmatpush1.bf16.msra.mxu0 0
    %4112 = vmatprep.subr.bf16.mxu0 0
    %4113 = vmatpush1.bf16.msra.mxu0 0
    %4114 = vmatprep.subr.bf16.mxu0 0
    %4115 = vmatpush1.bf16.msra.mxu0 0
    %4116 = vmatprep.mubr.bf16.mxu0 0
    %4117 = vmatmul.mubr.bf16.gmra.mrb[0].mxu0 %v3095
    %v4118 = vpop.f32.mrb[0].mxu0
    %v4119 = vadd.f32 %v3911, %v4118
    %v4120 = vpop.f32.mrb[0].mxu0
    %v4121 = vpop.f32.mrb[0].mxu0
    %v4122 = vpop.f32.mrb[0].mxu0
    %4123 = vdwg.mxu0
    %4124 = vmatprep.subr.bf16.mxu0 0
    %4125 = vmatpush1.bf16.msra.mxu0 %v3924
    %4126 = vmatprep.subr.bf16.mxu0 0
    %4127 = vmatpush1.bf16.msra.mxu0 %v3925
    %4128 = vmatprep.subr.bf16.mxu0 0
    %4129 = vmatpush1.bf16.msra.mxu0 0
    %4130 = vmatprep.subr.bf16.mxu0 0
    %4131 = vmatpush1.bf16.msra.mxu0 0
    %4132 = vmatprep.subr.bf16.mxu0 0
    %4133 = vmatpush1.bf16.msra.mxu0 0
    %4134 = vmatprep.subr.bf16.mxu0 0
    %4135 = vmatpush1.bf16.msra.mxu0 0
    %4136 = vmatprep.subr.bf16.mxu0 0
    %4137 = vmatpush1.bf16.msra.mxu0 0
    %4138 = vmatprep.subr.bf16.mxu0 0
    %4139 = vmatpush1.bf16.msra.mxu0 0
    %4140 = vmatprep.subr.bf16.mxu0 0
    %4141 = vmatpush1.bf16.msra.mxu0 0
    %4142 = vmatprep.subr.bf16.mxu0 0
    %4143 = vmatpush1.bf16.msra.mxu0 0
    %4144 = vmatprep.subr.bf16.mxu0 0
    %4145 = vmatpush1.bf16.msra.mxu0 0
    %4146 = vmatprep.subr.bf16.mxu0 0
    %4147 = vmatpush1.bf16.msra.mxu0 0
    %4148 = vmatprep.subr.bf16.mxu0 0
    %4149 = vmatpush1.bf16.msra.mxu0 0
    %4150 = vmatprep.subr.bf16.mxu0 0
    %4151 = vmatpush1.bf16.msra.mxu0 0
    %4152 = vmatprep.subr.bf16.mxu0 0
    %4153 = vmatpush1.bf16.msra.mxu0 0
    %4154 = vmatprep.subr.bf16.mxu0 0
    %4155 = vmatpush1.bf16.msra.mxu0 0
    %4156 = vmatprep.mubr.bf16.mxu0 0
    %4157 = vmatmul.mubr.bf16.gmra.mrb[0].mxu0 %v3294
    %v4158 = vpop.f32.mrb[0].mxu0
    %v4159 = vadd.f32 %v3899, %v4158
    %v4160 = vpop.f32.mrb[0].mxu0
    %v4161 = vpop.f32.mrb[0].mxu0
    %v4162 = vpop.f32.mrb[0].mxu0
    %4163 = vdwg.mxu0
    %4164 = vmatprep.subr.bf16.mxu0 0
    %4165 = vmatpush1.bf16.msra.mxu0 %v3976
    %4166 = vmatprep.subr.bf16.mxu0 0
    %4167 = vmatpush1.bf16.msra.mxu0 %v3977
    %4168 = vmatprep.subr.bf16.mxu0 0
    %4169 = vmatpush1.bf16.msra.mxu0 0
    %4170 = vmatprep.subr.bf16.mxu0 0
    %4171 = vmatpush1.bf16.msra.mxu0 0
    %4172 = vmatprep.subr.bf16.mxu0 0
    %4173 = vmatpush1.bf16.msra.mxu0 0
    %4174 = vmatprep.subr.bf16.mxu0 0
    %4175 = vmatpush1.bf16.msra.mxu0 0
    %4176 = vmatprep.subr.bf16.mxu0 0
    %4177 = vmatpush1.bf16.msra.mxu0 0
    %4178 = vmatprep.subr.bf16.mxu0 0
    %4179 = vmatpush1.bf16.msra.mxu0 0
    %4180 = vmatprep.subr.bf16.mxu0 0
    %4181 = vmatpush1.bf16.msra.mxu0 0
    %4182 = vmatprep.subr.bf16.mxu0 0
    %4183 = vmatpush1.bf16.msra.mxu0 0
    %4184 = vmatprep.subr.bf16.mxu0 0
    %4185 = vmatpush1.bf16.msra.mxu0 0
    %4186 = vmatprep.subr.bf16.mxu0 0
    %4187 = vmatpush1.bf16.msra.mxu0 0
    %4188 = vmatprep.subr.bf16.mxu0 0
    %4189 = vmatpush1.bf16.msra.mxu0 0
    %4190 = vmatprep.subr.bf16.mxu0 0
    %4191 = vmatpush1.bf16.msra.mxu0 0
    %4192 = vmatprep.subr.bf16.mxu0 0
    %4193 = vmatpush1.bf16.msra.mxu0 0
    %4194 = vmatprep.subr.bf16.mxu0 0
    %4195 = vmatpush1.bf16.msra.mxu0 0
    %4196 = vmatprep.mubr.bf16.mxu0 0
    %4197 = vmatmul.mubr.bf16.gmra.mrb[0].mxu0 %v3294
    %v4198 = vpop.f32.mrb[0].mxu0
    %v4199 = vadd.f32 %v3903, %v4198
    %v4200 = vpop.f32.mrb[0].mxu0
    %v4201 = vpop.f32.mrb[0].mxu0
    %v4202 = vpop.f32.mrb[0].mxu0
    %4203 = vdwg.mxu0
    %4204 = vmatprep.subr.bf16.mxu0 0
    %4205 = vmatpush1.bf16.msra.mxu0 %v4028
    %4206 = vmatprep.subr.bf16.mxu0 0
    %4207 = vmatpush1.bf16.msra.mxu0 %v4029
    %4208 = vmatprep.subr.bf16.mxu0 0
    %4209 = vmatpush1.bf16.msra.mxu0 0
    %4210 = vmatprep.subr.bf16.mxu0 0
    %4211 = vmatpush1.bf16.msra.mxu0 0
    %4212 = vmatprep.subr.bf16.mxu0 0
    %4213 = vmatpush1.bf16.msra.mxu0 0
    %4214 = vmatprep.subr.bf16.mxu0 0
    %4215 = vmatpush1.bf16.msra.mxu0 0
    %4216 = vmatprep.subr.bf16.mxu0 0
    %4217 = vmatpush1.bf16.msra.mxu0 0
    %4218 = vmatprep.subr.bf16.mxu0 0
    %4219 = vmatpush1.bf16.msra.mxu0 0
    %4220 = vmatprep.subr.bf16.mxu0 0
    %4221 = vmatpush1.bf16.msra.mxu0 0
    %4222 = vmatprep.subr.bf16.mxu0 0
    %4223 = vmatpush1.bf16.msra.mxu0 0
    %4224 = vmatprep.subr.bf16.mxu0 0
    %4225 = vmatpush1.bf16.msra.mxu0 0
    %4226 = vmatprep.subr.bf16.mxu0 0
    %4227 = vmatpush1.bf16.msra.mxu0 0
    %4228 = vmatprep.subr.bf16.mxu0 0
    %4229 = vmatpush1.bf16.msra.mxu0 0
    %4230 = vmatprep.subr.bf16.mxu0 0
    %4231 = vmatpush1.bf16.msra.mxu0 0
    %4232 = vmatprep.subr.bf16.mxu0 0
    %4233 = vmatpush1.bf16.msra.mxu0 0
    %4234 = vmatprep.subr.bf16.mxu0 0
    %4235 = vmatpush1.bf16.msra.mxu0 0
    %4236 = vmatprep.mubr.bf16.mxu0 0
    %4237 = vmatmul.mubr.bf16.gmra.mrb[0].mxu0 %v3294
    %v4238 = vpop.f32.mrb[0].mxu0
    %v4239 = vadd.f32 %v3907, %v4238
    %v4240 = vpop.f32.mrb[0].mxu0
    %v4241 = vpop.f32.mrb[0].mxu0
    %v4242 = vpop.f32.mrb[0].mxu0
    %4243 = vdwg.mxu0
    %4244 = vmatprep.subr.bf16.mxu0 0
    %4245 = vmatpush1.bf16.msra.mxu0 %v4080
    %4246 = vmatprep.subr.bf16.mxu0 0
    %4247 = vmatpush1.bf16.msra.mxu0 %v4081
    %4248 = vmatprep.subr.bf16.mxu0 0
    %4249 = vmatpush1.bf16.msra.mxu0 0
    %4250 = vmatprep.subr.bf16.mxu0 0
    %4251 = vmatpush1.bf16.msra.mxu0 0
    %4252 = vmatprep.subr.bf16.mxu0 0
    %4253 = vmatpush1.bf16.msra.mxu0 0
    %4254 = vmatprep.subr.bf16.mxu0 0
    %4255 = vmatpush1.bf16.msra.mxu0 0
    %4256 = vmatprep.subr.bf16.mxu0 0
    %4257 = vmatpush1.bf16.msra.mxu0 0
    %4258 = vmatprep.subr.bf16.mxu0 0
    %4259 = vmatpush1.bf16.msra.mxu0 0
    %4260 = vmatprep.subr.bf16.mxu0 0
    %4261 = vmatpush1.bf16.msra.mxu0 0
    %4262 = vmatprep.subr.bf16.mxu0 0
    %4263 = vmatpush1.bf16.msra.mxu0 0
    %4264 = vmatprep.subr.bf16.mxu0 0
    %4265 = vmatpush1.bf16.msra.mxu0 0
    %4266 = vmatprep.subr.bf16.mxu0 0
    %4267 = vmatpush1.bf16.msra.mxu0 0
    %4268 = vmatprep.subr.bf16.mxu0 0
    %4269 = vmatpush1.bf16.msra.mxu0 0
    %4270 = vmatprep.subr.bf16.mxu0 0
    %4271 = vmatpush1.bf16.msra.mxu0 0
    %4272 = vmatprep.subr.bf16.mxu0 0
    %4273 = vmatpush1.bf16.msra.mxu0 0
    %4274 = vmatprep.subr.bf16.mxu0 0
    %4275 = vmatpush1.bf16.msra.mxu0 0
    %4276 = vmatprep.mubr.bf16.mxu0 0
    %4277 = vmatmul.mubr.bf16.gmra.mrb[0].mxu0 %v3294
    %v4278 = vpop.f32.mrb[0].mxu0
    %v4279 = vadd.f32 %v3911, %v4278
    %v4280 = vpop.f32.mrb[0].mxu0
    %v4281 = vpop.f32.mrb[0].mxu0
    %v4282 = vpop.f32.mrb[0].mxu0
    %4283 = vdwg.mxu0
    %v4284 = vpack.c.bf16 %v3132, %v3132
    %v4285 = vpack.c.bf16 %v3184, %v3184
    %v4286 = vpack.c.bf16 %v3236, %v3236
    %v4287 = vpack.c.bf16 %v3288, %v3288
    %v4288 = vpack.c.bf16 %v3331, %v3331
    %v4289 = vpack.c.bf16 %v3371, %v3371
    %v4290 = vpack.c.bf16 %v3411, %v3411
    %v4291 = vpack.c.bf16 %v3451, %v3451
    %v4292 = vpack.c.bf16 %v3549, %v3549
    %v4293 = vpack.c.bf16 %v3601, %v3601
    %v4294 = vpack.c.bf16 %v3653, %v3653
    %v4295 = vpack.c.bf16 %v3705, %v3705
    %v4296 = vpack.c.bf16 %v3745, %v3745
    %v4297 = vpack.c.bf16 %v3785, %v3785
    %v4298 = vpack.c.bf16 %v3825, %v3825
    %v4299 = vpack.c.bf16 %v3865, %v3865
    %v4301 = vsel %vm1535, %v4284, 0
    %v4304 = vsel %vm1535, %v4292, 0
    %4306 = vmatprep.subr.bf16.mxu0 0
    %4307 = vmatpush1.bf16.xpose.msra.mxu0 %v4304
    %4308 = vmatprep.subr.bf16.mxu0 0
    %4309 = vmatpush1.bf16.xpose.msra.mxu0 0
    %4310 = vmatprep.subr.bf16.mxu0 0
    %4311 = vmatpush1.bf16.xpose.msra.mxu0 0
    %4312 = vmatprep.subr.bf16.mxu0 0
    %4313 = vmatpush1.bf16.xpose.msra.mxu0 0
    %4314 = vmatprep.subr.bf16.mxu0 0
    %4315 = vmatpush1.bf16.xpose.msra.mxu0 0
    %4316 = vmatprep.subr.bf16.mxu0 0
    %4317 = vmatpush1.bf16.xpose.msra.mxu0 0
    %4318 = vmatprep.subr.bf16.mxu0 0
    %4319 = vmatpush1.bf16.xpose.msra.mxu0 0
    %4320 = vmatprep.subr.bf16.mxu0 0
    %4321 = vmatpush1.bf16.xpose.msra.mxu0 0
    %4322 = vmatprep.subr.bf16.mxu0 0
    %4323 = vmatpush1.bf16.xpose.msra.mxu0 0
    %4324 = vmatprep.subr.bf16.mxu0 0
    %4325 = vmatpush1.bf16.xpose.msra.mxu0 0
    %4326 = vmatprep.subr.bf16.mxu0 0
    %4327 = vmatpush1.bf16.xpose.msra.mxu0 0
    %4328 = vmatprep.subr.bf16.mxu0 0
    %4329 = vmatpush1.bf16.xpose.msra.mxu0 0
    %4330 = vmatprep.subr.bf16.mxu0 0
    %4331 = vmatpush1.bf16.xpose.msra.mxu0 0
    %4332 = vmatprep.subr.bf16.mxu0 0
    %4333 = vmatpush1.bf16.xpose.msra.mxu0 0
    %4334 = vmatprep.subr.bf16.mxu0 0
    %4335 = vmatpush1.bf16.xpose.msra.mxu0 0
    %4336 = vmatprep.subr.bf16.mxu0 0
    %4337 = vmatpush1.bf16.xpose.msra.mxu0 0
    %4338 = vmatprep.mubr.bf16.mxu0 0
    %4339 = vmatmul.mubr.bf16.gmra.mrb[0].mxu0 %v4301
    %v4340 = vpop.f32.mrb[0].mxu0
    %v4341 = vadd.f32 %v228, %v4340
    %v4342 = vpop.f32.mrb[0].mxu0
    %v4343 = vpop.f32.mrb[0].mxu0
    %v4344 = vpop.f32.mrb[0].mxu0
    %4345 = vdwg.mxu0
    %v4347 = vsel %vm1535, %v4285, 0
    %v4350 = vsel %vm1535, %v4293, 0
    %4352 = vmatprep.subr.bf16.mxu0 0
    %4353 = vmatpush1.bf16.xpose.msra.mxu0 %v4350
    %4354 = vmatprep.subr.bf16.mxu0 0
    %4355 = vmatpush1.bf16.xpose.msra.mxu0 0
    %4356 = vmatprep.subr.bf16.mxu0 0
    %4357 = vmatpush1.bf16.xpose.msra.mxu0 0
    %4358 = vmatprep.subr.bf16.mxu0 0
    %4359 = vmatpush1.bf16.xpose.msra.mxu0 0
    %4360 = vmatprep.subr.bf16.mxu0 0
    %4361 = vmatpush1.bf16.xpose.msra.mxu0 0
    %4362 = vmatprep.subr.bf16.mxu0 0
    %4363 = vmatpush1.bf16.xpose.msra.mxu0 0
    %4364 = vmatprep.subr.bf16.mxu0 0
    %4365 = vmatpush1.bf16.xpose.msra.mxu0 0
    %4366 = vmatprep.subr.bf16.mxu0 0
    %4367 = vmatpush1.bf16.xpose.msra.mxu0 0
    %4368 = vmatprep.subr.bf16.mxu0 0
    %4369 = vmatpush1.bf16.xpose.msra.mxu0 0
    %4370 = vmatprep.subr.bf16.mxu0 0
    %4371 = vmatpush1.bf16.xpose.msra.mxu0 0
    %4372 = vmatprep.subr.bf16.mxu0 0
    %4373 = vmatpush1.bf16.xpose.msra.mxu0 0
    %4374 = vmatprep.subr.bf16.mxu0 0
    %4375 = vmatpush1.bf16.xpose.msra.mxu0 0
    %4376 = vmatprep.subr.bf16.mxu0 0
    %4377 = vmatpush1.bf16.xpose.msra.mxu0 0
    %4378 = vmatprep.subr.bf16.mxu0 0
    %4379 = vmatpush1.bf16.xpose.msra.mxu0 0
    %4380 = vmatprep.subr.bf16.mxu0 0
    %4381 = vmatpush1.bf16.xpose.msra.mxu0 0
    %4382 = vmatprep.subr.bf16.mxu0 0
    %4383 = vmatpush1.bf16.xpose.msra.mxu0 0
    %4384 = vmatprep.mubr.bf16.mxu0 0
    %4385 = vmatmul.mubr.bf16.gmra.mrb[0].mxu0 %v4347
    %v4386 = vpop.f32.mrb[0].mxu0
    %v4387 = vadd.f32 %v228, %v4386
    %v4388 = vpop.f32.mrb[0].mxu0
    %v4389 = vpop.f32.mrb[0].mxu0
    %v4390 = vpop.f32.mrb[0].mxu0
    %4391 = vdwg.mxu0
    %v4393 = vsel %vm1535, %v4286, 0
    %v4396 = vsel %vm1535, %v4294, 0
    %4398 = vmatprep.subr.bf16.mxu0 0
    %4399 = vmatpush1.bf16.xpose.msra.mxu0 %v4396
    %4400 = vmatprep.subr.bf16.mxu0 0
    %4401 = vmatpush1.bf16.xpose.msra.mxu0 0
    %4402 = vmatprep.subr.bf16.mxu0 0
    %4403 = vmatpush1.bf16.xpose.msra.mxu0 0
    %4404 = vmatprep.subr.bf16.mxu0 0
    %4405 = vmatpush1.bf16.xpose.msra.mxu0 0
    %4406 = vmatprep.subr.bf16.mxu0 0
    %4407 = vmatpush1.bf16.xpose.msra.mxu0 0
    %4408 = vmatprep.subr.bf16.mxu0 0
    %4409 = vmatpush1.bf16.xpose.msra.mxu0 0
    %4410 = vmatprep.subr.bf16.mxu0 0
    %4411 = vmatpush1.bf16.xpose.msra.mxu0 0
    %4412 = vmatprep.subr.bf16.mxu0 0
    %4413 = vmatpush1.bf16.xpose.msra.mxu0 0
    %4414 = vmatprep.subr.bf16.mxu0 0
    %4415 = vmatpush1.bf16.xpose.msra.mxu0 0
    %4416 = vmatprep.subr.bf16.mxu0 0
    %4417 = vmatpush1.bf16.xpose.msra.mxu0 0
    %4418 = vmatprep.subr.bf16.mxu0 0
    %4419 = vmatpush1.bf16.xpose.msra.mxu0 0
    %4420 = vmatprep.subr.bf16.mxu0 0
    %4421 = vmatpush1.bf16.xpose.msra.mxu0 0
    %4422 = vmatprep.subr.bf16.mxu0 0
    %4423 = vmatpush1.bf16.xpose.msra.mxu0 0
    %4424 = vmatprep.subr.bf16.mxu0 0
    %4425 = vmatpush1.bf16.xpose.msra.mxu0 0
    %4426 = vmatprep.subr.bf16.mxu0 0
    %4427 = vmatpush1.bf16.xpose.msra.mxu0 0
    %4428 = vmatprep.subr.bf16.mxu0 0
    %4429 = vmatpush1.bf16.xpose.msra.mxu0 0
    %4430 = vmatprep.mubr.bf16.mxu0 0
    %4431 = vmatmul.mubr.bf16.gmra.mrb[0].mxu0 %v4393
    %v4432 = vpop.f32.mrb[0].mxu0
    %v4433 = vadd.f32 %v228, %v4432
    %v4434 = vpop.f32.mrb[0].mxu0
    %v4435 = vpop.f32.mrb[0].mxu0
    %v4436 = vpop.f32.mrb[0].mxu0
    %4437 = vdwg.mxu0
    %v4439 = vsel %vm1535, %v4287, 0
    %v4442 = vsel %vm1535, %v4295, 0
    %4444 = vmatprep.subr.bf16.mxu0 0
    %4445 = vmatpush1.bf16.xpose.msra.mxu0 %v4442
    %4446 = vmatprep.subr.bf16.mxu0 0
    %4447 = vmatpush1.bf16.xpose.msra.mxu0 0
    %4448 = vmatprep.subr.bf16.mxu0 0
    %4449 = vmatpush1.bf16.xpose.msra.mxu0 0
    %4450 = vmatprep.subr.bf16.mxu0 0
    %4451 = vmatpush1.bf16.xpose.msra.mxu0 0
    %4452 = vmatprep.subr.bf16.mxu0 0
    %4453 = vmatpush1.bf16.xpose.msra.mxu0 0
    %4454 = vmatprep.subr.bf16.mxu0 0
    %4455 = vmatpush1.bf16.xpose.msra.mxu0 0
    %4456 = vmatprep.subr.bf16.mxu0 0
    %4457 = vmatpush1.bf16.xpose.msra.mxu0 0
    %4458 = vmatprep.subr.bf16.mxu0 0
    %4459 = vmatpush1.bf16.xpose.msra.mxu0 0
    %4460 = vmatprep.subr.bf16.mxu0 0
    %4461 = vmatpush1.bf16.xpose.msra.mxu0 0
    %4462 = vmatprep.subr.bf16.mxu0 0
    %4463 = vmatpush1.bf16.xpose.msra.mxu0 0
    %4464 = vmatprep.subr.bf16.mxu0 0
    %4465 = vmatpush1.bf16.xpose.msra.mxu0 0
    %4466 = vmatprep.subr.bf16.mxu0 0
    %4467 = vmatpush1.bf16.xpose.msra.mxu0 0
    %4468 = vmatprep.subr.bf16.mxu0 0
    %4469 = vmatpush1.bf16.xpose.msra.mxu0 0
    %4470 = vmatprep.subr.bf16.mxu0 0
    %4471 = vmatpush1.bf16.xpose.msra.mxu0 0
    %4472 = vmatprep.subr.bf16.mxu0 0
    %4473 = vmatpush1.bf16.xpose.msra.mxu0 0
    %4474 = vmatprep.subr.bf16.mxu0 0
    %4475 = vmatpush1.bf16.xpose.msra.mxu0 0
    %4476 = vmatprep.mubr.bf16.mxu0 0
    %4477 = vmatmul.mubr.bf16.gmra.mrb[0].mxu0 %v4439
    %v4478 = vpop.f32.mrb[0].mxu0
    %v4479 = vadd.f32 %v228, %v4478
    %v4480 = vpop.f32.mrb[0].mxu0
    %v4481 = vpop.f32.mrb[0].mxu0
    %v4482 = vpop.f32.mrb[0].mxu0
    %4483 = vdwg.mxu0
    %v4485 = vsel %vm1535, %v4288, 0
    %v4488 = vsel %vm1535, %v4296, 0
    %4490 = vmatprep.subr.bf16.mxu0 0
    %4491 = vmatpush1.bf16.xpose.msra.mxu0 %v4488
    %4492 = vmatprep.subr.bf16.mxu0 0
    %4493 = vmatpush1.bf16.xpose.msra.mxu0 0
    %4494 = vmatprep.subr.bf16.mxu0 0
    %4495 = vmatpush1.bf16.xpose.msra.mxu0 0
    %4496 = vmatprep.subr.bf16.mxu0 0
    %4497 = vmatpush1.bf16.xpose.msra.mxu0 0
    %4498 = vmatprep.subr.bf16.mxu0 0
    %4499 = vmatpush1.bf16.xpose.msra.mxu0 0
    %4500 = vmatprep.subr.bf16.mxu0 0
    %4501 = vmatpush1.bf16.xpose.msra.mxu0 0
    %4502 = vmatprep.subr.bf16.mxu0 0
    %4503 = vmatpush1.bf16.xpose.msra.mxu0 0
    %4504 = vmatprep.subr.bf16.mxu0 0
    %4505 = vmatpush1.bf16.xpose.msra.mxu0 0
    %4506 = vmatprep.subr.bf16.mxu0 0
    %4507 = vmatpush1.bf16.xpose.msra.mxu0 0
    %4508 = vmatprep.subr.bf16.mxu0 0
    %4509 = vmatpush1.bf16.xpose.msra.mxu0 0
    %4510 = vmatprep.subr.bf16.mxu0 0
    %4511 = vmatpush1.bf16.xpose.msra.mxu0 0
    %4512 = vmatprep.subr.bf16.mxu0 0
    %4513 = vmatpush1.bf16.xpose.msra.mxu0 0
    %4514 = vmatprep.subr.bf16.mxu0 0
    %4515 = vmatpush1.bf16.xpose.msra.mxu0 0
    %4516 = vmatprep.subr.bf16.mxu0 0
    %4517 = vmatpush1.bf16.xpose.msra.mxu0 0
    %4518 = vmatprep.subr.bf16.mxu0 0
    %4519 = vmatpush1.bf16.xpose.msra.mxu0 0
    %4520 = vmatprep.subr.bf16.mxu0 0
    %4521 = vmatpush1.bf16.xpose.msra.mxu0 0
    %4522 = vmatprep.mubr.bf16.mxu0 0
    %4523 = vmatmul.mubr.bf16.gmra.mrb[0].mxu0 %v4485
    %v4524 = vpop.f32.mrb[0].mxu0
    %v4525 = vadd.f32 %v228, %v4524
    %v4526 = vpop.f32.mrb[0].mxu0
    %v4527 = vpop.f32.mrb[0].mxu0
    %v4528 = vpop.f32.mrb[0].mxu0
    %4529 = vdwg.mxu0
    %v4531 = vsel %vm1535, %v4289, 0
    %v4534 = vsel %vm1535, %v4297, 0
    %4536 = vmatprep.subr.bf16.mxu0 0
    %4537 = vmatpush1.bf16.xpose.msra.mxu0 %v4534
    %4538 = vmatprep.subr.bf16.mxu0 0
    %4539 = vmatpush1.bf16.xpose.msra.mxu0 0
    %4540 = vmatprep.subr.bf16.mxu0 0
    %4541 = vmatpush1.bf16.xpose.msra.mxu0 0
    %4542 = vmatprep.subr.bf16.mxu0 0
    %4543 = vmatpush1.bf16.xpose.msra.mxu0 0
    %4544 = vmatprep.subr.bf16.mxu0 0
    %4545 = vmatpush1.bf16.xpose.msra.mxu0 0
    %4546 = vmatprep.subr.bf16.mxu0 0
    %4547 = vmatpush1.bf16.xpose.msra.mxu0 0
    %4548 = vmatprep.subr.bf16.mxu0 0
    %4549 = vmatpush1.bf16.xpose.msra.mxu0 0
    %4550 = vmatprep.subr.bf16.mxu0 0
    %4551 = vmatpush1.bf16.xpose.msra.mxu0 0
    %4552 = vmatprep.subr.bf16.mxu0 0
    %4553 = vmatpush1.bf16.xpose.msra.mxu0 0
    %4554 = vmatprep.subr.bf16.mxu0 0
    %4555 = vmatpush1.bf16.xpose.msra.mxu0 0
    %4556 = vmatprep.subr.bf16.mxu0 0
    %4557 = vmatpush1.bf16.xpose.msra.mxu0 0
    %4558 = vmatprep.subr.bf16.mxu0 0
    %4559 = vmatpush1.bf16.xpose.msra.mxu0 0
    %4560 = vmatprep.subr.bf16.mxu0 0
    %4561 = vmatpush1.bf16.xpose.msra.mxu0 0
    %4562 = vmatprep.subr.bf16.mxu0 0
    %4563 = vmatpush1.bf16.xpose.msra.mxu0 0
    %4564 = vmatprep.subr.bf16.mxu0 0
    %4565 = vmatpush1.bf16.xpose.msra.mxu0 0
    %4566 = vmatprep.subr.bf16.mxu0 0
    %4567 = vmatpush1.bf16.xpose.msra.mxu0 0
    %4568 = vmatprep.mubr.bf16.mxu0 0
    %4569 = vmatmul.mubr.bf16.gmra.mrb[0].mxu0 %v4531
    %v4570 = vpop.f32.mrb[0].mxu0
    %v4571 = vadd.f32 %v228, %v4570
    %v4572 = vpop.f32.mrb[0].mxu0
    %v4573 = vpop.f32.mrb[0].mxu0
    %v4574 = vpop.f32.mrb[0].mxu0
    %4575 = vdwg.mxu0
    %v4577 = vsel %vm1535, %v4290, 0
    %v4580 = vsel %vm1535, %v4298, 0
    %4582 = vmatprep.subr.bf16.mxu0 0
    %4583 = vmatpush1.bf16.xpose.msra.mxu0 %v4580
    %4584 = vmatprep.subr.bf16.mxu0 0
    %4585 = vmatpush1.bf16.xpose.msra.mxu0 0
    %4586 = vmatprep.subr.bf16.mxu0 0
    %4587 = vmatpush1.bf16.xpose.msra.mxu0 0
    %4588 = vmatprep.subr.bf16.mxu0 0
    %4589 = vmatpush1.bf16.xpose.msra.mxu0 0
    %4590 = vmatprep.subr.bf16.mxu0 0
    %4591 = vmatpush1.bf16.xpose.msra.mxu0 0
    %4592 = vmatprep.subr.bf16.mxu0 0
    %4593 = vmatpush1.bf16.xpose.msra.mxu0 0
    %4594 = vmatprep.subr.bf16.mxu0 0
    %4595 = vmatpush1.bf16.xpose.msra.mxu0 0
    %4596 = vmatprep.subr.bf16.mxu0 0
    %4597 = vmatpush1.bf16.xpose.msra.mxu0 0
    %4598 = vmatprep.subr.bf16.mxu0 0
    %4599 = vmatpush1.bf16.xpose.msra.mxu0 0
    %4600 = vmatprep.subr.bf16.mxu0 0
    %4601 = vmatpush1.bf16.xpose.msra.mxu0 0
    %4602 = vmatprep.subr.bf16.mxu0 0
    %4603 = vmatpush1.bf16.xpose.msra.mxu0 0
    %4604 = vmatprep.subr.bf16.mxu0 0
    %4605 = vmatpush1.bf16.xpose.msra.mxu0 0
    %4606 = vmatprep.subr.bf16.mxu0 0
    %4607 = vmatpush1.bf16.xpose.msra.mxu0 0
    %4608 = vmatprep.subr.bf16.mxu0 0
    %4609 = vmatpush1.bf16.xpose.msra.mxu0 0
    %4610 = vmatprep.subr.bf16.mxu0 0
    %4611 = vmatpush1.bf16.xpose.msra.mxu0 0
    %4612 = vmatprep.subr.bf16.mxu0 0
    %4613 = vmatpush1.bf16.xpose.msra.mxu0 0
    %4614 = vmatprep.mubr.bf16.mxu0 0
    %4615 = vmatmul.mubr.bf16.gmra.mrb[0].mxu0 %v4577
    %v4616 = vpop.f32.mrb[0].mxu0
    %v4617 = vadd.f32 %v228, %v4616
    %v4618 = vpop.f32.mrb[0].mxu0
    %v4619 = vpop.f32.mrb[0].mxu0
    %v4620 = vpop.f32.mrb[0].mxu0
    %4621 = vdwg.mxu0
    %v4623 = vsel %vm1535, %v4291, 0
    %v4626 = vsel %vm1535, %v4299, 0
    %4628 = vmatprep.subr.bf16.mxu0 0
    %4629 = vmatpush1.bf16.xpose.msra.mxu0 %v4626
    %4630 = vmatprep.subr.bf16.mxu0 0
    %4631 = vmatpush1.bf16.xpose.msra.mxu0 0
    %4632 = vmatprep.subr.bf16.mxu0 0
    %4633 = vmatpush1.bf16.xpose.msra.mxu0 0
    %4634 = vmatprep.subr.bf16.mxu0 0
    %4635 = vmatpush1.bf16.xpose.msra.mxu0 0
    %4636 = vmatprep.subr.bf16.mxu0 0
    %4637 = vmatpush1.bf16.xpose.msra.mxu0 0
    %4638 = vmatprep.subr.bf16.mxu0 0
    %4639 = vmatpush1.bf16.xpose.msra.mxu0 0
    %4640 = vmatprep.subr.bf16.mxu0 0
    %4641 = vmatpush1.bf16.xpose.msra.mxu0 0
    %4642 = vmatprep.subr.bf16.mxu0 0
    %4643 = vmatpush1.bf16.xpose.msra.mxu0 0
    %4644 = vmatprep.subr.bf16.mxu0 0
    %4645 = vmatpush1.bf16.xpose.msra.mxu0 0
    %4646 = vmatprep.subr.bf16.mxu0 0
    %4647 = vmatpush1.bf16.xpose.msra.mxu0 0
    %4648 = vmatprep.subr.bf16.mxu0 0
    %4649 = vmatpush1.bf16.xpose.msra.mxu0 0
    %4650 = vmatprep.subr.bf16.mxu0 0
    %4651 = vmatpush1.bf16.xpose.msra.mxu0 0
    %4652 = vmatprep.subr.bf16.mxu0 0
    %4653 = vmatpush1.bf16.xpose.msra.mxu0 0
    %4654 = vmatprep.subr.bf16.mxu0 0
    %4655 = vmatpush1.bf16.xpose.msra.mxu0 0
    %4656 = vmatprep.subr.bf16.mxu0 0
    %4657 = vmatpush1.bf16.xpose.msra.mxu0 0
    %4658 = vmatprep.subr.bf16.mxu0 0
    %4659 = vmatpush1.bf16.xpose.msra.mxu0 0
    %4660 = vmatprep.mubr.bf16.mxu0 0
    %4661 = vmatmul.mubr.bf16.gmra.mrb[0].mxu0 %v4623
    %v4662 = vpop.f32.mrb[0].mxu0
    %v4663 = vadd.f32 %v228, %v4662
    %v4664 = vpop.f32.mrb[0].mxu0
    %v4665 = vpop.f32.mrb[0].mxu0
    %v4666 = vpop.f32.mrb[0].mxu0
    %4667 = vdwg.mxu0
    %v4668 = vsel %vm1535, %v4341, -inf
    %4669 = vmax.xlane.f32.xlu0 %v4668
    %v4670 = vpop.xlane.xlu0 %4669
    %v4671 = vsel %vm1535, %v4387, -inf
    %4672 = vmax.xlane.f32.xlu0 %v4671
    %v4673 = vpop.xlane.xlu0 %4672
    %v4674 = vsel %vm1535, %v4433, -inf
    %4675 = vmax.xlane.f32.xlu0 %v4674
    %v4676 = vpop.xlane.xlu0 %4675
    %v4677 = vsel %vm1535, %v4479, -inf
    %4678 = vmax.xlane.f32.xlu0 %v4677
    %v4679 = vpop.xlane.xlu0 %4678
    %v4680 = vsel %vm1535, %v4525, -inf
    %4681 = vmax.xlane.f32.xlu0 %v4680
    %v4682 = vpop.xlane.xlu0 %4681
    %v4683 = vsel %vm1535, %v4571, -inf
    %4684 = vmax.xlane.f32.xlu0 %v4683
    %v4685 = vpop.xlane.xlu0 %4684
    %v4686 = vsel %vm1535, %v4617, -inf
    %4687 = vmax.xlane.f32.xlu0 %v4686
    %v4688 = vpop.xlane.xlu0 %4687
    %v4689 = vsel %vm1535, %v4663, -inf
    %4690 = vmax.xlane.f32.xlu0 %v4689
    %v4691 = vpop.xlane.xlu0 %4690
    %v4692 = vsub.f32 %v4341, %v4670
    %v4693 = vsub.f32 %v4387, %v4673
    %v4694 = vsub.f32 %v4433, %v4676
    %v4695 = vsub.f32 %v4479, %v4679
    %v4696 = vsub.f32 %v4525, %v4682
    %v4697 = vsub.f32 %v4571, %v4685
    %v4698 = vsub.f32 %v4617, %v4688
    %v4699 = vsub.f32 %v4663, %v4691
    %v4700 = vmul.f32 %v4692, 1.442695
    %v4701 = vpow.pop %v4700
    %v4702 = vmul.f32 %v4693, 1.442695
    %v4703 = vpow.pop %v4702
    %v4704 = vmul.f32 %v4694, 1.442695
    %v4705 = vpow.pop %v4704
    %v4706 = vmul.f32 %v4695, 1.442695
    %v4707 = vpow.pop %v4706
    %v4708 = vmul.f32 %v4696, 1.442695
    %v4709 = vpow.pop %v4708
    %v4710 = vmul.f32 %v4697, 1.442695
    %v4711 = vpow.pop %v4710
    %v4712 = vmul.f32 %v4698, 1.442695
    %v4713 = vpow.pop %v4712
    %v4714 = vmul.f32 %v4699, 1.442695
    %v4715 = vpow.pop %v4714
    %v4716 = vsel %vm1535, %v4701, 0.0
    %4717 = vadd.xlane.f32.xlu0 %v4716
    %v4718 = vpop.xlane.xlu0 %4717
    %v4719 = vsel %vm1535, %v4703, 0.0
    %4720 = vadd.xlane.f32.xlu0 %v4719
    %v4721 = vpop.xlane.xlu0 %4720
    %v4722 = vsel %vm1535, %v4705, 0.0
    %4723 = vadd.xlane.f32.xlu0 %v4722
    %v4724 = vpop.xlane.xlu0 %4723
    %v4725 = vsel %vm1535, %v4707, 0.0
    %4726 = vadd.xlane.f32.xlu0 %v4725
    %v4727 = vpop.xlane.xlu0 %4726
    %v4728 = vsel %vm1535, %v4709, 0.0
    %4729 = vadd.xlane.f32.xlu0 %v4728
    %v4730 = vpop.xlane.xlu0 %4729
    %v4731 = vsel %vm1535, %v4711, 0.0
    %4732 = vadd.xlane.f32.xlu0 %v4731
    %v4733 = vpop.xlane.xlu0 %4732
    %v4734 = vsel %vm1535, %v4713, 0.0
    %4735 = vadd.xlane.f32.xlu0 %v4734
    %v4736 = vpop.xlane.xlu0 %4735
    %v4737 = vsel %vm1535, %v4715, 0.0
    %4738 = vadd.xlane.f32.xlu0 %v4737
    %v4739 = vpop.xlane.xlu0 %4738
    %v4740 = vrcp.pop %v4718
    %v4741 = vrcp.pop %v4721
    %v4742 = vrcp.pop %v4724
    %v4743 = vrcp.pop %v4727
    %v4744 = vrcp.pop %v4730
    %v4745 = vrcp.pop %v4733
    %v4746 = vrcp.pop %v4736
    %v4747 = vrcp.pop %v4739
    %v4748 = vmul.f32 %v4701, %v4740
    %v4749 = vmul.f32 %v4703, %v4741
    %v4750 = vmul.f32 %v4705, %v4742
    %v4751 = vmul.f32 %v4707, %v4743
    %v4752 = vmul.f32 %v4709, %v4744
    %v4753 = vmul.f32 %v4711, %v4745
    %v4754 = vmul.f32 %v4713, %v4746
    %v4755 = vmul.f32 %v4715, %v4747
    %v4756 = vpack.c.bf16 %v4748, %v4748
    %v4757 = vpack.c.bf16 %v4749, %v4749
    %v4758 = vpack.c.bf16 %v4750, %v4750
    %v4759 = vpack.c.bf16 %v4751, %v4751
    %v4760 = vpack.c.bf16 %v4752, %v4752
    %v4761 = vpack.c.bf16 %v4753, %v4753
    %v4762 = vpack.c.bf16 %v4754, %v4754
    %v4763 = vpack.c.bf16 %v4755, %v4755
    %v4764 = vpack.c.bf16 %v3963, %v3963
    %v4765 = vpack.c.bf16 %v4015, %v4015
    %v4766 = vpack.c.bf16 %v4067, %v4067
    %v4767 = vpack.c.bf16 %v4119, %v4119
    %v4768 = vpack.c.bf16 %v4159, %v4159
    %v4769 = vpack.c.bf16 %v4199, %v4199
    %v4770 = vpack.c.bf16 %v4239, %v4239
    %v4771 = vpack.c.bf16 %v4279, %v4279
    %v4773 = vsel %vm1535, %v4756, 0
    %v4776 = vsel %vm2011, %v4764, 0
    %4778 = vmatprep.subr.bf16.mxu0 0
    %4779 = vmatpush1.bf16.msra.mxu0 %v4776
    %4780 = vmatprep.subr.bf16.mxu0 0
    %4781 = vmatpush1.bf16.msra.mxu0 0
    %4782 = vmatprep.subr.bf16.mxu0 0
    %4783 = vmatpush1.bf16.msra.mxu0 0
    %4784 = vmatprep.subr.bf16.mxu0 0
    %4785 = vmatpush1.bf16.msra.mxu0 0
    %4786 = vmatprep.subr.bf16.mxu0 0
    %4787 = vmatpush1.bf16.msra.mxu0 0
    %4788 = vmatprep.subr.bf16.mxu0 0
    %4789 = vmatpush1.bf16.msra.mxu0 0
    %4790 = vmatprep.subr.bf16.mxu0 0
    %4791 = vmatpush1.bf16.msra.mxu0 0
    %4792 = vmatprep.subr.bf16.mxu0 0
    %4793 = vmatpush1.bf16.msra.mxu0 0
    %4794 = vmatprep.subr.bf16.mxu0 0
    %4795 = vmatpush1.bf16.msra.mxu0 0
    %4796 = vmatprep.subr.bf16.mxu0 0
    %4797 = vmatpush1.bf16.msra.mxu0 0
    %4798 = vmatprep.subr.bf16.mxu0 0
    %4799 = vmatpush1.bf16.msra.mxu0 0
    %4800 = vmatprep.subr.bf16.mxu0 0
    %4801 = vmatpush1.bf16.msra.mxu0 0
    %4802 = vmatprep.subr.bf16.mxu0 0
    %4803 = vmatpush1.bf16.msra.mxu0 0
    %4804 = vmatprep.subr.bf16.mxu0 0
    %4805 = vmatpush1.bf16.msra.mxu0 0
    %4806 = vmatprep.subr.bf16.mxu0 0
    %4807 = vmatpush1.bf16.msra.mxu0 0
    %4808 = vmatprep.subr.bf16.mxu0 0
    %4809 = vmatpush1.bf16.msra.mxu0 0
    %4810 = vmatprep.mubr.bf16.mxu0 0
    %4811 = vmatmul.mubr.bf16.gmra.mrb[0].mxu0 %v4773
    %v4812 = vpop.f32.mrb[0].mxu0
    %v4813 = vadd.f32 0.0, %v4812
    %v4814 = vpop.f32.mrb[0].mxu0
    %v4815 = vpop.f32.mrb[0].mxu0
    %v4816 = vpop.f32.mrb[0].mxu0
    %4817 = vdwg.mxu0
    %v4819 = vsel %vm1535, %v4757, 0
    %v4822 = vsel %vm2011, %v4765, 0
    %4824 = vmatprep.subr.bf16.mxu0 0
    %4825 = vmatpush1.bf16.msra.mxu0 %v4822
    %4826 = vmatprep.subr.bf16.mxu0 0
    %4827 = vmatpush1.bf16.msra.mxu0 0
    %4828 = vmatprep.subr.bf16.mxu0 0
    %4829 = vmatpush1.bf16.msra.mxu0 0
    %4830 = vmatprep.subr.bf16.mxu0 0
    %4831 = vmatpush1.bf16.msra.mxu0 0
    %4832 = vmatprep.subr.bf16.mxu0 0
    %4833 = vmatpush1.bf16.msra.mxu0 0
    %4834 = vmatprep.subr.bf16.mxu0 0
    %4835 = vmatpush1.bf16.msra.mxu0 0
    %4836 = vmatprep.subr.bf16.mxu0 0
    %4837 = vmatpush1.bf16.msra.mxu0 0
    %4838 = vmatprep.subr.bf16.mxu0 0
    %4839 = vmatpush1.bf16.msra.mxu0 0
    %4840 = vmatprep.subr.bf16.mxu0 0
    %4841 = vmatpush1.bf16.msra.mxu0 0
    %4842 = vmatprep.subr.bf16.mxu0 0
    %4843 = vmatpush1.bf16.msra.mxu0 0
    %4844 = vmatprep.subr.bf16.mxu0 0
    %4845 = vmatpush1.bf16.msra.mxu0 0
    %4846 = vmatprep.subr.bf16.mxu0 0
    %4847 = vmatpush1.bf16.msra.mxu0 0
    %4848 = vmatprep.subr.bf16.mxu0 0
    %4849 = vmatpush1.bf16.msra.mxu0 0
    %4850 = vmatprep.subr.bf16.mxu0 0
    %4851 = vmatpush1.bf16.msra.mxu0 0
    %4852 = vmatprep.subr.bf16.mxu0 0
    %4853 = vmatpush1.bf16.msra.mxu0 0
    %4854 = vmatprep.subr.bf16.mxu0 0
    %4855 = vmatpush1.bf16.msra.mxu0 0
    %4856 = vmatprep.mubr.bf16.mxu0 0
    %4857 = vmatmul.mubr.bf16.gmra.mrb[0].mxu0 %v4819
    %v4858 = vpop.f32.mrb[0].mxu0
    %v4859 = vadd.f32 0.0, %v4858
    %v4860 = vpop.f32.mrb[0].mxu0
    %v4861 = vpop.f32.mrb[0].mxu0
    %v4862 = vpop.f32.mrb[0].mxu0
    %4863 = vdwg.mxu0
    %v4865 = vsel %vm1535, %v4758, 0
    %v4868 = vsel %vm2011, %v4766, 0
    %4870 = vmatprep.subr.bf16.mxu0 0
    %4871 = vmatpush1.bf16.msra.mxu0 %v4868
    %4872 = vmatprep.subr.bf16.mxu0 0
    %4873 = vmatpush1.bf16.msra.mxu0 0
    %4874 = vmatprep.subr.bf16.mxu0 0
    %4875 = vmatpush1.bf16.msra.mxu0 0
    %4876 = vmatprep.subr.bf16.mxu0 0
    %4877 = vmatpush1.bf16.msra.mxu0 0
    %4878 = vmatprep.subr.bf16.mxu0 0
    %4879 = vmatpush1.bf16.msra.mxu0 0
    %4880 = vmatprep.subr.bf16.mxu0 0
    %4881 = vmatpush1.bf16.msra.mxu0 0
    %4882 = vmatprep.subr.bf16.mxu0 0
    %4883 = vmatpush1.bf16.msra.mxu0 0
    %4884 = vmatprep.subr.bf16.mxu0 0
    %4885 = vmatpush1.bf16.msra.mxu0 0
    %4886 = vmatprep.subr.bf16.mxu0 0
    %4887 = vmatpush1.bf16.msra.mxu0 0
    %4888 = vmatprep.subr.bf16.mxu0 0
    %4889 = vmatpush1.bf16.msra.mxu0 0
    %4890 = vmatprep.subr.bf16.mxu0 0
    %4891 = vmatpush1.bf16.msra.mxu0 0
    %4892 = vmatprep.subr.bf16.mxu0 0
    %4893 = vmatpush1.bf16.msra.mxu0 0
    %4894 = vmatprep.subr.bf16.mxu0 0
    %4895 = vmatpush1.bf16.msra.mxu0 0
    %4896 = vmatprep.subr.bf16.mxu0 0
    %4897 = vmatpush1.bf16.msra.mxu0 0
    %4898 = vmatprep.subr.bf16.mxu0 0
    %4899 = vmatpush1.bf16.msra.mxu0 0
    %4900 = vmatprep.subr.bf16.mxu0 0
    %4901 = vmatpush1.bf16.msra.mxu0 0
    %4902 = vmatprep.mubr.bf16.mxu0 0
    %4903 = vmatmul.mubr.bf16.gmra.mrb[0].mxu0 %v4865
    %v4904 = vpop.f32.mrb[0].mxu0
    %v4905 = vadd.f32 0.0, %v4904
    %v4906 = vpop.f32.mrb[0].mxu0
    %v4907 = vpop.f32.mrb[0].mxu0
    %v4908 = vpop.f32.mrb[0].mxu0
    %4909 = vdwg.mxu0
    %v4911 = vsel %vm1535, %v4759, 0
    %v4914 = vsel %vm2011, %v4767, 0
    %4916 = vmatprep.subr.bf16.mxu0 0
    %4917 = vmatpush1.bf16.msra.mxu0 %v4914
    %4918 = vmatprep.subr.bf16.mxu0 0
    %4919 = vmatpush1.bf16.msra.mxu0 0
    %4920 = vmatprep.subr.bf16.mxu0 0
    %4921 = vmatpush1.bf16.msra.mxu0 0
    %4922 = vmatprep.subr.bf16.mxu0 0
    %4923 = vmatpush1.bf16.msra.mxu0 0
    %4924 = vmatprep.subr.bf16.mxu0 0
    %4925 = vmatpush1.bf16.msra.mxu0 0
    %4926 = vmatprep.subr.bf16.mxu0 0
    %4927 = vmatpush1.bf16.msra.mxu0 0
    %4928 = vmatprep.subr.bf16.mxu0 0
    %4929 = vmatpush1.bf16.msra.mxu0 0
    %4930 = vmatprep.subr.bf16.mxu0 0
    %4931 = vmatpush1.bf16.msra.mxu0 0
    %4932 = vmatprep.subr.bf16.mxu0 0
    %4933 = vmatpush1.bf16.msra.mxu0 0
    %4934 = vmatprep.subr.bf16.mxu0 0
    %4935 = vmatpush1.bf16.msra.mxu0 0
    %4936 = vmatprep.subr.bf16.mxu0 0
    %4937 = vmatpush1.bf16.msra.mxu0 0
    %4938 = vmatprep.subr.bf16.mxu0 0
    %4939 = vmatpush1.bf16.msra.mxu0 0
    %4940 = vmatprep.subr.bf16.mxu0 0
    %4941 = vmatpush1.bf16.msra.mxu0 0
    %4942 = vmatprep.subr.bf16.mxu0 0
    %4943 = vmatpush1.bf16.msra.mxu0 0
    %4944 = vmatprep.subr.bf16.mxu0 0
    %4945 = vmatpush1.bf16.msra.mxu0 0
    %4946 = vmatprep.subr.bf16.mxu0 0
    %4947 = vmatpush1.bf16.msra.mxu0 0
    %4948 = vmatprep.mubr.bf16.mxu0 0
    %4949 = vmatmul.mubr.bf16.gmra.mrb[0].mxu0 %v4911
    %v4950 = vpop.f32.mrb[0].mxu0
    %v4951 = vadd.f32 0.0, %v4950
    %v4952 = vpop.f32.mrb[0].mxu0
    %v4953 = vpop.f32.mrb[0].mxu0
    %v4954 = vpop.f32.mrb[0].mxu0
    %4955 = vdwg.mxu0
    %v4957 = vsel %vm1535, %v4760, 0
    %v4960 = vsel %vm2011, %v4768, 0
    %4962 = vmatprep.subr.bf16.mxu0 0
    %4963 = vmatpush1.bf16.msra.mxu0 %v4960
    %4964 = vmatprep.subr.bf16.mxu0 0
    %4965 = vmatpush1.bf16.msra.mxu0 0
    %4966 = vmatprep.subr.bf16.mxu0 0
    %4967 = vmatpush1.bf16.msra.mxu0 0
    %4968 = vmatprep.subr.bf16.mxu0 0
    %4969 = vmatpush1.bf16.msra.mxu0 0
    %4970 = vmatprep.subr.bf16.mxu0 0
    %4971 = vmatpush1.bf16.msra.mxu0 0
    %4972 = vmatprep.subr.bf16.mxu0 0
    %4973 = vmatpush1.bf16.msra.mxu0 0
    %4974 = vmatprep.subr.bf16.mxu0 0
    %4975 = vmatpush1.bf16.msra.mxu0 0
    %4976 = vmatprep.subr.bf16.mxu0 0
    %4977 = vmatpush1.bf16.msra.mxu0 0
    %4978 = vmatprep.subr.bf16.mxu0 0
    %4979 = vmatpush1.bf16.msra.mxu0 0
    %4980 = vmatprep.subr.bf16.mxu0 0
    %4981 = vmatpush1.bf16.msra.mxu0 0
    %4982 = vmatprep.subr.bf16.mxu0 0
    %4983 = vmatpush1.bf16.msra.mxu0 0
    %4984 = vmatprep.subr.bf16.mxu0 0
    %4985 = vmatpush1.bf16.msra.mxu0 0
    %4986 = vmatprep.subr.bf16.mxu0 0
    %4987 = vmatpush1.bf16.msra.mxu0 0
    %4988 = vmatprep.subr.bf16.mxu0 0
    %4989 = vmatpush1.bf16.msra.mxu0 0
    %4990 = vmatprep.subr.bf16.mxu0 0
    %4991 = vmatpush1.bf16.msra.mxu0 0
    %4992 = vmatprep.subr.bf16.mxu0 0
    %4993 = vmatpush1.bf16.msra.mxu0 0
    %4994 = vmatprep.mubr.bf16.mxu0 0
    %4995 = vmatmul.mubr.bf16.gmra.mrb[0].mxu0 %v4957
    %v4996 = vpop.f32.mrb[0].mxu0
    %v4997 = vadd.f32 0.0, %v4996
    %v4998 = vpop.f32.mrb[0].mxu0
    %v4999 = vpop.f32.mrb[0].mxu0
    %v5000 = vpop.f32.mrb[0].mxu0
    %5001 = vdwg.mxu0
    %v5003 = vsel %vm1535, %v4761, 0
    %v5006 = vsel %vm2011, %v4769, 0
    %5008 = vmatprep.subr.bf16.mxu0 0
    %5009 = vmatpush1.bf16.msra.mxu0 %v5006
    %5010 = vmatprep.subr.bf16.mxu0 0
    %5011 = vmatpush1.bf16.msra.mxu0 0
    %5012 = vmatprep.subr.bf16.mxu0 0
    %5013 = vmatpush1.bf16.msra.mxu0 0
    %5014 = vmatprep.subr.bf16.mxu0 0
    %5015 = vmatpush1.bf16.msra.mxu0 0
    %5016 = vmatprep.subr.bf16.mxu0 0
    %5017 = vmatpush1.bf16.msra.mxu0 0
    %5018 = vmatprep.subr.bf16.mxu0 0
    %5019 = vmatpush1.bf16.msra.mxu0 0
    %5020 = vmatprep.subr.bf16.mxu0 0
    %5021 = vmatpush1.bf16.msra.mxu0 0
    %5022 = vmatprep.subr.bf16.mxu0 0
    %5023 = vmatpush1.bf16.msra.mxu0 0
    %5024 = vmatprep.subr.bf16.mxu0 0
    %5025 = vmatpush1.bf16.msra.mxu0 0
    %5026 = vmatprep.subr.bf16.mxu0 0
    %5027 = vmatpush1.bf16.msra.mxu0 0
    %5028 = vmatprep.subr.bf16.mxu0 0
    %5029 = vmatpush1.bf16.msra.mxu0 0
    %5030 = vmatprep.subr.bf16.mxu0 0
    %5031 = vmatpush1.bf16.msra.mxu0 0
    %5032 = vmatprep.subr.bf16.mxu0 0
    %5033 = vmatpush1.bf16.msra.mxu0 0
    %5034 = vmatprep.subr.bf16.mxu0 0
    %5035 = vmatpush1.bf16.msra.mxu0 0
    %5036 = vmatprep.subr.bf16.mxu0 0
    %5037 = vmatpush1.bf16.msra.mxu0 0
    %5038 = vmatprep.subr.bf16.mxu0 0
    %5039 = vmatpush1.bf16.msra.mxu0 0
    %5040 = vmatprep.mubr.bf16.mxu0 0
    %5041 = vmatmul.mubr.bf16.gmra.mrb[0].mxu0 %v5003
    %v5042 = vpop.f32.mrb[0].mxu0
    %v5043 = vadd.f32 0.0, %v5042
    %v5044 = vpop.f32.mrb[0].mxu0
    %v5045 = vpop.f32.mrb[0].mxu0
    %v5046 = vpop.f32.mrb[0].mxu0
    %5047 = vdwg.mxu0
    %v5049 = vsel %vm1535, %v4762, 0
    %v5052 = vsel %vm2011, %v4770, 0
    %5054 = vmatprep.subr.bf16.mxu0 0
    %5055 = vmatpush1.bf16.msra.mxu0 %v5052
    %5056 = vmatprep.subr.bf16.mxu0 0
    %5057 = vmatpush1.bf16.msra.mxu0 0
    %5058 = vmatprep.subr.bf16.mxu0 0
    %5059 = vmatpush1.bf16.msra.mxu0 0
    %5060 = vmatprep.subr.bf16.mxu0 0
    %5061 = vmatpush1.bf16.msra.mxu0 0
    %5062 = vmatprep.subr.bf16.mxu0 0
    %5063 = vmatpush1.bf16.msra.mxu0 0
    %5064 = vmatprep.subr.bf16.mxu0 0
    %5065 = vmatpush1.bf16.msra.mxu0 0
    %5066 = vmatprep.subr.bf16.mxu0 0
    %5067 = vmatpush1.bf16.msra.mxu0 0
    %5068 = vmatprep.subr.bf16.mxu0 0
    %5069 = vmatpush1.bf16.msra.mxu0 0
    %5070 = vmatprep.subr.bf16.mxu0 0
    %5071 = vmatpush1.bf16.msra.mxu0 0
    %5072 = vmatprep.subr.bf16.mxu0 0
    %5073 = vmatpush1.bf16.msra.mxu0 0
    %5074 = vmatprep.subr.bf16.mxu0 0
    %5075 = vmatpush1.bf16.msra.mxu0 0
    %5076 = vmatprep.subr.bf16.mxu0 0
    %5077 = vmatpush1.bf16.msra.mxu0 0
    %5078 = vmatprep.subr.bf16.mxu0 0
    %5079 = vmatpush1.bf16.msra.mxu0 0
    %5080 = vmatprep.subr.bf16.mxu0 0
    %5081 = vmatpush1.bf16.msra.mxu0 0
    %5082 = vmatprep.subr.bf16.mxu0 0
    %5083 = vmatpush1.bf16.msra.mxu0 0
    %5084 = vmatprep.subr.bf16.mxu0 0
    %5085 = vmatpush1.bf16.msra.mxu0 0
    %5086 = vmatprep.mubr.bf16.mxu0 0
    %5087 = vmatmul.mubr.bf16.gmra.mrb[0].mxu0 %v5049
    %v5088 = vpop.f32.mrb[0].mxu0
    %v5089 = vadd.f32 0.0, %v5088
    %v5090 = vpop.f32.mrb[0].mxu0
    %v5091 = vpop.f32.mrb[0].mxu0
    %v5092 = vpop.f32.mrb[0].mxu0
    %5093 = vdwg.mxu0
    %v5095 = vsel %vm1535, %v4763, 0
    %v5098 = vsel %vm2011, %v4771, 0
    %5100 = vmatprep.subr.bf16.mxu0 0
    %5101 = vmatpush1.bf16.msra.mxu0 %v5098
    %5102 = vmatprep.subr.bf16.mxu0 0
    %5103 = vmatpush1.bf16.msra.mxu0 0
    %5104 = vmatprep.subr.bf16.mxu0 0
    %5105 = vmatpush1.bf16.msra.mxu0 0
    %5106 = vmatprep.subr.bf16.mxu0 0
    %5107 = vmatpush1.bf16.msra.mxu0 0
    %5108 = vmatprep.subr.bf16.mxu0 0
    %5109 = vmatpush1.bf16.msra.mxu0 0
    %5110 = vmatprep.subr.bf16.mxu0 0
    %5111 = vmatpush1.bf16.msra.mxu0 0
    %5112 = vmatprep.subr.bf16.mxu0 0
    %5113 = vmatpush1.bf16.msra.mxu0 0
    %5114 = vmatprep.subr.bf16.mxu0 0
    %5115 = vmatpush1.bf16.msra.mxu0 0
    %5116 = vmatprep.subr.bf16.mxu0 0
    %5117 = vmatpush1.bf16.msra.mxu0 0
    %5118 = vmatprep.subr.bf16.mxu0 0
    %5119 = vmatpush1.bf16.msra.mxu0 0
    %5120 = vmatprep.subr.bf16.mxu0 0
    %5121 = vmatpush1.bf16.msra.mxu0 0
    %5122 = vmatprep.subr.bf16.mxu0 0
    %5123 = vmatpush1.bf16.msra.mxu0 0
    %5124 = vmatprep.subr.bf16.mxu0 0
    %5125 = vmatpush1.bf16.msra.mxu0 0
    %5126 = vmatprep.subr.bf16.mxu0 0
    %5127 = vmatpush1.bf16.msra.mxu0 0
    %5128 = vmatprep.subr.bf16.mxu0 0
    %5129 = vmatpush1.bf16.msra.mxu0 0
    %5130 = vmatprep.subr.bf16.mxu0 0
    %5131 = vmatpush1.bf16.msra.mxu0 0
    %5132 = vmatprep.mubr.bf16.mxu0 0
    %5133 = vmatmul.mubr.bf16.gmra.mrb[0].mxu0 %v5095
    %v5134 = vpop.f32.mrb[0].mxu0
    %v5135 = vadd.f32 0.0, %v5134
    %v5136 = vpop.f32.mrb[0].mxu0
    %v5137 = vpop.f32.mrb[0].mxu0
    %v5138 = vpop.f32.mrb[0].mxu0
    %5139 = vdwg.mxu0
    %v5140 = vpack.c.bf16 %v4813, %v4813
    %v5141 = vpack.c.bf16 %v4859, %v4859
    %v5142 = vpack.c.bf16 %v4905, %v4905
    %v5143 = vpack.c.bf16 %v4951, %v4951
    %v5144 = vpack.c.bf16 %v4997, %v4997
    %v5145 = vpack.c.bf16 %v5043, %v5043
    %v5146 = vpack.c.bf16 %v5089, %v5089
    %v5147 = vpack.c.bf16 %v5135, %v5135
    %s5148 = scalar_lea.vmem %s11, 16
    %v5149 = vld [vmem:[%s5148] sm:$0xf]
    %v5150 = vld [vmem:[%s5148 + $0x4] sm:$0xf]
    %v5151 = vld [vmem:[%s5148 + $0x8] sm:$0xf]
    %v5152 = vld [vmem:[%s5148 + $0xc] sm:$0xf]
    %v5154 = vsel %vm1535, %v5140, 0
    %v5157 = vsel %vm2011, %v5149, 0
    %5159 = vmatprep.subr.bf16.mxu0 0
    %5160 = vmatpush1.bf16.msra.mxu0 %v5157
    %5161 = vmatprep.subr.bf16.mxu0 0
    %5162 = vmatpush1.bf16.msra.mxu0 0
    %5163 = vmatprep.subr.bf16.mxu0 0
    %5164 = vmatpush1.bf16.msra.mxu0 0
    %5165 = vmatprep.subr.bf16.mxu0 0
    %5166 = vmatpush1.bf16.msra.mxu0 0
    %5167 = vmatprep.subr.bf16.mxu0 0
    %5168 = vmatpush1.bf16.msra.mxu0 0
    %5169 = vmatprep.subr.bf16.mxu0 0
    %5170 = vmatpush1.bf16.msra.mxu0 0
    %5171 = vmatprep.subr.bf16.mxu0 0
    %5172 = vmatpush1.bf16.msra.mxu0 0
    %5173 = vmatprep.subr.bf16.mxu0 0
    %5174 = vmatpush1.bf16.msra.mxu0 0
    %5175 = vmatprep.subr.bf16.mxu0 0
    %5176 = vmatpush1.bf16.msra.mxu0 0
    %5177 = vmatprep.subr.bf16.mxu0 0
    %5178 = vmatpush1.bf16.msra.mxu0 0
    %5179 = vmatprep.subr.bf16.mxu0 0
    %5180 = vmatpush1.bf16.msra.mxu0 0
    %5181 = vmatprep.subr.bf16.mxu0 0
    %5182 = vmatpush1.bf16.msra.mxu0 0
    %5183 = vmatprep.subr.bf16.mxu0 0
    %5184 = vmatpush1.bf16.msra.mxu0 0
    %5185 = vmatprep.subr.bf16.mxu0 0
    %5186 = vmatpush1.bf16.msra.mxu0 0
    %5187 = vmatprep.subr.bf16.mxu0 0
    %5188 = vmatpush1.bf16.msra.mxu0 0
    %5189 = vmatprep.subr.bf16.mxu0 0
    %5190 = vmatpush1.bf16.msra.mxu0 0
    %5191 = vmatprep.mubr.bf16.mxu0 0
    %5192 = vmatmul.mubr.bf16.gmra.mrb[0].mxu0 %v5154
    %v5193 = vpop.f32.mrb[0].mxu0
    %v5194 = vadd.f32 0.0, %v5193
    %v5195 = vpop.f32.mrb[0].mxu0
    %v5196 = vpop.f32.mrb[0].mxu0
    %v5197 = vpop.f32.mrb[0].mxu0
    %5198 = vdwg.mxu0
    %v5200 = vsel %vm1535, %v5141, 0
    %v5203 = vsel %vm2011, %v5150, 0
    %5205 = vmatprep.subr.bf16.mxu0 0
    %5206 = vmatpush1.bf16.msra.mxu0 %v5203
    %5207 = vmatprep.subr.bf16.mxu0 0
    %5208 = vmatpush1.bf16.msra.mxu0 0
    %5209 = vmatprep.subr.bf16.mxu0 0
    %5210 = vmatpush1.bf16.msra.mxu0 0
    %5211 = vmatprep.subr.bf16.mxu0 0
    %5212 = vmatpush1.bf16.msra.mxu0 0
    %5213 = vmatprep.subr.bf16.mxu0 0
    %5214 = vmatpush1.bf16.msra.mxu0 0
    %5215 = vmatprep.subr.bf16.mxu0 0
    %5216 = vmatpush1.bf16.msra.mxu0 0
    %5217 = vmatprep.subr.bf16.mxu0 0
    %5218 = vmatpush1.bf16.msra.mxu0 0
    %5219 = vmatprep.subr.bf16.mxu0 0
    %5220 = vmatpush1.bf16.msra.mxu0 0
    %5221 = vmatprep.subr.bf16.mxu0 0
    %5222 = vmatpush1.bf16.msra.mxu0 0
    %5223 = vmatprep.subr.bf16.mxu0 0
    %5224 = vmatpush1.bf16.msra.mxu0 0
    %5225 = vmatprep.subr.bf16.mxu0 0
    %5226 = vmatpush1.bf16.msra.mxu0 0
    %5227 = vmatprep.subr.bf16.mxu0 0
    %5228 = vmatpush1.bf16.msra.mxu0 0
    %5229 = vmatprep.subr.bf16.mxu0 0
    %5230 = vmatpush1.bf16.msra.mxu0 0
    %5231 = vmatprep.subr.bf16.mxu0 0
    %5232 = vmatpush1.bf16.msra.mxu0 0
    %5233 = vmatprep.subr.bf16.mxu0 0
    %5234 = vmatpush1.bf16.msra.mxu0 0
    %5235 = vmatprep.subr.bf16.mxu0 0
    %5236 = vmatpush1.bf16.msra.mxu0 0
    %5237 = vmatprep.mubr.bf16.mxu0 0
    %5238 = vmatmul.mubr.bf16.gmra.mrb[0].mxu0 %v5200
    %v5239 = vpop.f32.mrb[0].mxu0
    %v5240 = vadd.f32 0.0, %v5239
    %v5241 = vpop.f32.mrb[0].mxu0
    %v5242 = vpop.f32.mrb[0].mxu0
    %v5243 = vpop.f32.mrb[0].mxu0
    %5244 = vdwg.mxu0
    %v5246 = vsel %vm1535, %v5142, 0
    %v5249 = vsel %vm2011, %v5151, 0
    %5251 = vmatprep.subr.bf16.mxu0 0
    %5252 = vmatpush1.bf16.msra.mxu0 %v5249
    %5253 = vmatprep.subr.bf16.mxu0 0
    %5254 = vmatpush1.bf16.msra.mxu0 0
    %5255 = vmatprep.subr.bf16.mxu0 0
    %5256 = vmatpush1.bf16.msra.mxu0 0
    %5257 = vmatprep.subr.bf16.mxu0 0
    %5258 = vmatpush1.bf16.msra.mxu0 0
    %5259 = vmatprep.subr.bf16.mxu0 0
    %5260 = vmatpush1.bf16.msra.mxu0 0
    %5261 = vmatprep.subr.bf16.mxu0 0
    %5262 = vmatpush1.bf16.msra.mxu0 0
    %5263 = vmatprep.subr.bf16.mxu0 0
    %5264 = vmatpush1.bf16.msra.mxu0 0
    %5265 = vmatprep.subr.bf16.mxu0 0
    %5266 = vmatpush1.bf16.msra.mxu0 0
    %5267 = vmatprep.subr.bf16.mxu0 0
    %5268 = vmatpush1.bf16.msra.mxu0 0
    %5269 = vmatprep.subr.bf16.mxu0 0
    %5270 = vmatpush1.bf16.msra.mxu0 0
    %5271 = vmatprep.subr.bf16.mxu0 0
    %5272 = vmatpush1.bf16.msra.mxu0 0
    %5273 = vmatprep.subr.bf16.mxu0 0
    %5274 = vmatpush1.bf16.msra.mxu0 0
    %5275 = vmatprep.subr.bf16.mxu0 0
    %5276 = vmatpush1.bf16.msra.mxu0 0
    %5277 = vmatprep.subr.bf16.mxu0 0
    %5278 = vmatpush1.bf16.msra.mxu0 0
    %5279 = vmatprep.subr.bf16.mxu0 0
    %5280 = vmatpush1.bf16.msra.mxu0 0
    %5281 = vmatprep.subr.bf16.mxu0 0
    %5282 = vmatpush1.bf16.msra.mxu0 0
    %5283 = vmatprep.mubr.bf16.mxu0 0
    %5284 = vmatmul.mubr.bf16.gmra.mrb[0].mxu0 %v5246
    %v5285 = vpop.f32.mrb[0].mxu0
    %v5286 = vadd.f32 0.0, %v5285
    %v5287 = vpop.f32.mrb[0].mxu0
    %v5288 = vpop.f32.mrb[0].mxu0
    %v5289 = vpop.f32.mrb[0].mxu0
    %5290 = vdwg.mxu0
    %v5292 = vsel %vm1535, %v5143, 0
    %v5295 = vsel %vm2011, %v5152, 0
    %5297 = vmatprep.subr.bf16.mxu0 0
    %5298 = vmatpush1.bf16.msra.mxu0 %v5295
    %5299 = vmatprep.subr.bf16.mxu0 0
    %5300 = vmatpush1.bf16.msra.mxu0 0
    %5301 = vmatprep.subr.bf16.mxu0 0
    %5302 = vmatpush1.bf16.msra.mxu0 0
    %5303 = vmatprep.subr.bf16.mxu0 0
    %5304 = vmatpush1.bf16.msra.mxu0 0
    %5305 = vmatprep.subr.bf16.mxu0 0
    %5306 = vmatpush1.bf16.msra.mxu0 0
    %5307 = vmatprep.subr.bf16.mxu0 0
    %5308 = vmatpush1.bf16.msra.mxu0 0
    %5309 = vmatprep.subr.bf16.mxu0 0
    %5310 = vmatpush1.bf16.msra.mxu0 0
    %5311 = vmatprep.subr.bf16.mxu0 0
    %5312 = vmatpush1.bf16.msra.mxu0 0
    %5313 = vmatprep.subr.bf16.mxu0 0
    %5314 = vmatpush1.bf16.msra.mxu0 0
    %5315 = vmatprep.subr.bf16.mxu0 0
    %5316 = vmatpush1.bf16.msra.mxu0 0
    %5317 = vmatprep.subr.bf16.mxu0 0
    %5318 = vmatpush1.bf16.msra.mxu0 0
    %5319 = vmatprep.subr.bf16.mxu0 0
    %5320 = vmatpush1.bf16.msra.mxu0 0
    %5321 = vmatprep.subr.bf16.mxu0 0
    %5322 = vmatpush1.bf16.msra.mxu0 0
    %5323 = vmatprep.subr.bf16.mxu0 0
    %5324 = vmatpush1.bf16.msra.mxu0 0
    %5325 = vmatprep.subr.bf16.mxu0 0
    %5326 = vmatpush1.bf16.msra.mxu0 0
    %5327 = vmatprep.subr.bf16.mxu0 0
    %5328 = vmatpush1.bf16.msra.mxu0 0
    %5329 = vmatprep.mubr.bf16.mxu0 0
    %5330 = vmatmul.mubr.bf16.gmra.mrb[0].mxu0 %v5292
    %v5331 = vpop.f32.mrb[0].mxu0
    %v5332 = vadd.f32 0.0, %v5331
    %v5333 = vpop.f32.mrb[0].mxu0
    %v5334 = vpop.f32.mrb[0].mxu0
    %v5335 = vpop.f32.mrb[0].mxu0
    %5336 = vdwg.mxu0
    %v5338 = vsel %vm1535, %v5144, 0
    %5340 = vmatprep.subr.bf16.mxu0 0
    %5341 = vmatpush1.bf16.msra.mxu0 %v5157
    %5342 = vmatprep.subr.bf16.mxu0 0
    %5343 = vmatpush1.bf16.msra.mxu0 0
    %5344 = vmatprep.subr.bf16.mxu0 0
    %5345 = vmatpush1.bf16.msra.mxu0 0
    %5346 = vmatprep.subr.bf16.mxu0 0
    %5347 = vmatpush1.bf16.msra.mxu0 0
    %5348 = vmatprep.subr.bf16.mxu0 0
    %5349 = vmatpush1.bf16.msra.mxu0 0
    %5350 = vmatprep.subr.bf16.mxu0 0
    %5351 = vmatpush1.bf16.msra.mxu0 0
    %5352 = vmatprep.subr.bf16.mxu0 0
    %5353 = vmatpush1.bf16.msra.mxu0 0
    %5354 = vmatprep.subr.bf16.mxu0 0
    %5355 = vmatpush1.bf16.msra.mxu0 0
    %5356 = vmatprep.subr.bf16.mxu0 0
    %5357 = vmatpush1.bf16.msra.mxu0 0
    %5358 = vmatprep.subr.bf16.mxu0 0
    %5359 = vmatpush1.bf16.msra.mxu0 0
    %5360 = vmatprep.subr.bf16.mxu0 0
    %5361 = vmatpush1.bf16.msra.mxu0 0
    %5362 = vmatprep.subr.bf16.mxu0 0
    %5363 = vmatpush1.bf16.msra.mxu0 0
    %5364 = vmatprep.subr.bf16.mxu0 0
    %5365 = vmatpush1.bf16.msra.mxu0 0
    %5366 = vmatprep.subr.bf16.mxu0 0
    %5367 = vmatpush1.bf16.msra.mxu0 0
    %5368 = vmatprep.subr.bf16.mxu0 0
    %5369 = vmatpush1.bf16.msra.mxu0 0
    %5370 = vmatprep.subr.bf16.mxu0 0
    %5371 = vmatpush1.bf16.msra.mxu0 0
    %5372 = vmatprep.mubr.bf16.mxu0 0
    %5373 = vmatmul.mubr.bf16.gmra.mrb[0].mxu0 %v5338
    %v5374 = vpop.f32.mrb[0].mxu0
    %v5375 = vadd.f32 0.0, %v5374
    %v5376 = vpop.f32.mrb[0].mxu0
    %v5377 = vpop.f32.mrb[0].mxu0
    %v5378 = vpop.f32.mrb[0].mxu0
    %5379 = vdwg.mxu0
    %v5381 = vsel %vm1535, %v5145, 0
    %5383 = vmatprep.subr.bf16.mxu0 0
    %5384 = vmatpush1.bf16.msra.mxu0 %v5203
    %5385 = vmatprep.subr.bf16.mxu0 0
    %5386 = vmatpush1.bf16.msra.mxu0 0
    %5387 = vmatprep.subr.bf16.mxu0 0
    %5388 = vmatpush1.bf16.msra.mxu0 0
    %5389 = vmatprep.subr.bf16.mxu0 0
    %5390 = vmatpush1.bf16.msra.mxu0 0
    %5391 = vmatprep.subr.bf16.mxu0 0
    %5392 = vmatpush1.bf16.msra.mxu0 0
    %5393 = vmatprep.subr.bf16.mxu0 0
    %5394 = vmatpush1.bf16.msra.mxu0 0
    %5395 = vmatprep.subr.bf16.mxu0 0
    %5396 = vmatpush1.bf16.msra.mxu0 0
    %5397 = vmatprep.subr.bf16.mxu0 0
    %5398 = vmatpush1.bf16.msra.mxu0 0
    %5399 = vmatprep.subr.bf16.mxu0 0
    %5400 = vmatpush1.bf16.msra.mxu0 0
    %5401 = vmatprep.subr.bf16.mxu0 0
    %5402 = vmatpush1.bf16.msra.mxu0 0
    %5403 = vmatprep.subr.bf16.mxu0 0
    %5404 = vmatpush1.bf16.msra.mxu0 0
    %5405 = vmatprep.subr.bf16.mxu0 0
    %5406 = vmatpush1.bf16.msra.mxu0 0
    %5407 = vmatprep.subr.bf16.mxu0 0
    %5408 = vmatpush1.bf16.msra.mxu0 0
    %5409 = vmatprep.subr.bf16.mxu0 0
    %5410 = vmatpush1.bf16.msra.mxu0 0
    %5411 = vmatprep.subr.bf16.mxu0 0
    %5412 = vmatpush1.bf16.msra.mxu0 0
    %5413 = vmatprep.subr.bf16.mxu0 0
    %5414 = vmatpush1.bf16.msra.mxu0 0
    %5415 = vmatprep.mubr.bf16.mxu0 0
    %5416 = vmatmul.mubr.bf16.gmra.mrb[0].mxu0 %v5381
    %v5417 = vpop.f32.mrb[0].mxu0
    %v5418 = vadd.f32 0.0, %v5417
    %v5419 = vpop.f32.mrb[0].mxu0
    %v5420 = vpop.f32.mrb[0].mxu0
    %v5421 = vpop.f32.mrb[0].mxu0
    %5422 = vdwg.mxu0
    %v5424 = vsel %vm1535, %v5146, 0
    %5426 = vmatprep.subr.bf16.mxu0 0
    %5427 = vmatpush1.bf16.msra.mxu0 %v5249
    %5428 = vmatprep.subr.bf16.mxu0 0
    %5429 = vmatpush1.bf16.msra.mxu0 0
    %5430 = vmatprep.subr.bf16.mxu0 0
    %5431 = vmatpush1.bf16.msra.mxu0 0
    %5432 = vmatprep.subr.bf16.mxu0 0
    %5433 = vmatpush1.bf16.msra.mxu0 0
    %5434 = vmatprep.subr.bf16.mxu0 0
    %5435 = vmatpush1.bf16.msra.mxu0 0
    %5436 = vmatprep.subr.bf16.mxu0 0
    %5437 = vmatpush1.bf16.msra.mxu0 0
    %5438 = vmatprep.subr.bf16.mxu0 0
    %5439 = vmatpush1.bf16.msra.mxu0 0
    %5440 = vmatprep.subr.bf16.mxu0 0
    %5441 = vmatpush1.bf16.msra.mxu0 0
    %5442 = vmatprep.subr.bf16.mxu0 0
    %5443 = vmatpush1.bf16.msra.mxu0 0
    %5444 = vmatprep.subr.bf16.mxu0 0
    %5445 = vmatpush1.bf16.msra.mxu0 0
    %5446 = vmatprep.subr.bf16.mxu0 0
    %5447 = vmatpush1.bf16.msra.mxu0 0
    %5448 = vmatprep.subr.bf16.mxu0 0
    %5449 = vmatpush1.bf16.msra.mxu0 0
    %5450 = vmatprep.subr.bf16.mxu0 0
    %5451 = vmatpush1.bf16.msra.mxu0 0
    %5452 = vmatprep.subr.bf16.mxu0 0
    %5453 = vmatpush1.bf16.msra.mxu0 0
    %5454 = vmatprep.subr.bf16.mxu0 0
    %5455 = vmatpush1.bf16.msra.mxu0 0
    %5456 = vmatprep.subr.bf16.mxu0 0
    %5457 = vmatpush1.bf16.msra.mxu0 0
    %5458 = vmatprep.mubr.bf16.mxu0 0
    %5459 = vmatmul.mubr.bf16.gmra.mrb[0].mxu0 %v5424
    %v5460 = vpop.f32.mrb[0].mxu0
    %v5461 = vadd.f32 0.0, %v5460
    %v5462 = vpop.f32.mrb[0].mxu0
    %v5463 = vpop.f32.mrb[0].mxu0
    %v5464 = vpop.f32.mrb[0].mxu0
    %5465 = vdwg.mxu0
    %v5467 = vsel %vm1535, %v5147, 0
    %5469 = vmatprep.subr.bf16.mxu0 0
    %5470 = vmatpush1.bf16.msra.mxu0 %v5295
    %5471 = vmatprep.subr.bf16.mxu0 0
    %5472 = vmatpush1.bf16.msra.mxu0 0
    %5473 = vmatprep.subr.bf16.mxu0 0
    %5474 = vmatpush1.bf16.msra.mxu0 0
    %5475 = vmatprep.subr.bf16.mxu0 0
    %5476 = vmatpush1.bf16.msra.mxu0 0
    %5477 = vmatprep.subr.bf16.mxu0 0
    %5478 = vmatpush1.bf16.msra.mxu0 0
    %5479 = vmatprep.subr.bf16.mxu0 0
    %5480 = vmatpush1.bf16.msra.mxu0 0
    %5481 = vmatprep.subr.bf16.mxu0 0
    %5482 = vmatpush1.bf16.msra.mxu0 0
    %5483 = vmatprep.subr.bf16.mxu0 0
    %5484 = vmatpush1.bf16.msra.mxu0 0
    %5485 = vmatprep.subr.bf16.mxu0 0
    %5486 = vmatpush1.bf16.msra.mxu0 0
    %5487 = vmatprep.subr.bf16.mxu0 0
    %5488 = vmatpush1.bf16.msra.mxu0 0
    %5489 = vmatprep.subr.bf16.mxu0 0
    %5490 = vmatpush1.bf16.msra.mxu0 0
    %5491 = vmatprep.subr.bf16.mxu0 0
    %5492 = vmatpush1.bf16.msra.mxu0 0
    %5493 = vmatprep.subr.bf16.mxu0 0
    %5494 = vmatpush1.bf16.msra.mxu0 0
    %5495 = vmatprep.subr.bf16.mxu0 0
    %5496 = vmatpush1.bf16.msra.mxu0 0
    %5497 = vmatprep.subr.bf16.mxu0 0
    %5498 = vmatpush1.bf16.msra.mxu0 0
    %5499 = vmatprep.subr.bf16.mxu0 0
    %5500 = vmatpush1.bf16.msra.mxu0 0
    %5501 = vmatprep.mubr.bf16.mxu0 0
    %5502 = vmatmul.mubr.bf16.gmra.mrb[0].mxu0 %v5467
    %v5503 = vpop.f32.mrb[0].mxu0
    %v5504 = vadd.f32 0.0, %v5503
    %v5505 = vpop.f32.mrb[0].mxu0
    %v5506 = vpop.f32.mrb[0].mxu0
    %v5507 = vpop.f32.mrb[0].mxu0
    %5508 = vdwg.mxu0
    %v5509 = vsel %vm231, %v5194, 0.0
    %v5510 = vsel %vm231, %v5240, 0.0
    %v5511 = vadd.f32 %v5509, %v5510
    %v5512 = vsel %vm231, %v5286, 0.0
    %v5513 = vadd.f32 %v5511, %v5512
    %v5514 = vsel %vm231, %v5332, 0.0
    %v5515 = vadd.f32 %v5513, %v5514
    %v5516 = vsel %vm231, %v5375, 0.0
    %v5517 = vsel %vm231, %v5418, 0.0
    %v5518 = vadd.f32 %v5516, %v5517
    %v5519 = vsel %vm231, %v5461, 0.0
    %v5520 = vadd.f32 %v5518, %v5519
    %v5521 = vsel %vm231, %v5504, 0.0
    %v5522 = vadd.f32 %v5520, %v5521
    %v5523 = vadd.f32 %v2986, %v5515
    %v5524 = vadd.f32 %v2987, %v5522
    %s5525 = scalar_lea.vmem %s12, 1
    %v5526 = vld [vmem:[%s5525] sm:$0x1]
    %v5528 = vlaneseq
    %v5529 = vshrl.u32 %v5528, 7
    %v5530 = vsub.s32 0, %v5529
    %v5531 = vrot.slane %v5526, %v5530
    %v5533 = vadd.f32 %v5523, %v5531
    %v5534 = vadd.f32 %v5524, %v5531
    %s5535 = scalar_lea.vmem %s13, 1
    %v5536 = vld [vmem:[%s5535] sm:$0x1]
    %s5537 = scalar_lea.vmem %s14, 1
    %v5538 = vld [vmem:[%s5537] sm:$0x1]
    %v5539 = vsel %vm231, %v5533, 0.0
    %5540 = vadd.xlane.f32.xlu0 %v5539
    %v5541 = vpop.xlane.xlu0 %5540
    %v5542 = vsel %vm231, %v5534, 0.0
    %5543 = vadd.xlane.f32.xlu0 %v5542
    %v5544 = vpop.xlane.xlu0 %5543
    %v5545 = vmul.f32 %v5541, %v238
    %v5546 = vmul.f32 %v5544, %v238
    %v5547 = vsub.f32 %v5533, %v5545
    %v5548 = vsub.f32 %v5534, %v5546
    %v5549 = vmul.f32 %v5547, %v5547
    %v5550 = vmul.f32 %v5548, %v5548
    %v5551 = vsel %vm231, %v5549, 0.0
    %5552 = vadd.xlane.f32.xlu0 %v5551
    %v5553 = vpop.xlane.xlu0 %5552
    %v5554 = vsel %vm231, %v5550, 0.0
    %5555 = vadd.xlane.f32.xlu0 %v5554
    %v5556 = vpop.xlane.xlu0 %5555
    %v5557 = vmul.f32 %v5553, %v238
    %v5558 = vmul.f32 %v5556, %v238
    %v5559 = vadd.f32 %v5557, 1e-12
    %v5560 = vadd.f32 %v5558, 1e-12
    %v5561 = vrsqrt.pop %v5559
    %v5562 = vrsqrt.pop %v5560
    %v5563 = vmul.f32 %v5547, %v5561
    %v5564 = vmul.f32 %v5548, %v5562
    %v5566 = vlaneseq
    %v5567 = vshrl.u32 %v5566, 7
    %v5568 = vsub.s32 0, %v5567
    %v5569 = vrot.slane %v5536, %v5568
    %v5571 = vmul.f32 %v5563, %v5569
    %v5572 = vmul.f32 %v5564, %v5569
    %v5574 = vlaneseq
    %v5575 = vshrl.u32 %v5574, 7
    %v5576 = vsub.s32 0, %v5575
    %v5577 = vrot.slane %v5538, %v5576
    %v5579 = vadd.f32 %v5571, %v5577
    %v5580 = vadd.f32 %v5572, %v5577
    %v5581 = vpack.c.bf16 %v5580, %v5579
    %s5582 = scalar_lea.vmem %s15, 16
    %v5583 = vld [vmem:[%s5582] sm:$0xf]
    %v5584 = vld [vmem:[%s5582 + $0x4] sm:$0xf]
    %v5585 = vld [vmem:[%s5582 + $0x8] sm:$0xf]
    %v5586 = vld [vmem:[%s5582 + $0xc] sm:$0xf]
    %s5587 = scalar_lea.vmem %s16, 1
    %v5588 = vld [vmem:[%s5587] sm:$0x1]
    %v5590 = vlaneseq
    %v5591 = vshrl.u32 %v5590, 7
    %v5592 = vsub.s32 0, %v5591
    %v5593 = vrot.slane %v5588, %v5592
    %v5599 = vunpack.c.l.b16 %v5583
    %v5600 = vunpack.c.l.b16 %v5584
    %v5601 = vunpack.c.l.b16 %v5585
    %v5602 = vunpack.c.l.b16 %v5586
    %v5603 = vpack.c.b16 %v5600, %v5599
    %v5604 = vpack.c.b16 %v5602, %v5601
    %v5608 = vsel %vm231, %v5581, 0
    %5610 = vmatprep.subr.bf16.mxu0 0
    %5611 = vmatpush1.bf16.msra.mxu0 %v5603
    %5612 = vmatprep.subr.bf16.mxu0 0
    %5613 = vmatpush1.bf16.msra.mxu0 %v5604
    %5614 = vmatprep.subr.bf16.mxu0 0
    %5615 = vmatpush1.bf16.msra.mxu0 0
    %5616 = vmatprep.subr.bf16.mxu0 0
    %5617 = vmatpush1.bf16.msra.mxu0 0
    %5618 = vmatprep.subr.bf16.mxu0 0
    %5619 = vmatpush1.bf16.msra.mxu0 0
    %5620 = vmatprep.subr.bf16.mxu0 0
    %5621 = vmatpush1.bf16.msra.mxu0 0
    %5622 = vmatprep.subr.bf16.mxu0 0
    %5623 = vmatpush1.bf16.msra.mxu0 0
    %5624 = vmatprep.subr.bf16.mxu0 0
    %5625 = vmatpush1.bf16.msra.mxu0 0
    %5626 = vmatprep.subr.bf16.mxu0 0
    %5627 = vmatpush1.bf16.msra.mxu0 0
    %5628 = vmatprep.subr.bf16.mxu0 0
    %5629 = vmatpush1.bf16.msra.mxu0 0
    %5630 = vmatprep.subr.bf16.mxu0 0
    %5631 = vmatpush1.bf16.msra.mxu0 0
    %5632 = vmatprep.subr.bf16.mxu0 0
    %5633 = vmatpush1.bf16.msra.mxu0 0
    %5634 = vmatprep.subr.bf16.mxu0 0
    %5635 = vmatpush1.bf16.msra.mxu0 0
    %5636 = vmatprep.subr.bf16.mxu0 0
    %5637 = vmatpush1.bf16.msra.mxu0 0
    %5638 = vmatprep.subr.bf16.mxu0 0
    %5639 = vmatpush1.bf16.msra.mxu0 0
    %5640 = vmatprep.subr.bf16.mxu0 0
    %5641 = vmatpush1.bf16.msra.mxu0 0
    %5642 = vmatprep.mubr.bf16.mxu0 0
    %5643 = vmatmul.mubr.bf16.gmra.mrb[0].mxu0 %v5608
    %v5644 = vpop.f32.mrb[0].mxu0
    %v5645 = vadd.f32 %v5593, %v5644
    %v5646 = vpop.f32.mrb[0].mxu0
    %v5647 = vpop.f32.mrb[0].mxu0
    %v5648 = vadd.f32 %v5593, %v5647
    %v5649 = vpop.f32.mrb[0].mxu0
    %5650 = vdwg.mxu0
    %v5651 = vmul.f32 %v5645, %v5645
    %v5652 = vmul.f32 %v5648, %v5648
    %v5653 = vmul.f32 %v5645, %v5651
    %v5654 = vmul.f32 %v5648, %v5652
    %v5655 = vmul.f32 %v5653, 0.044715
    %v5656 = vmul.f32 %v5654, 0.044715
    %v5657 = vadd.f32 %v5645, %v5655
    %v5658 = vadd.f32 %v5648, %v5656
    %v5659 = vmul.f32 %v5657, 0.7978846
    %v5660 = vmul.f32 %v5658, 0.7978846
    %v5661 = vtanh.pop %v5659
    %v5662 = vtanh.pop %v5660
    %v5663 = vadd.f32 %v5661, 1.0
    %v5664 = vadd.f32 %v5662, 1.0
    %v5665 = vmul.f32 %v5663, 0.5
    %v5666 = vmul.f32 %v5664, 0.5
    %v5667 = vmul.f32 %v5645, %v5665
    %v5668 = vmul.f32 %v5648, %v5666
    %v5669 = vpack.c.bf16 %v5668, %v5667
    %s5670 = scalar_lea.vmem %s17, 32
    %v5671 = vld [vmem:[%s5670] sm:$0xf]
    %v5672 = vld [vmem:[%s5670 + $0x4] sm:$0xf]
    %v5673 = vld [vmem:[%s5670 + $0x8] sm:$0xf]
    %v5674 = vld [vmem:[%s5670 + $0xc] sm:$0xf]
    %v5675 = vld [vmem:[%s5670 + $0x10] sm:$0xf]
    %v5676 = vld [vmem:[%s5670 + $0x14] sm:$0xf]
    %v5677 = vld [vmem:[%s5670 + $0x18] sm:$0xf]
    %v5678 = vld [vmem:[%s5670 + $0x1c] sm:$0xf]
    %v5687 = vunpack.c.l.b16 %v5671
    %v5688 = vunpack.c.l.b16 %v5672
    %v5689 = vunpack.c.l.b16 %v5673
    %v5690 = vunpack.c.l.b16 %v5674
    %v5691 = vunpack.c.l.b16 %v5675
    %v5692 = vunpack.c.l.b16 %v5676
    %v5693 = vunpack.c.l.b16 %v5677
    %v5694 = vunpack.c.l.b16 %v5678
    %v5695 = vpack.c.b16 %v5688, %v5687
    %v5696 = vpack.c.b16 %v5690, %v5689
    %v5697 = vpack.c.b16 %v5692, %v5691
    %v5698 = vpack.c.b16 %v5694, %v5693
    %v5704 = vsel %vm180, %v5669, 0
    %5706 = vmatprep.subr.bf16.mxu0 0
    %5707 = vmatpush1.bf16.msra.mxu0 %v5695
    %5708 = vmatprep.subr.bf16.mxu0 0
    %5709 = vmatpush1.bf16.msra.mxu0 %v5696
    %5710 = vmatprep.subr.bf16.mxu0 0
    %5711 = vmatpush1.bf16.msra.mxu0 %v5697
    %5712 = vmatprep.subr.bf16.mxu0 0
    %5713 = vmatpush1.bf16.msra.mxu0 %v5698
    %5714 = vmatprep.subr.bf16.mxu0 0
    %5715 = vmatpush1.bf16.msra.mxu0 0
    %5716 = vmatprep.subr.bf16.mxu0 0
    %5717 = vmatpush1.bf16.msra.mxu0 0
    %5718 = vmatprep.subr.bf16.mxu0 0
    %5719 = vmatpush1.bf16.msra.mxu0 0
    %5720 = vmatprep.subr.bf16.mxu0 0
    %5721 = vmatpush1.bf16.msra.mxu0 0
    %5722 = vmatprep.subr.bf16.mxu0 0
    %5723 = vmatpush1.bf16.msra.mxu0 0
    %5724 = vmatprep.subr.bf16.mxu0 0
    %5725 = vmatpush1.bf16.msra.mxu0 0
    %5726 = vmatprep.subr.bf16.mxu0 0
    %5727 = vmatpush1.bf16.msra.mxu0 0
    %5728 = vmatprep.subr.bf16.mxu0 0
    %5729 = vmatpush1.bf16.msra.mxu0 0
    %5730 = vmatprep.subr.bf16.mxu0 0
    %5731 = vmatpush1.bf16.msra.mxu0 0
    %5732 = vmatprep.subr.bf16.mxu0 0
    %5733 = vmatpush1.bf16.msra.mxu0 0
    %5734 = vmatprep.subr.bf16.mxu0 0
    %5735 = vmatpush1.bf16.msra.mxu0 0
    %5736 = vmatprep.subr.bf16.mxu0 0
    %5737 = vmatpush1.bf16.msra.mxu0 0
    %5738 = vmatprep.mubr.bf16.mxu0 0
    %5739 = vmatmul.mubr.bf16.gmra.mrb[0].mxu0 %v5704
    %v5740 = vpop.f32.mrb[0].mxu0
    %v5741 = vadd.f32 0.0, %v5740
    %v5742 = vpop.f32.mrb[0].mxu0
    %v5743 = vpop.f32.mrb[0].mxu0
    %v5744 = vadd.f32 0.0, %v5743
    %v5745 = vpop.f32.mrb[0].mxu0
    %5746 = vdwg.mxu0
    %v5747 = vadd.f32 %v5533, %v5741
    %v5748 = vadd.f32 %v5534, %v5744
    %s5749 = scalar_lea.vmem %s18, 1
    %v5750 = vld [vmem:[%s5749] sm:$0x1]
    %v5752 = vlaneseq
    %v5753 = vshrl.u32 %v5752, 7
    %v5754 = vsub.s32 0, %v5753
    %v5755 = vrot.slane %v5750, %v5754
    %v5757 = vadd.f32 %v5747, %v5755
    %v5758 = vadd.f32 %v5748, %v5755
    %v5759 = vld [vmem:[%s19] sm:$0x1]
    %v5760 = vld [vmem:[%s20] sm:$0x1]
    %v5761 = vsel %vm231, %v5757, 0.0
    %5762 = vadd.xlane.f32.xlu0 %v5761
    %v5763 = vpop.xlane.xlu0 %5762
    %v5764 = vsel %vm231, %v5758, 0.0
    %5765 = vadd.xlane.f32.xlu0 %v5764
    %v5766 = vpop.xlane.xlu0 %5765
    %v5767 = vmul.f32 %v5763, %v238
    %v5768 = vmul.f32 %v5766, %v238
    %v5769 = vsub.f32 %v5757, %v5767
    %v5770 = vsub.f32 %v5758, %v5768
    %v5771 = vmul.f32 %v5769, %v5769
    %v5772 = vmul.f32 %v5770, %v5770
    %v5773 = vsel %vm231, %v5771, 0.0
    %5774 = vadd.xlane.f32.xlu0 %v5773
    %v5775 = vpop.xlane.xlu0 %5774
    %v5776 = vsel %vm231, %v5772, 0.0
    %5777 = vadd.xlane.f32.xlu0 %v5776
    %v5778 = vpop.xlane.xlu0 %5777
    %v5779 = vmul.f32 %v5775, %v238
    %v5780 = vmul.f32 %v5778, %v238
    %v5781 = vadd.f32 %v5779, 1e-12
    %v5782 = vadd.f32 %v5780, 1e-12
    %v5783 = vrsqrt.pop %v5781
    %v5784 = vrsqrt.pop %v5782
    %v5785 = vmul.f32 %v5769, %v5783
    %v5786 = vmul.f32 %v5770, %v5784
    %v5788 = vlaneseq
    %v5789 = vshrl.u32 %v5788, 7
    %v5790 = vsub.s32 0, %v5789
    %v5791 = vrot.slane %v5759, %v5790
    %v5793 = vmul.f32 %v5785, %v5791
    %v5794 = vmul.f32 %v5786, %v5791
    %v5796 = vlaneseq
    %v5797 = vshrl.u32 %v5796, 7
    %v5798 = vsub.s32 0, %v5797
    %v5799 = vrot.slane %v5760, %v5798
    %v5801 = vadd.f32 %v5793, %v5799
    %v5802 = vadd.f32 %v5794, %v5799
    %v5803 = vpack.c.bf16 %v5801, %v5801
    %v5804 = vpack.c.bf16 %v5802, %v5802
    %v5805 = vld [vmem:[%s21] sm:$0xf]
    %v5806 = vld [vmem:[%s21 + $0x4] sm:$0xf]
    %v5807 = vld [vmem:[%s21 + $0x8] sm:$0xf]
    %v5808 = vld [vmem:[%s21 + $0xc] sm:$0xf]
    %v5809 = vld [vmem:[%s22] sm:$0x1]
    %v5811 = vlaneseq
    %v5812 = vshrl.u32 %v5811, 7
    %v5813 = vsub.s32 0, %v5812
    %v5814 = vrot.slane %v5809, %v5813
    %v5818 = vunpack.c.l.b16 %v5803
    %v5819 = vunpack.c.l.b16 %v5804
    %v5820 = vrot.slane %v5819, 7
    %vm5821 = vcmask 1041409
    %v5822 = vsel %vm5821, %v5820, %v5818
    %v5823 = vpack.c.b16 %v5822, %v5822
    %v5828 = vunpack.c.l.b16 %v5805
    %v5829 = vunpack.c.l.b16 %v5806
    %v5830 = vunpack.c.l.b16 %v5807
    %v5831 = vunpack.c.l.b16 %v5808
    %v5832 = vpack.c.b16 %v5829, %v5828
    %v5833 = vpack.c.b16 %v5831, %v5830
    %v5837 = vsel %vm231, %v5823, 0
    %5839 = vmatprep.subr.bf16.mxu0 0
    %5840 = vmatpush1.bf16.msra.mxu0 %v5832
    %5841 = vmatprep.subr.bf16.mxu0 0
    %5842 = vmatpush1.bf16.msra.mxu0 %v5833
    %5843 = vmatprep.subr.bf16.mxu0 0
    %5844 = vmatpush1.bf16.msra.mxu0 0
    %5845 = vmatprep.subr.bf16.mxu0 0
    %5846 = vmatpush1.bf16.msra.mxu0 0
    %5847 = vmatprep.subr.bf16.mxu0 0
    %5848 = vmatpush1.bf16.msra.mxu0 0
    %5849 = vmatprep.subr.bf16.mxu0 0
    %5850 = vmatpush1.bf16.msra.mxu0 0
    %5851 = vmatprep.subr.bf16.mxu0 0
    %5852 = vmatpush1.bf16.msra.mxu0 0
    %5853 = vmatprep.subr.bf16.mxu0 0
    %5854 = vmatpush1.bf16.msra.mxu0 0
    %5855 = vmatprep.subr.bf16.mxu0 0
    %5856 = vmatpush1.bf16.msra.mxu0 0
    %5857 = vmatprep.subr.bf16.mxu0 0
    %5858 = vmatpush1.bf16.msra.mxu0 0
    %5859 = vmatprep.subr.bf16.mxu0 0
    %5860 = vmatpush1.bf16.msra.mxu0 0
    %5861 = vmatprep.subr.bf16.mxu0 0
    %5862 = vmatpush1.bf16.msra.mxu0 0
    %5863 = vmatprep.subr.bf16.mxu0 0
    %5864 = vmatpush1.bf16.msra.mxu0 0
    %5865 = vmatprep.subr.bf16.mxu0 0
    %5866 = vmatpush1.bf16.msra.mxu0 0
    %5867 = vmatprep.subr.bf16.mxu0 0
    %5868 = vmatpush1.bf16.msra.mxu0 0
    %5869 = vmatprep.subr.bf16.mxu0 0
    %5870 = vmatpush1.bf16.msra.mxu0 0
    %5871 = vmatprep.mubr.bf16.mxu0 0
    %5872 = vmatmul.mubr.bf16.gmra.mrb[0].mxu0 %v5837
    %v5873 = vpop.f32.mrb[0].mxu0
    %v5874 = vadd.f32 %v5814, %v5873
    %v5875 = vpop.f32.mrb[0].mxu0
    %v5876 = vpop.f32.mrb[0].mxu0
    %v5877 = vpop.f32.mrb[0].mxu0
    %5878 = vdwg.mxu0
    %v5879 = vtanh.pop %v5874
    %vm5880 = vcmask 254976
    %5881 = vst.msk [vmem:[#allocation2] sm:$0x3] %vm5880, %v5879
    // Predicated region
    $region94: #{vit_forward.1} parent=1 // pred_check
      _
    $region95: #{vit_forward.1} parent=1 // pred_check_branch
      %5883 = sbr.rel (0) target = $region97
    $region96: #{vit_forward.1} parent=1 // pred_region
      %s5885 = ssub.s32 32, 32
      %5886 = vsyncadd [#allocation3], %s5885
      %s5888 = sshll.u32 [#allocation2], 4
      %s5889 = int_to_ptr.vmem [resolvable:$true] %s5888
      %5891 = dma.vmem_to_hbm [thread:$0]  %s5889, 32, %s23, [#allocation3]
    $region97: #{vit_forward.1} parent=1 // pred_fallthru
      _
    // Predicated region
    $region98: #{vit_forward.1} parent=1 // pred_check
      _
    $region99: #{vit_forward.1} parent=1 // pred_check_branch
      %5893 = sbr.rel (0) target = $region101
    $region100: #{vit_forward.1} parent=1 // pred_region
      %5894 = dma.done [#allocation3], 32
    $region101: #{vit_forward.1} parent=1 // pred_fallthru
      _
    %5895 = vsyncpa [#allocation3], 1

</llo_original>
